<compile_context>
chip_gen: v7x
topology: tpu7x:2x2x1
jax: 0.10.0
libtpu: 0.0.40
codegen_flags: <defaults>
</compile_context>

<pallas_src>
import jax
import jax.numpy as jnp
from jax import lax
from jax.experimental import pallas as pl
from jax.experimental.pallas import tpu as pltpu


# ---------------------------------------------------------------------------
# Kernel 1/2: 3x3 conv (stride 1, pad 1), fused BN-stats outputs, optional
# fused input prologue (per-channel affine + LeakyReLU).  bf16 MXU, f32 acc.
# ---------------------------------------------------------------------------
def _make_conv3x3_kernel(H, W, Cin, Cout, pre_affine, neg_slope=0.01):
    def kernel(*refs):
        if pre_affine:
            x_ref, w_ref, s_ref, b_ref, o_ref, sum_ref, ssq_ref, xpad_ref = refs
        else:
            x_ref, w_ref, o_ref, sum_ref, ssq_ref, xpad_ref = refs

        x = x_ref[0].astype(jnp.float32)                      # (H, W, Cin)
        if pre_affine:
            # previous layer's BatchNorm affine + LeakyReLU(0.01), fused here
            x = x * s_ref[...] + b_ref[...]
            x = jnp.where(x >= 0.0, x, neg_slope * x)

        # zero-padded plane lives only in VMEM (no HBM im2col / pad copies)
        xpad_ref[...] = jnp.zeros_like(xpad_ref)
        xpad_ref[pl.ds(1, H), pl.ds(1, W), :] = x

        acc = jnp.zeros((H * W, Cout), jnp.float32)
        for dh in range(3):
            for dw in range(3):
                patch = xpad_ref[pl.ds(dh, H), pl.ds(dw, W), :]
                patch = patch.reshape(H * W, Cin).astype(jnp.bfloat16)
                acc = acc + jnp.dot(patch, w_ref[dh, dw],
                                    preferred_element_type=jnp.float32)

        o_ref[0] = acc.reshape(H, W, Cout).astype(o_ref.dtype)
        # per-channel partial sums for training-mode BatchNorm (f32)
        sum_ref[0] = jnp.sum(acc, axis=0, keepdims=True)
        ssq_ref[0] = jnp.sum(acc * acc, axis=0, keepdims=True)

    return kernel


def conv3x3_stats(x, w_bf16, pre_scale=None, pre_shift=None,
                  out_dtype=jnp.bfloat16):
    """3x3/s1/p1 conv.  Returns (conv_out, per-channel sum, per-channel sumsq)."""
    N, H, W, Cin = x.shape
    Cout = w_bf16.shape[-1]
    pre = pre_scale is not None

    in_specs = [pl.BlockSpec((1, H, W, Cin), lambda n: (n, 0, 0, 0)),
                pl.BlockSpec((3, 3, Cin, Cout), lambda n: (0, 0, 0, 0))]
    args = [x, w_bf16]
    if pre:
        in_specs += [pl.BlockSpec((1, Cin), lambda n: (0, 0)),
                     pl.BlockSpec((1, Cin), lambda n: (0, 0))]
        args += [pre_scale.reshape(1, Cin).astype(jnp.float32),
                 pre_shift.reshape(1, Cin).astype(jnp.float32)]

    out_shape = (jax.ShapeDtypeStruct((N, H, W, Cout), out_dtype),
                 jax.ShapeDtypeStruct((N, 1, Cout), jnp.float32),
                 jax.ShapeDtypeStruct((N, 1, Cout), jnp.float32))
    out_specs = (pl.BlockSpec((1, H, W, Cout), lambda n: (n, 0, 0, 0)),
                 pl.BlockSpec((1, 1, Cout), lambda n: (n, 0, 0)),
                 pl.BlockSpec((1, 1, Cout), lambda n: (n, 0, 0)))

    y, s, ss = pl.pallas_call(
        _make_conv3x3_kernel(H, W, Cin, Cout, pre),
        grid=(N,),
        in_specs=in_specs,
        out_specs=out_specs,
        out_shape=out_shape,
        scratch_shapes=[pltpu.VMEM((H + 2, W + 2, Cin), jnp.float32)],
        compiler_params=pltpu.CompilerParams(dimension_semantics=("parallel",)),
    )(*args)
    # tiny O(N*C) reduction of the per-sample partials
    return y, jnp.sum(s, axis=0)[0], jnp.sum(ss, axis=0)[0]


def bn_scale_shift(ch_sum, ch_ssq, count, gamma, beta, eps=1e-5):
    # training-mode BatchNorm: biased batch variance (matches PyTorch normalization)
    mean = ch_sum / count
    var = jnp.maximum(ch_ssq / count - mean * mean, 0.0)
    scale = gamma * lax.rsqrt(var + eps)
    shift = beta - mean * scale
    return scale, shift


# ---------------------------------------------------------------------------
# Kernel 3: bilinear resize (align_corners=False) fused with the 1x1 conv.
#   * 1x1 conv (+ folded BN1 affine) and W-axis interp are one combined mixing
#     matrix Wmix (W*Cmid, out_W*Cout)   ->  y = x(H, W*Cmid) @ Wmix
#   * H-axis interp is a second matmul   ->  z = Mh(out_H, H) @ y
#   Exact rewrite: conv1x1 is per-pixel linear channel mixing, bilinear is
#   per-channel linear spatial mixing with weights summing to 1, so they commute
#   and the bias passes through unchanged.
# ---------------------------------------------------------------------------
def _bilinear_conv_kernel(x_ref, wmix_ref, mh_ref, bias_ref, o_ref):
    x = x_ref[0].astype(jnp.float32)                                     # (H, W*Cmid)
    y = jnp.dot(x, wmix_ref[...], preferred_element_type=jnp.float32)    # (H, oW*Cout)
    z = jnp.dot(mh_ref[...], y, preferred_element_type=jnp.float32)      # (oH, oW*Cout)
    o_ref[0] = z + bias_ref[...]


def _interp_matrix(out_size, in_size):
    # PyTorch bilinear, align_corners=False; each row sums to exactly 1.
    o = jnp.arange(out_size, dtype=jnp.float32)
    src = jnp.maximum((o + 0.5) * (float(in_size) / float(out_size)) - 0.5, 0.0)
    j0 = jnp.clip(jnp.floor(src).astype(jnp.int32), 0, in_size - 1)
    j1 = jnp.minimum(j0 + 1, in_size - 1)
    w1 = src - j0.astype(jnp.float32)
    w0 = 1.0 - w1
    return (jax.nn.one_hot(j0, in_size, dtype=jnp.float32) * w0[:, None] +
            jax.nn.one_hot(j1, in_size, dtype=jnp.float32) * w1[:, None])


def bilinear_conv1x1(x, wc, bc, out_size):
    N, H, W, Cmid = x.shape
    out_H, out_W = out_size
    Cout = wc.shape[-1]

    Mh = _interp_matrix(out_H, H)                                 # (out_H, H)
    Mw = _interp_matrix(out_W, W)                                 # (out_W, W)
    # Wmix[w*Cmid + c, ow*Cout + o] = Mw[ow, w] * wc[c, o]
    wmix = (Mw.T[:, None, :, None] *
            wc.astype(jnp.float32)[None, :, None, :]).reshape(W * Cmid, out_W * Cout)
    bias_row = jnp.tile(bc.astype(jnp.float32), out_W).reshape(1, out_W * Cout)

    x2 = x.reshape(N, H, W * Cmid)                                # free reshape in XLA

    out = pl.pallas_call(
        _bilinear_conv_kernel,
        grid=(N,),
        in_specs=[pl.BlockSpec((1, H, W * Cmid), lambda n: (n, 0, 0)),
                  pl.BlockSpec((W * Cmid, out_W * Cout), lambda n: (0, 0)),
                  pl.BlockSpec((out_H, H), lambda n: (0, 0)),
                  pl.BlockSpec((1, out_W * Cout), lambda n: (0, 0))],
        out_specs=pl.BlockSpec((1, out_H, out_W * Cout), lambda n: (n, 0, 0)),
        out_shape=jax.ShapeDtypeStruct((N, out_H, out_W * Cout), jnp.float32),
        compiler_params=pltpu.CompilerParams(dimension_semantics=("parallel",)),
    )(x2, wmix, Mh, bias_row)
    return out.reshape(N, out_H, out_W, Cout)


# ---------------------------------------------------------------------------
# UpSample forward
# ---------------------------------------------------------------------------
def upsample_forward(params, x_nchw, y_nchw, size=None):
    x = jnp.transpose(x_nchw, (0, 2, 3, 1)).astype(jnp.float32)   # NCHW -> NHWC
    N, H, W, _ = x.shape
    count = float(N * H * W)

    # seq0: Conv3x3 -> BN (batch stats) -> LeakyReLU
    # (conv bias omitted: it cancels exactly inside training-mode BatchNorm)
    t0, s0, ss0 = conv3x3_stats(x, params['w0'])
    sc0, sh0 = bn_scale_shift(s0, ss0, count, params['g0'], params['b0'])

    # seq0: Conv3x3 -> BN;  BN0 affine + LeakyReLU are fused into this conv's prologue
    t1, s1, ss1 = conv3x3_stats(t0, params['w1'], pre_scale=sc0, pre_shift=sh0)
    sc1, sh1 = bn_scale_shift(s1, ss1, count, params['g1'], params['b1'])

    # BN1 is a per-channel affine; bilinear weights sum to 1 so it commutes with the
    # resize and folds exactly into the 1x1 conv weights / bias.
    wc = params['wc'] * sc1[:, None]
    bc = sh1 @ params['wc'] + params['bc']

    if size is None:
        size = (2 * H, 2 * W)                                   # scale_factor=2
    up = bilinear_conv1x1(t1, wc, bc, size)                     # (N, oH, oW, s_out)

    # TODO(synk): channel concat + the single small layout transpose are XLA glue
    # (pure data movement); the skip tensor `y` stays in NCHW untouched.
    up_nchw = jnp.transpose(up, (0, 3, 1, 2))                   # NHWC -> NCHW
    return jnp.concatenate([up_nchw, y_nchw.astype(up_nchw.dtype)], axis=1)


# ---------------------------------------------------------------------------
# Deterministic parameter init (shapes from UpSample.__init__ defaults)
# ---------------------------------------------------------------------------
def init_params(key, in_channels, s_out_channels=None, mid_layer_channels=None,
                div_factor=2):
    if s_out_channels is None:
        s_out_channels = in_channels // (2 * div_factor)
    if mid_layer_channels is None:
        mid_layer_channels = in_channels // div_factor
    ks = jax.random.split(key, 8)

    def conv_w(k, cin, cout, ksz):
        # stored as (kh, kw, Cin, Cout); bf16 for the MXU
        return (jax.random.normal(k, (ksz, ksz, cin, cout), jnp.float32) * 0.05)

    return {
        'w0': conv_w(ks[0], in_channels, in_channels, 3).astype(jnp.bfloat16),
        'g0': 1.0 + 0.1 * jax.random.normal(ks[1], (in_channels,), jnp.float32),
        'b0': 0.1 * jax.random.normal(ks[2], (in_channels,), jnp.float32),
        'w1': conv_w(ks[3], in_channels, mid_layer_channels, 3).astype(jnp.bfloat16),
        'g1': 1.0 + 0.1 * jax.random.normal(ks[4], (mid_layer_channels,), jnp.float32),
        'b1': 0.1 * jax.random.normal(ks[5], (mid_layer_channels,), jnp.float32),
        'wc': jax.random.normal(ks[6], (mid_layer_channels, s_out_channels),
                                jnp.float32) * 0.05,
        'bc': 0.05 * jax.random.normal(ks[7], (s_out_channels,), jnp.float32),
    }


if __name__ == "__main__":
    key = jax.random.PRNGKey(0)
    kp, kx, ky = jax.random.split(key, 3)

    N, IN_C, H, W = 2, 32, 16, 16          # UpSample(32): mid=16, s_out=8
    SKIP_C = 8
    params = init_params(kp, IN_C)

    x = jax.random.normal(kx, (N, IN_C, H, W), jnp.float32)          # NCHW
    y = jax.random.normal(ky, (N, SKIP_C, 2 * H, 2 * W), jnp.float32)

    fwd = jax.jit(upsample_forward)
    out = jax.block_until_ready(fwd(params, x, y))

    assert out.shape == (N, IN_C // 4 + SKIP_C, 2 * H, 2 * W), out.shape
    assert bool(jnp.all(jnp.isfinite(out)))
    print("KERNEL_OK")
</pallas_src>

<mosaic_0001>
module attributes {stable_mosaic.version = 11 : i64} {
  func.func @kernel(%arg0: i32, %arg1: memref<1x16x16x32xf32, #tpu.memory_space<vmem>>, %arg2: memref<3x3x32x32xbf16, #tpu.memory_space<vmem>>, %arg3: memref<1x16x16x32xbf16, #tpu.memory_space<vmem>>, %arg4: memref<1x1x32xf32, #tpu.memory_space<vmem>>, %arg5: memref<1x1x32xf32, #tpu.memory_space<vmem>>, %arg6: memref<18x18x32xf32, #tpu.memory_space<vmem>>) attributes {dimension_semantics = [#tpu.dimension_semantics<parallel>], iteration_bounds = array<i64: 2>, scalar_prefetch = 0 : i64, scratch_operands = 1 : i64, tpu.core_type = #tpu.core_type<tc>, window_params = [{transform_indices = @transform_0, window_bounds = array<i64: 1, 16, 16, 32>}, {pipeline_mode = #tpu.pipeline_mode<synchronous>, transform_indices = @transform_1, window_bounds = array<i64: 3, 3, 32, 32>}, {transform_indices = @transform_2, window_bounds = array<i64: 1, 16, 16, 32>}, {transform_indices = @transform_3, window_bounds = array<i64: 1, 1, 32>}, {transform_indices = @transform_4, window_bounds = array<i64: 1, 1, 32>}]} {
    %c0 = arith.constant 0 : index
    %c0_0 = arith.constant 0 : index
    %c0_1 = arith.constant 0 : index
    %c0_2 = arith.constant 0 : index
    %0 = vector.load %arg1[%c0, %c0_0, %c0_1, %c0_2] : memref<1x16x16x32xf32, #tpu.memory_space<vmem>>, vector<1x16x16x32xf32>
    %1 = vector.shape_cast %0 : vector<1x16x16x32xf32> to vector<16x16x32xf32>
    %cst = arith.constant 0.000000e+00 : f32
    %2 = vector.broadcast %cst : f32 to vector<18x18x32xf32>
    %c0_3 = arith.constant 0 : index
    %c0_4 = arith.constant 0 : index
    %c0_5 = arith.constant 0 : index
    %3 = vector.load %arg6[%c0_3, %c0_4, %c0_5] : memref<18x18x32xf32, #tpu.memory_space<vmem>>, vector<18x18x32xf32>
    tpu.vector_store %arg6[%c0_3, %c0_4, %c0_5], %2 {strides = array<i32>} : memref<18x18x32xf32, #tpu.memory_space<vmem>>, vector<18x18x32xf32>,
    %c1 = arith.constant 1 : index
    %c1_6 = arith.constant 1 : index
    %c0_7 = arith.constant 0 : index
    %4 = vector.load %arg6[%c1, %c1_6, %c0_7] : memref<18x18x32xf32, #tpu.memory_space<vmem>>, vector<16x16x32xf32>
    tpu.vector_store %arg6[%c1, %c1_6, %c0_7], %1 {strides = array<i32>} : memref<18x18x32xf32, #tpu.memory_space<vmem>>, vector<16x16x32xf32>,
    %cst_8 = arith.constant 0.000000e+00 : f32
    %5 = vector.broadcast %cst_8 : f32 to vector<256x32xf32>
    %c0_9 = arith.constant 0 : index
    %c0_10 = arith.constant 0 : index
    %c0_11 = arith.constant 0 : index
    %6 = vector.load %arg6[%c0_9, %c0_10, %c0_11] : memref<18x18x32xf32, #tpu.memory_space<vmem>>, vector<16x16x32xf32>
    %7 = vector.shape_cast %6 : vector<16x16x32xf32> to vector<256x32xf32>
    %8 = arith.truncf %7 : vector<256x32xf32> to vector<256x32xbf16>
    %c0_12 = arith.constant 0 : index
    %c0_13 = arith.constant 0 : index
    %c0_14 = arith.constant 0 : index
    %c0_15 = arith.constant 0 : index
    %9 = vector.load %arg2[%c0_12, %c0_13, %c0_14, %c0_15] : memref<3x3x32x32xbf16, #tpu.memory_space<vmem>>, vector<1x1x32x32xbf16>
    %10 = vector.shape_cast %9 : vector<1x1x32x32xbf16> to vector<32x32xbf16>
    %cst_16 = arith.constant dense<0.000000e+00> : vector<256x32xf32>
    %11 = tpu.matmul %8, %10, %cst_16 {dimension_numbers = #tpu.dot_dimension_numbers<[1], [0], [0], [1], [0, 0, 1, 1], [], []>} : vector<256x32xbf16>, vector<32x32xbf16>, vector<256x32xf32> -> vector<256x32xf32>
    %12 = arith.addf %5, %11 : vector<256x32xf32>
    %c0_17 = arith.constant 0 : index
    %c1_18 = arith.constant 1 : index
    %c0_19 = arith.constant 0 : index
    %13 = vector.load %arg6[%c0_17, %c1_18, %c0_19] : memref<18x18x32xf32, #tpu.memory_space<vmem>>, vector<16x16x32xf32>
    %14 = vector.shape_cast %13 : vector<16x16x32xf32> to vector<256x32xf32>
    %15 = arith.truncf %14 : vector<256x32xf32> to vector<256x32xbf16>
    %c0_20 = arith.constant 0 : index
    %c1_21 = arith.constant 1 : index
    %c0_22 = arith.constant 0 : index
    %c0_23 = arith.constant 0 : index
    %16 = vector.load %arg2[%c0_20, %c1_21, %c0_22, %c0_23] : memref<3x3x32x32xbf16, #tpu.memory_space<vmem>>, vector<1x1x32x32xbf16>
    %17 = vector.shape_cast %16 : vector<1x1x32x32xbf16> to vector<32x32xbf16>
    %cst_24 = arith.constant dense<0.000000e+00> : vector<256x32xf32>
    %18 = tpu.matmul %15, %17, %cst_24 {dimension_numbers = #tpu.dot_dimension_numbers<[1], [0], [0], [1], [0, 0, 1, 1], [], []>} : vector<256x32xbf16>, vector<32x32xbf16>, vector<256x32xf32> -> vector<256x32xf32>
    %19 = arith.addf %12, %18 : vector<256x32xf32>
    %c0_25 = arith.constant 0 : index
    %c2 = arith.constant 2 : index
    %c0_26 = arith.constant 0 : index
    %20 = vector.load %arg6[%c0_25, %c2, %c0_26] : memref<18x18x32xf32, #tpu.memory_space<vmem>>, vector<16x16x32xf32>
    %21 = vector.shape_cast %20 : vector<16x16x32xf32> to vector<256x32xf32>
    %22 = arith.truncf %21 : vector<256x32xf32> to vector<256x32xbf16>
    %c0_27 = arith.constant 0 : index
    %c2_28 = arith.constant 2 : index
    %c0_29 = arith.constant 0 : index
    %c0_30 = arith.constant 0 : index
    %23 = vector.load %arg2[%c0_27, %c2_28, %c0_29, %c0_30] : memref<3x3x32x32xbf16, #tpu.memory_space<vmem>>, vector<1x1x32x32xbf16>
    %24 = vector.shape_cast %23 : vector<1x1x32x32xbf16> to vector<32x32xbf16>
    %cst_31 = arith.constant dense<0.000000e+00> : vector<256x32xf32>
    %25 = tpu.matmul %22, %24, %cst_31 {dimension_numbers = #tpu.dot_dimension_numbers<[1], [0], [0], [1], [0, 0, 1, 1], [], []>} : vector<256x32xbf16>, vector<32x32xbf16>, vector<256x32xf32> -> vector<256x32xf32>
    %26 = arith.addf %19, %25 : vector<256x32xf32>
    %c1_32 = arith.constant 1 : index
    %c0_33 = arith.constant 0 : index
    %c0_34 = arith.constant 0 : index
    %27 = vector.load %arg6[%c1_32, %c0_33, %c0_34] : memref<18x18x32xf32, #tpu.memory_space<vmem>>, vector<16x16x32xf32>
    %28 = vector.shape_cast %27 : vector<16x16x32xf32> to vector<256x32xf32>
    %29 = arith.truncf %28 : vector<256x32xf32> to vector<256x32xbf16>
    %c1_35 = arith.constant 1 : index
    %c0_36 = arith.constant 0 : index
    %c0_37 = arith.constant 0 : index
    %c0_38 = arith.constant 0 : index
    %30 = vector.load %arg2[%c1_35, %c0_36, %c0_37, %c0_38] : memref<3x3x32x32xbf16, #tpu.memory_space<vmem>>, vector<1x1x32x32xbf16>
    %31 = vector.shape_cast %30 : vector<1x1x32x32xbf16> to vector<32x32xbf16>
    %cst_39 = arith.constant dense<0.000000e+00> : vector<256x32xf32>
    %32 = tpu.matmul %29, %31, %cst_39 {dimension_numbers = #tpu.dot_dimension_numbers<[1], [0], [0], [1], [0, 0, 1, 1], [], []>} : vector<256x32xbf16>, vector<32x32xbf16>, vector<256x32xf32> -> vector<256x32xf32>
    %33 = arith.addf %26, %32 : vector<256x32xf32>
    %c1_40 = arith.constant 1 : index
    %c1_41 = arith.constant 1 : index
    %c0_42 = arith.constant 0 : index
    %34 = vector.load %arg6[%c1_40, %c1_41, %c0_42] : memref<18x18x32xf32, #tpu.memory_space<vmem>>, vector<16x16x32xf32>
    %35 = vector.shape_cast %34 : vector<16x16x32xf32> to vector<256x32xf32>
    %36 = arith.truncf %35 : vector<256x32xf32> to vector<256x32xbf16>
    %c1_43 = arith.constant 1 : index
    %c1_44 = arith.constant 1 : index
    %c0_45 = arith.constant 0 : index
    %c0_46 = arith.constant 0 : index
    %37 = vector.load %arg2[%c1_43, %c1_44, %c0_45, %c0_46] : memref<3x3x32x32xbf16, #tpu.memory_space<vmem>>, vector<1x1x32x32xbf16>
    %38 = vector.shape_cast %37 : vector<1x1x32x32xbf16> to vector<32x32xbf16>
    %cst_47 = arith.constant dense<0.000000e+00> : vector<256x32xf32>
    %39 = tpu.matmul %36, %38, %cst_47 {dimension_numbers = #tpu.dot_dimension_numbers<[1], [0], [0], [1], [0, 0, 1, 1], [], []>} : vector<256x32xbf16>, vector<32x32xbf16>, vector<256x32xf32> -> vector<256x32xf32>
    %40 = arith.addf %33, %39 : vector<256x32xf32>
    %c1_48 = arith.constant 1 : index
    %c2_49 = arith.constant 2 : index
    %c0_50 = arith.constant 0 : index
    %41 = vector.load %arg6[%c1_48, %c2_49, %c0_50] : memref<18x18x32xf32, #tpu.memory_space<vmem>>, vector<16x16x32xf32>
    %42 = vector.shape_cast %41 : vector<16x16x32xf32> to vector<256x32xf32>
    %43 = arith.truncf %42 : vector<256x32xf32> to vector<256x32xbf16>
    %c1_51 = arith.constant 1 : index
    %c2_52 = arith.constant 2 : index
    %c0_53 = arith.constant 0 : index
    %c0_54 = arith.constant 0 : index
    %44 = vector.load %arg2[%c1_51, %c2_52, %c0_53, %c0_54] : memref<3x3x32x32xbf16, #tpu.memory_space<vmem>>, vector<1x1x32x32xbf16>
    %45 = vector.shape_cast %44 : vector<1x1x32x32xbf16> to vector<32x32xbf16>
    %cst_55 = arith.constant dense<0.000000e+00> : vector<256x32xf32>
    %46 = tpu.matmul %43, %45, %cst_55 {dimension_numbers = #tpu.dot_dimension_numbers<[1], [0], [0], [1], [0, 0, 1, 1], [], []>} : vector<256x32xbf16>, vector<32x32xbf16>, vector<256x32xf32> -> vector<256x32xf32>
    %47 = arith.addf %40, %46 : vector<256x32xf32>
    %c2_56 = arith.constant 2 : index
    %c0_57 = arith.constant 0 : index
    %c0_58 = arith.constant 0 : index
    %48 = vector.load %arg6[%c2_56, %c0_57, %c0_58] : memref<18x18x32xf32, #tpu.memory_space<vmem>>, vector<16x16x32xf32>
    %49 = vector.shape_cast %48 : vector<16x16x32xf32> to vector<256x32xf32>
    %50 = arith.truncf %49 : vector<256x32xf32> to vector<256x32xbf16>
    %c2_59 = arith.constant 2 : index
    %c0_60 = arith.constant 0 : index
    %c0_61 = arith.constant 0 : index
    %c0_62 = arith.constant 0 : index
    %51 = vector.load %arg2[%c2_59, %c0_60, %c0_61, %c0_62] : memref<3x3x32x32xbf16, #tpu.memory_space<vmem>>, vector<1x1x32x32xbf16>
    %52 = vector.shape_cast %51 : vector<1x1x32x32xbf16> to vector<32x32xbf16>
    %cst_63 = arith.constant dense<0.000000e+00> : vector<256x32xf32>
    %53 = tpu.matmul %50, %52, %cst_63 {dimension_numbers = #tpu.dot_dimension_numbers<[1], [0], [0], [1], [0, 0, 1, 1], [], []>} : vector<256x32xbf16>, vector<32x32xbf16>, vector<256x32xf32> -> vector<256x32xf32>
    %54 = arith.addf %47, %53 : vector<256x32xf32>
    %c2_64 = arith.constant 2 : index
    %c1_65 = arith.constant 1 : index
    %c0_66 = arith.constant 0 : index
    %55 = vector.load %arg6[%c2_64, %c1_65, %c0_66] : memref<18x18x32xf32, #tpu.memory_space<vmem>>, vector<16x16x32xf32>
    %56 = vector.shape_cast %55 : vector<16x16x32xf32> to vector<256x32xf32>
    %57 = arith.truncf %56 : vector<256x32xf32> to vector<256x32xbf16>
    %c2_67 = arith.constant 2 : index
    %c1_68 = arith.constant 1 : index
    %c0_69 = arith.constant 0 : index
    %c0_70 = arith.constant 0 : index
    %58 = vector.load %arg2[%c2_67, %c1_68, %c0_69, %c0_70] : memref<3x3x32x32xbf16, #tpu.memory_space<vmem>>, vector<1x1x32x32xbf16>
    %59 = vector.shape_cast %58 : vector<1x1x32x32xbf16> to vector<32x32xbf16>
    %cst_71 = arith.constant dense<0.000000e+00> : vector<256x32xf32>
    %60 = tpu.matmul %57, %59, %cst_71 {dimension_numbers = #tpu.dot_dimension_numbers<[1], [0], [0], [1], [0, 0, 1, 1], [], []>} : vector<256x32xbf16>, vector<32x32xbf16>, vector<256x32xf32> -> vector<256x32xf32>
    %61 = arith.addf %54, %60 : vector<256x32xf32>
    %c2_72 = arith.constant 2 : index
    %c2_73 = arith.constant 2 : index
    %c0_74 = arith.constant 0 : index
    %62 = vector.load %arg6[%c2_72, %c2_73, %c0_74] : memref<18x18x32xf32, #tpu.memory_space<vmem>>, vector<16x16x32xf32>
    %63 = vector.shape_cast %62 : vector<16x16x32xf32> to vector<256x32xf32>
    %64 = arith.truncf %63 : vector<256x32xf32> to vector<256x32xbf16>
    %c2_75 = arith.constant 2 : index
    %c2_76 = arith.constant 2 : index
    %c0_77 = arith.constant 0 : index
    %c0_78 = arith.constant 0 : index
    %65 = vector.load %arg2[%c2_75, %c2_76, %c0_77, %c0_78] : memref<3x3x32x32xbf16, #tpu.memory_space<vmem>>, vector<1x1x32x32xbf16>
    %66 = vector.shape_cast %65 : vector<1x1x32x32xbf16> to vector<32x32xbf16>
    %cst_79 = arith.constant dense<0.000000e+00> : vector<256x32xf32>
    %67 = tpu.matmul %64, %66, %cst_79 {dimension_numbers = #tpu.dot_dimension_numbers<[1], [0], [0], [1], [0, 0, 1, 1], [], []>} : vector<256x32xbf16>, vector<32x32xbf16>, vector<256x32xf32> -> vector<256x32xf32>
    %68 = arith.addf %61, %67 : vector<256x32xf32>
    %69 = vector.shape_cast %68 : vector<256x32xf32> to vector<16x16x32xf32>
    %70 = arith.truncf %69 : vector<16x16x32xf32> to vector<16x16x32xbf16>
    %c0_80 = arith.constant 0 : index
    %c0_81 = arith.constant 0 : index
    %c0_82 = arith.constant 0 : index
    %c0_83 = arith.constant 0 : index
    %71 = vector.load %arg3[%c0_80, %c0_81, %c0_82, %c0_83] : memref<1x16x16x32xbf16, #tpu.memory_space<vmem>>, vector<1x16x16x32xbf16>
    %72 = vector.shape_cast %71 : vector<1x16x16x32xbf16> to vector<16x16x32xbf16>
    %73 = vector.shape_cast %70 : vector<16x16x32xbf16> to vector<1x16x16x32xbf16>
    tpu.vector_store %arg3[%c0_80, %c0_81, %c0_82, %c0_83], %73 {strides = array<i32>} : memref<1x16x16x32xbf16, #tpu.memory_space<vmem>>, vector<1x16x16x32xbf16>,
    %cst_84 = arith.constant dense<0.000000e+00> : vector<32xf32>
    %74 = vector.multi_reduction <add>, %68, %cst_84 [0] : vector<256x32xf32> to vector<32xf32>
    %75 = vector.shape_cast %74 : vector<32xf32> to vector<1x32xf32>
    %c0_85 = arith.constant 0 : index
    %c0_86 = arith.constant 0 : index
    %c0_87 = arith.constant 0 : index
    %76 = vector.load %arg4[%c0_85, %c0_86, %c0_87] : memref<1x1x32xf32, #tpu.memory_space<vmem>>, vector<1x1x32xf32>
    %77 = vector.shape_cast %76 : vector<1x1x32xf32> to vector<1x32xf32>
    %78 = vector.shape_cast %75 : vector<1x32xf32> to vector<1x1x32xf32>
    tpu.vector_store %arg4[%c0_85, %c0_86, %c0_87], %78 {strides = array<i32>} : memref<1x1x32xf32, #tpu.memory_space<vmem>>, vector<1x1x32xf32>,
    %79 = arith.mulf %68, %68 : vector<256x32xf32>
    %cst_88 = arith.constant dense<0.000000e+00> : vector<32xf32>
    %80 = vector.multi_reduction <add>, %79, %cst_88 [0] : vector<256x32xf32> to vector<32xf32>
    %81 = vector.shape_cast %80 : vector<32xf32> to vector<1x32xf32>
    %c0_89 = arith.constant 0 : index
    %c0_90 = arith.constant 0 : index
    %c0_91 = arith.constant 0 : index
    %82 = vector.load %arg5[%c0_89, %c0_90, %c0_91] : memref<1x1x32xf32, #tpu.memory_space<vmem>>, vector<1x1x32xf32>
    %83 = vector.shape_cast %82 : vector<1x1x32xf32> to vector<1x32xf32>
    %84 = vector.shape_cast %81 : vector<1x32xf32> to vector<1x1x32xf32>
    tpu.vector_store %arg5[%c0_89, %c0_90, %c0_91], %84 {strides = array<i32>} : memref<1x1x32xf32, #tpu.memory_space<vmem>>, vector<1x1x32xf32>,
    return
  }
  func.func @transform_0(%arg0: i32) -> (i32, i32, i32, i32) {
    %c0_i32 = arith.constant 0 : i32
    %c0_i32_0 = arith.constant 0 : i32
    %c0_i32_1 = arith.constant 0 : i32
    %c0_i32_2 = arith.constant 0 : i32
    return %arg0, %c0_i32, %c0_i32_0, %c0_i32_1 : i32, i32, i32, i32
  }
  func.func @transform_1(%arg0: i32) -> (i32, i32, i32, i32) {
    %c0_i32 = arith.constant 0 : i32
    %c0_i32_0 = arith.constant 0 : i32
    %c0_i32_1 = arith.constant 0 : i32
    %c0_i32_2 = arith.constant 0 : i32
    %c0_i32_3 = arith.constant 0 : i32
    return %c0_i32, %c0_i32_0, %c0_i32_1, %c0_i32_2 : i32, i32, i32, i32
  }
  func.func @transform_2(%arg0: i32) -> (i32, i32, i32, i32) {
    %c0_i32 = arith.constant 0 : i32
    %c0_i32_0 = arith.constant 0 : i32
    %c0_i32_1 = arith.constant 0 : i32
    %c0_i32_2 = arith.constant 0 : i32
    return %arg0, %c0_i32, %c0_i32_0, %c0_i32_1 : i32, i32, i32, i32
  }
  func.func @transform_3(%arg0: i32) -> (i32, i32, i32) {
    %c0_i32 = arith.constant 0 : i32
    %c0_i32_0 = arith.constant 0 : i32
    %c0_i32_1 = arith.constant 0 : i32
    return %arg0, %c0_i32, %c0_i32_0 : i32, i32, i32
  }
  func.func @transform_4(%arg0: i32) -> (i32, i32, i32) {
    %c0_i32 = arith.constant 0 : i32
    %c0_i32_0 = arith.constant 0 : i32
    %c0_i32_1 = arith.constant 0 : i32
    return %arg0, %c0_i32, %c0_i32_0 : i32, i32, i32
  }
}

module attributes {stable_mosaic.version = 11 : i64} {
  func.func @kernel(%arg0: i32, %arg1: memref<1x16x16x32xbf16, #tpu.memory_space<vmem>>, %arg2: memref<3x3x32x16xbf16, #tpu.memory_space<vmem>>, %arg3: memref<1x32xf32, #tpu.memory_space<vmem>>, %arg4: memref<1x32xf32, #tpu.memory_space<vmem>>, %arg5: memref<1x16x16x16xbf16, #tpu.memory_space<vmem>>, %arg6: memref<1x1x16xf32, #tpu.memory_space<vmem>>, %arg7: memref<1x1x16xf32, #tpu.memory_space<vmem>>, %arg8: memref<18x18x32xf32, #tpu.memory_space<vmem>>) attributes {dimension_semantics = [#tpu.dimension_semantics<parallel>], iteration_bounds = array<i64: 2>, scalar_prefetch = 0 : i64, scratch_operands = 1 : i64, tpu.core_type = #tpu.core_type<tc>, window_params = [{transform_indices = @transform_0, window_bounds = array<i64: 1, 16, 16, 32>}, {pipeline_mode = #tpu.pipeline_mode<synchronous>, transform_indices = @transform_1, window_bounds = array<i64: 3, 3, 32, 16>}, {pipeline_mode = #tpu.pipeline_mode<synchronous>, transform_indices = @transform_2, window_bounds = array<i64: 1, 32>}, {pipeline_mode = #tpu.pipeline_mode<synchronous>, transform_indices = @transform_3, window_bounds = array<i64: 1, 32>}, {transform_indices = @transform_4, window_bounds = array<i64: 1, 16, 16, 16>}, {transform_indices = @transform_5, window_bounds = array<i64: 1, 1, 16>}, {transform_indices = @transform_6, window_bounds = array<i64: 1, 1, 16>}]} {
    %c0 = arith.constant 0 : index
    %c0_0 = arith.constant 0 : index
    %c0_1 = arith.constant 0 : index
    %c0_2 = arith.constant 0 : index
    %0 = vector.load %arg1[%c0, %c0_0, %c0_1, %c0_2] : memref<1x16x16x32xbf16, #tpu.memory_space<vmem>>, vector<1x16x16x32xbf16>
    %1 = vector.shape_cast %0 : vector<1x16x16x32xbf16> to vector<16x16x32xbf16>
    %2 = arith.extf %1 : vector<16x16x32xbf16> to vector<16x16x32xf32>
    %c0_3 = arith.constant 0 : index
    %c0_4 = arith.constant 0 : index
    %3 = vector.load %arg3[%c0_3, %c0_4] : memref<1x32xf32, #tpu.memory_space<vmem>>, vector<1x32xf32>
    %4 = vector.shape_cast %3 : vector<1x32xf32> to vector<1x1x32xf32>
    %5 = vector.broadcast %4 : vector<1x1x32xf32> to vector<16x16x32xf32>
    %6 = arith.mulf %2, %5 : vector<16x16x32xf32>
    %c0_5 = arith.constant 0 : index
    %c0_6 = arith.constant 0 : index
    %7 = vector.load %arg4[%c0_5, %c0_6] : memref<1x32xf32, #tpu.memory_space<vmem>>, vector<1x32xf32>
    %8 = vector.shape_cast %7 : vector<1x32xf32> to vector<1x1x32xf32>
    %9 = vector.broadcast %8 : vector<1x1x32xf32> to vector<16x16x32xf32>
    %10 = arith.addf %6, %9 : vector<16x16x32xf32>
    %cst = arith.constant 0.000000e+00 : f32
    %11 = vector.broadcast %cst : f32 to vector<16x16x32xf32>
    %12 = arith.cmpf oge, %10, %11 : vector<16x16x32xf32>
    %cst_7 = arith.constant 0.00999999977 : f32
    %13 = vector.broadcast %cst_7 : f32 to vector<16x16x32xf32>
    %14 = arith.mulf %13, %10 : vector<16x16x32xf32>
    %15 = arith.select %12, %10, %14 : vector<16x16x32xi1>, vector<16x16x32xf32>
    %cst_8 = arith.constant 0.000000e+00 : f32
    %16 = vector.broadcast %cst_8 : f32 to vector<18x18x32xf32>
    %c0_9 = arith.constant 0 : index
    %c0_10 = arith.constant 0 : index
    %c0_11 = arith.constant 0 : index
    %17 = vector.load %arg8[%c0_9, %c0_10, %c0_11] : memref<18x18x32xf32, #tpu.memory_space<vmem>>, vector<18x18x32xf32>
    tpu.vector_store %arg8[%c0_9, %c0_10, %c0_11], %16 {strides = array<i32>} : memref<18x18x32xf32, #tpu.memory_space<vmem>>, vector<18x18x32xf32>,
    %c1 = arith.constant 1 : index
    %c1_12 = arith.constant 1 : index
    %c0_13 = arith.constant 0 : index
    %18 = vector.load %arg8[%c1, %c1_12, %c0_13] : memref<18x18x32xf32, #tpu.memory_space<vmem>>, vector<16x16x32xf32>
    tpu.vector_store %arg8[%c1, %c1_12, %c0_13], %15 {strides = array<i32>} : memref<18x18x32xf32, #tpu.memory_space<vmem>>, vector<16x16x32xf32>,
    %cst_14 = arith.constant 0.000000e+00 : f32
    %19 = vector.broadcast %cst_14 : f32 to vector<256x16xf32>
    %c0_15 = arith.constant 0 : index
    %c0_16 = arith.constant 0 : index
    %c0_17 = arith.constant 0 : index
    %20 = vector.load %arg8[%c0_15, %c0_16, %c0_17] : memref<18x18x32xf32, #tpu.memory_space<vmem>>, vector<16x16x32xf32>
    %21 = vector.shape_cast %20 : vector<16x16x32xf32> to vector<256x32xf32>
    %22 = arith.truncf %21 : vector<256x32xf32> to vector<256x32xbf16>
    %c0_18 = arith.constant 0 : index
    %c0_19 = arith.constant 0 : index
    %c0_20 = arith.constant 0 : index
    %c0_21 = arith.constant 0 : index
    %23 = vector.load %arg2[%c0_18, %c0_19, %c0_20, %c0_21] : memref<3x3x32x16xbf16, #tpu.memory_space<vmem>>, vector<1x1x32x16xbf16>
    %24 = vector.shape_cast %23 : vector<1x1x32x16xbf16> to vector<32x16xbf16>
    %cst_22 = arith.constant dense<0.000000e+00> : vector<256x16xf32>
    %25 = tpu.matmul %22, %24, %cst_22 {dimension_numbers = #tpu.dot_dimension_numbers<[1], [0], [0], [1], [0, 0, 1, 1], [], []>} : vector<256x32xbf16>, vector<32x16xbf16>, vector<256x16xf32> -> vector<256x16xf32>
    %26 = arith.addf %19, %25 : vector<256x16xf32>
    %c0_23 = arith.constant 0 : index
    %c1_24 = arith.constant 1 : index
    %c0_25 = arith.constant 0 : index
    %27 = vector.load %arg8[%c0_23, %c1_24, %c0_25] : memref<18x18x32xf32, #tpu.memory_space<vmem>>, vector<16x16x32xf32>
    %28 = vector.shape_cast %27 : vector<16x16x32xf32> to vector<256x32xf32>
    %29 = arith.truncf %28 : vector<256x32xf32> to vector<256x32xbf16>
    %c0_26 = arith.constant 0 : index
    %c1_27 = arith.constant 1 : index
    %c0_28 = arith.constant 0 : index
    %c0_29 = arith.constant 0 : index
    %30 = vector.load %arg2[%c0_26, %c1_27, %c0_28, %c0_29] : memref<3x3x32x16xbf16, #tpu.memory_space<vmem>>, vector<1x1x32x16xbf16>
    %31 = vector.shape_cast %30 : vector<1x1x32x16xbf16> to vector<32x16xbf16>
    %cst_30 = arith.constant dense<0.000000e+00> : vector<256x16xf32>
    %32 = tpu.matmul %29, %31, %cst_30 {dimension_numbers = #tpu.dot_dimension_numbers<[1], [0], [0], [1], [0, 0, 1, 1], [], []>} : vector<256x32xbf16>, vector<32x16xbf16>, vector<256x16xf32> -> vector<256x16xf32>
    %33 = arith.addf %26, %32 : vector<256x16xf32>
    %c0_31 = arith.constant 0 : index
    %c2 = arith.constant 2 : index
    %c0_32 = arith.constant 0 : index
    %34 = vector.load %arg8[%c0_31, %c2, %c0_32] : memref<18x18x32xf32, #tpu.memory_space<vmem>>, vector<16x16x32xf32>
    %35 = vector.shape_cast %34 : vector<16x16x32xf32> to vector<256x32xf32>
    %36 = arith.truncf %35 : vector<256x32xf32> to vector<256x32xbf16>
    %c0_33 = arith.constant 0 : index
    %c2_34 = arith.constant 2 : index
    %c0_35 = arith.constant 0 : index
    %c0_36 = arith.constant 0 : index
    %37 = vector.load %arg2[%c0_33, %c2_34, %c0_35, %c0_36] : memref<3x3x32x16xbf16, #tpu.memory_space<vmem>>, vector<1x1x32x16xbf16>
    %38 = vector.shape_cast %37 : vector<1x1x32x16xbf16> to vector<32x16xbf16>
    %cst_37 = arith.constant dense<0.000000e+00> : vector<256x16xf32>
    %39 = tpu.matmul %36, %38, %cst_37 {dimension_numbers = #tpu.dot_dimension_numbers<[1], [0], [0], [1], [0, 0, 1, 1], [], []>} : vector<256x32xbf16>, vector<32x16xbf16>, vector<256x16xf32> -> vector<256x16xf32>
    %40 = arith.addf %33, %39 : vector<256x16xf32>
    %c1_38 = arith.constant 1 : index
    %c0_39 = arith.constant 0 : index
    %c0_40 = arith.constant 0 : index
    %41 = vector.load %arg8[%c1_38, %c0_39, %c0_40] : memref<18x18x32xf32, #tpu.memory_space<vmem>>, vector<16x16x32xf32>
    %42 = vector.shape_cast %41 : vector<16x16x32xf32> to vector<256x32xf32>
    %43 = arith.truncf %42 : vector<256x32xf32> to vector<256x32xbf16>
    %c1_41 = arith.constant 1 : index
    %c0_42 = arith.constant 0 : index
    %c0_43 = arith.constant 0 : index
    %c0_44 = arith.constant 0 : index
    %44 = vector.load %arg2[%c1_41, %c0_42, %c0_43, %c0_44] : memref<3x3x32x16xbf16, #tpu.memory_space<vmem>>, vector<1x1x32x16xbf16>
    %45 = vector.shape_cast %44 : vector<1x1x32x16xbf16> to vector<32x16xbf16>
    %cst_45 = arith.constant dense<0.000000e+00> : vector<256x16xf32>
    %46 = tpu.matmul %43, %45, %cst_45 {dimension_numbers = #tpu.dot_dimension_numbers<[1], [0], [0], [1], [0, 0, 1, 1], [], []>} : vector<256x32xbf16>, vector<32x16xbf16>, vector<256x16xf32> -> vector<256x16xf32>
    %47 = arith.addf %40, %46 : vector<256x16xf32>
    %c1_46 = arith.constant 1 : index
    %c1_47 = arith.constant 1 : index
    %c0_48 = arith.constant 0 : index
    %48 = vector.load %arg8[%c1_46, %c1_47, %c0_48] : memref<18x18x32xf32, #tpu.memory_space<vmem>>, vector<16x16x32xf32>
    %49 = vector.shape_cast %48 : vector<16x16x32xf32> to vector<256x32xf32>
    %50 = arith.truncf %49 : vector<256x32xf32> to vector<256x32xbf16>
    %c1_49 = arith.constant 1 : index
    %c1_50 = arith.constant 1 : index
    %c0_51 = arith.constant 0 : index
    %c0_52 = arith.constant 0 : index
    %51 = vector.load %arg2[%c1_49, %c1_50, %c0_51, %c0_52] : memref<3x3x32x16xbf16, #tpu.memory_space<vmem>>, vector<1x1x32x16xbf16>
    %52 = vector.shape_cast %51 : vector<1x1x32x16xbf16> to vector<32x16xbf16>
    %cst_53 = arith.constant dense<0.000000e+00> : vector<256x16xf32>
    %53 = tpu.matmul %50, %52, %cst_53 {dimension_numbers = #tpu.dot_dimension_numbers<[1], [0], [0], [1], [0, 0, 1, 1], [], []>} : vector<256x32xbf16>, vector<32x16xbf16>, vector<256x16xf32> -> vector<256x16xf32>
    %54 = arith.addf %47, %53 : vector<256x16xf32>
    %c1_54 = arith.constant 1 : index
    %c2_55 = arith.constant 2 : index
    %c0_56 = arith.constant 0 : index
    %55 = vector.load %arg8[%c1_54, %c2_55, %c0_56] : memref<18x18x32xf32, #tpu.memory_space<vmem>>, vector<16x16x32xf32>
    %56 = vector.shape_cast %55 : vector<16x16x32xf32> to vector<256x32xf32>
    %57 = arith.truncf %56 : vector<256x32xf32> to vector<256x32xbf16>
    %c1_57 = arith.constant 1 : index
    %c2_58 = arith.constant 2 : index
    %c0_59 = arith.constant 0 : index
    %c0_60 = arith.constant 0 : index
    %58 = vector.load %arg2[%c1_57, %c2_58, %c0_59, %c0_60] : memref<3x3x32x16xbf16, #tpu.memory_space<vmem>>, vector<1x1x32x16xbf16>
    %59 = vector.shape_cast %58 : vector<1x1x32x16xbf16> to vector<32x16xbf16>
    %cst_61 = arith.constant dense<0.000000e+00> : vector<256x16xf32>
    %60 = tpu.matmul %57, %59, %cst_61 {dimension_numbers = #tpu.dot_dimension_numbers<[1], [0], [0], [1], [0, 0, 1, 1], [], []>} : vector<256x32xbf16>, vector<32x16xbf16>, vector<256x16xf32> -> vector<256x16xf32>
    %61 = arith.addf %54, %60 : vector<256x16xf32>
    %c2_62 = arith.constant 2 : index
    %c0_63 = arith.constant 0 : index
    %c0_64 = arith.constant 0 : index
    %62 = vector.load %arg8[%c2_62, %c0_63, %c0_64] : memref<18x18x32xf32, #tpu.memory_space<vmem>>, vector<16x16x32xf32>
    %63 = vector.shape_cast %62 : vector<16x16x32xf32> to vector<256x32xf32>
    %64 = arith.truncf %63 : vector<256x32xf32> to vector<256x32xbf16>
    %c2_65 = arith.constant 2 : index
    %c0_66 = arith.constant 0 : index
    %c0_67 = arith.constant 0 : index
    %c0_68 = arith.constant 0 : index
    %65 = vector.load %arg2[%c2_65, %c0_66, %c0_67, %c0_68] : memref<3x3x32x16xbf16, #tpu.memory_space<vmem>>, vector<1x1x32x16xbf16>
    %66 = vector.shape_cast %65 : vector<1x1x32x16xbf16> to vector<32x16xbf16>
    %cst_69 = arith.constant dense<0.000000e+00> : vector<256x16xf32>
    %67 = tpu.matmul %64, %66, %cst_69 {dimension_numbers = #tpu.dot_dimension_numbers<[1], [0], [0], [1], [0, 0, 1, 1], [], []>} : vector<256x32xbf16>, vector<32x16xbf16>, vector<256x16xf32> -> vector<256x16xf32>
    %68 = arith.addf %61, %67 : vector<256x16xf32>
    %c2_70 = arith.constant 2 : index
    %c1_71 = arith.constant 1 : index
    %c0_72 = arith.constant 0 : index
    %69 = vector.load %arg8[%c2_70, %c1_71, %c0_72] : memref<18x18x32xf32, #tpu.memory_space<vmem>>, vector<16x16x32xf32>
    %70 = vector.shape_cast %69 : vector<16x16x32xf32> to vector<256x32xf32>
    %71 = arith.truncf %70 : vector<256x32xf32> to vector<256x32xbf16>
    %c2_73 = arith.constant 2 : index
    %c1_74 = arith.constant 1 : index
    %c0_75 = arith.constant 0 : index
    %c0_76 = arith.constant 0 : index
    %72 = vector.load %arg2[%c2_73, %c1_74, %c0_75, %c0_76] : memref<3x3x32x16xbf16, #tpu.memory_space<vmem>>, vector<1x1x32x16xbf16>
    %73 = vector.shape_cast %72 : vector<1x1x32x16xbf16> to vector<32x16xbf16>
    %cst_77 = arith.constant dense<0.000000e+00> : vector<256x16xf32>
    %74 = tpu.matmul %71, %73, %cst_77 {dimension_numbers = #tpu.dot_dimension_numbers<[1], [0], [0], [1], [0, 0, 1, 1], [], []>} : vector<256x32xbf16>, vector<32x16xbf16>, vector<256x16xf32> -> vector<256x16xf32>
    %75 = arith.addf %68, %74 : vector<256x16xf32>
    %c2_78 = arith.constant 2 : index
    %c2_79 = arith.constant 2 : index
    %c0_80 = arith.constant 0 : index
    %76 = vector.load %arg8[%c2_78, %c2_79, %c0_80] : memref<18x18x32xf32, #tpu.memory_space<vmem>>, vector<16x16x32xf32>
    %77 = vector.shape_cast %76 : vector<16x16x32xf32> to vector<256x32xf32>
    %78 = arith.truncf %77 : vector<256x32xf32> to vector<256x32xbf16>
    %c2_81 = arith.constant 2 : index
    %c2_82 = arith.constant 2 : index
    %c0_83 = arith.constant 0 : index
    %c0_84 = arith.constant 0 : index
    %79 = vector.load %arg2[%c2_81, %c2_82, %c0_83, %c0_84] : memref<3x3x32x16xbf16, #tpu.memory_space<vmem>>, vector<1x1x32x16xbf16>
    %80 = vector.shape_cast %79 : vector<1x1x32x16xbf16> to vector<32x16xbf16>
    %cst_85 = arith.constant dense<0.000000e+00> : vector<256x16xf32>
    %81 = tpu.matmul %78, %80, %cst_85 {dimension_numbers = #tpu.dot_dimension_numbers<[1], [0], [0], [1], [0, 0, 1, 1], [], []>} : vector<256x32xbf16>, vector<32x16xbf16>, vector<256x16xf32> -> vector<256x16xf32>
    %82 = arith.addf %75, %81 : vector<256x16xf32>
    %83 = vector.shape_cast %82 : vector<256x16xf32> to vector<16x16x16xf32>
    %84 = arith.truncf %83 : vector<16x16x16xf32> to vector<16x16x16xbf16>
    %c0_86 = arith.constant 0 : index
    %c0_87 = arith.constant 0 : index
    %c0_88 = arith.constant 0 : index
    %c0_89 = arith.constant 0 : index
    %85 = vector.load %arg5[%c0_86, %c0_87, %c0_88, %c0_89] : memref<1x16x16x16xbf16, #tpu.memory_space<vmem>>, vector<1x16x16x16xbf16>
    %86 = vector.shape_cast %85 : vector<1x16x16x16xbf16> to vector<16x16x16xbf16>
    %87 = vector.shape_cast %84 : vector<16x16x16xbf16> to vector<1x16x16x16xbf16>
    tpu.vector_store %arg5[%c0_86, %c0_87, %c0_88, %c0_89], %87 {strides = array<i32>} : memref<1x16x16x16xbf16, #tpu.memory_space<vmem>>, vector<1x16x16x16xbf16>,
    %cst_90 = arith.constant dense<0.000000e+00> : vector<16xf32>
    %88 = vector.multi_reduction <add>, %82, %cst_90 [0] : vector<256x16xf32> to vector<16xf32>
    %89 = vector.shape_cast %88 : vector<16xf32> to vector<1x16xf32>
    %c0_91 = arith.constant 0 : index
    %c0_92 = arith.constant 0 : index
    %c0_93 = arith.constant 0 : index
    %90 = vector.load %arg6[%c0_91, %c0_92, %c0_93] : memref<1x1x16xf32, #tpu.memory_space<vmem>>, vector<1x1x16xf32>
    %91 = vector.shape_cast %90 : vector<1x1x16xf32> to vector<1x16xf32>
    %92 = vector.shape_cast %89 : vector<1x16xf32> to vector<1x1x16xf32>
    tpu.vector_store %arg6[%c0_91, %c0_92, %c0_93], %92 {strides = array<i32>} : memref<1x1x16xf32, #tpu.memory_space<vmem>>, vector<1x1x16xf32>,
    %93 = arith.mulf %82, %82 : vector<256x16xf32>
    %cst_94 = arith.constant dense<0.000000e+00> : vector<16xf32>
    %94 = vector.multi_reduction <add>, %93, %cst_94 [0] : vector<256x16xf32> to vector<16xf32>
    %95 = vector.shape_cast %94 : vector<16xf32> to vector<1x16xf32>
    %c0_95 = arith.constant 0 : index
    %c0_96 = arith.constant 0 : index
    %c0_97 = arith.constant 0 : index
    %96 = vector.load %arg7[%c0_95, %c0_96, %c0_97] : memref<1x1x16xf32, #tpu.memory_space<vmem>>, vector<1x1x16xf32>
    %97 = vector.shape_cast %96 : vector<1x1x16xf32> to vector<1x16xf32>
    %98 = vector.shape_cast %95 : vector<1x16xf32> to vector<1x1x16xf32>
    tpu.vector_store %arg7[%c0_95, %c0_96, %c0_97], %98 {strides = array<i32>} : memref<1x1x16xf32, #tpu.memory_space<vmem>>, vector<1x1x16xf32>,
    return
  }
  func.func @transform_0(%arg0: i32) -> (i32, i32, i32, i32) {
    %c0_i32 = arith.constant 0 : i32
    %c0_i32_0 = arith.constant 0 : i32
    %c0_i32_1 = arith.constant 0 : i32
    %c0_i32_2 = arith.constant 0 : i32
    return %arg0, %c0_i32, %c0_i32_0, %c0_i32_1 : i32, i32, i32, i32
  }
  func.func @transform_1(%arg0: i32) -> (i32, i32, i32, i32) {
    %c0_i32 = arith.constant 0 : i32
    %c0_i32_0 = arith.constant 0 : i32
    %c0_i32_1 = arith.constant 0 : i32
    %c0_i32_2 = arith.constant 0 : i32
    %c0_i32_3 = arith.constant 0 : i32
    return %c0_i32, %c0_i32_0, %c0_i32_1, %c0_i32_2 : i32, i32, i32, i32
  }
  func.func @transform_2(%arg0: i32) -> (i32, i32) {
    %c0_i32 = arith.constant 0 : i32
    %c0_i32_0 = arith.constant 0 : i32
    %c0_i32_1 = arith.constant 0 : i32
    return %c0_i32, %c0_i32_0 : i32, i32
  }
  func.func @transform_3(%arg0: i32) -> (i32, i32) {
    %c0_i32 = arith.constant 0 : i32
    %c0_i32_0 = arith.constant 0 : i32
    %c0_i32_1 = arith.constant 0 : i32
    return %c0_i32, %c0_i32_0 : i32, i32
  }
  func.func @transform_4(%arg0: i32) -> (i32, i32, i32, i32) {
    %c0_i32 = arith.constant 0 : i32
    %c0_i32_0 = arith.constant 0 : i32
    %c0_i32_1 = arith.constant 0 : i32
    %c0_i32_2 = arith.constant 0 : i32
    return %arg0, %c0_i32, %c0_i32_0, %c0_i32_1 : i32, i32, i32, i32
  }
  func.func @transform_5(%arg0: i32) -> (i32, i32, i32) {
    %c0_i32 = arith.constant 0 : i32
    %c0_i32_0 = arith.constant 0 : i32
    %c0_i32_1 = arith.constant 0 : i32
    return %arg0, %c0_i32, %c0_i32_0 : i32, i32, i32
  }
  func.func @transform_6(%arg0: i32) -> (i32, i32, i32) {
    %c0_i32 = arith.constant 0 : i32
    %c0_i32_0 = arith.constant 0 : i32
    %c0_i32_1 = arith.constant 0 : i32
    return %arg0, %c0_i32, %c0_i32_0 : i32, i32, i32
  }
}

module attributes {stable_mosaic.version = 11 : i64} {
  func.func @_bilinear_conv_kernel(%arg0: i32, %arg1: memref<1x16x256xbf16, #tpu.memory_space<vmem>>, %arg2: memref<256x256xf32, #tpu.memory_space<vmem>>, %arg3: memref<32x16xf32, #tpu.memory_space<vmem>>, %arg4: memref<1x256xf32, #tpu.memory_space<vmem>>, %arg5: memref<1x32x256xf32, #tpu.memory_space<vmem>>) attributes {dimension_semantics = [#tpu.dimension_semantics<parallel>], iteration_bounds = array<i64: 2>, scalar_prefetch = 0 : i64, scratch_operands = 0 : i64, tpu.core_type = #tpu.core_type<tc>, window_params = [{transform_indices = @transform_0, window_bounds = array<i64: 1, 16, 256>}, {pipeline_mode = #tpu.pipeline_mode<synchronous>, transform_indices = @transform_1, window_bounds = array<i64: 256, 256>}, {pipeline_mode = #tpu.pipeline_mode<synchronous>, transform_indices = @transform_2, window_bounds = array<i64: 32, 16>}, {pipeline_mode = #tpu.pipeline_mode<synchronous>, transform_indices = @transform_3, window_bounds = array<i64: 1, 256>}, {transform_indices = @transform_4, window_bounds = array<i64: 1, 32, 256>}]} {
    %c0 = arith.constant 0 : index
    %c0_0 = arith.constant 0 : index
    %c0_1 = arith.constant 0 : index
    %0 = vector.load %arg1[%c0, %c0_0, %c0_1] : memref<1x16x256xbf16, #tpu.memory_space<vmem>>, vector<1x16x256xbf16>
    %1 = vector.shape_cast %0 : vector<1x16x256xbf16> to vector<16x256xbf16>
    %2 = arith.extf %1 : vector<16x256xbf16> to vector<16x256xf32>
    %c0_2 = arith.constant 0 : index
    %c0_3 = arith.constant 0 : index
    %3 = vector.load %arg2[%c0_2, %c0_3] : memref<256x256xf32, #tpu.memory_space<vmem>>, vector<256x256xf32>
    %cst = arith.constant dense<0.000000e+00> : vector<16x256xf32>
    %4 = tpu.matmul %2, %3, %cst {dimension_numbers = #tpu.dot_dimension_numbers<[1], [0], [0], [1], [0, 0, 1, 1], [], []>} : vector<16x256xf32>, vector<256x256xf32>, vector<16x256xf32> -> vector<16x256xf32>
    %c0_4 = arith.constant 0 : index
    %c0_5 = arith.constant 0 : index
    %5 = vector.load %arg3[%c0_4, %c0_5] : memref<32x16xf32, #tpu.memory_space<vmem>>, vector<32x16xf32>
    %cst_6 = arith.constant dense<0.000000e+00> : vector<32x256xf32>
    %6 = tpu.matmul %5, %4, %cst_6 {dimension_numbers = #tpu.dot_dimension_numbers<[1], [0], [0], [1], [0, 0, 1, 1], [], []>} : vector<32x16xf32>, vector<16x256xf32>, vector<32x256xf32> -> vector<32x256xf32>
    %c0_7 = arith.constant 0 : index
    %c0_8 = arith.constant 0 : index
    %7 = vector.load %arg4[%c0_7, %c0_8] : memref<1x256xf32, #tpu.memory_space<vmem>>, vector<1x256xf32>
    %8 = vector.broadcast %7 : vector<1x256xf32> to vector<32x256xf32>
    %9 = arith.addf %6, %8 : vector<32x256xf32>
    %c0_9 = arith.constant 0 : index
    %c0_10 = arith.constant 0 : index
    %c0_11 = arith.constant 0 : index
    %10 = vector.load %arg5[%c0_9, %c0_10, %c0_11] : memref<1x32x256xf32, #tpu.memory_space<vmem>>, vector<1x32x256xf32>
    %11 = vector.shape_cast %10 : vector<1x32x256xf32> to vector<32x256xf32>
    %12 = vector.shape_cast %9 : vector<32x256xf32> to vector<1x32x256xf32>
    tpu.vector_store %arg5[%c0_9, %c0_10, %c0_11], %12 {strides = array<i32>} : memref<1x32x256xf32, #tpu.memory_space<vmem>>, vector<1x32x256xf32>,
    return
  }
  func.func @transform_0(%arg0: i32) -> (i32, i32, i32) {
    %c0_i32 = arith.constant 0 : i32
    %c0_i32_0 = arith.constant 0 : i32
    %c0_i32_1 = arith.constant 0 : i32
    return %arg0, %c0_i32, %c0_i32_0 : i32, i32, i32
  }
  func.func @transform_1(%arg0: i32) -> (i32, i32) {
    %c0_i32 = arith.constant 0 : i32
    %c0_i32_0 = arith.constant 0 : i32
    %c0_i32_1 = arith.constant 0 : i32
    return %c0_i32, %c0_i32_0 : i32, i32
  }
  func.func @transform_2(%arg0: i32) -> (i32, i32) {
    %c0_i32 = arith.constant 0 : i32
    %c0_i32_0 = arith.constant 0 : i32
    %c0_i32_1 = arith.constant 0 : i32
    return %c0_i32, %c0_i32_0 : i32, i32
  }
  func.func @transform_3(%arg0: i32) -> (i32, i32) {
    %c0_i32 = arith.constant 0 : i32
    %c0_i32_0 = arith.constant 0 : i32
    %c0_i32_1 = arith.constant 0 : i32
    return %c0_i32, %c0_i32_0 : i32, i32
  }
  func.func @transform_4(%arg0: i32) -> (i32, i32, i32) {
    %c0_i32 = arith.constant 0 : i32
    %c0_i32_0 = arith.constant 0 : i32
    %c0_i32_1 = arith.constant 0 : i32
    return %arg0, %c0_i32, %c0_i32_0 : i32, i32, i32
  }
}

</mosaic_0001>

<llo_original>
// kernel: upsample_forward.3
$region0: #{upsample_forward.3}
  #allocation0 [shape = 'u32[]', space=smem, size = 0x4, offset = 0x4, fixed_abs, tag = 'smem constant byte address 0x4 - core index']
  #allocation1 [shape = 'u32[144,128]{1,0:T(1,128)}', space=vmem, size = 0x12000, scoped, tag = 'internal scratch']
  #allocation2 [shape = 'f32[18,18,32]{2,1,0:T(8,128)}', space=vmem, size = 0x36000, scoped, tag = 'scratch operand']
  %s0 = inlined_call_operand.hbm [shape: f32[2,16,16,32], index: 0, kind: input, shape index: {}]
  %s1 = inlined_call_operand.hbm [shape: bf16[3,3,32,32], index: 1, kind: input, shape index: {}]
  %s2 = inlined_call_operand.vmem [shape: bf16[2,16,16,32], index: 2, kind: output, shape index: {0}]
  %s3 = inlined_call_operand.vmem [shape: f32[2,1,32], index: 3, kind: output, shape index: {1}]
  %s4 = inlined_call_operand.vmem [shape: f32[2,1,32], index: 4, kind: output, shape index: {2}]
  %5 = xla_tuple %s2, %s3, %s4
  %s6 = sld [smem:[#allocation0]]
  $region65: #{upsample_forward.3} parent=0
    _
  %s8 = ssub.s32 1, %s6
  %s9 = scalar_select 0, %s8, %s6
  $region1: #{upsample_forward.3} parent=0
    #allocation3 [shape = 'u8[262144]{0}', space=vmem, size = 0x40000, scoped, tag = 'input window, operand 0']
    #allocation4 [shape = 's32[2]{0}', space=sflag, size = 0x8, scoped, tag = 'scoped memory for upsample_forward.3']
    #allocation5 [shape = 'u8[73728]{0}', space=vmem, size = 0x12000, scoped, tag = 'input window, operand 1, single buffered']
    #allocation6 [shape = 's32[1]{0}', space=sflag, size = 0x4, scoped, tag = 'scoped memory for upsample_forward.3']
    %10 = vsyncpa [#allocation4], 0
    %s11 = scalar_lea.sflag [#allocation4], 1
    %12 = vsyncpa %s11, 0
    %13 = vsyncpa [#allocation6], 0
    loop: start=0, step=1, limit=4
    $region2: #{upsample_forward.3} parent=1 // loop_pre_header
      _
    $region3: #{upsample_forward.3} parent=1 // loop_header
      %s15 = sphi 0, %s19
      %p16 = scmp.ge.s32.totalorder %s15, 4
      %s25 = sphi 0, %s27
      %s28 = sphi 0, %s25
      %s29 = sphi 0, %s28
      %s45 = sphi 0, %s29
      %s49 = sphi 0, %s49
      %s51 = sphi 0, %s49
      %s52 = sphi 0, %s51
      %s66 = sphi 0, %s52
      %s72 = sphi 0, %s74
      %s75 = sphi 0, %s72
      %s76 = sphi 0, %s75
      %s92 = sphi 0, %s76
      %s98 = sphi 0, %s100
      %s101 = sphi 0, %s98
      %s102 = sphi 0, %s101
      %s118 = sphi 0, %s102
      %s124 = sphi 0, %s126
      %s127 = sphi 0, %s124
      %s128 = sphi 0, %s127
      %s144 = sphi 0, %s128
    $region4: #{upsample_forward.3} parent=1 // loop_header_branch
      %18 = sbr.rel (%p16) target = $region8
    $region5: #{upsample_forward.3} parent=1 // loop_body
      %s20 = ssub.s32 %s15, 1
      %s21 = ssub.s32 %s15, 2
      %s22 = sadd.s32 %s15, 1
      %s23 = ssub.s32 %s15, %s22
      %p24 = scmp.eq.s32.totalorder %s23, 0
      %s26 = sadd.s32 %s25, 1
      %s27 = scalar_select %p24, %s25, %s26
      %p30 = pneg %p24
      %p31 = scmp.eq.s32.totalorder %s15, 1
      %p32 = por %p30, %p31
      %p33 = scmp.ne.s32.totalorder %s25, %s28
      %p34 = scmp.eq.s32.totalorder %s15, 0
      %p35 = por %p33, %p34
      %p36 = scmp.ne.s32.totalorder %s25, %s28
      %p37 = scmp.eq.s32.totalorder %s20, 1
      %p38 = por %p36, %p37
      %p39 = scmp.ne.s32.totalorder %s28, %s29
      %p40 = scmp.eq.s32.totalorder %s20, 0
      %p41 = por %p39, %p40
      %p42 = scmp.ne.s32.totalorder %s28, %s29
      %p43 = scmp.eq.s32.totalorder %s21, 1
      %p44 = por %p42, %p43
      %p46 = scmp.ne.s32.totalorder %s29, %s45
      %p47 = scmp.eq.s32.totalorder %s21, 0
      %p48 = por %p46, %p47
      %s50 = sadd.s32 %s49, 1
      %p53 = scmp.eq.s32.totalorder %s15, 1
      %p54 = scmp.ne.s32.totalorder %s49, %s51
      %p55 = scmp.eq.s32.totalorder %s15, 0
      %p56 = por %p54, %p55
      %p57 = scmp.ne.s32.totalorder %s49, %s51
      %p58 = scmp.eq.s32.totalorder %s20, 1
      %p59 = por %p57, %p58
      %p60 = scmp.ne.s32.totalorder %s51, %s52
      %p61 = scmp.eq.s32.totalorder %s20, 0
      %p62 = por %p60, %p61
      %p63 = scmp.ne.s32.totalorder %s51, %s52
      %p64 = scmp.eq.s32.totalorder %s21, 1
      %p65 = por %p63, %p64
      %p67 = scmp.ne.s32.totalorder %s52, %s66
      %p68 = scmp.eq.s32.totalorder %s21, 0
      %p69 = por %p67, %p68
      %s70 = ssub.s32 %s15, %s22
      %p71 = scmp.eq.s32.totalorder %s70, 0
      %s73 = sadd.s32 %s72, 1
      %s74 = scalar_select %p71, %s72, %s73
      %p77 = pneg %p71
      %p78 = scmp.eq.s32.totalorder %s15, 1
      %p79 = por %p77, %p78
      %p80 = scmp.ne.s32.totalorder %s72, %s75
      %p81 = scmp.eq.s32.totalorder %s15, 0
      %p82 = por %p80, %p81
      %p83 = scmp.ne.s32.totalorder %s72, %s75
      %p84 = scmp.eq.s32.totalorder %s20, 1
      %p85 = por %p83, %p84
      %p86 = scmp.ne.s32.totalorder %s75, %s76
      %p87 = scmp.eq.s32.totalorder %s20, 0
      %p88 = por %p86, %p87
      %p89 = scmp.ne.s32.totalorder %s75, %s76
      %p90 = scmp.eq.s32.totalorder %s21, 1
      %p91 = por %p89, %p90
      %p93 = scmp.ne.s32.totalorder %s76, %s92
      %p94 = scmp.eq.s32.totalorder %s21, 0
      %p95 = por %p93, %p94
      %s96 = ssub.s32 %s15, %s22
      %p97 = scmp.eq.s32.totalorder %s96, 0
      %s99 = sadd.s32 %s98, 1
      %s100 = scalar_select %p97, %s98, %s99
      %p103 = pneg %p97
      %p104 = scmp.eq.s32.totalorder %s15, 1
      %p105 = por %p103, %p104
      %p106 = scmp.ne.s32.totalorder %s98, %s101
      %p107 = scmp.eq.s32.totalorder %s15, 0
      %p108 = por %p106, %p107
      %p109 = scmp.ne.s32.totalorder %s98, %s101
      %p110 = scmp.eq.s32.totalorder %s20, 1
      %p111 = por %p109, %p110
      %p112 = scmp.ne.s32.totalorder %s101, %s102
      %p113 = scmp.eq.s32.totalorder %s20, 0
      %p114 = por %p112, %p113
      %p115 = scmp.ne.s32.totalorder %s101, %s102
      %p116 = scmp.eq.s32.totalorder %s21, 1
      %p117 = por %p115, %p116
      %p119 = scmp.ne.s32.totalorder %s102, %s118
      %p120 = scmp.eq.s32.totalorder %s21, 0
      %p121 = por %p119, %p120
      %s122 = ssub.s32 %s15, %s22
      %p123 = scmp.eq.s32.totalorder %s122, 0
      %s125 = sadd.s32 %s124, 1
      %s126 = scalar_select %p123, %s124, %s125
      %p129 = pneg %p123
      %p130 = scmp.eq.s32.totalorder %s15, 1
      %p131 = por %p129, %p130
      %p132 = scmp.ne.s32.totalorder %s124, %s127
      %p133 = scmp.eq.s32.totalorder %s15, 0
      %p134 = por %p132, %p133
      %p135 = scmp.ne.s32.totalorder %s124, %s127
      %p136 = scmp.eq.s32.totalorder %s20, 1
      %p137 = por %p135, %p136
      %p138 = scmp.ne.s32.totalorder %s127, %s128
      %p139 = scmp.eq.s32.totalorder %s20, 0
      %p140 = por %p138, %p139
      %p141 = scmp.ne.s32.totalorder %s127, %s128
      %p142 = scmp.eq.s32.totalorder %s21, 1
      %p143 = por %p141, %p142
      %p145 = scmp.ne.s32.totalorder %s128, %s144
      %p146 = scmp.eq.s32.totalorder %s21, 0
      %p147 = por %p145, %p146
      %p148 = scmp.le.s32.totalorder 1, %s15
      %p149 = scmp.lt.s32.totalorder %s15, 3
      %p150 = pnand %p148, %p149
      %p151 = pneg %p150
      // Predicated region
      $region9: #{upsample_forward.3} parent=5 // pred_check
        _
      $region10: #{upsample_forward.3} parent=5 // pred_check_branch
        %153 = sbr.rel (%p150) target = $region12
      $region11: #{upsample_forward.3} parent=5 // pred_region
        %s154 = ssub.s32 %s15, 1
        // Predicated region
        $region13: #{upsample_forward.3} parent=11 // pred_check
          %p155 = pneg %p62
        $region14: #{upsample_forward.3} parent=11 // pred_check_branch
          %157 = sbr.rel (%p155) target = $region16
        $region15: #{upsample_forward.3} parent=11 // pred_region
          %s159 = ssub.s32 2304, 2304
          %160 = vsyncadd [#allocation6], %s159
          %s161 = sshll.u32 [#allocation5], 4
          %s162 = int_to_ptr.vmem [resolvable:$true] %s161
          %167 = dma.hbm_to_vmem [thread:$0]  %s1, 2304, %s162, [#allocation6], 64, 64, 4
        $region16: #{upsample_forward.3} parent=11 // pred_fallthru
          _
      $region12: #{upsample_forward.3} parent=5 // pred_fallthru
        _
      %p168 = scmp.lt.s32.totalorder %s15, 2
      // Predicated region
      $region17: #{upsample_forward.3} parent=5 // pred_check
        %p169 = pneg %p168
      $region18: #{upsample_forward.3} parent=5 // pred_check_branch
        %171 = sbr.rel (%p169) target = $region20
      $region19: #{upsample_forward.3} parent=5 // pred_region
        // Predicated region
        $region21: #{upsample_forward.3} parent=19 // pred_check
          %p172 = pneg %p35
        $region22: #{upsample_forward.3} parent=19 // pred_check_branch
          %174 = sbr.rel (%p172) target = $region24
        $region23: #{upsample_forward.3} parent=19 // pred_region
          %s175 = sand.u32 %s25, 1
          %s176 = scalar_lea.sflag [#allocation4], %s175
          %s177 = sand.u32 %s25, 1
          %s178 = smul.addr %s177, 256
          %s179 = scalar_lea.vmem [#allocation3], %s178
          %s181 = ssub.s32 4096, 4096
          %182 = vsyncadd %s176, %s181
          %s183 = smul.addr %s15, 32
          %s184 = smul.addr %s183, 128
          %s185 = scalar_lea.hbm %s0, %s184
          %s186 = sshll.u32 %s179, 4
          %s187 = int_to_ptr.vmem [resolvable:$true] %s186
          %192 = dma.hbm_to_vmem [thread:$0]  %s185, 4096, %s187, %s176, 128, 128, 8
        $region24: #{upsample_forward.3} parent=19 // pred_fallthru
          _
      $region20: #{upsample_forward.3} parent=5 // pred_fallthru
        _
      %p193 = scmp.le.s32.totalorder 1, %s15
      %p194 = scmp.lt.s32.totalorder %s15, 3
      %p195 = pnand %p193, %p194
      %p196 = pneg %p195
      // Predicated region
      $region25: #{upsample_forward.3} parent=5 // pred_check
        _
      $region26: #{upsample_forward.3} parent=5 // pred_check_branch
        %198 = sbr.rel (%p195) target = $region28
      $region27: #{upsample_forward.3} parent=5 // pred_region
        %s199 = ssub.s32 %s15, 1
        %s200 = sand.u32 %s28, 1
        %s201 = scalar_lea.sflag [#allocation4], %s200
        %s202 = sand.u32 %s28, 1
        %s203 = smul.addr %s202, 256
        %s204 = scalar_lea.vmem [#allocation3], %s203
        // Predicated region
        $region29: #{upsample_forward.3} parent=27 // pred_check
          %p205 = pneg %p41
        $region30: #{upsample_forward.3} parent=27 // pred_check_branch
          %207 = sbr.rel (%p205) target = $region32
        $region31: #{upsample_forward.3} parent=27 // pred_region
          %208 = dma.done %s201, 4096
        $region32: #{upsample_forward.3} parent=27 // pred_fallthru
          _
        // Predicated region
        $region33: #{upsample_forward.3} parent=27 // pred_check
          %p209 = pneg %p62
        $region34: #{upsample_forward.3} parent=27 // pred_check_branch
          %211 = sbr.rel (%p209) target = $region36
        $region35: #{upsample_forward.3} parent=27 // pred_region
          %212 = dma.done [#allocation6], 2304
        $region36: #{upsample_forward.3} parent=27 // pred_fallthru
          _
        %s213 = sand.u32 %s28, 1
        %s214 = scalar_lea.sflag [#allocation4], %s213
        %s215 = sand.u32 %s28, 1
        %s216 = smul.addr %s215, 256
        %s217 = scalar_lea.vmem [#allocation3], %s216
        %p218 = pneg %p41
        %p219 = pneg %p38
        %p220 = pneg %p62
        %p221 = pneg %p59
        %p222 = pneg %p88
        %p223 = pneg %p85
        %p224 = scmp.lt.s32.totalorder %s20, 1
        %s225 = scalar_select %p224, %s20, 1
        %s226 = smul.addr %s225, 32
        %s227 = smul.addr %s226, 4
        %s228 = scalar_lea.vmem %s2, %s227
        %p229 = pneg %p114
        %p230 = pneg %p111
        %p231 = scmp.lt.s32.totalorder %s20, 1
        %s232 = scalar_select %p231, %s20, 1
        %s233 = scalar_lea.vmem %s3, %s232
        %p234 = pneg %p140
        %p235 = pneg %p137
        %p236 = scmp.lt.s32.totalorder %s20, 1
        %s237 = scalar_select %p236, %s20, 1
        %s238 = scalar_lea.vmem %s4, %s237
        %p239 = scmp.lt.s32.totalorder %s20, 1
        %s240 = scalar_select %p239, %s20, 1
        %s241 = smul.addr %s240, 32
        %s242 = smul.addr %s241, 4
        %s243 = scalar_lea.vmem %s2, %s242
        %p244 = scmp.lt.s32.totalorder %s20, 1
        %s245 = scalar_select %p244, %s20, 1
        %s246 = scalar_lea.vmem %s3, %s245
        %p247 = scmp.lt.s32.totalorder %s20, 1
        %s248 = scalar_select %p247, %s20, 1
        %s249 = scalar_lea.vmem %s4, %s248
        %v251 = vld [vmem:[%s204] sm:$0xff]
        %v252 = vld [vmem:[%s204 + $0x8] sm:$0xff]
        %v253 = vld [vmem:[%s204 + $0x10] sm:$0xff]
        %v254 = vld [vmem:[%s204 + $0x18] sm:$0xff]
        %v255 = vld [vmem:[%s204 + $0x20] sm:$0xff]
        %v256 = vld [vmem:[%s204 + $0x28] sm:$0xff]
        %v257 = vld [vmem:[%s204 + $0x30] sm:$0xff]
        %v258 = vld [vmem:[%s204 + $0x38] sm:$0xff]
        %v259 = vld [vmem:[%s204 + $0x40] sm:$0xff]
        %v260 = vld [vmem:[%s204 + $0x48] sm:$0xff]
        %v261 = vld [vmem:[%s204 + $0x50] sm:$0xff]
        %v262 = vld [vmem:[%s204 + $0x58] sm:$0xff]
        %v263 = vld [vmem:[%s204 + $0x60] sm:$0xff]
        %v264 = vld [vmem:[%s204 + $0x68] sm:$0xff]
        %v265 = vld [vmem:[%s204 + $0x70] sm:$0xff]
        %v266 = vld [vmem:[%s204 + $0x78] sm:$0xff]
        %v267 = vld [vmem:[%s204 + $0x80] sm:$0xff]
        %v268 = vld [vmem:[%s204 + $0x88] sm:$0xff]
        %v269 = vld [vmem:[%s204 + $0x90] sm:$0xff]
        %v270 = vld [vmem:[%s204 + $0x98] sm:$0xff]
        %v271 = vld [vmem:[%s204 + $0xa0] sm:$0xff]
        %v272 = vld [vmem:[%s204 + $0xa8] sm:$0xff]
        %v273 = vld [vmem:[%s204 + $0xb0] sm:$0xff]
        %v274 = vld [vmem:[%s204 + $0xb8] sm:$0xff]
        %v275 = vld [vmem:[%s204 + $0xc0] sm:$0xff]
        %v276 = vld [vmem:[%s204 + $0xc8] sm:$0xff]
        %v277 = vld [vmem:[%s204 + $0xd0] sm:$0xff]
        %v278 = vld [vmem:[%s204 + $0xd8] sm:$0xff]
        %v279 = vld [vmem:[%s204 + $0xe0] sm:$0xff]
        %v280 = vld [vmem:[%s204 + $0xe8] sm:$0xff]
        %v281 = vld [vmem:[%s204 + $0xf0] sm:$0xff]
        %v282 = vld [vmem:[%s204 + $0xf8] sm:$0xff]
        %vm283 = vcmask 261120
        %284 = vst.msk [vmem:[#allocation2] sm:$0xff] %vm283, 0.0
        %285 = vst.msk [vmem:[#allocation2 + $0x8] sm:$0xff] %vm283, 0.0
        %vm286 = vcmask 254976
        %287 = vst.msk [vmem:[#allocation2 + $0x10] sm:$0x3] %vm286, 0.0
        %288 = vst.msk [vmem:[#allocation2 + $0x18] sm:$0xff] %vm283, 0.0
        %289 = vst.msk [vmem:[#allocation2 + $0x20] sm:$0xff] %vm283, 0.0
        %290 = vst.msk [vmem:[#allocation2 + $0x28] sm:$0x3] %vm286, 0.0
        %291 = vst.msk [vmem:[#allocation2 + $0x30] sm:$0xff] %vm283, 0.0
        %292 = vst.msk [vmem:[#allocation2 + $0x38] sm:$0xff] %vm283, 0.0
        %293 = vst.msk [vmem:[#allocation2 + $0x40] sm:$0x3] %vm286, 0.0
        %294 = vst.msk [vmem:[#allocation2 + $0x48] sm:$0xff] %vm283, 0.0
        %295 = vst.msk [vmem:[#allocation2 + $0x50] sm:$0xff] %vm283, 0.0
        %296 = vst.msk [vmem:[#allocation2 + $0x58] sm:$0x3] %vm286, 0.0
        %297 = vst.msk [vmem:[#allocation2 + $0x60] sm:$0xff] %vm283, 0.0
        %298 = vst.msk [vmem:[#allocation2 + $0x68] sm:$0xff] %vm283, 0.0
        %299 = vst.msk [vmem:[#allocation2 + $0x70] sm:$0x3] %vm286, 0.0
        %300 = vst.msk [vmem:[#allocation2 + $0x78] sm:$0xff] %vm283, 0.0
        %301 = vst.msk [vmem:[#allocation2 + $0x80] sm:$0xff] %vm283, 0.0
        %302 = vst.msk [vmem:[#allocation2 + $0x88] sm:$0x3] %vm286, 0.0
        %303 = vst.msk [vmem:[#allocation2 + $0x90] sm:$0xff] %vm283, 0.0
        %304 = vst.msk [vmem:[#allocation2 + $0x98] sm:$0xff] %vm283, 0.0
        %305 = vst.msk [vmem:[#allocation2 + $0xa0] sm:$0x3] %vm286, 0.0
        %306 = vst.msk [vmem:[#allocation2 + $0xa8] sm:$0xff] %vm283, 0.0
        %307 = vst.msk [vmem:[#allocation2 + $0xb0] sm:$0xff] %vm283, 0.0
        %308 = vst.msk [vmem:[#allocation2 + $0xb8] sm:$0x3] %vm286, 0.0
        %309 = vst.msk [vmem:[#allocation2 + $0xc0] sm:$0xff] %vm283, 0.0
        %310 = vst.msk [vmem:[#allocation2 + $0xc8] sm:$0xff] %vm283, 0.0
        %311 = vst.msk [vmem:[#allocation2 + $0xd0] sm:$0x3] %vm286, 0.0
        %312 = vst.msk [vmem:[#allocation2 + $0xd8] sm:$0xff] %vm283, 0.0
        %313 = vst.msk [vmem:[#allocation2 + $0xe0] sm:$0xff] %vm283, 0.0
        %314 = vst.msk [vmem:[#allocation2 + $0xe8] sm:$0x3] %vm286, 0.0
        %315 = vst.msk [vmem:[#allocation2 + $0xf0] sm:$0xff] %vm283, 0.0
        %316 = vst.msk [vmem:[#allocation2 + $0xf8] sm:$0xff] %vm283, 0.0
        %317 = vst.msk [vmem:[#allocation2 + $0x100] sm:$0x3] %vm286, 0.0
        %318 = vst.msk [vmem:[#allocation2 + $0x108] sm:$0xff] %vm283, 0.0
        %319 = vst.msk [vmem:[#allocation2 + $0x110] sm:$0xff] %vm283, 0.0
        %320 = vst.msk [vmem:[#allocation2 + $0x118] sm:$0x3] %vm286, 0.0
        %321 = vst.msk [vmem:[#allocation2 + $0x120] sm:$0xff] %vm283, 0.0
        %322 = vst.msk [vmem:[#allocation2 + $0x128] sm:$0xff] %vm283, 0.0
        %323 = vst.msk [vmem:[#allocation2 + $0x130] sm:$0x3] %vm286, 0.0
        %324 = vst.msk [vmem:[#allocation2 + $0x138] sm:$0xff] %vm283, 0.0
        %325 = vst.msk [vmem:[#allocation2 + $0x140] sm:$0xff] %vm283, 0.0
        %326 = vst.msk [vmem:[#allocation2 + $0x148] sm:$0x3] %vm286, 0.0
        %327 = vst.msk [vmem:[#allocation2 + $0x150] sm:$0xff] %vm283, 0.0
        %328 = vst.msk [vmem:[#allocation2 + $0x158] sm:$0xff] %vm283, 0.0
        %329 = vst.msk [vmem:[#allocation2 + $0x160] sm:$0x3] %vm286, 0.0
        %330 = vst.msk [vmem:[#allocation2 + $0x168] sm:$0xff] %vm283, 0.0
        %331 = vst.msk [vmem:[#allocation2 + $0x170] sm:$0xff] %vm283, 0.0
        %332 = vst.msk [vmem:[#allocation2 + $0x178] sm:$0x3] %vm286, 0.0
        %333 = vst.msk [vmem:[#allocation2 + $0x180] sm:$0xff] %vm283, 0.0
        %334 = vst.msk [vmem:[#allocation2 + $0x188] sm:$0xff] %vm283, 0.0
        %335 = vst.msk [vmem:[#allocation2 + $0x190] sm:$0x3] %vm286, 0.0
        %336 = vst.msk [vmem:[#allocation2 + $0x198] sm:$0xff] %vm283, 0.0
        %337 = vst.msk [vmem:[#allocation2 + $0x1a0] sm:$0xff] %vm283, 0.0
        %338 = vst.msk [vmem:[#allocation2 + $0x1a8] sm:$0x3] %vm286, 0.0
        %s339 = scalar_lea.vmem [#allocation2], 24
        %340 = vst.msk [vmem:[%s339 + $0x1] sm:$0xff] %vm283, %v251
        %341 = vst.msk [vmem:[%s339 + $0x9] sm:$0xff] %vm283, %v252
        %342 = vst.msk [vmem:[%s339 + $0x19] sm:$0xff] %vm283, %v253
        %343 = vst.msk [vmem:[%s339 + $0x21] sm:$0xff] %vm283, %v254
        %344 = vst.msk [vmem:[%s339 + $0x31] sm:$0xff] %vm283, %v255
        %345 = vst.msk [vmem:[%s339 + $0x39] sm:$0xff] %vm283, %v256
        %346 = vst.msk [vmem:[%s339 + $0x49] sm:$0xff] %vm283, %v257
        %347 = vst.msk [vmem:[%s339 + $0x51] sm:$0xff] %vm283, %v258
        %348 = vst.msk [vmem:[%s339 + $0x61] sm:$0xff] %vm283, %v259
        %349 = vst.msk [vmem:[%s339 + $0x69] sm:$0xff] %vm283, %v260
        %350 = vst.msk [vmem:[%s339 + $0x79] sm:$0xff] %vm283, %v261
        %351 = vst.msk [vmem:[%s339 + $0x81] sm:$0xff] %vm283, %v262
        %352 = vst.msk [vmem:[%s339 + $0x91] sm:$0xff] %vm283, %v263
        %353 = vst.msk [vmem:[%s339 + $0x99] sm:$0xff] %vm283, %v264
        %354 = vst.msk [vmem:[%s339 + $0xa9] sm:$0xff] %vm283, %v265
        %355 = vst.msk [vmem:[%s339 + $0xb1] sm:$0xff] %vm283, %v266
        %356 = vst.msk [vmem:[%s339 + $0xc1] sm:$0xff] %vm283, %v267
        %357 = vst.msk [vmem:[%s339 + $0xc9] sm:$0xff] %vm283, %v268
        %358 = vst.msk [vmem:[%s339 + $0xd9] sm:$0xff] %vm283, %v269
        %359 = vst.msk [vmem:[%s339 + $0xe1] sm:$0xff] %vm283, %v270
        %360 = vst.msk [vmem:[%s339 + $0xf1] sm:$0xff] %vm283, %v271
        %361 = vst.msk [vmem:[%s339 + $0xf9] sm:$0xff] %vm283, %v272
        %362 = vst.msk [vmem:[%s339 + $0x109] sm:$0xff] %vm283, %v273
        %363 = vst.msk [vmem:[%s339 + $0x111] sm:$0xff] %vm283, %v274
        %364 = vst.msk [vmem:[%s339 + $0x121] sm:$0xff] %vm283, %v275
        %365 = vst.msk [vmem:[%s339 + $0x129] sm:$0xff] %vm283, %v276
        %366 = vst.msk [vmem:[%s339 + $0x139] sm:$0xff] %vm283, %v277
        %367 = vst.msk [vmem:[%s339 + $0x141] sm:$0xff] %vm283, %v278
        %368 = vst.msk [vmem:[%s339 + $0x151] sm:$0xff] %vm283, %v279
        %369 = vst.msk [vmem:[%s339 + $0x159] sm:$0xff] %vm283, %v280
        %370 = vst.msk [vmem:[%s339 + $0x169] sm:$0xff] %vm283, %v281
        %371 = vst.msk [vmem:[%s339 + $0x171] sm:$0xff] %vm283, %v282
        %v372 = vld [vmem:[#allocation2] sm:$0xff]
        %v373 = vld [vmem:[#allocation2 + $0x8] sm:$0xff]
        %v374 = vld [vmem:[#allocation2 + $0x18] sm:$0xff]
        %v375 = vld [vmem:[#allocation2 + $0x20] sm:$0xff]
        %v376 = vld [vmem:[#allocation2 + $0x30] sm:$0xff]
        %v377 = vld [vmem:[#allocation2 + $0x38] sm:$0xff]
        %v378 = vld [vmem:[#allocation2 + $0x48] sm:$0xff]
        %v379 = vld [vmem:[#allocation2 + $0x50] sm:$0xff]
        %v380 = vld [vmem:[#allocation2 + $0x60] sm:$0xff]
        %v381 = vld [vmem:[#allocation2 + $0x68] sm:$0xff]
        %v382 = vld [vmem:[#allocation2 + $0x78] sm:$0xff]
        %v383 = vld [vmem:[#allocation2 + $0x80] sm:$0xff]
        %v384 = vld [vmem:[#allocation2 + $0x90] sm:$0xff]
        %v385 = vld [vmem:[#allocation2 + $0x98] sm:$0xff]
        %v386 = vld [vmem:[#allocation2 + $0xa8] sm:$0xff]
        %v387 = vld [vmem:[#allocation2 + $0xb0] sm:$0xff]
        %v388 = vld [vmem:[#allocation2 + $0xc0] sm:$0xff]
        %v389 = vld [vmem:[#allocation2 + $0xc8] sm:$0xff]
        %v390 = vld [vmem:[#allocation2 + $0xd8] sm:$0xff]
        %v391 = vld [vmem:[#allocation2 + $0xe0] sm:$0xff]
        %v392 = vld [vmem:[#allocation2 + $0xf0] sm:$0xff]
        %v393 = vld [vmem:[#allocation2 + $0xf8] sm:$0xff]
        %v394 = vld [vmem:[#allocation2 + $0x108] sm:$0xff]
        %v395 = vld [vmem:[#allocation2 + $0x110] sm:$0xff]
        %v396 = vld [vmem:[#allocation2 + $0x120] sm:$0xff]
        %v397 = vld [vmem:[#allocation2 + $0x128] sm:$0xff]
        %v398 = vld [vmem:[#allocation2 + $0x138] sm:$0xff]
        %v399 = vld [vmem:[#allocation2 + $0x140] sm:$0xff]
        %v400 = vld [vmem:[#allocation2 + $0x150] sm:$0xff]
        %v401 = vld [vmem:[#allocation2 + $0x158] sm:$0xff]
        %v402 = vld [vmem:[#allocation2 + $0x168] sm:$0xff]
        %v403 = vld [vmem:[#allocation2 + $0x170] sm:$0xff]
        %v404 = vpack.c.bf16 %v373, %v372
        %v405 = vpack.c.bf16 %v375, %v374
        %v406 = vpack.c.bf16 %v377, %v376
        %v407 = vpack.c.bf16 %v379, %v378
        %v408 = vpack.c.bf16 %v381, %v380
        %v409 = vpack.c.bf16 %v383, %v382
        %v410 = vpack.c.bf16 %v385, %v384
        %v411 = vpack.c.bf16 %v387, %v386
        %v412 = vpack.c.bf16 %v389, %v388
        %v413 = vpack.c.bf16 %v391, %v390
        %v414 = vpack.c.bf16 %v393, %v392
        %v415 = vpack.c.bf16 %v395, %v394
        %v416 = vpack.c.bf16 %v397, %v396
        %v417 = vpack.c.bf16 %v399, %v398
        %v418 = vpack.c.bf16 %v401, %v400
        %v419 = vpack.c.bf16 %v403, %v402
        %v420 = vld [vmem:[#allocation5] sm:$0xf]
        %v421 = vld [vmem:[#allocation5 + $0x4] sm:$0xf]
        %v422 = vld [vmem:[#allocation5 + $0x8] sm:$0xf]
        %v423 = vld [vmem:[#allocation5 + $0xc] sm:$0xf]
        %v424 = vld [vmem:[#allocation2 + $0x1] sm:$0xff]
        %v425 = vld [vmem:[#allocation2 + $0x9] sm:$0xff]
        %v426 = vld [vmem:[#allocation2 + $0x19] sm:$0xff]
        %v427 = vld [vmem:[#allocation2 + $0x21] sm:$0xff]
        %v428 = vld [vmem:[#allocation2 + $0x31] sm:$0xff]
        %v429 = vld [vmem:[#allocation2 + $0x39] sm:$0xff]
        %v430 = vld [vmem:[#allocation2 + $0x49] sm:$0xff]
        %v431 = vld [vmem:[#allocation2 + $0x51] sm:$0xff]
        %v432 = vld [vmem:[#allocation2 + $0x61] sm:$0xff]
        %v433 = vld [vmem:[#allocation2 + $0x69] sm:$0xff]
        %v434 = vld [vmem:[#allocation2 + $0x79] sm:$0xff]
        %v435 = vld [vmem:[#allocation2 + $0x81] sm:$0xff]
        %v436 = vld [vmem:[#allocation2 + $0x91] sm:$0xff]
        %v437 = vld [vmem:[#allocation2 + $0x99] sm:$0xff]
        %v438 = vld [vmem:[#allocation2 + $0xa9] sm:$0xff]
        %v439 = vld [vmem:[#allocation2 + $0xb1] sm:$0xff]
        %v440 = vld [vmem:[#allocation2 + $0xc1] sm:$0xff]
        %v441 = vld [vmem:[#allocation2 + $0xc9] sm:$0xff]
        %v442 = vld [vmem:[#allocation2 + $0xd9] sm:$0xff]
        %v443 = vld [vmem:[#allocation2 + $0xe1] sm:$0xff]
        %v444 = vld [vmem:[#allocation2 + $0xf1] sm:$0xff]
        %v445 = vld [vmem:[#allocation2 + $0xf9] sm:$0xff]
        %v446 = vld [vmem:[#allocation2 + $0x109] sm:$0xff]
        %v447 = vld [vmem:[#allocation2 + $0x111] sm:$0xff]
        %v448 = vld [vmem:[#allocation2 + $0x121] sm:$0xff]
        %v449 = vld [vmem:[#allocation2 + $0x129] sm:$0xff]
        %v450 = vld [vmem:[#allocation2 + $0x139] sm:$0xff]
        %v451 = vld [vmem:[#allocation2 + $0x141] sm:$0xff]
        %v452 = vld [vmem:[#allocation2 + $0x151] sm:$0xff]
        %v453 = vld [vmem:[#allocation2 + $0x159] sm:$0xff]
        %v454 = vld [vmem:[#allocation2 + $0x169] sm:$0xff]
        %v455 = vld [vmem:[#allocation2 + $0x171] sm:$0xff]
        %v456 = vpack.c.bf16 %v425, %v424
        %v457 = vpack.c.bf16 %v427, %v426
        %v458 = vpack.c.bf16 %v429, %v428
        %v459 = vpack.c.bf16 %v431, %v430
        %v460 = vpack.c.bf16 %v433, %v432
        %v461 = vpack.c.bf16 %v435, %v434
        %v462 = vpack.c.bf16 %v437, %v436
        %v463 = vpack.c.bf16 %v439, %v438
        %v464 = vpack.c.bf16 %v441, %v440
        %v465 = vpack.c.bf16 %v443, %v442
        %v466 = vpack.c.bf16 %v445, %v444
        %v467 = vpack.c.bf16 %v447, %v446
        %v468 = vpack.c.bf16 %v449, %v448
        %v469 = vpack.c.bf16 %v451, %v450
        %v470 = vpack.c.bf16 %v453, %v452
        %v471 = vpack.c.bf16 %v455, %v454
        %s472 = scalar_lea.vmem [#allocation5], 16
        %v473 = vld [vmem:[%s472] sm:$0xf]
        %v474 = vld [vmem:[%s472 + $0x4] sm:$0xf]
        %v475 = vld [vmem:[%s472 + $0x8] sm:$0xf]
        %v476 = vld [vmem:[%s472 + $0xc] sm:$0xf]
        %v481 = vunpack.c.l.b16 %v473
        %v482 = vunpack.c.l.b16 %v474
        %v483 = vunpack.c.l.b16 %v475
        %v484 = vunpack.c.l.b16 %v476
        %v485 = vpack.c.b16 %v482, %v481
        %v486 = vpack.c.b16 %v484, %v483
        %v490 = vsel %vm283, %v456, 0
        %v493 = vsel %vm283, %v457, 0
        %v496 = vsel %vm283, %v458, 0
        %v499 = vsel %vm283, %v459, 0
        %v502 = vsel %vm283, %v460, 0
        %v505 = vsel %vm283, %v461, 0
        %v508 = vsel %vm283, %v462, 0
        %v511 = vsel %vm283, %v463, 0
        %v514 = vsel %vm283, %v464, 0
        %v517 = vsel %vm283, %v465, 0
        %v520 = vsel %vm283, %v466, 0
        %v523 = vsel %vm283, %v467, 0
        %v526 = vsel %vm283, %v468, 0
        %v529 = vsel %vm283, %v469, 0
        %v532 = vsel %vm283, %v470, 0
        %v535 = vsel %vm283, %v471, 0
        %537 = vmatprep.subr.bf16.mxu0 0
        %538 = vmatpush1.bf16.msra.mxu0 %v485
        %539 = vmatprep.subr.bf16.mxu0 0
        %540 = vmatpush1.bf16.msra.mxu0 %v486
        %541 = vmatprep.subr.bf16.mxu0 0
        %542 = vmatpush1.bf16.msra.mxu0 0
        %543 = vmatprep.subr.bf16.mxu0 0
        %544 = vmatpush1.bf16.msra.mxu0 0
        %545 = vmatprep.subr.bf16.mxu0 0
        %546 = vmatpush1.bf16.msra.mxu0 0
        %547 = vmatprep.subr.bf16.mxu0 0
        %548 = vmatpush1.bf16.msra.mxu0 0
        %549 = vmatprep.subr.bf16.mxu0 0
        %550 = vmatpush1.bf16.msra.mxu0 0
        %551 = vmatprep.subr.bf16.mxu0 0
        %552 = vmatpush1.bf16.msra.mxu0 0
        %553 = vmatprep.subr.bf16.mxu0 0
        %554 = vmatpush1.bf16.msra.mxu0 0
        %555 = vmatprep.subr.bf16.mxu0 0
        %556 = vmatpush1.bf16.msra.mxu0 0
        %557 = vmatprep.subr.bf16.mxu0 0
        %558 = vmatpush1.bf16.msra.mxu0 0
        %559 = vmatprep.subr.bf16.mxu0 0
        %560 = vmatpush1.bf16.msra.mxu0 0
        %561 = vmatprep.subr.bf16.mxu0 0
        %562 = vmatpush1.bf16.msra.mxu0 0
        %563 = vmatprep.subr.bf16.mxu0 0
        %564 = vmatpush1.bf16.msra.mxu0 0
        %565 = vmatprep.subr.bf16.mxu0 0
        %566 = vmatpush1.bf16.msra.mxu0 0
        %567 = vmatprep.subr.bf16.mxu0 0
        %568 = vmatpush1.bf16.msra.mxu0 0
        %569 = vmatprep.mubr.bf16.mxu0 0
        %570 = vmatmul.mubr.bf16.gmra.mrb[0].mxu0 %v490
        %v571 = vpop.f32.mrb[0].mxu0
        %v572 = vadd.f32 0.0, %v571
        %v573 = vpop.f32.mrb[0].mxu0
        %v574 = vpop.f32.mrb[0].mxu0
        %v575 = vadd.f32 0.0, %v574
        %v576 = vpop.f32.mrb[0].mxu0
        %577 = vmatprep.mubr.bf16.mxu0 0
        %578 = vmatmul.mubr.bf16.gmra.mrb[0].mxu0 %v493
        %v579 = vpop.f32.mrb[0].mxu0
        %v580 = vadd.f32 0.0, %v579
        %v581 = vpop.f32.mrb[0].mxu0
        %v582 = vpop.f32.mrb[0].mxu0
        %v583 = vadd.f32 0.0, %v582
        %v584 = vpop.f32.mrb[0].mxu0
        %585 = vmatprep.mubr.bf16.mxu0 0
        %586 = vmatmul.mubr.bf16.gmra.mrb[0].mxu0 %v496
        %v587 = vpop.f32.mrb[0].mxu0
        %v588 = vadd.f32 0.0, %v587
        %v589 = vpop.f32.mrb[0].mxu0
        %v590 = vpop.f32.mrb[0].mxu0
        %v591 = vadd.f32 0.0, %v590
        %v592 = vpop.f32.mrb[0].mxu0
        %593 = vmatprep.mubr.bf16.mxu0 0
        %594 = vmatmul.mubr.bf16.gmra.mrb[0].mxu0 %v499
        %v595 = vpop.f32.mrb[0].mxu0
        %v596 = vadd.f32 0.0, %v595
        %v597 = vpop.f32.mrb[0].mxu0
        %v598 = vpop.f32.mrb[0].mxu0
        %v599 = vadd.f32 0.0, %v598
        %v600 = vpop.f32.mrb[0].mxu0
        %601 = vmatprep.mubr.bf16.mxu0 0
        %602 = vmatmul.mubr.bf16.gmra.mrb[0].mxu0 %v502
        %v603 = vpop.f32.mrb[0].mxu0
        %v604 = vadd.f32 0.0, %v603
        %v605 = vpop.f32.mrb[0].mxu0
        %v606 = vpop.f32.mrb[0].mxu0
        %v607 = vadd.f32 0.0, %v606
        %v608 = vpop.f32.mrb[0].mxu0
        %609 = vmatprep.mubr.bf16.mxu0 0
        %610 = vmatmul.mubr.bf16.gmra.mrb[0].mxu0 %v505
        %v611 = vpop.f32.mrb[0].mxu0
        %v612 = vadd.f32 0.0, %v611
        %v613 = vpop.f32.mrb[0].mxu0
        %v614 = vpop.f32.mrb[0].mxu0
        %v615 = vadd.f32 0.0, %v614
        %v616 = vpop.f32.mrb[0].mxu0
        %617 = vmatprep.mubr.bf16.mxu0 0
        %618 = vmatmul.mubr.bf16.gmra.mrb[0].mxu0 %v508
        %v619 = vpop.f32.mrb[0].mxu0
        %v620 = vadd.f32 0.0, %v619
        %v621 = vpop.f32.mrb[0].mxu0
        %v622 = vpop.f32.mrb[0].mxu0
        %v623 = vadd.f32 0.0, %v622
        %v624 = vpop.f32.mrb[0].mxu0
        %625 = vmatprep.mubr.bf16.mxu0 0
        %626 = vmatmul.mubr.bf16.gmra.mrb[0].mxu0 %v511
        %v627 = vpop.f32.mrb[0].mxu0
        %v628 = vadd.f32 0.0, %v627
        %v629 = vpop.f32.mrb[0].mxu0
        %v630 = vpop.f32.mrb[0].mxu0
        %v631 = vadd.f32 0.0, %v630
        %v632 = vpop.f32.mrb[0].mxu0
        %633 = vmatprep.mubr.bf16.mxu0 0
        %634 = vmatmul.mubr.bf16.gmra.mrb[0].mxu0 %v514
        %v635 = vpop.f32.mrb[0].mxu0
        %v636 = vadd.f32 0.0, %v635
        %v637 = vpop.f32.mrb[0].mxu0
        %v638 = vpop.f32.mrb[0].mxu0
        %v639 = vadd.f32 0.0, %v638
        %v640 = vpop.f32.mrb[0].mxu0
        %641 = vmatprep.mubr.bf16.mxu0 0
        %642 = vmatmul.mubr.bf16.gmra.mrb[0].mxu0 %v517
        %v643 = vpop.f32.mrb[0].mxu0
        %v644 = vadd.f32 0.0, %v643
        %v645 = vpop.f32.mrb[0].mxu0
        %v646 = vpop.f32.mrb[0].mxu0
        %v647 = vadd.f32 0.0, %v646
        %v648 = vpop.f32.mrb[0].mxu0
        %649 = vmatprep.mubr.bf16.mxu0 0
        %650 = vmatmul.mubr.bf16.gmra.mrb[0].mxu0 %v520
        %v651 = vpop.f32.mrb[0].mxu0
        %v652 = vadd.f32 0.0, %v651
        %v653 = vpop.f32.mrb[0].mxu0
        %v654 = vpop.f32.mrb[0].mxu0
        %v655 = vadd.f32 0.0, %v654
        %v656 = vpop.f32.mrb[0].mxu0
        %657 = vmatprep.mubr.bf16.mxu0 0
        %658 = vmatmul.mubr.bf16.gmra.mrb[0].mxu0 %v523
        %v659 = vpop.f32.mrb[0].mxu0
        %v660 = vadd.f32 0.0, %v659
        %v661 = vpop.f32.mrb[0].mxu0
        %v662 = vpop.f32.mrb[0].mxu0
        %v663 = vadd.f32 0.0, %v662
        %v664 = vpop.f32.mrb[0].mxu0
        %665 = vmatprep.mubr.bf16.mxu0 0
        %666 = vmatmul.mubr.bf16.gmra.mrb[0].mxu0 %v526
        %v667 = vpop.f32.mrb[0].mxu0
        %v668 = vadd.f32 0.0, %v667
        %v669 = vpop.f32.mrb[0].mxu0
        %v670 = vpop.f32.mrb[0].mxu0
        %v671 = vadd.f32 0.0, %v670
        %v672 = vpop.f32.mrb[0].mxu0
        %673 = vmatprep.mubr.bf16.mxu0 0
        %674 = vmatmul.mubr.bf16.gmra.mrb[0].mxu0 %v529
        %v675 = vpop.f32.mrb[0].mxu0
        %v676 = vadd.f32 0.0, %v675
        %v677 = vpop.f32.mrb[0].mxu0
        %v678 = vpop.f32.mrb[0].mxu0
        %v679 = vadd.f32 0.0, %v678
        %v680 = vpop.f32.mrb[0].mxu0
        %681 = vmatprep.mubr.bf16.mxu0 0
        %682 = vmatmul.mubr.bf16.gmra.mrb[0].mxu0 %v532
        %v683 = vpop.f32.mrb[0].mxu0
        %v684 = vadd.f32 0.0, %v683
        %v685 = vpop.f32.mrb[0].mxu0
        %v686 = vpop.f32.mrb[0].mxu0
        %v687 = vadd.f32 0.0, %v686
        %v688 = vpop.f32.mrb[0].mxu0
        %689 = vmatprep.mubr.bf16.mxu0 0
        %690 = vmatmul.mubr.bf16.gmra.mrb[0].mxu0 %v535
        %v691 = vpop.f32.mrb[0].mxu0
        %v692 = vadd.f32 0.0, %v691
        %v693 = vpop.f32.mrb[0].mxu0
        %v694 = vpop.f32.mrb[0].mxu0
        %v695 = vadd.f32 0.0, %v694
        %v696 = vpop.f32.mrb[0].mxu0
        %697 = vdwg.mxu0
        %v702 = vunpack.c.l.b16 %v420
        %v703 = vunpack.c.l.b16 %v421
        %v704 = vunpack.c.l.b16 %v422
        %v705 = vunpack.c.l.b16 %v423
        %v706 = vpack.c.b16 %v703, %v702
        %v707 = vpack.c.b16 %v705, %v704
        %v711 = vsel %vm283, %v404, 0
        %v714 = vsel %vm283, %v405, 0
        %v717 = vsel %vm283, %v406, 0
        %v720 = vsel %vm283, %v407, 0
        %v723 = vsel %vm283, %v408, 0
        %v726 = vsel %vm283, %v409, 0
        %v729 = vsel %vm283, %v410, 0
        %v732 = vsel %vm283, %v411, 0
        %v735 = vsel %vm283, %v412, 0
        %v738 = vsel %vm283, %v413, 0
        %v741 = vsel %vm283, %v414, 0
        %v744 = vsel %vm283, %v415, 0
        %v747 = vsel %vm283, %v416, 0
        %v750 = vsel %vm283, %v417, 0
        %v753 = vsel %vm283, %v418, 0
        %v756 = vsel %vm283, %v419, 0
        %758 = vmatprep.subr.bf16.mxu0 0
        %759 = vmatpush1.bf16.msra.mxu0 %v706
        %760 = vmatprep.subr.bf16.mxu0 0
        %761 = vmatpush1.bf16.msra.mxu0 %v707
        %762 = vmatprep.subr.bf16.mxu0 0
        %763 = vmatpush1.bf16.msra.mxu0 0
        %764 = vmatprep.subr.bf16.mxu0 0
        %765 = vmatpush1.bf16.msra.mxu0 0
        %766 = vmatprep.subr.bf16.mxu0 0
        %767 = vmatpush1.bf16.msra.mxu0 0
        %768 = vmatprep.subr.bf16.mxu0 0
        %769 = vmatpush1.bf16.msra.mxu0 0
        %770 = vmatprep.subr.bf16.mxu0 0
        %771 = vmatpush1.bf16.msra.mxu0 0
        %772 = vmatprep.subr.bf16.mxu0 0
        %773 = vmatpush1.bf16.msra.mxu0 0
        %774 = vmatprep.subr.bf16.mxu0 0
        %775 = vmatpush1.bf16.msra.mxu0 0
        %776 = vmatprep.subr.bf16.mxu0 0
        %777 = vmatpush1.bf16.msra.mxu0 0
        %778 = vmatprep.subr.bf16.mxu0 0
        %779 = vmatpush1.bf16.msra.mxu0 0
        %780 = vmatprep.subr.bf16.mxu0 0
        %781 = vmatpush1.bf16.msra.mxu0 0
        %782 = vmatprep.subr.bf16.mxu0 0
        %783 = vmatpush1.bf16.msra.mxu0 0
        %784 = vmatprep.subr.bf16.mxu0 0
        %785 = vmatpush1.bf16.msra.mxu0 0
        %786 = vmatprep.subr.bf16.mxu0 0
        %787 = vmatpush1.bf16.msra.mxu0 0
        %788 = vmatprep.subr.bf16.mxu0 0
        %789 = vmatpush1.bf16.msra.mxu0 0
        %790 = vmatprep.mubr.bf16.mxu0 0
        %791 = vmatmul.mubr.bf16.gmra.mrb[0].mxu0 %v711
        %v792 = vpop.f32.mrb[0].mxu0
        %v793 = vadd.f32 %v572, %v792
        %v794 = vpop.f32.mrb[0].mxu0
        %v795 = vpop.f32.mrb[0].mxu0
        %v796 = vadd.f32 %v575, %v795
        %v797 = vpop.f32.mrb[0].mxu0
        %798 = vmatprep.mubr.bf16.mxu0 0
        %799 = vmatmul.mubr.bf16.gmra.mrb[0].mxu0 %v714
        %v800 = vpop.f32.mrb[0].mxu0
        %v801 = vadd.f32 %v580, %v800
        %v802 = vpop.f32.mrb[0].mxu0
        %v803 = vpop.f32.mrb[0].mxu0
        %v804 = vadd.f32 %v583, %v803
        %v805 = vpop.f32.mrb[0].mxu0
        %806 = vmatprep.mubr.bf16.mxu0 0
        %807 = vmatmul.mubr.bf16.gmra.mrb[0].mxu0 %v717
        %v808 = vpop.f32.mrb[0].mxu0
        %v809 = vadd.f32 %v588, %v808
        %v810 = vpop.f32.mrb[0].mxu0
        %v811 = vpop.f32.mrb[0].mxu0
        %v812 = vadd.f32 %v591, %v811
        %v813 = vpop.f32.mrb[0].mxu0
        %814 = vmatprep.mubr.bf16.mxu0 0
        %815 = vmatmul.mubr.bf16.gmra.mrb[0].mxu0 %v720
        %v816 = vpop.f32.mrb[0].mxu0
        %v817 = vadd.f32 %v596, %v816
        %v818 = vpop.f32.mrb[0].mxu0
        %v819 = vpop.f32.mrb[0].mxu0
        %v820 = vadd.f32 %v599, %v819
        %v821 = vpop.f32.mrb[0].mxu0
        %822 = vmatprep.mubr.bf16.mxu0 0
        %823 = vmatmul.mubr.bf16.gmra.mrb[0].mxu0 %v723
        %v824 = vpop.f32.mrb[0].mxu0
        %v825 = vadd.f32 %v604, %v824
        %v826 = vpop.f32.mrb[0].mxu0
        %v827 = vpop.f32.mrb[0].mxu0
        %v828 = vadd.f32 %v607, %v827
        %v829 = vpop.f32.mrb[0].mxu0
        %830 = vmatprep.mubr.bf16.mxu0 0
        %831 = vmatmul.mubr.bf16.gmra.mrb[0].mxu0 %v726
        %v832 = vpop.f32.mrb[0].mxu0
        %v833 = vadd.f32 %v612, %v832
        %v834 = vpop.f32.mrb[0].mxu0
        %v835 = vpop.f32.mrb[0].mxu0
        %v836 = vadd.f32 %v615, %v835
        %v837 = vpop.f32.mrb[0].mxu0
        %838 = vmatprep.mubr.bf16.mxu0 0
        %839 = vmatmul.mubr.bf16.gmra.mrb[0].mxu0 %v729
        %v840 = vpop.f32.mrb[0].mxu0
        %v841 = vadd.f32 %v620, %v840
        %v842 = vpop.f32.mrb[0].mxu0
        %v843 = vpop.f32.mrb[0].mxu0
        %v844 = vadd.f32 %v623, %v843
        %v845 = vpop.f32.mrb[0].mxu0
        %846 = vmatprep.mubr.bf16.mxu0 0
        %847 = vmatmul.mubr.bf16.gmra.mrb[0].mxu0 %v732
        %v848 = vpop.f32.mrb[0].mxu0
        %v849 = vadd.f32 %v628, %v848
        %v850 = vpop.f32.mrb[0].mxu0
        %v851 = vpop.f32.mrb[0].mxu0
        %v852 = vadd.f32 %v631, %v851
        %v853 = vpop.f32.mrb[0].mxu0
        %854 = vmatprep.mubr.bf16.mxu0 0
        %855 = vmatmul.mubr.bf16.gmra.mrb[0].mxu0 %v735
        %v856 = vpop.f32.mrb[0].mxu0
        %v857 = vadd.f32 %v636, %v856
        %v858 = vpop.f32.mrb[0].mxu0
        %v859 = vpop.f32.mrb[0].mxu0
        %v860 = vadd.f32 %v639, %v859
        %v861 = vpop.f32.mrb[0].mxu0
        %862 = vmatprep.mubr.bf16.mxu0 0
        %863 = vmatmul.mubr.bf16.gmra.mrb[0].mxu0 %v738
        %v864 = vpop.f32.mrb[0].mxu0
        %v865 = vadd.f32 %v644, %v864
        %v866 = vpop.f32.mrb[0].mxu0
        %v867 = vpop.f32.mrb[0].mxu0
        %v868 = vadd.f32 %v647, %v867
        %v869 = vpop.f32.mrb[0].mxu0
        %870 = vmatprep.mubr.bf16.mxu0 0
        %871 = vmatmul.mubr.bf16.gmra.mrb[0].mxu0 %v741
        %v872 = vpop.f32.mrb[0].mxu0
        %v873 = vadd.f32 %v652, %v872
        %v874 = vpop.f32.mrb[0].mxu0
        %v875 = vpop.f32.mrb[0].mxu0
        %v876 = vadd.f32 %v655, %v875
        %v877 = vpop.f32.mrb[0].mxu0
        %878 = vmatprep.mubr.bf16.mxu0 0
        %879 = vmatmul.mubr.bf16.gmra.mrb[0].mxu0 %v744
        %v880 = vpop.f32.mrb[0].mxu0
        %v881 = vadd.f32 %v660, %v880
        %v882 = vpop.f32.mrb[0].mxu0
        %v883 = vpop.f32.mrb[0].mxu0
        %v884 = vadd.f32 %v663, %v883
        %v885 = vpop.f32.mrb[0].mxu0
        %886 = vmatprep.mubr.bf16.mxu0 0
        %887 = vmatmul.mubr.bf16.gmra.mrb[0].mxu0 %v747
        %v888 = vpop.f32.mrb[0].mxu0
        %v889 = vadd.f32 %v668, %v888
        %v890 = vpop.f32.mrb[0].mxu0
        %v891 = vpop.f32.mrb[0].mxu0
        %v892 = vadd.f32 %v671, %v891
        %v893 = vpop.f32.mrb[0].mxu0
        %894 = vmatprep.mubr.bf16.mxu0 0
        %895 = vmatmul.mubr.bf16.gmra.mrb[0].mxu0 %v750
        %v896 = vpop.f32.mrb[0].mxu0
        %v897 = vadd.f32 %v676, %v896
        %v898 = vpop.f32.mrb[0].mxu0
        %v899 = vpop.f32.mrb[0].mxu0
        %v900 = vadd.f32 %v679, %v899
        %v901 = vpop.f32.mrb[0].mxu0
        %902 = vmatprep.mubr.bf16.mxu0 0
        %903 = vmatmul.mubr.bf16.gmra.mrb[0].mxu0 %v753
        %v904 = vpop.f32.mrb[0].mxu0
        %v905 = vadd.f32 %v684, %v904
        %v906 = vpop.f32.mrb[0].mxu0
        %v907 = vpop.f32.mrb[0].mxu0
        %v908 = vadd.f32 %v687, %v907
        %v909 = vpop.f32.mrb[0].mxu0
        %910 = vmatprep.mubr.bf16.mxu0 0
        %911 = vmatmul.mubr.bf16.gmra.mrb[0].mxu0 %v756
        %v912 = vpop.f32.mrb[0].mxu0
        %v913 = vadd.f32 %v692, %v912
        %v914 = vpop.f32.mrb[0].mxu0
        %v915 = vpop.f32.mrb[0].mxu0
        %v916 = vadd.f32 %v695, %v915
        %v917 = vpop.f32.mrb[0].mxu0
        %918 = vdwg.mxu0
        %v919 = vld [vmem:[#allocation2 + $0x2] sm:$0xff]
        %v920 = vld [vmem:[#allocation2 + $0xa] sm:$0xff]
        %v921 = vld [vmem:[#allocation2 + $0x1a] sm:$0xff]
        %v922 = vld [vmem:[#allocation2 + $0x22] sm:$0xff]
        %v923 = vld [vmem:[#allocation2 + $0x32] sm:$0xff]
        %v924 = vld [vmem:[#allocation2 + $0x3a] sm:$0xff]
        %v925 = vld [vmem:[#allocation2 + $0x4a] sm:$0xff]
        %v926 = vld [vmem:[#allocation2 + $0x52] sm:$0xff]
        %v927 = vld [vmem:[#allocation2 + $0x62] sm:$0xff]
        %v928 = vld [vmem:[#allocation2 + $0x6a] sm:$0xff]
        %v929 = vld [vmem:[#allocation2 + $0x7a] sm:$0xff]
        %v930 = vld [vmem:[#allocation2 + $0x82] sm:$0xff]
        %v931 = vld [vmem:[#allocation2 + $0x92] sm:$0xff]
        %v932 = vld [vmem:[#allocation2 + $0x9a] sm:$0xff]
        %v933 = vld [vmem:[#allocation2 + $0xaa] sm:$0xff]
        %v934 = vld [vmem:[#allocation2 + $0xb2] sm:$0xff]
        %v935 = vld [vmem:[#allocation2 + $0xc2] sm:$0xff]
        %v936 = vld [vmem:[#allocation2 + $0xca] sm:$0xff]
        %v937 = vld [vmem:[#allocation2 + $0xda] sm:$0xff]
        %v938 = vld [vmem:[#allocation2 + $0xe2] sm:$0xff]
        %v939 = vld [vmem:[#allocation2 + $0xf2] sm:$0xff]
        %v940 = vld [vmem:[#allocation2 + $0xfa] sm:$0xff]
        %v941 = vld [vmem:[#allocation2 + $0x10a] sm:$0xff]
        %v942 = vld [vmem:[#allocation2 + $0x112] sm:$0xff]
        %v943 = vld [vmem:[#allocation2 + $0x122] sm:$0xff]
        %v944 = vld [vmem:[#allocation2 + $0x12a] sm:$0xff]
        %v945 = vld [vmem:[#allocation2 + $0x13a] sm:$0xff]
        %v946 = vld [vmem:[#allocation2 + $0x142] sm:$0xff]
        %v947 = vld [vmem:[#allocation2 + $0x152] sm:$0xff]
        %v948 = vld [vmem:[#allocation2 + $0x15a] sm:$0xff]
        %v949 = vld [vmem:[#allocation2 + $0x16a] sm:$0xff]
        %v950 = vld [vmem:[#allocation2 + $0x172] sm:$0xff]
        %v951 = vpack.c.bf16 %v920, %v919
        %v952 = vpack.c.bf16 %v922, %v921
        %v953 = vpack.c.bf16 %v924, %v923
        %v954 = vpack.c.bf16 %v926, %v925
        %v955 = vpack.c.bf16 %v928, %v927
        %v956 = vpack.c.bf16 %v930, %v929
        %v957 = vpack.c.bf16 %v932, %v931
        %v958 = vpack.c.bf16 %v934, %v933
        %v959 = vpack.c.bf16 %v936, %v935
        %v960 = vpack.c.bf16 %v938, %v937
        %v961 = vpack.c.bf16 %v940, %v939
        %v962 = vpack.c.bf16 %v942, %v941
        %v963 = vpack.c.bf16 %v944, %v943
        %v964 = vpack.c.bf16 %v946, %v945
        %v965 = vpack.c.bf16 %v948, %v947
        %v966 = vpack.c.bf16 %v950, %v949
        %s967 = scalar_lea.vmem [#allocation5], 32
        %v968 = vld [vmem:[%s967] sm:$0xf]
        %v969 = vld [vmem:[%s967 + $0x4] sm:$0xf]
        %v970 = vld [vmem:[%s967 + $0x8] sm:$0xf]
        %v971 = vld [vmem:[%s967 + $0xc] sm:$0xf]
        %v976 = vunpack.c.l.b16 %v968
        %v977 = vunpack.c.l.b16 %v969
        %v978 = vunpack.c.l.b16 %v970
        %v979 = vunpack.c.l.b16 %v971
        %v980 = vpack.c.b16 %v977, %v976
        %v981 = vpack.c.b16 %v979, %v978
        %v985 = vsel %vm283, %v951, 0
        %v988 = vsel %vm283, %v952, 0
        %v991 = vsel %vm283, %v953, 0
        %v994 = vsel %vm283, %v954, 0
        %v997 = vsel %vm283, %v955, 0
        %v1000 = vsel %vm283, %v956, 0
        %v1003 = vsel %vm283, %v957, 0
        %v1006 = vsel %vm283, %v958, 0
        %v1009 = vsel %vm283, %v959, 0
        %v1012 = vsel %vm283, %v960, 0
        %v1015 = vsel %vm283, %v961, 0
        %v1018 = vsel %vm283, %v962, 0
        %v1021 = vsel %vm283, %v963, 0
        %v1024 = vsel %vm283, %v964, 0
        %v1027 = vsel %vm283, %v965, 0
        %v1030 = vsel %vm283, %v966, 0
        %1032 = vmatprep.subr.bf16.mxu0 0
        %1033 = vmatpush1.bf16.msra.mxu0 %v980
        %1034 = vmatprep.subr.bf16.mxu0 0
        %1035 = vmatpush1.bf16.msra.mxu0 %v981
        %1036 = vmatprep.subr.bf16.mxu0 0
        %1037 = vmatpush1.bf16.msra.mxu0 0
        %1038 = vmatprep.subr.bf16.mxu0 0
        %1039 = vmatpush1.bf16.msra.mxu0 0
        %1040 = vmatprep.subr.bf16.mxu0 0
        %1041 = vmatpush1.bf16.msra.mxu0 0
        %1042 = vmatprep.subr.bf16.mxu0 0
        %1043 = vmatpush1.bf16.msra.mxu0 0
        %1044 = vmatprep.subr.bf16.mxu0 0
        %1045 = vmatpush1.bf16.msra.mxu0 0
        %1046 = vmatprep.subr.bf16.mxu0 0
        %1047 = vmatpush1.bf16.msra.mxu0 0
        %1048 = vmatprep.subr.bf16.mxu0 0
        %1049 = vmatpush1.bf16.msra.mxu0 0
        %1050 = vmatprep.subr.bf16.mxu0 0
        %1051 = vmatpush1.bf16.msra.mxu0 0
        %1052 = vmatprep.subr.bf16.mxu0 0
        %1053 = vmatpush1.bf16.msra.mxu0 0
        %1054 = vmatprep.subr.bf16.mxu0 0
        %1055 = vmatpush1.bf16.msra.mxu0 0
        %1056 = vmatprep.subr.bf16.mxu0 0
        %1057 = vmatpush1.bf16.msra.mxu0 0
        %1058 = vmatprep.subr.bf16.mxu0 0
        %1059 = vmatpush1.bf16.msra.mxu0 0
        %1060 = vmatprep.subr.bf16.mxu0 0
        %1061 = vmatpush1.bf16.msra.mxu0 0
        %1062 = vmatprep.subr.bf16.mxu0 0
        %1063 = vmatpush1.bf16.msra.mxu0 0
        %1064 = vmatprep.mubr.bf16.mxu0 0
        %1065 = vmatmul.mubr.bf16.gmra.mrb[0].mxu0 %v985
        %v1066 = vpop.f32.mrb[0].mxu0
        %v1067 = vadd.f32 0.0, %v1066
        %v1068 = vpop.f32.mrb[0].mxu0
        %v1069 = vpop.f32.mrb[0].mxu0
        %v1070 = vadd.f32 0.0, %v1069
        %v1071 = vpop.f32.mrb[0].mxu0
        %1072 = vmatprep.mubr.bf16.mxu0 0
        %1073 = vmatmul.mubr.bf16.gmra.mrb[0].mxu0 %v988
        %v1074 = vpop.f32.mrb[0].mxu0
        %v1075 = vadd.f32 0.0, %v1074
        %v1076 = vpop.f32.mrb[0].mxu0
        %v1077 = vpop.f32.mrb[0].mxu0
        %v1078 = vadd.f32 0.0, %v1077
        %v1079 = vpop.f32.mrb[0].mxu0
        %1080 = vmatprep.mubr.bf16.mxu0 0
        %1081 = vmatmul.mubr.bf16.gmra.mrb[0].mxu0 %v991
        %v1082 = vpop.f32.mrb[0].mxu0
        %v1083 = vadd.f32 0.0, %v1082
        %v1084 = vpop.f32.mrb[0].mxu0
        %v1085 = vpop.f32.mrb[0].mxu0
        %v1086 = vadd.f32 0.0, %v1085
        %v1087 = vpop.f32.mrb[0].mxu0
        %1088 = vmatprep.mubr.bf16.mxu0 0
        %1089 = vmatmul.mubr.bf16.gmra.mrb[0].mxu0 %v994
        %v1090 = vpop.f32.mrb[0].mxu0
        %v1091 = vadd.f32 0.0, %v1090
        %v1092 = vpop.f32.mrb[0].mxu0
        %v1093 = vpop.f32.mrb[0].mxu0
        %v1094 = vadd.f32 0.0, %v1093
        %v1095 = vpop.f32.mrb[0].mxu0
        %1096 = vmatprep.mubr.bf16.mxu0 0
        %1097 = vmatmul.mubr.bf16.gmra.mrb[0].mxu0 %v997
        %v1098 = vpop.f32.mrb[0].mxu0
        %v1099 = vadd.f32 0.0, %v1098
        %v1100 = vpop.f32.mrb[0].mxu0
        %v1101 = vpop.f32.mrb[0].mxu0
        %v1102 = vadd.f32 0.0, %v1101
        %v1103 = vpop.f32.mrb[0].mxu0
        %1104 = vmatprep.mubr.bf16.mxu0 0
        %1105 = vmatmul.mubr.bf16.gmra.mrb[0].mxu0 %v1000
        %v1106 = vpop.f32.mrb[0].mxu0
        %v1107 = vadd.f32 0.0, %v1106
        %v1108 = vpop.f32.mrb[0].mxu0
        %v1109 = vpop.f32.mrb[0].mxu0
        %v1110 = vadd.f32 0.0, %v1109
        %v1111 = vpop.f32.mrb[0].mxu0
        %1112 = vmatprep.mubr.bf16.mxu0 0
        %1113 = vmatmul.mubr.bf16.gmra.mrb[0].mxu0 %v1003
        %v1114 = vpop.f32.mrb[0].mxu0
        %v1115 = vadd.f32 0.0, %v1114
        %v1116 = vpop.f32.mrb[0].mxu0
        %v1117 = vpop.f32.mrb[0].mxu0
        %v1118 = vadd.f32 0.0, %v1117
        %v1119 = vpop.f32.mrb[0].mxu0
        %1120 = vmatprep.mubr.bf16.mxu0 0
        %1121 = vmatmul.mubr.bf16.gmra.mrb[0].mxu0 %v1006
        %v1122 = vpop.f32.mrb[0].mxu0
        %v1123 = vadd.f32 0.0, %v1122
        %v1124 = vpop.f32.mrb[0].mxu0
        %v1125 = vpop.f32.mrb[0].mxu0
        %v1126 = vadd.f32 0.0, %v1125
        %v1127 = vpop.f32.mrb[0].mxu0
        %1128 = vmatprep.mubr.bf16.mxu0 0
        %1129 = vmatmul.mubr.bf16.gmra.mrb[0].mxu0 %v1009
        %v1130 = vpop.f32.mrb[0].mxu0
        %v1131 = vadd.f32 0.0, %v1130
        %v1132 = vpop.f32.mrb[0].mxu0
        %v1133 = vpop.f32.mrb[0].mxu0
        %v1134 = vadd.f32 0.0, %v1133
        %v1135 = vpop.f32.mrb[0].mxu0
        %1136 = vmatprep.mubr.bf16.mxu0 0
        %1137 = vmatmul.mubr.bf16.gmra.mrb[0].mxu0 %v1012
        %v1138 = vpop.f32.mrb[0].mxu0
        %v1139 = vadd.f32 0.0, %v1138
        %v1140 = vpop.f32.mrb[0].mxu0
        %v1141 = vpop.f32.mrb[0].mxu0
        %v1142 = vadd.f32 0.0, %v1141
        %v1143 = vpop.f32.mrb[0].mxu0
        %1144 = vmatprep.mubr.bf16.mxu0 0
        %1145 = vmatmul.mubr.bf16.gmra.mrb[0].mxu0 %v1015
        %v1146 = vpop.f32.mrb[0].mxu0
        %v1147 = vadd.f32 0.0, %v1146
        %v1148 = vpop.f32.mrb[0].mxu0
        %v1149 = vpop.f32.mrb[0].mxu0
        %v1150 = vadd.f32 0.0, %v1149
        %v1151 = vpop.f32.mrb[0].mxu0
        %1152 = vmatprep.mubr.bf16.mxu0 0
        %1153 = vmatmul.mubr.bf16.gmra.mrb[0].mxu0 %v1018
        %v1154 = vpop.f32.mrb[0].mxu0
        %v1155 = vadd.f32 0.0, %v1154
        %v1156 = vpop.f32.mrb[0].mxu0
        %v1157 = vpop.f32.mrb[0].mxu0
        %v1158 = vadd.f32 0.0, %v1157
        %v1159 = vpop.f32.mrb[0].mxu0
        %1160 = vmatprep.mubr.bf16.mxu0 0
        %1161 = vmatmul.mubr.bf16.gmra.mrb[0].mxu0 %v1021
        %v1162 = vpop.f32.mrb[0].mxu0
        %v1163 = vadd.f32 0.0, %v1162
        %v1164 = vpop.f32.mrb[0].mxu0
        %v1165 = vpop.f32.mrb[0].mxu0
        %v1166 = vadd.f32 0.0, %v1165
        %v1167 = vpop.f32.mrb[0].mxu0
        %1168 = vmatprep.mubr.bf16.mxu0 0
        %1169 = vmatmul.mubr.bf16.gmra.mrb[0].mxu0 %v1024
        %v1170 = vpop.f32.mrb[0].mxu0
        %v1171 = vadd.f32 0.0, %v1170
        %v1172 = vpop.f32.mrb[0].mxu0
        %v1173 = vpop.f32.mrb[0].mxu0
        %v1174 = vadd.f32 0.0, %v1173
        %v1175 = vpop.f32.mrb[0].mxu0
        %1176 = vmatprep.mubr.bf16.mxu0 0
        %1177 = vmatmul.mubr.bf16.gmra.mrb[0].mxu0 %v1027
        %v1178 = vpop.f32.mrb[0].mxu0
        %v1179 = vadd.f32 0.0, %v1178
        %v1180 = vpop.f32.mrb[0].mxu0
        %v1181 = vpop.f32.mrb[0].mxu0
        %v1182 = vadd.f32 0.0, %v1181
        %v1183 = vpop.f32.mrb[0].mxu0
        %1184 = vmatprep.mubr.bf16.mxu0 0
        %1185 = vmatmul.mubr.bf16.gmra.mrb[0].mxu0 %v1030
        %v1186 = vpop.f32.mrb[0].mxu0
        %v1187 = vadd.f32 0.0, %v1186
        %v1188 = vpop.f32.mrb[0].mxu0
        %v1189 = vpop.f32.mrb[0].mxu0
        %v1190 = vadd.f32 0.0, %v1189
        %v1191 = vpop.f32.mrb[0].mxu0
        %1192 = vdwg.mxu0
        %v1193 = vadd.f32 %v793, %v1067
        %v1194 = vadd.f32 %v796, %v1070
        %v1195 = vadd.f32 %v801, %v1075
        %v1196 = vadd.f32 %v804, %v1078
        %v1197 = vadd.f32 %v809, %v1083
        %v1198 = vadd.f32 %v812, %v1086
        %v1199 = vadd.f32 %v817, %v1091
        %v1200 = vadd.f32 %v820, %v1094
        %v1201 = vadd.f32 %v825, %v1099
        %v1202 = vadd.f32 %v828, %v1102
        %v1203 = vadd.f32 %v833, %v1107
        %v1204 = vadd.f32 %v836, %v1110
        %v1205 = vadd.f32 %v841, %v1115
        %v1206 = vadd.f32 %v844, %v1118
        %v1207 = vadd.f32 %v849, %v1123
        %v1208 = vadd.f32 %v852, %v1126
        %v1209 = vadd.f32 %v857, %v1131
        %v1210 = vadd.f32 %v860, %v1134
        %v1211 = vadd.f32 %v865, %v1139
        %v1212 = vadd.f32 %v868, %v1142
        %v1213 = vadd.f32 %v873, %v1147
        %v1214 = vadd.f32 %v876, %v1150
        %v1215 = vadd.f32 %v881, %v1155
        %v1216 = vadd.f32 %v884, %v1158
        %v1217 = vadd.f32 %v889, %v1163
        %v1218 = vadd.f32 %v892, %v1166
        %v1219 = vadd.f32 %v897, %v1171
        %v1220 = vadd.f32 %v900, %v1174
        %v1221 = vadd.f32 %v905, %v1179
        %v1222 = vadd.f32 %v908, %v1182
        %v1223 = vadd.f32 %v913, %v1187
        %v1224 = vadd.f32 %v916, %v1190
        %v1225 = vld [vmem:[%s339] sm:$0xff]
        %v1226 = vld [vmem:[%s339 + $0x8] sm:$0xff]
        %v1227 = vld [vmem:[%s339 + $0x18] sm:$0xff]
        %v1228 = vld [vmem:[%s339 + $0x20] sm:$0xff]
        %v1229 = vld [vmem:[%s339 + $0x30] sm:$0xff]
        %v1230 = vld [vmem:[%s339 + $0x38] sm:$0xff]
        %v1231 = vld [vmem:[%s339 + $0x48] sm:$0xff]
        %v1232 = vld [vmem:[%s339 + $0x50] sm:$0xff]
        %v1233 = vld [vmem:[%s339 + $0x60] sm:$0xff]
        %v1234 = vld [vmem:[%s339 + $0x68] sm:$0xff]
        %v1235 = vld [vmem:[%s339 + $0x78] sm:$0xff]
        %v1236 = vld [vmem:[%s339 + $0x80] sm:$0xff]
        %v1237 = vld [vmem:[%s339 + $0x90] sm:$0xff]
        %v1238 = vld [vmem:[%s339 + $0x98] sm:$0xff]
        %v1239 = vld [vmem:[%s339 + $0xa8] sm:$0xff]
        %v1240 = vld [vmem:[%s339 + $0xb0] sm:$0xff]
        %v1241 = vld [vmem:[%s339 + $0xc0] sm:$0xff]
        %v1242 = vld [vmem:[%s339 + $0xc8] sm:$0xff]
        %v1243 = vld [vmem:[%s339 + $0xd8] sm:$0xff]
        %v1244 = vld [vmem:[%s339 + $0xe0] sm:$0xff]
        %v1245 = vld [vmem:[%s339 + $0xf0] sm:$0xff]
        %v1246 = vld [vmem:[%s339 + $0xf8] sm:$0xff]
        %v1247 = vld [vmem:[%s339 + $0x108] sm:$0xff]
        %v1248 = vld [vmem:[%s339 + $0x110] sm:$0xff]
        %v1249 = vld [vmem:[%s339 + $0x120] sm:$0xff]
        %v1250 = vld [vmem:[%s339 + $0x128] sm:$0xff]
        %v1251 = vld [vmem:[%s339 + $0x138] sm:$0xff]
        %v1252 = vld [vmem:[%s339 + $0x140] sm:$0xff]
        %v1253 = vld [vmem:[%s339 + $0x150] sm:$0xff]
        %v1254 = vld [vmem:[%s339 + $0x158] sm:$0xff]
        %v1255 = vld [vmem:[%s339 + $0x168] sm:$0xff]
        %v1256 = vld [vmem:[%s339 + $0x170] sm:$0xff]
        %v1257 = vpack.c.bf16 %v1226, %v1225
        %v1258 = vpack.c.bf16 %v1228, %v1227
        %v1259 = vpack.c.bf16 %v1230, %v1229
        %v1260 = vpack.c.bf16 %v1232, %v1231
        %v1261 = vpack.c.bf16 %v1234, %v1233
        %v1262 = vpack.c.bf16 %v1236, %v1235
        %v1263 = vpack.c.bf16 %v1238, %v1237
        %v1264 = vpack.c.bf16 %v1240, %v1239
        %v1265 = vpack.c.bf16 %v1242, %v1241
        %v1266 = vpack.c.bf16 %v1244, %v1243
        %v1267 = vpack.c.bf16 %v1246, %v1245
        %v1268 = vpack.c.bf16 %v1248, %v1247
        %v1269 = vpack.c.bf16 %v1250, %v1249
        %v1270 = vpack.c.bf16 %v1252, %v1251
        %v1271 = vpack.c.bf16 %v1254, %v1253
        %v1272 = vpack.c.bf16 %v1256, %v1255
        %s1273 = scalar_lea.vmem [#allocation5], 48
        %v1274 = vld [vmem:[%s1273] sm:$0xf]
        %v1275 = vld [vmem:[%s1273 + $0x4] sm:$0xf]
        %v1276 = vld [vmem:[%s1273 + $0x8] sm:$0xf]
        %v1277 = vld [vmem:[%s1273 + $0xc] sm:$0xf]
        %v1282 = vunpack.c.l.b16 %v1274
        %v1283 = vunpack.c.l.b16 %v1275
        %v1284 = vunpack.c.l.b16 %v1276
        %v1285 = vunpack.c.l.b16 %v1277
        %v1286 = vpack.c.b16 %v1283, %v1282
        %v1287 = vpack.c.b16 %v1285, %v1284
        %v1291 = vsel %vm283, %v1257, 0
        %v1294 = vsel %vm283, %v1258, 0
        %v1297 = vsel %vm283, %v1259, 0
        %v1300 = vsel %vm283, %v1260, 0
        %v1303 = vsel %vm283, %v1261, 0
        %v1306 = vsel %vm283, %v1262, 0
        %v1309 = vsel %vm283, %v1263, 0
        %v1312 = vsel %vm283, %v1264, 0
        %v1315 = vsel %vm283, %v1265, 0
        %v1318 = vsel %vm283, %v1266, 0
        %v1321 = vsel %vm283, %v1267, 0
        %v1324 = vsel %vm283, %v1268, 0
        %v1327 = vsel %vm283, %v1269, 0
        %v1330 = vsel %vm283, %v1270, 0
        %v1333 = vsel %vm283, %v1271, 0
        %v1336 = vsel %vm283, %v1272, 0
        %1338 = vmatprep.subr.bf16.mxu0 0
        %1339 = vmatpush1.bf16.msra.mxu0 %v1286
        %1340 = vmatprep.subr.bf16.mxu0 0
        %1341 = vmatpush1.bf16.msra.mxu0 %v1287
        %1342 = vmatprep.subr.bf16.mxu0 0
        %1343 = vmatpush1.bf16.msra.mxu0 0
        %1344 = vmatprep.subr.bf16.mxu0 0
        %1345 = vmatpush1.bf16.msra.mxu0 0
        %1346 = vmatprep.subr.bf16.mxu0 0
        %1347 = vmatpush1.bf16.msra.mxu0 0
        %1348 = vmatprep.subr.bf16.mxu0 0
        %1349 = vmatpush1.bf16.msra.mxu0 0
        %1350 = vmatprep.subr.bf16.mxu0 0
        %1351 = vmatpush1.bf16.msra.mxu0 0
        %1352 = vmatprep.subr.bf16.mxu0 0
        %1353 = vmatpush1.bf16.msra.mxu0 0
        %1354 = vmatprep.subr.bf16.mxu0 0
        %1355 = vmatpush1.bf16.msra.mxu0 0
        %1356 = vmatprep.subr.bf16.mxu0 0
        %1357 = vmatpush1.bf16.msra.mxu0 0
        %1358 = vmatprep.subr.bf16.mxu0 0
        %1359 = vmatpush1.bf16.msra.mxu0 0
        %1360 = vmatprep.subr.bf16.mxu0 0
        %1361 = vmatpush1.bf16.msra.mxu0 0
        %1362 = vmatprep.subr.bf16.mxu0 0
        %1363 = vmatpush1.bf16.msra.mxu0 0
        %1364 = vmatprep.subr.bf16.mxu0 0
        %1365 = vmatpush1.bf16.msra.mxu0 0
        %1366 = vmatprep.subr.bf16.mxu0 0
        %1367 = vmatpush1.bf16.msra.mxu0 0
        %1368 = vmatprep.subr.bf16.mxu0 0
        %1369 = vmatpush1.bf16.msra.mxu0 0
        %1370 = vmatprep.mubr.bf16.mxu0 0
        %1371 = vmatmul.mubr.bf16.gmra.mrb[0].mxu0 %v1291
        %v1372 = vpop.f32.mrb[0].mxu0
        %v1373 = vadd.f32 0.0, %v1372
        %v1374 = vpop.f32.mrb[0].mxu0
        %v1375 = vpop.f32.mrb[0].mxu0
        %v1376 = vadd.f32 0.0, %v1375
        %v1377 = vpop.f32.mrb[0].mxu0
        %1378 = vmatprep.mubr.bf16.mxu0 0
        %1379 = vmatmul.mubr.bf16.gmra.mrb[0].mxu0 %v1294
        %v1380 = vpop.f32.mrb[0].mxu0
        %v1381 = vadd.f32 0.0, %v1380
        %v1382 = vpop.f32.mrb[0].mxu0
        %v1383 = vpop.f32.mrb[0].mxu0
        %v1384 = vadd.f32 0.0, %v1383
        %v1385 = vpop.f32.mrb[0].mxu0
        %1386 = vmatprep.mubr.bf16.mxu0 0
        %1387 = vmatmul.mubr.bf16.gmra.mrb[0].mxu0 %v1297
        %v1388 = vpop.f32.mrb[0].mxu0
        %v1389 = vadd.f32 0.0, %v1388
        %v1390 = vpop.f32.mrb[0].mxu0
        %v1391 = vpop.f32.mrb[0].mxu0
        %v1392 = vadd.f32 0.0, %v1391
        %v1393 = vpop.f32.mrb[0].mxu0
        %1394 = vmatprep.mubr.bf16.mxu0 0
        %1395 = vmatmul.mubr.bf16.gmra.mrb[0].mxu0 %v1300
        %v1396 = vpop.f32.mrb[0].mxu0
        %v1397 = vadd.f32 0.0, %v1396
        %v1398 = vpop.f32.mrb[0].mxu0
        %v1399 = vpop.f32.mrb[0].mxu0
        %v1400 = vadd.f32 0.0, %v1399
        %v1401 = vpop.f32.mrb[0].mxu0
        %1402 = vmatprep.mubr.bf16.mxu0 0
        %1403 = vmatmul.mubr.bf16.gmra.mrb[0].mxu0 %v1303
        %v1404 = vpop.f32.mrb[0].mxu0
        %v1405 = vadd.f32 0.0, %v1404
        %v1406 = vpop.f32.mrb[0].mxu0
        %v1407 = vpop.f32.mrb[0].mxu0
        %v1408 = vadd.f32 0.0, %v1407
        %v1409 = vpop.f32.mrb[0].mxu0
        %1410 = vmatprep.mubr.bf16.mxu0 0
        %1411 = vmatmul.mubr.bf16.gmra.mrb[0].mxu0 %v1306
        %v1412 = vpop.f32.mrb[0].mxu0
        %v1413 = vadd.f32 0.0, %v1412
        %v1414 = vpop.f32.mrb[0].mxu0
        %v1415 = vpop.f32.mrb[0].mxu0
        %v1416 = vadd.f32 0.0, %v1415
        %v1417 = vpop.f32.mrb[0].mxu0
        %1418 = vmatprep.mubr.bf16.mxu0 0
        %1419 = vmatmul.mubr.bf16.gmra.mrb[0].mxu0 %v1309
        %v1420 = vpop.f32.mrb[0].mxu0
        %v1421 = vadd.f32 0.0, %v1420
        %v1422 = vpop.f32.mrb[0].mxu0
        %v1423 = vpop.f32.mrb[0].mxu0
        %v1424 = vadd.f32 0.0, %v1423
        %v1425 = vpop.f32.mrb[0].mxu0
        %1426 = vmatprep.mubr.bf16.mxu0 0
        %1427 = vmatmul.mubr.bf16.gmra.mrb[0].mxu0 %v1312
        %v1428 = vpop.f32.mrb[0].mxu0
        %v1429 = vadd.f32 0.0, %v1428
        %v1430 = vpop.f32.mrb[0].mxu0
        %v1431 = vpop.f32.mrb[0].mxu0
        %v1432 = vadd.f32 0.0, %v1431
        %v1433 = vpop.f32.mrb[0].mxu0
        %1434 = vmatprep.mubr.bf16.mxu0 0
        %1435 = vmatmul.mubr.bf16.gmra.mrb[0].mxu0 %v1315
        %v1436 = vpop.f32.mrb[0].mxu0
        %v1437 = vadd.f32 0.0, %v1436
        %v1438 = vpop.f32.mrb[0].mxu0
        %v1439 = vpop.f32.mrb[0].mxu0
        %v1440 = vadd.f32 0.0, %v1439
        %v1441 = vpop.f32.mrb[0].mxu0
        %1442 = vmatprep.mubr.bf16.mxu0 0
        %1443 = vmatmul.mubr.bf16.gmra.mrb[0].mxu0 %v1318
        %v1444 = vpop.f32.mrb[0].mxu0
        %v1445 = vadd.f32 0.0, %v1444
        %v1446 = vpop.f32.mrb[0].mxu0
        %v1447 = vpop.f32.mrb[0].mxu0
        %v1448 = vadd.f32 0.0, %v1447
        %v1449 = vpop.f32.mrb[0].mxu0
        %1450 = vmatprep.mubr.bf16.mxu0 0
        %1451 = vmatmul.mubr.bf16.gmra.mrb[0].mxu0 %v1321
        %v1452 = vpop.f32.mrb[0].mxu0
        %v1453 = vadd.f32 0.0, %v1452
        %v1454 = vpop.f32.mrb[0].mxu0
        %v1455 = vpop.f32.mrb[0].mxu0
        %v1456 = vadd.f32 0.0, %v1455
        %v1457 = vpop.f32.mrb[0].mxu0
        %1458 = vmatprep.mubr.bf16.mxu0 0
        %1459 = vmatmul.mubr.bf16.gmra.mrb[0].mxu0 %v1324
        %v1460 = vpop.f32.mrb[0].mxu0
        %v1461 = vadd.f32 0.0, %v1460
        %v1462 = vpop.f32.mrb[0].mxu0
        %v1463 = vpop.f32.mrb[0].mxu0
        %v1464 = vadd.f32 0.0, %v1463
        %v1465 = vpop.f32.mrb[0].mxu0
        %1466 = vmatprep.mubr.bf16.mxu0 0
        %1467 = vmatmul.mubr.bf16.gmra.mrb[0].mxu0 %v1327
        %v1468 = vpop.f32.mrb[0].mxu0
        %v1469 = vadd.f32 0.0, %v1468
        %v1470 = vpop.f32.mrb[0].mxu0
        %v1471 = vpop.f32.mrb[0].mxu0
        %v1472 = vadd.f32 0.0, %v1471
        %v1473 = vpop.f32.mrb[0].mxu0
        %1474 = vmatprep.mubr.bf16.mxu0 0
        %1475 = vmatmul.mubr.bf16.gmra.mrb[0].mxu0 %v1330
        %v1476 = vpop.f32.mrb[0].mxu0
        %v1477 = vadd.f32 0.0, %v1476
        %v1478 = vpop.f32.mrb[0].mxu0
        %v1479 = vpop.f32.mrb[0].mxu0
        %v1480 = vadd.f32 0.0, %v1479
        %v1481 = vpop.f32.mrb[0].mxu0
        %1482 = vmatprep.mubr.bf16.mxu0 0
        %1483 = vmatmul.mubr.bf16.gmra.mrb[0].mxu0 %v1333
        %v1484 = vpop.f32.mrb[0].mxu0
        %v1485 = vadd.f32 0.0, %v1484
        %v1486 = vpop.f32.mrb[0].mxu0
        %v1487 = vpop.f32.mrb[0].mxu0
        %v1488 = vadd.f32 0.0, %v1487
        %v1489 = vpop.f32.mrb[0].mxu0
        %1490 = vmatprep.mubr.bf16.mxu0 0
        %1491 = vmatmul.mubr.bf16.gmra.mrb[0].mxu0 %v1336
        %v1492 = vpop.f32.mrb[0].mxu0
        %v1493 = vadd.f32 0.0, %v1492
        %v1494 = vpop.f32.mrb[0].mxu0
        %v1495 = vpop.f32.mrb[0].mxu0
        %v1496 = vadd.f32 0.0, %v1495
        %v1497 = vpop.f32.mrb[0].mxu0
        %1498 = vdwg.mxu0
        %v1499 = vadd.f32 %v1193, %v1373
        %v1500 = vadd.f32 %v1194, %v1376
        %v1501 = vadd.f32 %v1195, %v1381
        %v1502 = vadd.f32 %v1196, %v1384
        %v1503 = vadd.f32 %v1197, %v1389
        %v1504 = vadd.f32 %v1198, %v1392
        %v1505 = vadd.f32 %v1199, %v1397
        %v1506 = vadd.f32 %v1200, %v1400
        %v1507 = vadd.f32 %v1201, %v1405
        %v1508 = vadd.f32 %v1202, %v1408
        %v1509 = vadd.f32 %v1203, %v1413
        %v1510 = vadd.f32 %v1204, %v1416
        %v1511 = vadd.f32 %v1205, %v1421
        %v1512 = vadd.f32 %v1206, %v1424
        %v1513 = vadd.f32 %v1207, %v1429
        %v1514 = vadd.f32 %v1208, %v1432
        %v1515 = vadd.f32 %v1209, %v1437
        %v1516 = vadd.f32 %v1210, %v1440
        %v1517 = vadd.f32 %v1211, %v1445
        %v1518 = vadd.f32 %v1212, %v1448
        %v1519 = vadd.f32 %v1213, %v1453
        %v1520 = vadd.f32 %v1214, %v1456
        %v1521 = vadd.f32 %v1215, %v1461
        %v1522 = vadd.f32 %v1216, %v1464
        %v1523 = vadd.f32 %v1217, %v1469
        %v1524 = vadd.f32 %v1218, %v1472
        %v1525 = vadd.f32 %v1219, %v1477
        %v1526 = vadd.f32 %v1220, %v1480
        %v1527 = vadd.f32 %v1221, %v1485
        %v1528 = vadd.f32 %v1222, %v1488
        %v1529 = vadd.f32 %v1223, %v1493
        %v1530 = vadd.f32 %v1224, %v1496
        %v1531 = vld [vmem:[%s339 + $0x1] sm:$0xff]
        %v1532 = vld [vmem:[%s339 + $0x9] sm:$0xff]
        %v1533 = vld [vmem:[%s339 + $0x19] sm:$0xff]
        %v1534 = vld [vmem:[%s339 + $0x21] sm:$0xff]
        %v1535 = vld [vmem:[%s339 + $0x31] sm:$0xff]
        %v1536 = vld [vmem:[%s339 + $0x39] sm:$0xff]
        %v1537 = vld [vmem:[%s339 + $0x49] sm:$0xff]
        %v1538 = vld [vmem:[%s339 + $0x51] sm:$0xff]
        %v1539 = vld [vmem:[%s339 + $0x61] sm:$0xff]
        %v1540 = vld [vmem:[%s339 + $0x69] sm:$0xff]
        %v1541 = vld [vmem:[%s339 + $0x79] sm:$0xff]
        %v1542 = vld [vmem:[%s339 + $0x81] sm:$0xff]
        %v1543 = vld [vmem:[%s339 + $0x91] sm:$0xff]
        %v1544 = vld [vmem:[%s339 + $0x99] sm:$0xff]
        %v1545 = vld [vmem:[%s339 + $0xa9] sm:$0xff]
        %v1546 = vld [vmem:[%s339 + $0xb1] sm:$0xff]
        %v1547 = vld [vmem:[%s339 + $0xc1] sm:$0xff]
        %v1548 = vld [vmem:[%s339 + $0xc9] sm:$0xff]
        %v1549 = vld [vmem:[%s339 + $0xd9] sm:$0xff]
        %v1550 = vld [vmem:[%s339 + $0xe1] sm:$0xff]
        %v1551 = vld [vmem:[%s339 + $0xf1] sm:$0xff]
        %v1552 = vld [vmem:[%s339 + $0xf9] sm:$0xff]
        %v1553 = vld [vmem:[%s339 + $0x109] sm:$0xff]
        %v1554 = vld [vmem:[%s339 + $0x111] sm:$0xff]
        %v1555 = vld [vmem:[%s339 + $0x121] sm:$0xff]
        %v1556 = vld [vmem:[%s339 + $0x129] sm:$0xff]
        %v1557 = vld [vmem:[%s339 + $0x139] sm:$0xff]
        %v1558 = vld [vmem:[%s339 + $0x141] sm:$0xff]
        %v1559 = vld [vmem:[%s339 + $0x151] sm:$0xff]
        %v1560 = vld [vmem:[%s339 + $0x159] sm:$0xff]
        %v1561 = vld [vmem:[%s339 + $0x169] sm:$0xff]
        %v1562 = vld [vmem:[%s339 + $0x171] sm:$0xff]
        %v1563 = vpack.c.bf16 %v1532, %v1531
        %v1564 = vpack.c.bf16 %v1534, %v1533
        %v1565 = vpack.c.bf16 %v1536, %v1535
        %v1566 = vpack.c.bf16 %v1538, %v1537
        %v1567 = vpack.c.bf16 %v1540, %v1539
        %v1568 = vpack.c.bf16 %v1542, %v1541
        %v1569 = vpack.c.bf16 %v1544, %v1543
        %v1570 = vpack.c.bf16 %v1546, %v1545
        %v1571 = vpack.c.bf16 %v1548, %v1547
        %v1572 = vpack.c.bf16 %v1550, %v1549
        %v1573 = vpack.c.bf16 %v1552, %v1551
        %v1574 = vpack.c.bf16 %v1554, %v1553
        %v1575 = vpack.c.bf16 %v1556, %v1555
        %v1576 = vpack.c.bf16 %v1558, %v1557
        %v1577 = vpack.c.bf16 %v1560, %v1559
        %v1578 = vpack.c.bf16 %v1562, %v1561
        %s1579 = scalar_lea.vmem [#allocation5], 64
        %v1580 = vld [vmem:[%s1579] sm:$0xf]
        %v1581 = vld [vmem:[%s1579 + $0x4] sm:$0xf]
        %v1582 = vld [vmem:[%s1579 + $0x8] sm:$0xf]
        %v1583 = vld [vmem:[%s1579 + $0xc] sm:$0xf]
        %v1588 = vunpack.c.l.b16 %v1580
        %v1589 = vunpack.c.l.b16 %v1581
        %v1590 = vunpack.c.l.b16 %v1582
        %v1591 = vunpack.c.l.b16 %v1583
        %v1592 = vpack.c.b16 %v1589, %v1588
        %v1593 = vpack.c.b16 %v1591, %v1590
        %v1597 = vsel %vm283, %v1563, 0
        %v1600 = vsel %vm283, %v1564, 0
        %v1603 = vsel %vm283, %v1565, 0
        %v1606 = vsel %vm283, %v1566, 0
        %v1609 = vsel %vm283, %v1567, 0
        %v1612 = vsel %vm283, %v1568, 0
        %v1615 = vsel %vm283, %v1569, 0
        %v1618 = vsel %vm283, %v1570, 0
        %v1621 = vsel %vm283, %v1571, 0
        %v1624 = vsel %vm283, %v1572, 0
        %v1627 = vsel %vm283, %v1573, 0
        %v1630 = vsel %vm283, %v1574, 0
        %v1633 = vsel %vm283, %v1575, 0
        %v1636 = vsel %vm283, %v1576, 0
        %v1639 = vsel %vm283, %v1577, 0
        %v1642 = vsel %vm283, %v1578, 0
        %1644 = vmatprep.subr.bf16.mxu0 0
        %1645 = vmatpush1.bf16.msra.mxu0 %v1592
        %1646 = vmatprep.subr.bf16.mxu0 0
        %1647 = vmatpush1.bf16.msra.mxu0 %v1593
        %1648 = vmatprep.subr.bf16.mxu0 0
        %1649 = vmatpush1.bf16.msra.mxu0 0
        %1650 = vmatprep.subr.bf16.mxu0 0
        %1651 = vmatpush1.bf16.msra.mxu0 0
        %1652 = vmatprep.subr.bf16.mxu0 0
        %1653 = vmatpush1.bf16.msra.mxu0 0
        %1654 = vmatprep.subr.bf16.mxu0 0
        %1655 = vmatpush1.bf16.msra.mxu0 0
        %1656 = vmatprep.subr.bf16.mxu0 0
        %1657 = vmatpush1.bf16.msra.mxu0 0
        %1658 = vmatprep.subr.bf16.mxu0 0
        %1659 = vmatpush1.bf16.msra.mxu0 0
        %1660 = vmatprep.subr.bf16.mxu0 0
        %1661 = vmatpush1.bf16.msra.mxu0 0
        %1662 = vmatprep.subr.bf16.mxu0 0
        %1663 = vmatpush1.bf16.msra.mxu0 0
        %1664 = vmatprep.subr.bf16.mxu0 0
        %1665 = vmatpush1.bf16.msra.mxu0 0
        %1666 = vmatprep.subr.bf16.mxu0 0
        %1667 = vmatpush1.bf16.msra.mxu0 0
        %1668 = vmatprep.subr.bf16.mxu0 0
        %1669 = vmatpush1.bf16.msra.mxu0 0
        %1670 = vmatprep.subr.bf16.mxu0 0
        %1671 = vmatpush1.bf16.msra.mxu0 0
        %1672 = vmatprep.subr.bf16.mxu0 0
        %1673 = vmatpush1.bf16.msra.mxu0 0
        %1674 = vmatprep.subr.bf16.mxu0 0
        %1675 = vmatpush1.bf16.msra.mxu0 0
        %1676 = vmatprep.mubr.bf16.mxu0 0
        %1677 = vmatmul.mubr.bf16.gmra.mrb[0].mxu0 %v1597
        %v1678 = vpop.f32.mrb[0].mxu0
        %v1679 = vadd.f32 0.0, %v1678
        %v1680 = vpop.f32.mrb[0].mxu0
        %v1681 = vpop.f32.mrb[0].mxu0
        %v1682 = vadd.f32 0.0, %v1681
        %v1683 = vpop.f32.mrb[0].mxu0
        %1684 = vmatprep.mubr.bf16.mxu0 0
        %1685 = vmatmul.mubr.bf16.gmra.mrb[0].mxu0 %v1600
        %v1686 = vpop.f32.mrb[0].mxu0
        %v1687 = vadd.f32 0.0, %v1686
        %v1688 = vpop.f32.mrb[0].mxu0
        %v1689 = vpop.f32.mrb[0].mxu0
        %v1690 = vadd.f32 0.0, %v1689
        %v1691 = vpop.f32.mrb[0].mxu0
        %1692 = vmatprep.mubr.bf16.mxu0 0
        %1693 = vmatmul.mubr.bf16.gmra.mrb[0].mxu0 %v1603
        %v1694 = vpop.f32.mrb[0].mxu0
        %v1695 = vadd.f32 0.0, %v1694
        %v1696 = vpop.f32.mrb[0].mxu0
        %v1697 = vpop.f32.mrb[0].mxu0
        %v1698 = vadd.f32 0.0, %v1697
        %v1699 = vpop.f32.mrb[0].mxu0
        %1700 = vmatprep.mubr.bf16.mxu0 0
        %1701 = vmatmul.mubr.bf16.gmra.mrb[0].mxu0 %v1606
        %v1702 = vpop.f32.mrb[0].mxu0
        %v1703 = vadd.f32 0.0, %v1702
        %v1704 = vpop.f32.mrb[0].mxu0
        %v1705 = vpop.f32.mrb[0].mxu0
        %v1706 = vadd.f32 0.0, %v1705
        %v1707 = vpop.f32.mrb[0].mxu0
        %1708 = vmatprep.mubr.bf16.mxu0 0
        %1709 = vmatmul.mubr.bf16.gmra.mrb[0].mxu0 %v1609
        %v1710 = vpop.f32.mrb[0].mxu0
        %v1711 = vadd.f32 0.0, %v1710
        %v1712 = vpop.f32.mrb[0].mxu0
        %v1713 = vpop.f32.mrb[0].mxu0
        %v1714 = vadd.f32 0.0, %v1713
        %v1715 = vpop.f32.mrb[0].mxu0
        %1716 = vmatprep.mubr.bf16.mxu0 0
        %1717 = vmatmul.mubr.bf16.gmra.mrb[0].mxu0 %v1612
        %v1718 = vpop.f32.mrb[0].mxu0
        %v1719 = vadd.f32 0.0, %v1718
        %v1720 = vpop.f32.mrb[0].mxu0
        %v1721 = vpop.f32.mrb[0].mxu0
        %v1722 = vadd.f32 0.0, %v1721
        %v1723 = vpop.f32.mrb[0].mxu0
        %1724 = vmatprep.mubr.bf16.mxu0 0
        %1725 = vmatmul.mubr.bf16.gmra.mrb[0].mxu0 %v1615
        %v1726 = vpop.f32.mrb[0].mxu0
        %v1727 = vadd.f32 0.0, %v1726
        %v1728 = vpop.f32.mrb[0].mxu0
        %v1729 = vpop.f32.mrb[0].mxu0
        %v1730 = vadd.f32 0.0, %v1729
        %v1731 = vpop.f32.mrb[0].mxu0
        %1732 = vmatprep.mubr.bf16.mxu0 0
        %1733 = vmatmul.mubr.bf16.gmra.mrb[0].mxu0 %v1618
        %v1734 = vpop.f32.mrb[0].mxu0
        %v1735 = vadd.f32 0.0, %v1734
        %v1736 = vpop.f32.mrb[0].mxu0
        %v1737 = vpop.f32.mrb[0].mxu0
        %v1738 = vadd.f32 0.0, %v1737
        %v1739 = vpop.f32.mrb[0].mxu0
        %1740 = vmatprep.mubr.bf16.mxu0 0
        %1741 = vmatmul.mubr.bf16.gmra.mrb[0].mxu0 %v1621
        %v1742 = vpop.f32.mrb[0].mxu0
        %v1743 = vadd.f32 0.0, %v1742
        %v1744 = vpop.f32.mrb[0].mxu0
        %v1745 = vpop.f32.mrb[0].mxu0
        %v1746 = vadd.f32 0.0, %v1745
        %v1747 = vpop.f32.mrb[0].mxu0
        %1748 = vmatprep.mubr.bf16.mxu0 0
        %1749 = vmatmul.mubr.bf16.gmra.mrb[0].mxu0 %v1624
        %v1750 = vpop.f32.mrb[0].mxu0
        %v1751 = vadd.f32 0.0, %v1750
        %v1752 = vpop.f32.mrb[0].mxu0
        %v1753 = vpop.f32.mrb[0].mxu0
        %v1754 = vadd.f32 0.0, %v1753
        %v1755 = vpop.f32.mrb[0].mxu0
        %1756 = vmatprep.mubr.bf16.mxu0 0
        %1757 = vmatmul.mubr.bf16.gmra.mrb[0].mxu0 %v1627
        %v1758 = vpop.f32.mrb[0].mxu0
        %v1759 = vadd.f32 0.0, %v1758
        %v1760 = vpop.f32.mrb[0].mxu0
        %v1761 = vpop.f32.mrb[0].mxu0
        %v1762 = vadd.f32 0.0, %v1761
        %v1763 = vpop.f32.mrb[0].mxu0
        %1764 = vmatprep.mubr.bf16.mxu0 0
        %1765 = vmatmul.mubr.bf16.gmra.mrb[0].mxu0 %v1630
        %v1766 = vpop.f32.mrb[0].mxu0
        %v1767 = vadd.f32 0.0, %v1766
        %v1768 = vpop.f32.mrb[0].mxu0
        %v1769 = vpop.f32.mrb[0].mxu0
        %v1770 = vadd.f32 0.0, %v1769
        %v1771 = vpop.f32.mrb[0].mxu0
        %1772 = vmatprep.mubr.bf16.mxu0 0
        %1773 = vmatmul.mubr.bf16.gmra.mrb[0].mxu0 %v1633
        %v1774 = vpop.f32.mrb[0].mxu0
        %v1775 = vadd.f32 0.0, %v1774
        %v1776 = vpop.f32.mrb[0].mxu0
        %v1777 = vpop.f32.mrb[0].mxu0
        %v1778 = vadd.f32 0.0, %v1777
        %v1779 = vpop.f32.mrb[0].mxu0
        %1780 = vmatprep.mubr.bf16.mxu0 0
        %1781 = vmatmul.mubr.bf16.gmra.mrb[0].mxu0 %v1636
        %v1782 = vpop.f32.mrb[0].mxu0
        %v1783 = vadd.f32 0.0, %v1782
        %v1784 = vpop.f32.mrb[0].mxu0
        %v1785 = vpop.f32.mrb[0].mxu0
        %v1786 = vadd.f32 0.0, %v1785
        %v1787 = vpop.f32.mrb[0].mxu0
        %1788 = vmatprep.mubr.bf16.mxu0 0
        %1789 = vmatmul.mubr.bf16.gmra.mrb[0].mxu0 %v1639
        %v1790 = vpop.f32.mrb[0].mxu0
        %v1791 = vadd.f32 0.0, %v1790
        %v1792 = vpop.f32.mrb[0].mxu0
        %v1793 = vpop.f32.mrb[0].mxu0
        %v1794 = vadd.f32 0.0, %v1793
        %v1795 = vpop.f32.mrb[0].mxu0
        %1796 = vmatprep.mubr.bf16.mxu0 0
        %1797 = vmatmul.mubr.bf16.gmra.mrb[0].mxu0 %v1642
        %v1798 = vpop.f32.mrb[0].mxu0
        %v1799 = vadd.f32 0.0, %v1798
        %v1800 = vpop.f32.mrb[0].mxu0
        %v1801 = vpop.f32.mrb[0].mxu0
        %v1802 = vadd.f32 0.0, %v1801
        %v1803 = vpop.f32.mrb[0].mxu0
        %1804 = vdwg.mxu0
        %v1805 = vadd.f32 %v1499, %v1679
        %v1806 = vadd.f32 %v1500, %v1682
        %v1807 = vadd.f32 %v1501, %v1687
        %v1808 = vadd.f32 %v1502, %v1690
        %v1809 = vadd.f32 %v1503, %v1695
        %v1810 = vadd.f32 %v1504, %v1698
        %v1811 = vadd.f32 %v1505, %v1703
        %v1812 = vadd.f32 %v1506, %v1706
        %v1813 = vadd.f32 %v1507, %v1711
        %v1814 = vadd.f32 %v1508, %v1714
        %v1815 = vadd.f32 %v1509, %v1719
        %v1816 = vadd.f32 %v1510, %v1722
        %v1817 = vadd.f32 %v1511, %v1727
        %v1818 = vadd.f32 %v1512, %v1730
        %v1819 = vadd.f32 %v1513, %v1735
        %v1820 = vadd.f32 %v1514, %v1738
        %v1821 = vadd.f32 %v1515, %v1743
        %v1822 = vadd.f32 %v1516, %v1746
        %v1823 = vadd.f32 %v1517, %v1751
        %v1824 = vadd.f32 %v1518, %v1754
        %v1825 = vadd.f32 %v1519, %v1759
        %v1826 = vadd.f32 %v1520, %v1762
        %v1827 = vadd.f32 %v1521, %v1767
        %v1828 = vadd.f32 %v1522, %v1770
        %v1829 = vadd.f32 %v1523, %v1775
        %v1830 = vadd.f32 %v1524, %v1778
        %v1831 = vadd.f32 %v1525, %v1783
        %v1832 = vadd.f32 %v1526, %v1786
        %v1833 = vadd.f32 %v1527, %v1791
        %v1834 = vadd.f32 %v1528, %v1794
        %v1835 = vadd.f32 %v1529, %v1799
        %v1836 = vadd.f32 %v1530, %v1802
        %v1837 = vld [vmem:[%s339 + $0x2] sm:$0xff]
        %v1838 = vld [vmem:[%s339 + $0xa] sm:$0xff]
        %v1839 = vld [vmem:[%s339 + $0x1a] sm:$0xff]
        %v1840 = vld [vmem:[%s339 + $0x22] sm:$0xff]
        %v1841 = vld [vmem:[%s339 + $0x32] sm:$0xff]
        %v1842 = vld [vmem:[%s339 + $0x3a] sm:$0xff]
        %v1843 = vld [vmem:[%s339 + $0x4a] sm:$0xff]
        %v1844 = vld [vmem:[%s339 + $0x52] sm:$0xff]
        %v1845 = vld [vmem:[%s339 + $0x62] sm:$0xff]
        %v1846 = vld [vmem:[%s339 + $0x6a] sm:$0xff]
        %v1847 = vld [vmem:[%s339 + $0x7a] sm:$0xff]
        %v1848 = vld [vmem:[%s339 + $0x82] sm:$0xff]
        %v1849 = vld [vmem:[%s339 + $0x92] sm:$0xff]
        %v1850 = vld [vmem:[%s339 + $0x9a] sm:$0xff]
        %v1851 = vld [vmem:[%s339 + $0xaa] sm:$0xff]
        %v1852 = vld [vmem:[%s339 + $0xb2] sm:$0xff]
        %v1853 = vld [vmem:[%s339 + $0xc2] sm:$0xff]
        %v1854 = vld [vmem:[%s339 + $0xca] sm:$0xff]
        %v1855 = vld [vmem:[%s339 + $0xda] sm:$0xff]
        %v1856 = vld [vmem:[%s339 + $0xe2] sm:$0xff]
        %v1857 = vld [vmem:[%s339 + $0xf2] sm:$0xff]
        %v1858 = vld [vmem:[%s339 + $0xfa] sm:$0xff]
        %v1859 = vld [vmem:[%s339 + $0x10a] sm:$0xff]
        %v1860 = vld [vmem:[%s339 + $0x112] sm:$0xff]
        %v1861 = vld [vmem:[%s339 + $0x122] sm:$0xff]
        %v1862 = vld [vmem:[%s339 + $0x12a] sm:$0xff]
        %v1863 = vld [vmem:[%s339 + $0x13a] sm:$0xff]
        %v1864 = vld [vmem:[%s339 + $0x142] sm:$0xff]
        %v1865 = vld [vmem:[%s339 + $0x152] sm:$0xff]
        %v1866 = vld [vmem:[%s339 + $0x15a] sm:$0xff]
        %v1867 = vld [vmem:[%s339 + $0x16a] sm:$0xff]
        %v1868 = vld [vmem:[%s339 + $0x172] sm:$0xff]
        %v1869 = vpack.c.bf16 %v1838, %v1837
        %v1870 = vpack.c.bf16 %v1840, %v1839
        %v1871 = vpack.c.bf16 %v1842, %v1841
        %v1872 = vpack.c.bf16 %v1844, %v1843
        %v1873 = vpack.c.bf16 %v1846, %v1845
        %v1874 = vpack.c.bf16 %v1848, %v1847
        %v1875 = vpack.c.bf16 %v1850, %v1849
        %v1876 = vpack.c.bf16 %v1852, %v1851
        %v1877 = vpack.c.bf16 %v1854, %v1853
        %v1878 = vpack.c.bf16 %v1856, %v1855
        %v1879 = vpack.c.bf16 %v1858, %v1857
        %v1880 = vpack.c.bf16 %v1860, %v1859
        %v1881 = vpack.c.bf16 %v1862, %v1861
        %v1882 = vpack.c.bf16 %v1864, %v1863
        %v1883 = vpack.c.bf16 %v1866, %v1865
        %v1884 = vpack.c.bf16 %v1868, %v1867
        %s1885 = scalar_lea.vmem [#allocation5], 80
        %v1886 = vld [vmem:[%s1885] sm:$0xf]
        %v1887 = vld [vmem:[%s1885 + $0x4] sm:$0xf]
        %v1888 = vld [vmem:[%s1885 + $0x8] sm:$0xf]
        %v1889 = vld [vmem:[%s1885 + $0xc] sm:$0xf]
        %v1894 = vunpack.c.l.b16 %v1886
        %v1895 = vunpack.c.l.b16 %v1887
        %v1896 = vunpack.c.l.b16 %v1888
        %v1897 = vunpack.c.l.b16 %v1889
        %v1898 = vpack.c.b16 %v1895, %v1894
        %v1899 = vpack.c.b16 %v1897, %v1896
        %v1903 = vsel %vm283, %v1869, 0
        %v1906 = vsel %vm283, %v1870, 0
        %v1909 = vsel %vm283, %v1871, 0
        %v1912 = vsel %vm283, %v1872, 0
        %v1915 = vsel %vm283, %v1873, 0
        %v1918 = vsel %vm283, %v1874, 0
        %v1921 = vsel %vm283, %v1875, 0
        %v1924 = vsel %vm283, %v1876, 0
        %v1927 = vsel %vm283, %v1877, 0
        %v1930 = vsel %vm283, %v1878, 0
        %v1933 = vsel %vm283, %v1879, 0
        %v1936 = vsel %vm283, %v1880, 0
        %v1939 = vsel %vm283, %v1881, 0
        %v1942 = vsel %vm283, %v1882, 0
        %v1945 = vsel %vm283, %v1883, 0
        %v1948 = vsel %vm283, %v1884, 0
        %1950 = vmatprep.subr.bf16.mxu0 0
        %1951 = vmatpush1.bf16.msra.mxu0 %v1898
        %1952 = vmatprep.subr.bf16.mxu0 0
        %1953 = vmatpush1.bf16.msra.mxu0 %v1899
        %1954 = vmatprep.subr.bf16.mxu0 0
        %1955 = vmatpush1.bf16.msra.mxu0 0
        %1956 = vmatprep.subr.bf16.mxu0 0
        %1957 = vmatpush1.bf16.msra.mxu0 0
        %1958 = vmatprep.subr.bf16.mxu0 0
        %1959 = vmatpush1.bf16.msra.mxu0 0
        %1960 = vmatprep.subr.bf16.mxu0 0
        %1961 = vmatpush1.bf16.msra.mxu0 0
        %1962 = vmatprep.subr.bf16.mxu0 0
        %1963 = vmatpush1.bf16.msra.mxu0 0
        %1964 = vmatprep.subr.bf16.mxu0 0
        %1965 = vmatpush1.bf16.msra.mxu0 0
        %1966 = vmatprep.subr.bf16.mxu0 0
        %1967 = vmatpush1.bf16.msra.mxu0 0
        %1968 = vmatprep.subr.bf16.mxu0 0
        %1969 = vmatpush1.bf16.msra.mxu0 0
        %1970 = vmatprep.subr.bf16.mxu0 0
        %1971 = vmatpush1.bf16.msra.mxu0 0
        %1972 = vmatprep.subr.bf16.mxu0 0
        %1973 = vmatpush1.bf16.msra.mxu0 0
        %1974 = vmatprep.subr.bf16.mxu0 0
        %1975 = vmatpush1.bf16.msra.mxu0 0
        %1976 = vmatprep.subr.bf16.mxu0 0
        %1977 = vmatpush1.bf16.msra.mxu0 0
        %1978 = vmatprep.subr.bf16.mxu0 0
        %1979 = vmatpush1.bf16.msra.mxu0 0
        %1980 = vmatprep.subr.bf16.mxu0 0
        %1981 = vmatpush1.bf16.msra.mxu0 0
        %1982 = vmatprep.mubr.bf16.mxu0 0
        %1983 = vmatmul.mubr.bf16.gmra.mrb[0].mxu0 %v1903
        %v1984 = vpop.f32.mrb[0].mxu0
        %v1985 = vadd.f32 0.0, %v1984
        %v1986 = vpop.f32.mrb[0].mxu0
        %v1987 = vpop.f32.mrb[0].mxu0
        %v1988 = vadd.f32 0.0, %v1987
        %v1989 = vpop.f32.mrb[0].mxu0
        %1990 = vmatprep.mubr.bf16.mxu0 0
        %1991 = vmatmul.mubr.bf16.gmra.mrb[0].mxu0 %v1906
        %v1992 = vpop.f32.mrb[0].mxu0
        %v1993 = vadd.f32 0.0, %v1992
        %v1994 = vpop.f32.mrb[0].mxu0
        %v1995 = vpop.f32.mrb[0].mxu0
        %v1996 = vadd.f32 0.0, %v1995
        %v1997 = vpop.f32.mrb[0].mxu0
        %1998 = vmatprep.mubr.bf16.mxu0 0
        %1999 = vmatmul.mubr.bf16.gmra.mrb[0].mxu0 %v1909
        %v2000 = vpop.f32.mrb[0].mxu0
        %v2001 = vadd.f32 0.0, %v2000
        %v2002 = vpop.f32.mrb[0].mxu0
        %v2003 = vpop.f32.mrb[0].mxu0
        %v2004 = vadd.f32 0.0, %v2003
        %v2005 = vpop.f32.mrb[0].mxu0
        %2006 = vmatprep.mubr.bf16.mxu0 0
        %2007 = vmatmul.mubr.bf16.gmra.mrb[0].mxu0 %v1912
        %v2008 = vpop.f32.mrb[0].mxu0
        %v2009 = vadd.f32 0.0, %v2008
        %v2010 = vpop.f32.mrb[0].mxu0
        %v2011 = vpop.f32.mrb[0].mxu0
        %v2012 = vadd.f32 0.0, %v2011
        %v2013 = vpop.f32.mrb[0].mxu0
        %2014 = vmatprep.mubr.bf16.mxu0 0
        %2015 = vmatmul.mubr.bf16.gmra.mrb[0].mxu0 %v1915
        %v2016 = vpop.f32.mrb[0].mxu0
        %v2017 = vadd.f32 0.0, %v2016
        %v2018 = vpop.f32.mrb[0].mxu0
        %v2019 = vpop.f32.mrb[0].mxu0
        %v2020 = vadd.f32 0.0, %v2019
        %v2021 = vpop.f32.mrb[0].mxu0
        %2022 = vmatprep.mubr.bf16.mxu0 0
        %2023 = vmatmul.mubr.bf16.gmra.mrb[0].mxu0 %v1918
        %v2024 = vpop.f32.mrb[0].mxu0
        %v2025 = vadd.f32 0.0, %v2024
        %v2026 = vpop.f32.mrb[0].mxu0
        %v2027 = vpop.f32.mrb[0].mxu0
        %v2028 = vadd.f32 0.0, %v2027
        %v2029 = vpop.f32.mrb[0].mxu0
        %2030 = vmatprep.mubr.bf16.mxu0 0
        %2031 = vmatmul.mubr.bf16.gmra.mrb[0].mxu0 %v1921
        %v2032 = vpop.f32.mrb[0].mxu0
        %v2033 = vadd.f32 0.0, %v2032
        %v2034 = vpop.f32.mrb[0].mxu0
        %v2035 = vpop.f32.mrb[0].mxu0
        %v2036 = vadd.f32 0.0, %v2035
        %v2037 = vpop.f32.mrb[0].mxu0
        %2038 = vmatprep.mubr.bf16.mxu0 0
        %2039 = vmatmul.mubr.bf16.gmra.mrb[0].mxu0 %v1924
        %v2040 = vpop.f32.mrb[0].mxu0
        %v2041 = vadd.f32 0.0, %v2040
        %v2042 = vpop.f32.mrb[0].mxu0
        %v2043 = vpop.f32.mrb[0].mxu0
        %v2044 = vadd.f32 0.0, %v2043
        %v2045 = vpop.f32.mrb[0].mxu0
        %2046 = vmatprep.mubr.bf16.mxu0 0
        %2047 = vmatmul.mubr.bf16.gmra.mrb[0].mxu0 %v1927
        %v2048 = vpop.f32.mrb[0].mxu0
        %v2049 = vadd.f32 0.0, %v2048
        %v2050 = vpop.f32.mrb[0].mxu0
        %v2051 = vpop.f32.mrb[0].mxu0
        %v2052 = vadd.f32 0.0, %v2051
        %v2053 = vpop.f32.mrb[0].mxu0
        %2054 = vmatprep.mubr.bf16.mxu0 0
        %2055 = vmatmul.mubr.bf16.gmra.mrb[0].mxu0 %v1930
        %v2056 = vpop.f32.mrb[0].mxu0
        %v2057 = vadd.f32 0.0, %v2056
        %v2058 = vpop.f32.mrb[0].mxu0
        %v2059 = vpop.f32.mrb[0].mxu0
        %v2060 = vadd.f32 0.0, %v2059
        %v2061 = vpop.f32.mrb[0].mxu0
        %2062 = vmatprep.mubr.bf16.mxu0 0
        %2063 = vmatmul.mubr.bf16.gmra.mrb[0].mxu0 %v1933
        %v2064 = vpop.f32.mrb[0].mxu0
        %v2065 = vadd.f32 0.0, %v2064
        %v2066 = vpop.f32.mrb[0].mxu0
        %v2067 = vpop.f32.mrb[0].mxu0
        %v2068 = vadd.f32 0.0, %v2067
        %v2069 = vpop.f32.mrb[0].mxu0
        %2070 = vmatprep.mubr.bf16.mxu0 0
        %2071 = vmatmul.mubr.bf16.gmra.mrb[0].mxu0 %v1936
        %v2072 = vpop.f32.mrb[0].mxu0
        %v2073 = vadd.f32 0.0, %v2072
        %v2074 = vpop.f32.mrb[0].mxu0
        %v2075 = vpop.f32.mrb[0].mxu0
        %v2076 = vadd.f32 0.0, %v2075
        %v2077 = vpop.f32.mrb[0].mxu0
        %2078 = vmatprep.mubr.bf16.mxu0 0
        %2079 = vmatmul.mubr.bf16.gmra.mrb[0].mxu0 %v1939
        %v2080 = vpop.f32.mrb[0].mxu0
        %v2081 = vadd.f32 0.0, %v2080
        %v2082 = vpop.f32.mrb[0].mxu0
        %v2083 = vpop.f32.mrb[0].mxu0
        %v2084 = vadd.f32 0.0, %v2083
        %v2085 = vpop.f32.mrb[0].mxu0
        %2086 = vmatprep.mubr.bf16.mxu0 0
        %2087 = vmatmul.mubr.bf16.gmra.mrb[0].mxu0 %v1942
        %v2088 = vpop.f32.mrb[0].mxu0
        %v2089 = vadd.f32 0.0, %v2088
        %v2090 = vpop.f32.mrb[0].mxu0
        %v2091 = vpop.f32.mrb[0].mxu0
        %v2092 = vadd.f32 0.0, %v2091
        %v2093 = vpop.f32.mrb[0].mxu0
        %2094 = vmatprep.mubr.bf16.mxu0 0
        %2095 = vmatmul.mubr.bf16.gmra.mrb[0].mxu0 %v1945
        %v2096 = vpop.f32.mrb[0].mxu0
        %v2097 = vadd.f32 0.0, %v2096
        %v2098 = vpop.f32.mrb[0].mxu0
        %v2099 = vpop.f32.mrb[0].mxu0
        %v2100 = vadd.f32 0.0, %v2099
        %v2101 = vpop.f32.mrb[0].mxu0
        %2102 = vmatprep.mubr.bf16.mxu0 0
        %2103 = vmatmul.mubr.bf16.gmra.mrb[0].mxu0 %v1948
        %v2104 = vpop.f32.mrb[0].mxu0
        %v2105 = vadd.f32 0.0, %v2104
        %v2106 = vpop.f32.mrb[0].mxu0
        %v2107 = vpop.f32.mrb[0].mxu0
        %v2108 = vadd.f32 0.0, %v2107
        %v2109 = vpop.f32.mrb[0].mxu0
        %2110 = vdwg.mxu0
        %v2111 = vadd.f32 %v1805, %v1985
        %v2112 = vadd.f32 %v1806, %v1988
        %v2113 = vadd.f32 %v1807, %v1993
        %v2114 = vadd.f32 %v1808, %v1996
        %v2115 = vadd.f32 %v1809, %v2001
        %v2116 = vadd.f32 %v1810, %v2004
        %v2117 = vadd.f32 %v1811, %v2009
        %v2118 = vadd.f32 %v1812, %v2012
        %v2119 = vadd.f32 %v1813, %v2017
        %v2120 = vadd.f32 %v1814, %v2020
        %v2121 = vadd.f32 %v1815, %v2025
        %v2122 = vadd.f32 %v1816, %v2028
        %v2123 = vadd.f32 %v1817, %v2033
        %v2124 = vadd.f32 %v1818, %v2036
        %v2125 = vadd.f32 %v1819, %v2041
        %v2126 = vadd.f32 %v1820, %v2044
        %v2127 = vadd.f32 %v1821, %v2049
        %v2128 = vadd.f32 %v1822, %v2052
        %v2129 = vadd.f32 %v1823, %v2057
        %v2130 = vadd.f32 %v1824, %v2060
        %v2131 = vadd.f32 %v1825, %v2065
        %v2132 = vadd.f32 %v1826, %v2068
        %v2133 = vadd.f32 %v1827, %v2073
        %v2134 = vadd.f32 %v1828, %v2076
        %v2135 = vadd.f32 %v1829, %v2081
        %v2136 = vadd.f32 %v1830, %v2084
        %v2137 = vadd.f32 %v1831, %v2089
        %v2138 = vadd.f32 %v1832, %v2092
        %v2139 = vadd.f32 %v1833, %v2097
        %v2140 = vadd.f32 %v1834, %v2100
        %v2141 = vadd.f32 %v1835, %v2105
        %v2142 = vadd.f32 %v1836, %v2108
        %s2143 = scalar_lea.vmem [#allocation2], 48
        %v2144 = vld [vmem:[%s2143] sm:$0xff]
        %v2145 = vld [vmem:[%s2143 + $0x8] sm:$0xff]
        %v2146 = vld [vmem:[%s2143 + $0x18] sm:$0xff]
        %v2147 = vld [vmem:[%s2143 + $0x20] sm:$0xff]
        %v2148 = vld [vmem:[%s2143 + $0x30] sm:$0xff]
        %v2149 = vld [vmem:[%s2143 + $0x38] sm:$0xff]
        %v2150 = vld [vmem:[%s2143 + $0x48] sm:$0xff]
        %v2151 = vld [vmem:[%s2143 + $0x50] sm:$0xff]
        %v2152 = vld [vmem:[%s2143 + $0x60] sm:$0xff]
        %v2153 = vld [vmem:[%s2143 + $0x68] sm:$0xff]
        %v2154 = vld [vmem:[%s2143 + $0x78] sm:$0xff]
        %v2155 = vld [vmem:[%s2143 + $0x80] sm:$0xff]
        %v2156 = vld [vmem:[%s2143 + $0x90] sm:$0xff]
        %v2157 = vld [vmem:[%s2143 + $0x98] sm:$0xff]
        %v2158 = vld [vmem:[%s2143 + $0xa8] sm:$0xff]
        %v2159 = vld [vmem:[%s2143 + $0xb0] sm:$0xff]
        %v2160 = vld [vmem:[%s2143 + $0xc0] sm:$0xff]
        %v2161 = vld [vmem:[%s2143 + $0xc8] sm:$0xff]
        %v2162 = vld [vmem:[%s2143 + $0xd8] sm:$0xff]
        %v2163 = vld [vmem:[%s2143 + $0xe0] sm:$0xff]
        %v2164 = vld [vmem:[%s2143 + $0xf0] sm:$0xff]
        %v2165 = vld [vmem:[%s2143 + $0xf8] sm:$0xff]
        %v2166 = vld [vmem:[%s2143 + $0x108] sm:$0xff]
        %v2167 = vld [vmem:[%s2143 + $0x110] sm:$0xff]
        %v2168 = vld [vmem:[%s2143 + $0x120] sm:$0xff]
        %v2169 = vld [vmem:[%s2143 + $0x128] sm:$0xff]
        %v2170 = vld [vmem:[%s2143 + $0x138] sm:$0xff]
        %v2171 = vld [vmem:[%s2143 + $0x140] sm:$0xff]
        %v2172 = vld [vmem:[%s2143 + $0x150] sm:$0xff]
        %v2173 = vld [vmem:[%s2143 + $0x158] sm:$0xff]
        %v2174 = vld [vmem:[%s2143 + $0x168] sm:$0xff]
        %v2175 = vld [vmem:[%s2143 + $0x170] sm:$0xff]
        %v2176 = vpack.c.bf16 %v2145, %v2144
        %v2177 = vpack.c.bf16 %v2147, %v2146
        %v2178 = vpack.c.bf16 %v2149, %v2148
        %v2179 = vpack.c.bf16 %v2151, %v2150
        %v2180 = vpack.c.bf16 %v2153, %v2152
        %v2181 = vpack.c.bf16 %v2155, %v2154
        %v2182 = vpack.c.bf16 %v2157, %v2156
        %v2183 = vpack.c.bf16 %v2159, %v2158
        %v2184 = vpack.c.bf16 %v2161, %v2160
        %v2185 = vpack.c.bf16 %v2163, %v2162
        %v2186 = vpack.c.bf16 %v2165, %v2164
        %v2187 = vpack.c.bf16 %v2167, %v2166
        %v2188 = vpack.c.bf16 %v2169, %v2168
        %v2189 = vpack.c.bf16 %v2171, %v2170
        %v2190 = vpack.c.bf16 %v2173, %v2172
        %v2191 = vpack.c.bf16 %v2175, %v2174
        %s2192 = scalar_lea.vmem [#allocation5], 96
        %v2193 = vld [vmem:[%s2192] sm:$0xf]
        %v2194 = vld [vmem:[%s2192 + $0x4] sm:$0xf]
        %v2195 = vld [vmem:[%s2192 + $0x8] sm:$0xf]
        %v2196 = vld [vmem:[%s2192 + $0xc] sm:$0xf]
        %v2201 = vunpack.c.l.b16 %v2193
        %v2202 = vunpack.c.l.b16 %v2194
        %v2203 = vunpack.c.l.b16 %v2195
        %v2204 = vunpack.c.l.b16 %v2196
        %v2205 = vpack.c.b16 %v2202, %v2201
        %v2206 = vpack.c.b16 %v2204, %v2203
        %v2210 = vsel %vm283, %v2176, 0
        %v2213 = vsel %vm283, %v2177, 0
        %v2216 = vsel %vm283, %v2178, 0
        %v2219 = vsel %vm283, %v2179, 0
        %v2222 = vsel %vm283, %v2180, 0
        %v2225 = vsel %vm283, %v2181, 0
        %v2228 = vsel %vm283, %v2182, 0
        %v2231 = vsel %vm283, %v2183, 0
        %v2234 = vsel %vm283, %v2184, 0
        %v2237 = vsel %vm283, %v2185, 0
        %v2240 = vsel %vm283, %v2186, 0
        %v2243 = vsel %vm283, %v2187, 0
        %v2246 = vsel %vm283, %v2188, 0
        %v2249 = vsel %vm283, %v2189, 0
        %v2252 = vsel %vm283, %v2190, 0
        %v2255 = vsel %vm283, %v2191, 0
        %2257 = vmatprep.subr.bf16.mxu0 0
        %2258 = vmatpush1.bf16.msra.mxu0 %v2205
        %2259 = vmatprep.subr.bf16.mxu0 0
        %2260 = vmatpush1.bf16.msra.mxu0 %v2206
        %2261 = vmatprep.subr.bf16.mxu0 0
        %2262 = vmatpush1.bf16.msra.mxu0 0
        %2263 = vmatprep.subr.bf16.mxu0 0
        %2264 = vmatpush1.bf16.msra.mxu0 0
        %2265 = vmatprep.subr.bf16.mxu0 0
        %2266 = vmatpush1.bf16.msra.mxu0 0
        %2267 = vmatprep.subr.bf16.mxu0 0
        %2268 = vmatpush1.bf16.msra.mxu0 0
        %2269 = vmatprep.subr.bf16.mxu0 0
        %2270 = vmatpush1.bf16.msra.mxu0 0
        %2271 = vmatprep.subr.bf16.mxu0 0
        %2272 = vmatpush1.bf16.msra.mxu0 0
        %2273 = vmatprep.subr.bf16.mxu0 0
        %2274 = vmatpush1.bf16.msra.mxu0 0
        %2275 = vmatprep.subr.bf16.mxu0 0
        %2276 = vmatpush1.bf16.msra.mxu0 0
        %2277 = vmatprep.subr.bf16.mxu0 0
        %2278 = vmatpush1.bf16.msra.mxu0 0
        %2279 = vmatprep.subr.bf16.mxu0 0
        %2280 = vmatpush1.bf16.msra.mxu0 0
        %2281 = vmatprep.subr.bf16.mxu0 0
        %2282 = vmatpush1.bf16.msra.mxu0 0
        %2283 = vmatprep.subr.bf16.mxu0 0
        %2284 = vmatpush1.bf16.msra.mxu0 0
        %2285 = vmatprep.subr.bf16.mxu0 0
        %2286 = vmatpush1.bf16.msra.mxu0 0
        %2287 = vmatprep.subr.bf16.mxu0 0
        %2288 = vmatpush1.bf16.msra.mxu0 0
        %2289 = vmatprep.mubr.bf16.mxu0 0
        %2290 = vmatmul.mubr.bf16.gmra.mrb[0].mxu0 %v2210
        %v2291 = vpop.f32.mrb[0].mxu0
        %v2292 = vadd.f32 0.0, %v2291
        %v2293 = vpop.f32.mrb[0].mxu0
        %v2294 = vpop.f32.mrb[0].mxu0
        %v2295 = vadd.f32 0.0, %v2294
        %v2296 = vpop.f32.mrb[0].mxu0
        %2297 = vmatprep.mubr.bf16.mxu0 0
        %2298 = vmatmul.mubr.bf16.gmra.mrb[0].mxu0 %v2213
        %v2299 = vpop.f32.mrb[0].mxu0
        %v2300 = vadd.f32 0.0, %v2299
        %v2301 = vpop.f32.mrb[0].mxu0
        %v2302 = vpop.f32.mrb[0].mxu0
        %v2303 = vadd.f32 0.0, %v2302
        %v2304 = vpop.f32.mrb[0].mxu0
        %2305 = vmatprep.mubr.bf16.mxu0 0
        %2306 = vmatmul.mubr.bf16.gmra.mrb[0].mxu0 %v2216
        %v2307 = vpop.f32.mrb[0].mxu0
        %v2308 = vadd.f32 0.0, %v2307
        %v2309 = vpop.f32.mrb[0].mxu0
        %v2310 = vpop.f32.mrb[0].mxu0
        %v2311 = vadd.f32 0.0, %v2310
        %v2312 = vpop.f32.mrb[0].mxu0
        %2313 = vmatprep.mubr.bf16.mxu0 0
        %2314 = vmatmul.mubr.bf16.gmra.mrb[0].mxu0 %v2219
        %v2315 = vpop.f32.mrb[0].mxu0
        %v2316 = vadd.f32 0.0, %v2315
        %v2317 = vpop.f32.mrb[0].mxu0
        %v2318 = vpop.f32.mrb[0].mxu0
        %v2319 = vadd.f32 0.0, %v2318
        %v2320 = vpop.f32.mrb[0].mxu0
        %2321 = vmatprep.mubr.bf16.mxu0 0
        %2322 = vmatmul.mubr.bf16.gmra.mrb[0].mxu0 %v2222
        %v2323 = vpop.f32.mrb[0].mxu0
        %v2324 = vadd.f32 0.0, %v2323
        %v2325 = vpop.f32.mrb[0].mxu0
        %v2326 = vpop.f32.mrb[0].mxu0
        %v2327 = vadd.f32 0.0, %v2326
        %v2328 = vpop.f32.mrb[0].mxu0
        %2329 = vmatprep.mubr.bf16.mxu0 0
        %2330 = vmatmul.mubr.bf16.gmra.mrb[0].mxu0 %v2225
        %v2331 = vpop.f32.mrb[0].mxu0
        %v2332 = vadd.f32 0.0, %v2331
        %v2333 = vpop.f32.mrb[0].mxu0
        %v2334 = vpop.f32.mrb[0].mxu0
        %v2335 = vadd.f32 0.0, %v2334
        %v2336 = vpop.f32.mrb[0].mxu0
        %2337 = vmatprep.mubr.bf16.mxu0 0
        %2338 = vmatmul.mubr.bf16.gmra.mrb[0].mxu0 %v2228
        %v2339 = vpop.f32.mrb[0].mxu0
        %v2340 = vadd.f32 0.0, %v2339
        %v2341 = vpop.f32.mrb[0].mxu0
        %v2342 = vpop.f32.mrb[0].mxu0
        %v2343 = vadd.f32 0.0, %v2342
        %v2344 = vpop.f32.mrb[0].mxu0
        %2345 = vmatprep.mubr.bf16.mxu0 0
        %2346 = vmatmul.mubr.bf16.gmra.mrb[0].mxu0 %v2231
        %v2347 = vpop.f32.mrb[0].mxu0
        %v2348 = vadd.f32 0.0, %v2347
        %v2349 = vpop.f32.mrb[0].mxu0
        %v2350 = vpop.f32.mrb[0].mxu0
        %v2351 = vadd.f32 0.0, %v2350
        %v2352 = vpop.f32.mrb[0].mxu0
        %2353 = vmatprep.mubr.bf16.mxu0 0
        %2354 = vmatmul.mubr.bf16.gmra.mrb[0].mxu0 %v2234
        %v2355 = vpop.f32.mrb[0].mxu0
        %v2356 = vadd.f32 0.0, %v2355
        %v2357 = vpop.f32.mrb[0].mxu0
        %v2358 = vpop.f32.mrb[0].mxu0
        %v2359 = vadd.f32 0.0, %v2358
        %v2360 = vpop.f32.mrb[0].mxu0
        %2361 = vmatprep.mubr.bf16.mxu0 0
        %2362 = vmatmul.mubr.bf16.gmra.mrb[0].mxu0 %v2237
        %v2363 = vpop.f32.mrb[0].mxu0
        %v2364 = vadd.f32 0.0, %v2363
        %v2365 = vpop.f32.mrb[0].mxu0
        %v2366 = vpop.f32.mrb[0].mxu0
        %v2367 = vadd.f32 0.0, %v2366
        %v2368 = vpop.f32.mrb[0].mxu0
        %2369 = vmatprep.mubr.bf16.mxu0 0
        %2370 = vmatmul.mubr.bf16.gmra.mrb[0].mxu0 %v2240
        %v2371 = vpop.f32.mrb[0].mxu0
        %v2372 = vadd.f32 0.0, %v2371
        %v2373 = vpop.f32.mrb[0].mxu0
        %v2374 = vpop.f32.mrb[0].mxu0
        %v2375 = vadd.f32 0.0, %v2374
        %v2376 = vpop.f32.mrb[0].mxu0
        %2377 = vmatprep.mubr.bf16.mxu0 0
        %2378 = vmatmul.mubr.bf16.gmra.mrb[0].mxu0 %v2243
        %v2379 = vpop.f32.mrb[0].mxu0
        %v2380 = vadd.f32 0.0, %v2379
        %v2381 = vpop.f32.mrb[0].mxu0
        %v2382 = vpop.f32.mrb[0].mxu0
        %v2383 = vadd.f32 0.0, %v2382
        %v2384 = vpop.f32.mrb[0].mxu0
        %2385 = vmatprep.mubr.bf16.mxu0 0
        %2386 = vmatmul.mubr.bf16.gmra.mrb[0].mxu0 %v2246
        %v2387 = vpop.f32.mrb[0].mxu0
        %v2388 = vadd.f32 0.0, %v2387
        %v2389 = vpop.f32.mrb[0].mxu0
        %v2390 = vpop.f32.mrb[0].mxu0
        %v2391 = vadd.f32 0.0, %v2390
        %v2392 = vpop.f32.mrb[0].mxu0
        %2393 = vmatprep.mubr.bf16.mxu0 0
        %2394 = vmatmul.mubr.bf16.gmra.mrb[0].mxu0 %v2249
        %v2395 = vpop.f32.mrb[0].mxu0
        %v2396 = vadd.f32 0.0, %v2395
        %v2397 = vpop.f32.mrb[0].mxu0
        %v2398 = vpop.f32.mrb[0].mxu0
        %v2399 = vadd.f32 0.0, %v2398
        %v2400 = vpop.f32.mrb[0].mxu0
        %2401 = vmatprep.mubr.bf16.mxu0 0
        %2402 = vmatmul.mubr.bf16.gmra.mrb[0].mxu0 %v2252
        %v2403 = vpop.f32.mrb[0].mxu0
        %v2404 = vadd.f32 0.0, %v2403
        %v2405 = vpop.f32.mrb[0].mxu0
        %v2406 = vpop.f32.mrb[0].mxu0
        %v2407 = vadd.f32 0.0, %v2406
        %v2408 = vpop.f32.mrb[0].mxu0
        %2409 = vmatprep.mubr.bf16.mxu0 0
        %2410 = vmatmul.mubr.bf16.gmra.mrb[0].mxu0 %v2255
        %v2411 = vpop.f32.mrb[0].mxu0
        %v2412 = vadd.f32 0.0, %v2411
        %v2413 = vpop.f32.mrb[0].mxu0
        %v2414 = vpop.f32.mrb[0].mxu0
        %v2415 = vadd.f32 0.0, %v2414
        %v2416 = vpop.f32.mrb[0].mxu0
        %2417 = vdwg.mxu0
        %v2418 = vadd.f32 %v2111, %v2292
        %v2419 = vadd.f32 %v2112, %v2295
        %v2420 = vadd.f32 %v2113, %v2300
        %v2421 = vadd.f32 %v2114, %v2303
        %v2422 = vadd.f32 %v2115, %v2308
        %v2423 = vadd.f32 %v2116, %v2311
        %v2424 = vadd.f32 %v2117, %v2316
        %v2425 = vadd.f32 %v2118, %v2319
        %v2426 = vadd.f32 %v2119, %v2324
        %v2427 = vadd.f32 %v2120, %v2327
        %v2428 = vadd.f32 %v2121, %v2332
        %v2429 = vadd.f32 %v2122, %v2335
        %v2430 = vadd.f32 %v2123, %v2340
        %v2431 = vadd.f32 %v2124, %v2343
        %v2432 = vadd.f32 %v2125, %v2348
        %v2433 = vadd.f32 %v2126, %v2351
        %v2434 = vadd.f32 %v2127, %v2356
        %v2435 = vadd.f32 %v2128, %v2359
        %v2436 = vadd.f32 %v2129, %v2364
        %v2437 = vadd.f32 %v2130, %v2367
        %v2438 = vadd.f32 %v2131, %v2372
        %v2439 = vadd.f32 %v2132, %v2375
        %v2440 = vadd.f32 %v2133, %v2380
        %v2441 = vadd.f32 %v2134, %v2383
        %v2442 = vadd.f32 %v2135, %v2388
        %v2443 = vadd.f32 %v2136, %v2391
        %v2444 = vadd.f32 %v2137, %v2396
        %v2445 = vadd.f32 %v2138, %v2399
        %v2446 = vadd.f32 %v2139, %v2404
        %v2447 = vadd.f32 %v2140, %v2407
        %v2448 = vadd.f32 %v2141, %v2412
        %v2449 = vadd.f32 %v2142, %v2415
        %v2450 = vld [vmem:[%s2143 + $0x1] sm:$0xff]
        %v2451 = vld [vmem:[%s2143 + $0x9] sm:$0xff]
        %v2452 = vld [vmem:[%s2143 + $0x19] sm:$0xff]
        %v2453 = vld [vmem:[%s2143 + $0x21] sm:$0xff]
        %v2454 = vld [vmem:[%s2143 + $0x31] sm:$0xff]
        %v2455 = vld [vmem:[%s2143 + $0x39] sm:$0xff]
        %v2456 = vld [vmem:[%s2143 + $0x49] sm:$0xff]
        %v2457 = vld [vmem:[%s2143 + $0x51] sm:$0xff]
        %v2458 = vld [vmem:[%s2143 + $0x61] sm:$0xff]
        %v2459 = vld [vmem:[%s2143 + $0x69] sm:$0xff]
        %v2460 = vld [vmem:[%s2143 + $0x79] sm:$0xff]
        %v2461 = vld [vmem:[%s2143 + $0x81] sm:$0xff]
        %v2462 = vld [vmem:[%s2143 + $0x91] sm:$0xff]
        %v2463 = vld [vmem:[%s2143 + $0x99] sm:$0xff]
        %v2464 = vld [vmem:[%s2143 + $0xa9] sm:$0xff]
        %v2465 = vld [vmem:[%s2143 + $0xb1] sm:$0xff]
        %v2466 = vld [vmem:[%s2143 + $0xc1] sm:$0xff]
        %v2467 = vld [vmem:[%s2143 + $0xc9] sm:$0xff]
        %v2468 = vld [vmem:[%s2143 + $0xd9] sm:$0xff]
        %v2469 = vld [vmem:[%s2143 + $0xe1] sm:$0xff]
        %v2470 = vld [vmem:[%s2143 + $0xf1] sm:$0xff]
        %v2471 = vld [vmem:[%s2143 + $0xf9] sm:$0xff]
        %v2472 = vld [vmem:[%s2143 + $0x109] sm:$0xff]
        %v2473 = vld [vmem:[%s2143 + $0x111] sm:$0xff]
        %v2474 = vld [vmem:[%s2143 + $0x121] sm:$0xff]
        %v2475 = vld [vmem:[%s2143 + $0x129] sm:$0xff]
        %v2476 = vld [vmem:[%s2143 + $0x139] sm:$0xff]
        %v2477 = vld [vmem:[%s2143 + $0x141] sm:$0xff]
        %v2478 = vld [vmem:[%s2143 + $0x151] sm:$0xff]
        %v2479 = vld [vmem:[%s2143 + $0x159] sm:$0xff]
        %v2480 = vld [vmem:[%s2143 + $0x169] sm:$0xff]
        %v2481 = vld [vmem:[%s2143 + $0x171] sm:$0xff]
        %v2482 = vpack.c.bf16 %v2451, %v2450
        %v2483 = vpack.c.bf16 %v2453, %v2452
        %v2484 = vpack.c.bf16 %v2455, %v2454
        %v2485 = vpack.c.bf16 %v2457, %v2456
        %v2486 = vpack.c.bf16 %v2459, %v2458
        %v2487 = vpack.c.bf16 %v2461, %v2460
        %v2488 = vpack.c.bf16 %v2463, %v2462
        %v2489 = vpack.c.bf16 %v2465, %v2464
        %v2490 = vpack.c.bf16 %v2467, %v2466
        %v2491 = vpack.c.bf16 %v2469, %v2468
        %v2492 = vpack.c.bf16 %v2471, %v2470
        %v2493 = vpack.c.bf16 %v2473, %v2472
        %v2494 = vpack.c.bf16 %v2475, %v2474
        %v2495 = vpack.c.bf16 %v2477, %v2476
        %v2496 = vpack.c.bf16 %v2479, %v2478
        %v2497 = vpack.c.bf16 %v2481, %v2480
        %s2498 = scalar_lea.vmem [#allocation5], 112
        %v2499 = vld [vmem:[%s2498] sm:$0xf]
        %v2500 = vld [vmem:[%s2498 + $0x4] sm:$0xf]
        %v2501 = vld [vmem:[%s2498 + $0x8] sm:$0xf]
        %v2502 = vld [vmem:[%s2498 + $0xc] sm:$0xf]
        %v2507 = vunpack.c.l.b16 %v2499
        %v2508 = vunpack.c.l.b16 %v2500
        %v2509 = vunpack.c.l.b16 %v2501
        %v2510 = vunpack.c.l.b16 %v2502
        %v2511 = vpack.c.b16 %v2508, %v2507
        %v2512 = vpack.c.b16 %v2510, %v2509
        %v2516 = vsel %vm283, %v2482, 0
        %v2519 = vsel %vm283, %v2483, 0
        %v2522 = vsel %vm283, %v2484, 0
        %v2525 = vsel %vm283, %v2485, 0
        %v2528 = vsel %vm283, %v2486, 0
        %v2531 = vsel %vm283, %v2487, 0
        %v2534 = vsel %vm283, %v2488, 0
        %v2537 = vsel %vm283, %v2489, 0
        %v2540 = vsel %vm283, %v2490, 0
        %v2543 = vsel %vm283, %v2491, 0
        %v2546 = vsel %vm283, %v2492, 0
        %v2549 = vsel %vm283, %v2493, 0
        %v2552 = vsel %vm283, %v2494, 0
        %v2555 = vsel %vm283, %v2495, 0
        %v2558 = vsel %vm283, %v2496, 0
        %v2561 = vsel %vm283, %v2497, 0
        %2563 = vmatprep.subr.bf16.mxu0 0
        %2564 = vmatpush1.bf16.msra.mxu0 %v2511
        %2565 = vmatprep.subr.bf16.mxu0 0
        %2566 = vmatpush1.bf16.msra.mxu0 %v2512
        %2567 = vmatprep.subr.bf16.mxu0 0
        %2568 = vmatpush1.bf16.msra.mxu0 0
        %2569 = vmatprep.subr.bf16.mxu0 0
        %2570 = vmatpush1.bf16.msra.mxu0 0
        %2571 = vmatprep.subr.bf16.mxu0 0
        %2572 = vmatpush1.bf16.msra.mxu0 0
        %2573 = vmatprep.subr.bf16.mxu0 0
        %2574 = vmatpush1.bf16.msra.mxu0 0
        %2575 = vmatprep.subr.bf16.mxu0 0
        %2576 = vmatpush1.bf16.msra.mxu0 0
        %2577 = vmatprep.subr.bf16.mxu0 0
        %2578 = vmatpush1.bf16.msra.mxu0 0
        %2579 = vmatprep.subr.bf16.mxu0 0
        %2580 = vmatpush1.bf16.msra.mxu0 0
        %2581 = vmatprep.subr.bf16.mxu0 0
        %2582 = vmatpush1.bf16.msra.mxu0 0
        %2583 = vmatprep.subr.bf16.mxu0 0
        %2584 = vmatpush1.bf16.msra.mxu0 0
        %2585 = vmatprep.subr.bf16.mxu0 0
        %2586 = vmatpush1.bf16.msra.mxu0 0
        %2587 = vmatprep.subr.bf16.mxu0 0
        %2588 = vmatpush1.bf16.msra.mxu0 0
        %2589 = vmatprep.subr.bf16.mxu0 0
        %2590 = vmatpush1.bf16.msra.mxu0 0
        %2591 = vmatprep.subr.bf16.mxu0 0
        %2592 = vmatpush1.bf16.msra.mxu0 0
        %2593 = vmatprep.subr.bf16.mxu0 0
        %2594 = vmatpush1.bf16.msra.mxu0 0
        %2595 = vmatprep.mubr.bf16.mxu0 0
        %2596 = vmatmul.mubr.bf16.gmra.mrb[0].mxu0 %v2516
        %v2597 = vpop.f32.mrb[0].mxu0
        %v2598 = vadd.f32 0.0, %v2597
        %v2599 = vpop.f32.mrb[0].mxu0
        %v2600 = vpop.f32.mrb[0].mxu0
        %v2601 = vadd.f32 0.0, %v2600
        %v2602 = vpop.f32.mrb[0].mxu0
        %2603 = vmatprep.mubr.bf16.mxu0 0
        %2604 = vmatmul.mubr.bf16.gmra.mrb[0].mxu0 %v2519
        %v2605 = vpop.f32.mrb[0].mxu0
        %v2606 = vadd.f32 0.0, %v2605
        %v2607 = vpop.f32.mrb[0].mxu0
        %v2608 = vpop.f32.mrb[0].mxu0
        %v2609 = vadd.f32 0.0, %v2608
        %v2610 = vpop.f32.mrb[0].mxu0
        %2611 = vmatprep.mubr.bf16.mxu0 0
        %2612 = vmatmul.mubr.bf16.gmra.mrb[0].mxu0 %v2522
        %v2613 = vpop.f32.mrb[0].mxu0
        %v2614 = vadd.f32 0.0, %v2613
        %v2615 = vpop.f32.mrb[0].mxu0
        %v2616 = vpop.f32.mrb[0].mxu0
        %v2617 = vadd.f32 0.0, %v2616
        %v2618 = vpop.f32.mrb[0].mxu0
        %2619 = vmatprep.mubr.bf16.mxu0 0
        %2620 = vmatmul.mubr.bf16.gmra.mrb[0].mxu0 %v2525
        %v2621 = vpop.f32.mrb[0].mxu0
        %v2622 = vadd.f32 0.0, %v2621
        %v2623 = vpop.f32.mrb[0].mxu0
        %v2624 = vpop.f32.mrb[0].mxu0
        %v2625 = vadd.f32 0.0, %v2624
        %v2626 = vpop.f32.mrb[0].mxu0
        %2627 = vmatprep.mubr.bf16.mxu0 0
        %2628 = vmatmul.mubr.bf16.gmra.mrb[0].mxu0 %v2528
        %v2629 = vpop.f32.mrb[0].mxu0
        %v2630 = vadd.f32 0.0, %v2629
        %v2631 = vpop.f32.mrb[0].mxu0
        %v2632 = vpop.f32.mrb[0].mxu0
        %v2633 = vadd.f32 0.0, %v2632
        %v2634 = vpop.f32.mrb[0].mxu0
        %2635 = vmatprep.mubr.bf16.mxu0 0
        %2636 = vmatmul.mubr.bf16.gmra.mrb[0].mxu0 %v2531
        %v2637 = vpop.f32.mrb[0].mxu0
        %v2638 = vadd.f32 0.0, %v2637
        %v2639 = vpop.f32.mrb[0].mxu0
        %v2640 = vpop.f32.mrb[0].mxu0
        %v2641 = vadd.f32 0.0, %v2640
        %v2642 = vpop.f32.mrb[0].mxu0
        %2643 = vmatprep.mubr.bf16.mxu0 0
        %2644 = vmatmul.mubr.bf16.gmra.mrb[0].mxu0 %v2534
        %v2645 = vpop.f32.mrb[0].mxu0
        %v2646 = vadd.f32 0.0, %v2645
        %v2647 = vpop.f32.mrb[0].mxu0
        %v2648 = vpop.f32.mrb[0].mxu0
        %v2649 = vadd.f32 0.0, %v2648
        %v2650 = vpop.f32.mrb[0].mxu0
        %2651 = vmatprep.mubr.bf16.mxu0 0
        %2652 = vmatmul.mubr.bf16.gmra.mrb[0].mxu0 %v2537
        %v2653 = vpop.f32.mrb[0].mxu0
        %v2654 = vadd.f32 0.0, %v2653
        %v2655 = vpop.f32.mrb[0].mxu0
        %v2656 = vpop.f32.mrb[0].mxu0
        %v2657 = vadd.f32 0.0, %v2656
        %v2658 = vpop.f32.mrb[0].mxu0
        %2659 = vmatprep.mubr.bf16.mxu0 0
        %2660 = vmatmul.mubr.bf16.gmra.mrb[0].mxu0 %v2540
        %v2661 = vpop.f32.mrb[0].mxu0
        %v2662 = vadd.f32 0.0, %v2661
        %v2663 = vpop.f32.mrb[0].mxu0
        %v2664 = vpop.f32.mrb[0].mxu0
        %v2665 = vadd.f32 0.0, %v2664
        %v2666 = vpop.f32.mrb[0].mxu0
        %2667 = vmatprep.mubr.bf16.mxu0 0
        %2668 = vmatmul.mubr.bf16.gmra.mrb[0].mxu0 %v2543
        %v2669 = vpop.f32.mrb[0].mxu0
        %v2670 = vadd.f32 0.0, %v2669
        %v2671 = vpop.f32.mrb[0].mxu0
        %v2672 = vpop.f32.mrb[0].mxu0
        %v2673 = vadd.f32 0.0, %v2672
        %v2674 = vpop.f32.mrb[0].mxu0
        %2675 = vmatprep.mubr.bf16.mxu0 0
        %2676 = vmatmul.mubr.bf16.gmra.mrb[0].mxu0 %v2546
        %v2677 = vpop.f32.mrb[0].mxu0
        %v2678 = vadd.f32 0.0, %v2677
        %v2679 = vpop.f32.mrb[0].mxu0
        %v2680 = vpop.f32.mrb[0].mxu0
        %v2681 = vadd.f32 0.0, %v2680
        %v2682 = vpop.f32.mrb[0].mxu0
        %2683 = vmatprep.mubr.bf16.mxu0 0
        %2684 = vmatmul.mubr.bf16.gmra.mrb[0].mxu0 %v2549
        %v2685 = vpop.f32.mrb[0].mxu0
        %v2686 = vadd.f32 0.0, %v2685
        %v2687 = vpop.f32.mrb[0].mxu0
        %v2688 = vpop.f32.mrb[0].mxu0
        %v2689 = vadd.f32 0.0, %v2688
        %v2690 = vpop.f32.mrb[0].mxu0
        %2691 = vmatprep.mubr.bf16.mxu0 0
        %2692 = vmatmul.mubr.bf16.gmra.mrb[0].mxu0 %v2552
        %v2693 = vpop.f32.mrb[0].mxu0
        %v2694 = vadd.f32 0.0, %v2693
        %v2695 = vpop.f32.mrb[0].mxu0
        %v2696 = vpop.f32.mrb[0].mxu0
        %v2697 = vadd.f32 0.0, %v2696
        %v2698 = vpop.f32.mrb[0].mxu0
        %2699 = vmatprep.mubr.bf16.mxu0 0
        %2700 = vmatmul.mubr.bf16.gmra.mrb[0].mxu0 %v2555
        %v2701 = vpop.f32.mrb[0].mxu0
        %v2702 = vadd.f32 0.0, %v2701
        %v2703 = vpop.f32.mrb[0].mxu0
        %v2704 = vpop.f32.mrb[0].mxu0
        %v2705 = vadd.f32 0.0, %v2704
        %v2706 = vpop.f32.mrb[0].mxu0
        %2707 = vmatprep.mubr.bf16.mxu0 0
        %2708 = vmatmul.mubr.bf16.gmra.mrb[0].mxu0 %v2558
        %v2709 = vpop.f32.mrb[0].mxu0
        %v2710 = vadd.f32 0.0, %v2709
        %v2711 = vpop.f32.mrb[0].mxu0
        %v2712 = vpop.f32.mrb[0].mxu0
        %v2713 = vadd.f32 0.0, %v2712
        %v2714 = vpop.f32.mrb[0].mxu0
        %2715 = vmatprep.mubr.bf16.mxu0 0
        %2716 = vmatmul.mubr.bf16.gmra.mrb[0].mxu0 %v2561
        %v2717 = vpop.f32.mrb[0].mxu0
        %v2718 = vadd.f32 0.0, %v2717
        %v2719 = vpop.f32.mrb[0].mxu0
        %v2720 = vpop.f32.mrb[0].mxu0
        %v2721 = vadd.f32 0.0, %v2720
        %v2722 = vpop.f32.mrb[0].mxu0
        %2723 = vdwg.mxu0
        %v2724 = vadd.f32 %v2418, %v2598
        %v2725 = vadd.f32 %v2419, %v2601
        %v2726 = vadd.f32 %v2420, %v2606
        %v2727 = vadd.f32 %v2421, %v2609
        %v2728 = vadd.f32 %v2422, %v2614
        %v2729 = vadd.f32 %v2423, %v2617
        %v2730 = vadd.f32 %v2424, %v2622
        %v2731 = vadd.f32 %v2425, %v2625
        %v2732 = vadd.f32 %v2426, %v2630
        %v2733 = vadd.f32 %v2427, %v2633
        %v2734 = vadd.f32 %v2428, %v2638
        %v2735 = vadd.f32 %v2429, %v2641
        %v2736 = vadd.f32 %v2430, %v2646
        %v2737 = vadd.f32 %v2431, %v2649
        %v2738 = vadd.f32 %v2432, %v2654
        %v2739 = vadd.f32 %v2433, %v2657
        %v2740 = vadd.f32 %v2434, %v2662
        %v2741 = vadd.f32 %v2435, %v2665
        %v2742 = vadd.f32 %v2436, %v2670
        %v2743 = vadd.f32 %v2437, %v2673
        %v2744 = vadd.f32 %v2438, %v2678
        %v2745 = vadd.f32 %v2439, %v2681
        %v2746 = vadd.f32 %v2440, %v2686
        %v2747 = vadd.f32 %v2441, %v2689
        %v2748 = vadd.f32 %v2442, %v2694
        %v2749 = vadd.f32 %v2443, %v2697
        %v2750 = vadd.f32 %v2444, %v2702
        %v2751 = vadd.f32 %v2445, %v2705
        %v2752 = vadd.f32 %v2446, %v2710
        %v2753 = vadd.f32 %v2447, %v2713
        %v2754 = vadd.f32 %v2448, %v2718
        %v2755 = vadd.f32 %v2449, %v2721
        %v2756 = vld [vmem:[%s2143 + $0x2] sm:$0xff]
        %v2757 = vld [vmem:[%s2143 + $0xa] sm:$0xff]
        %v2758 = vld [vmem:[%s2143 + $0x1a] sm:$0xff]
        %v2759 = vld [vmem:[%s2143 + $0x22] sm:$0xff]
        %v2760 = vld [vmem:[%s2143 + $0x32] sm:$0xff]
        %v2761 = vld [vmem:[%s2143 + $0x3a] sm:$0xff]
        %v2762 = vld [vmem:[%s2143 + $0x4a] sm:$0xff]
        %v2763 = vld [vmem:[%s2143 + $0x52] sm:$0xff]
        %v2764 = vld [vmem:[%s2143 + $0x62] sm:$0xff]
        %v2765 = vld [vmem:[%s2143 + $0x6a] sm:$0xff]
        %v2766 = vld [vmem:[%s2143 + $0x7a] sm:$0xff]
        %v2767 = vld [vmem:[%s2143 + $0x82] sm:$0xff]
        %v2768 = vld [vmem:[%s2143 + $0x92] sm:$0xff]
        %v2769 = vld [vmem:[%s2143 + $0x9a] sm:$0xff]
        %v2770 = vld [vmem:[%s2143 + $0xaa] sm:$0xff]
        %v2771 = vld [vmem:[%s2143 + $0xb2] sm:$0xff]
        %v2772 = vld [vmem:[%s2143 + $0xc2] sm:$0xff]
        %v2773 = vld [vmem:[%s2143 + $0xca] sm:$0xff]
        %v2774 = vld [vmem:[%s2143 + $0xda] sm:$0xff]
        %v2775 = vld [vmem:[%s2143 + $0xe2] sm:$0xff]
        %v2776 = vld [vmem:[%s2143 + $0xf2] sm:$0xff]
        %v2777 = vld [vmem:[%s2143 + $0xfa] sm:$0xff]
        %v2778 = vld [vmem:[%s2143 + $0x10a] sm:$0xff]
        %v2779 = vld [vmem:[%s2143 + $0x112] sm:$0xff]
        %v2780 = vld [vmem:[%s2143 + $0x122] sm:$0xff]
        %v2781 = vld [vmem:[%s2143 + $0x12a] sm:$0xff]
        %v2782 = vld [vmem:[%s2143 + $0x13a] sm:$0xff]
        %v2783 = vld [vmem:[%s2143 + $0x142] sm:$0xff]
        %v2784 = vld [vmem:[%s2143 + $0x152] sm:$0xff]
        %v2785 = vld [vmem:[%s2143 + $0x15a] sm:$0xff]
        %v2786 = vld [vmem:[%s2143 + $0x16a] sm:$0xff]
        %v2787 = vld [vmem:[%s2143 + $0x172] sm:$0xff]
        %v2788 = vpack.c.bf16 %v2757, %v2756
        %v2789 = vpack.c.bf16 %v2759, %v2758
        %v2790 = vpack.c.bf16 %v2761, %v2760
        %v2791 = vpack.c.bf16 %v2763, %v2762
        %v2792 = vpack.c.bf16 %v2765, %v2764
        %v2793 = vpack.c.bf16 %v2767, %v2766
        %v2794 = vpack.c.bf16 %v2769, %v2768
        %v2795 = vpack.c.bf16 %v2771, %v2770
        %v2796 = vpack.c.bf16 %v2773, %v2772
        %v2797 = vpack.c.bf16 %v2775, %v2774
        %v2798 = vpack.c.bf16 %v2777, %v2776
        %v2799 = vpack.c.bf16 %v2779, %v2778
        %v2800 = vpack.c.bf16 %v2781, %v2780
        %v2801 = vpack.c.bf16 %v2783, %v2782
        %v2802 = vpack.c.bf16 %v2785, %v2784
        %v2803 = vpack.c.bf16 %v2787, %v2786
        %s2804 = scalar_lea.vmem [#allocation5], 128
        %v2805 = vld [vmem:[%s2804] sm:$0xf]
        %v2806 = vld [vmem:[%s2804 + $0x4] sm:$0xf]
        %v2807 = vld [vmem:[%s2804 + $0x8] sm:$0xf]
        %v2808 = vld [vmem:[%s2804 + $0xc] sm:$0xf]
        %v2813 = vunpack.c.l.b16 %v2805
        %v2814 = vunpack.c.l.b16 %v2806
        %v2815 = vunpack.c.l.b16 %v2807
        %v2816 = vunpack.c.l.b16 %v2808
        %v2817 = vpack.c.b16 %v2814, %v2813
        %v2818 = vpack.c.b16 %v2816, %v2815
        %v2822 = vsel %vm283, %v2788, 0
        %v2825 = vsel %vm283, %v2789, 0
        %v2828 = vsel %vm283, %v2790, 0
        %v2831 = vsel %vm283, %v2791, 0
        %v2834 = vsel %vm283, %v2792, 0
        %v2837 = vsel %vm283, %v2793, 0
        %v2840 = vsel %vm283, %v2794, 0
        %v2843 = vsel %vm283, %v2795, 0
        %v2846 = vsel %vm283, %v2796, 0
        %v2849 = vsel %vm283, %v2797, 0
        %v2852 = vsel %vm283, %v2798, 0
        %v2855 = vsel %vm283, %v2799, 0
        %v2858 = vsel %vm283, %v2800, 0
        %v2861 = vsel %vm283, %v2801, 0
        %v2864 = vsel %vm283, %v2802, 0
        %v2867 = vsel %vm283, %v2803, 0
        %2869 = vmatprep.subr.bf16.mxu0 0
        %2870 = vmatpush1.bf16.msra.mxu0 %v2817
        %2871 = vmatprep.subr.bf16.mxu0 0
        %2872 = vmatpush1.bf16.msra.mxu0 %v2818
        %2873 = vmatprep.subr.bf16.mxu0 0
        %2874 = vmatpush1.bf16.msra.mxu0 0
        %2875 = vmatprep.subr.bf16.mxu0 0
        %2876 = vmatpush1.bf16.msra.mxu0 0
        %2877 = vmatprep.subr.bf16.mxu0 0
        %2878 = vmatpush1.bf16.msra.mxu0 0
        %2879 = vmatprep.subr.bf16.mxu0 0
        %2880 = vmatpush1.bf16.msra.mxu0 0
        %2881 = vmatprep.subr.bf16.mxu0 0
        %2882 = vmatpush1.bf16.msra.mxu0 0
        %2883 = vmatprep.subr.bf16.mxu0 0
        %2884 = vmatpush1.bf16.msra.mxu0 0
        %2885 = vmatprep.subr.bf16.mxu0 0
        %2886 = vmatpush1.bf16.msra.mxu0 0
        %2887 = vmatprep.subr.bf16.mxu0 0
        %2888 = vmatpush1.bf16.msra.mxu0 0
        %2889 = vmatprep.subr.bf16.mxu0 0
        %2890 = vmatpush1.bf16.msra.mxu0 0
        %2891 = vmatprep.subr.bf16.mxu0 0
        %2892 = vmatpush1.bf16.msra.mxu0 0
        %2893 = vmatprep.subr.bf16.mxu0 0
        %2894 = vmatpush1.bf16.msra.mxu0 0
        %2895 = vmatprep.subr.bf16.mxu0 0
        %2896 = vmatpush1.bf16.msra.mxu0 0
        %2897 = vmatprep.subr.bf16.mxu0 0
        %2898 = vmatpush1.bf16.msra.mxu0 0
        %2899 = vmatprep.subr.bf16.mxu0 0
        %2900 = vmatpush1.bf16.msra.mxu0 0
        %2901 = vmatprep.mubr.bf16.mxu0 0
        %2902 = vmatmul.mubr.bf16.gmra.mrb[0].mxu0 %v2822
        %v2903 = vpop.f32.mrb[0].mxu0
        %v2904 = vadd.f32 0.0, %v2903
        %v2905 = vpop.f32.mrb[0].mxu0
        %v2906 = vpop.f32.mrb[0].mxu0
        %v2907 = vadd.f32 0.0, %v2906
        %v2908 = vpop.f32.mrb[0].mxu0
        %2909 = vmatprep.mubr.bf16.mxu0 0
        %2910 = vmatmul.mubr.bf16.gmra.mrb[0].mxu0 %v2825
        %v2911 = vpop.f32.mrb[0].mxu0
        %v2912 = vadd.f32 0.0, %v2911
        %v2913 = vpop.f32.mrb[0].mxu0
        %v2914 = vpop.f32.mrb[0].mxu0
        %v2915 = vadd.f32 0.0, %v2914
        %v2916 = vpop.f32.mrb[0].mxu0
        %2917 = vmatprep.mubr.bf16.mxu0 0
        %2918 = vmatmul.mubr.bf16.gmra.mrb[0].mxu0 %v2828
        %v2919 = vpop.f32.mrb[0].mxu0
        %v2920 = vadd.f32 0.0, %v2919
        %v2921 = vpop.f32.mrb[0].mxu0
        %v2922 = vpop.f32.mrb[0].mxu0
        %v2923 = vadd.f32 0.0, %v2922
        %v2924 = vpop.f32.mrb[0].mxu0
        %2925 = vmatprep.mubr.bf16.mxu0 0
        %2926 = vmatmul.mubr.bf16.gmra.mrb[0].mxu0 %v2831
        %v2927 = vpop.f32.mrb[0].mxu0
        %v2928 = vadd.f32 0.0, %v2927
        %v2929 = vpop.f32.mrb[0].mxu0
        %v2930 = vpop.f32.mrb[0].mxu0
        %v2931 = vadd.f32 0.0, %v2930
        %v2932 = vpop.f32.mrb[0].mxu0
        %2933 = vmatprep.mubr.bf16.mxu0 0
        %2934 = vmatmul.mubr.bf16.gmra.mrb[0].mxu0 %v2834
        %v2935 = vpop.f32.mrb[0].mxu0
        %v2936 = vadd.f32 0.0, %v2935
        %v2937 = vpop.f32.mrb[0].mxu0
        %v2938 = vpop.f32.mrb[0].mxu0
        %v2939 = vadd.f32 0.0, %v2938
        %v2940 = vpop.f32.mrb[0].mxu0
        %2941 = vmatprep.mubr.bf16.mxu0 0
        %2942 = vmatmul.mubr.bf16.gmra.mrb[0].mxu0 %v2837
        %v2943 = vpop.f32.mrb[0].mxu0
        %v2944 = vadd.f32 0.0, %v2943
        %v2945 = vpop.f32.mrb[0].mxu0
        %v2946 = vpop.f32.mrb[0].mxu0
        %v2947 = vadd.f32 0.0, %v2946
        %v2948 = vpop.f32.mrb[0].mxu0
        %2949 = vmatprep.mubr.bf16.mxu0 0
        %2950 = vmatmul.mubr.bf16.gmra.mrb[0].mxu0 %v2840
        %v2951 = vpop.f32.mrb[0].mxu0
        %v2952 = vadd.f32 0.0, %v2951
        %v2953 = vpop.f32.mrb[0].mxu0
        %v2954 = vpop.f32.mrb[0].mxu0
        %v2955 = vadd.f32 0.0, %v2954
        %v2956 = vpop.f32.mrb[0].mxu0
        %2957 = vmatprep.mubr.bf16.mxu0 0
        %2958 = vmatmul.mubr.bf16.gmra.mrb[0].mxu0 %v2843
        %v2959 = vpop.f32.mrb[0].mxu0
        %v2960 = vadd.f32 0.0, %v2959
        %v2961 = vpop.f32.mrb[0].mxu0
        %v2962 = vpop.f32.mrb[0].mxu0
        %v2963 = vadd.f32 0.0, %v2962
        %v2964 = vpop.f32.mrb[0].mxu0
        %2965 = vmatprep.mubr.bf16.mxu0 0
        %2966 = vmatmul.mubr.bf16.gmra.mrb[0].mxu0 %v2846
        %v2967 = vpop.f32.mrb[0].mxu0
        %v2968 = vadd.f32 0.0, %v2967
        %v2969 = vpop.f32.mrb[0].mxu0
        %v2970 = vpop.f32.mrb[0].mxu0
        %v2971 = vadd.f32 0.0, %v2970
        %v2972 = vpop.f32.mrb[0].mxu0
        %2973 = vmatprep.mubr.bf16.mxu0 0
        %2974 = vmatmul.mubr.bf16.gmra.mrb[0].mxu0 %v2849
        %v2975 = vpop.f32.mrb[0].mxu0
        %v2976 = vadd.f32 0.0, %v2975
        %v2977 = vpop.f32.mrb[0].mxu0
        %v2978 = vpop.f32.mrb[0].mxu0
        %v2979 = vadd.f32 0.0, %v2978
        %v2980 = vpop.f32.mrb[0].mxu0
        %2981 = vmatprep.mubr.bf16.mxu0 0
        %2982 = vmatmul.mubr.bf16.gmra.mrb[0].mxu0 %v2852
        %v2983 = vpop.f32.mrb[0].mxu0
        %v2984 = vadd.f32 0.0, %v2983
        %v2985 = vpop.f32.mrb[0].mxu0
        %v2986 = vpop.f32.mrb[0].mxu0
        %v2987 = vadd.f32 0.0, %v2986
        %v2988 = vpop.f32.mrb[0].mxu0
        %2989 = vmatprep.mubr.bf16.mxu0 0
        %2990 = vmatmul.mubr.bf16.gmra.mrb[0].mxu0 %v2855
        %v2991 = vpop.f32.mrb[0].mxu0
        %v2992 = vadd.f32 0.0, %v2991
        %v2993 = vpop.f32.mrb[0].mxu0
        %v2994 = vpop.f32.mrb[0].mxu0
        %v2995 = vadd.f32 0.0, %v2994
        %v2996 = vpop.f32.mrb[0].mxu0
        %2997 = vmatprep.mubr.bf16.mxu0 0
        %2998 = vmatmul.mubr.bf16.gmra.mrb[0].mxu0 %v2858
        %v2999 = vpop.f32.mrb[0].mxu0
        %v3000 = vadd.f32 0.0, %v2999
        %v3001 = vpop.f32.mrb[0].mxu0
        %v3002 = vpop.f32.mrb[0].mxu0
        %v3003 = vadd.f32 0.0, %v3002
        %v3004 = vpop.f32.mrb[0].mxu0
        %3005 = vmatprep.mubr.bf16.mxu0 0
        %3006 = vmatmul.mubr.bf16.gmra.mrb[0].mxu0 %v2861
        %v3007 = vpop.f32.mrb[0].mxu0
        %v3008 = vadd.f32 0.0, %v3007
        %v3009 = vpop.f32.mrb[0].mxu0
        %v3010 = vpop.f32.mrb[0].mxu0
        %v3011 = vadd.f32 0.0, %v3010
        %v3012 = vpop.f32.mrb[0].mxu0
        %3013 = vmatprep.mubr.bf16.mxu0 0
        %3014 = vmatmul.mubr.bf16.gmra.mrb[0].mxu0 %v2864
        %v3015 = vpop.f32.mrb[0].mxu0
        %v3016 = vadd.f32 0.0, %v3015
        %v3017 = vpop.f32.mrb[0].mxu0
        %v3018 = vpop.f32.mrb[0].mxu0
        %v3019 = vadd.f32 0.0, %v3018
        %v3020 = vpop.f32.mrb[0].mxu0
        %3021 = vmatprep.mubr.bf16.mxu0 0
        %3022 = vmatmul.mubr.bf16.gmra.mrb[0].mxu0 %v2867
        %v3023 = vpop.f32.mrb[0].mxu0
        %v3024 = vadd.f32 0.0, %v3023
        %v3025 = vpop.f32.mrb[0].mxu0
        %v3026 = vpop.f32.mrb[0].mxu0
        %v3027 = vadd.f32 0.0, %v3026
        %v3028 = vpop.f32.mrb[0].mxu0
        %3029 = vdwg.mxu0
        %v3030 = vadd.f32 %v2724, %v2904
        %v3031 = vadd.f32 %v2725, %v2907
        %v3032 = vadd.f32 %v2726, %v2912
        %v3033 = vadd.f32 %v2727, %v2915
        %v3034 = vadd.f32 %v2728, %v2920
        %v3035 = vadd.f32 %v2729, %v2923
        %v3036 = vadd.f32 %v2730, %v2928
        %v3037 = vadd.f32 %v2731, %v2931
        %v3038 = vadd.f32 %v2732, %v2936
        %v3039 = vadd.f32 %v2733, %v2939
        %v3040 = vadd.f32 %v2734, %v2944
        %v3041 = vadd.f32 %v2735, %v2947
        %v3042 = vadd.f32 %v2736, %v2952
        %v3043 = vadd.f32 %v2737, %v2955
        %v3044 = vadd.f32 %v2738, %v2960
        %v3045 = vadd.f32 %v2739, %v2963
        %v3046 = vadd.f32 %v2740, %v2968
        %v3047 = vadd.f32 %v2741, %v2971
        %v3048 = vadd.f32 %v2742, %v2976
        %v3049 = vadd.f32 %v2743, %v2979
        %v3050 = vadd.f32 %v2744, %v2984
        %v3051 = vadd.f32 %v2745, %v2987
        %v3052 = vadd.f32 %v2746, %v2992
        %v3053 = vadd.f32 %v2747, %v2995
        %v3054 = vadd.f32 %v2748, %v3000
        %v3055 = vadd.f32 %v2749, %v3003
        %v3056 = vadd.f32 %v2750, %v3008
        %v3057 = vadd.f32 %v2751, %v3011
        %v3058 = vadd.f32 %v2752, %v3016
        %v3059 = vadd.f32 %v2753, %v3019
        %v3060 = vadd.f32 %v2754, %v3024
        %v3061 = vadd.f32 %v2755, %v3027
        %v3062 = vpack.c.bf16 %v3031, %v3030
        %v3063 = vpack.c.bf16 %v3033, %v3032
        %v3064 = vpack.c.bf16 %v3035, %v3034
        %v3065 = vpack.c.bf16 %v3037, %v3036
        %v3066 = vpack.c.bf16 %v3039, %v3038
        %v3067 = vpack.c.bf16 %v3041, %v3040
        %v3068 = vpack.c.bf16 %v3043, %v3042
        %v3069 = vpack.c.bf16 %v3045, %v3044
        %v3070 = vpack.c.bf16 %v3047, %v3046
        %v3071 = vpack.c.bf16 %v3049, %v3048
        %v3072 = vpack.c.bf16 %v3051, %v3050
        %v3073 = vpack.c.bf16 %v3053, %v3052
        %v3074 = vpack.c.bf16 %v3055, %v3054
        %v3075 = vpack.c.bf16 %v3057, %v3056
        %v3076 = vpack.c.bf16 %v3059, %v3058
        %v3077 = vpack.c.bf16 %v3061, %v3060
        %v3094 = vunpack.c.l.b16 %v3062
        %v3095 = vunpack.c.h.b16 %v3062
        %v3096 = vunpack.c.l.b16 %v3063
        %v3097 = vunpack.c.h.b16 %v3063
        %v3098 = vunpack.c.l.b16 %v3064
        %v3099 = vunpack.c.h.b16 %v3064
        %v3100 = vunpack.c.l.b16 %v3065
        %v3101 = vunpack.c.h.b16 %v3065
        %v3102 = vunpack.c.l.b16 %v3066
        %v3103 = vunpack.c.h.b16 %v3066
        %v3104 = vunpack.c.l.b16 %v3067
        %v3105 = vunpack.c.h.b16 %v3067
        %v3106 = vunpack.c.l.b16 %v3068
        %v3107 = vunpack.c.h.b16 %v3068
        %v3108 = vunpack.c.l.b16 %v3069
        %v3109 = vunpack.c.h.b16 %v3069
        %v3110 = vunpack.c.l.b16 %v3070
        %v3111 = vunpack.c.h.b16 %v3070
        %v3112 = vunpack.c.l.b16 %v3071
        %v3113 = vunpack.c.h.b16 %v3071
        %v3114 = vunpack.c.l.b16 %v3072
        %v3115 = vunpack.c.h.b16 %v3072
        %v3116 = vunpack.c.l.b16 %v3073
        %v3117 = vunpack.c.h.b16 %v3073
        %v3118 = vunpack.c.l.b16 %v3074
        %v3119 = vunpack.c.h.b16 %v3074
        %v3120 = vunpack.c.l.b16 %v3075
        %v3121 = vunpack.c.h.b16 %v3075
        %v3122 = vunpack.c.l.b16 %v3076
        %v3123 = vunpack.c.h.b16 %v3076
        %v3124 = vunpack.c.l.b16 %v3077
        %v3125 = vunpack.c.h.b16 %v3077
        %v3126 = vpack.c.b16 %v3094, %v3094
        %v3127 = vpack.c.b16 %v3095, %v3095
        %v3128 = vpack.c.b16 %v3096, %v3096
        %v3129 = vpack.c.b16 %v3097, %v3097
        %v3130 = vpack.c.b16 %v3098, %v3098
        %v3131 = vpack.c.b16 %v3099, %v3099
        %v3132 = vpack.c.b16 %v3100, %v3100
        %v3133 = vpack.c.b16 %v3101, %v3101
        %v3134 = vpack.c.b16 %v3102, %v3102
        %v3135 = vpack.c.b16 %v3103, %v3103
        %v3136 = vpack.c.b16 %v3104, %v3104
        %v3137 = vpack.c.b16 %v3105, %v3105
        %v3138 = vpack.c.b16 %v3106, %v3106
        %v3139 = vpack.c.b16 %v3107, %v3107
        %v3140 = vpack.c.b16 %v3108, %v3108
        %v3141 = vpack.c.b16 %v3109, %v3109
        %v3142 = vpack.c.b16 %v3110, %v3110
        %v3143 = vpack.c.b16 %v3111, %v3111
        %v3144 = vpack.c.b16 %v3112, %v3112
        %v3145 = vpack.c.b16 %v3113, %v3113
        %v3146 = vpack.c.b16 %v3114, %v3114
        %v3147 = vpack.c.b16 %v3115, %v3115
        %v3148 = vpack.c.b16 %v3116, %v3116
        %v3149 = vpack.c.b16 %v3117, %v3117
        %v3150 = vpack.c.b16 %v3118, %v3118
        %v3151 = vpack.c.b16 %v3119, %v3119
        %v3152 = vpack.c.b16 %v3120, %v3120
        %v3153 = vpack.c.b16 %v3121, %v3121
        %v3154 = vpack.c.b16 %v3122, %v3122
        %v3155 = vpack.c.b16 %v3123, %v3123
        %v3156 = vpack.c.b16 %v3124, %v3124
        %v3157 = vpack.c.b16 %v3125, %v3125
        %vm3190 = vcmask 257024
        %3191 = vst.msk [vmem:[%s243] sm:$0xf] %vm3190, %v3126
        %3192 = vst.msk [vmem:[%s243 + $0x4] sm:$0xf] %vm3190, %v3127
        %3193 = vst.msk [vmem:[%s243 + $0x8] sm:$0xf] %vm3190, %v3128
        %3194 = vst.msk [vmem:[%s243 + $0xc] sm:$0xf] %vm3190, %v3129
        %3195 = vst.msk [vmem:[%s243 + $0x10] sm:$0xf] %vm3190, %v3130
        %3196 = vst.msk [vmem:[%s243 + $0x14] sm:$0xf] %vm3190, %v3131
        %3197 = vst.msk [vmem:[%s243 + $0x18] sm:$0xf] %vm3190, %v3132
        %3198 = vst.msk [vmem:[%s243 + $0x1c] sm:$0xf] %vm3190, %v3133
        %3199 = vst.msk [vmem:[%s243 + $0x20] sm:$0xf] %vm3190, %v3134
        %3200 = vst.msk [vmem:[%s243 + $0x24] sm:$0xf] %vm3190, %v3135
        %3201 = vst.msk [vmem:[%s243 + $0x28] sm:$0xf] %vm3190, %v3136
        %3202 = vst.msk [vmem:[%s243 + $0x2c] sm:$0xf] %vm3190, %v3137
        %3203 = vst.msk [vmem:[%s243 + $0x30] sm:$0xf] %vm3190, %v3138
        %3204 = vst.msk [vmem:[%s243 + $0x34] sm:$0xf] %vm3190, %v3139
        %3205 = vst.msk [vmem:[%s243 + $0x38] sm:$0xf] %vm3190, %v3140
        %3206 = vst.msk [vmem:[%s243 + $0x3c] sm:$0xf] %vm3190, %v3141
        %3207 = vst.msk [vmem:[%s243 + $0x40] sm:$0xf] %vm3190, %v3142
        %3208 = vst.msk [vmem:[%s243 + $0x44] sm:$0xf] %vm3190, %v3143
        %3209 = vst.msk [vmem:[%s243 + $0x48] sm:$0xf] %vm3190, %v3144
        %3210 = vst.msk [vmem:[%s243 + $0x4c] sm:$0xf] %vm3190, %v3145
        %3211 = vst.msk [vmem:[%s243 + $0x50] sm:$0xf] %vm3190, %v3146
        %3212 = vst.msk [vmem:[%s243 + $0x54] sm:$0xf] %vm3190, %v3147
        %3213 = vst.msk [vmem:[%s243 + $0x58] sm:$0xf] %vm3190, %v3148
        %3214 = vst.msk [vmem:[%s243 + $0x5c] sm:$0xf] %vm3190, %v3149
        %3215 = vst.msk [vmem:[%s243 + $0x60] sm:$0xf] %vm3190, %v3150
        %3216 = vst.msk [vmem:[%s243 + $0x64] sm:$0xf] %vm3190, %v3151
        %3217 = vst.msk [vmem:[%s243 + $0x68] sm:$0xf] %vm3190, %v3152
        %3218 = vst.msk [vmem:[%s243 + $0x6c] sm:$0xf] %vm3190, %v3153
        %3219 = vst.msk [vmem:[%s243 + $0x70] sm:$0xf] %vm3190, %v3154
        %3220 = vst.msk [vmem:[%s243 + $0x74] sm:$0xf] %vm3190, %v3155
        %3221 = vst.msk [vmem:[%s243 + $0x78] sm:$0xf] %vm3190, %v3156
        %3222 = vst.msk [vmem:[%s243 + $0x7c] sm:$0xf] %vm3190, %v3157
        %v3223 = vsel %vm283, %v3030, 0.0
        %v3224 = vsel %vm283, %v3031, 0.0
        %v3225 = vadd.f32 %v3223, %v3224
        %v3226 = vsel %vm283, %v3032, 0.0
        %v3227 = vadd.f32 %v3225, %v3226
        %v3228 = vsel %vm283, %v3033, 0.0
        %v3229 = vadd.f32 %v3227, %v3228
        %v3230 = vsel %vm283, %v3034, 0.0
        %v3231 = vadd.f32 %v3229, %v3230
        %v3232 = vsel %vm283, %v3035, 0.0
        %v3233 = vadd.f32 %v3231, %v3232
        %v3234 = vsel %vm283, %v3036, 0.0
        %v3235 = vadd.f32 %v3233, %v3234
        %v3236 = vsel %vm283, %v3037, 0.0
        %v3237 = vadd.f32 %v3235, %v3236
        %v3238 = vsel %vm283, %v3038, 0.0
        %v3239 = vadd.f32 %v3237, %v3238
        %v3240 = vsel %vm283, %v3039, 0.0
        %v3241 = vadd.f32 %v3239, %v3240
        %v3242 = vsel %vm283, %v3040, 0.0
        %v3243 = vadd.f32 %v3241, %v3242
        %v3244 = vsel %vm283, %v3041, 0.0
        %v3245 = vadd.f32 %v3243, %v3244
        %v3246 = vsel %vm283, %v3042, 0.0
        %v3247 = vadd.f32 %v3245, %v3246
        %v3248 = vsel %vm283, %v3043, 0.0
        %v3249 = vadd.f32 %v3247, %v3248
        %v3250 = vsel %vm283, %v3044, 0.0
        %v3251 = vadd.f32 %v3249, %v3250
        %v3252 = vsel %vm283, %v3045, 0.0
        %v3253 = vadd.f32 %v3251, %v3252
        %v3254 = vsel %vm283, %v3046, 0.0
        %v3255 = vadd.f32 %v3253, %v3254
        %v3256 = vsel %vm283, %v3047, 0.0
        %v3257 = vadd.f32 %v3255, %v3256
        %v3258 = vsel %vm283, %v3048, 0.0
        %v3259 = vadd.f32 %v3257, %v3258
        %v3260 = vsel %vm283, %v3049, 0.0
        %v3261 = vadd.f32 %v3259, %v3260
        %v3262 = vsel %vm283, %v3050, 0.0
        %v3263 = vadd.f32 %v3261, %v3262
        %v3264 = vsel %vm283, %v3051, 0.0
        %v3265 = vadd.f32 %v3263, %v3264
        %v3266 = vsel %vm283, %v3052, 0.0
        %v3267 = vadd.f32 %v3265, %v3266
        %v3268 = vsel %vm283, %v3053, 0.0
        %v3269 = vadd.f32 %v3267, %v3268
        %v3270 = vsel %vm283, %v3054, 0.0
        %v3271 = vadd.f32 %v3269, %v3270
        %v3272 = vsel %vm283, %v3055, 0.0
        %v3273 = vadd.f32 %v3271, %v3272
        %v3274 = vsel %vm283, %v3056, 0.0
        %v3275 = vadd.f32 %v3273, %v3274
        %v3276 = vsel %vm283, %v3057, 0.0
        %v3277 = vadd.f32 %v3275, %v3276
        %v3278 = vsel %vm283, %v3058, 0.0
        %v3279 = vadd.f32 %v3277, %v3278
        %v3280 = vsel %vm283, %v3059, 0.0
        %v3281 = vadd.f32 %v3279, %v3280
        %v3282 = vsel %vm283, %v3060, 0.0
        %v3283 = vadd.f32 %v3281, %v3282
        %v3284 = vsel %vm283, %v3061, 0.0
        %v3285 = vadd.f32 %v3283, %v3284
        %v3286 = vrot.slane %v3285, 4
        %v3287 = vadd.f32 %v3285, %v3286
        %v3288 = vrot.slane %v3287, 2
        %v3289 = vadd.f32 %v3287, %v3288
        %v3290 = vrot.slane %v3289, 1
        %v3291 = vadd.f32 %v3289, %v3290
        %vm3292 = vcmask 253952
        %3293 = vst.msk [vmem:[%s246] sm:$0x1] %vm3292, %v3291
        %v3294 = vmul.f32 %v3030, %v3030
        %v3295 = vmul.f32 %v3031, %v3031
        %v3296 = vmul.f32 %v3032, %v3032
        %v3297 = vmul.f32 %v3033, %v3033
        %v3298 = vmul.f32 %v3034, %v3034
        %v3299 = vmul.f32 %v3035, %v3035
        %v3300 = vmul.f32 %v3036, %v3036
        %v3301 = vmul.f32 %v3037, %v3037
        %v3302 = vmul.f32 %v3038, %v3038
        %v3303 = vmul.f32 %v3039, %v3039
        %v3304 = vmul.f32 %v3040, %v3040
        %v3305 = vmul.f32 %v3041, %v3041
        %v3306 = vmul.f32 %v3042, %v3042
        %v3307 = vmul.f32 %v3043, %v3043
        %v3308 = vmul.f32 %v3044, %v3044
        %v3309 = vmul.f32 %v3045, %v3045
        %v3310 = vmul.f32 %v3046, %v3046
        %v3311 = vmul.f32 %v3047, %v3047
        %v3312 = vmul.f32 %v3048, %v3048
        %v3313 = vmul.f32 %v3049, %v3049
        %v3314 = vmul.f32 %v3050, %v3050
        %v3315 = vmul.f32 %v3051, %v3051
        %v3316 = vmul.f32 %v3052, %v3052
        %v3317 = vmul.f32 %v3053, %v3053
        %v3318 = vmul.f32 %v3054, %v3054
        %v3319 = vmul.f32 %v3055, %v3055
        %v3320 = vmul.f32 %v3056, %v3056
        %v3321 = vmul.f32 %v3057, %v3057
        %v3322 = vmul.f32 %v3058, %v3058
        %v3323 = vmul.f32 %v3059, %v3059
        %v3324 = vmul.f32 %v3060, %v3060
        %v3325 = vmul.f32 %v3061, %v3061
        %v3326 = vsel %vm283, %v3294, 0.0
        %v3327 = vsel %vm283, %v3295, 0.0
        %v3328 = vadd.f32 %v3326, %v3327
        %v3329 = vsel %vm283, %v3296, 0.0
        %v3330 = vadd.f32 %v3328, %v3329
        %v3331 = vsel %vm283, %v3297, 0.0
        %v3332 = vadd.f32 %v3330, %v3331
        %v3333 = vsel %vm283, %v3298, 0.0
        %v3334 = vadd.f32 %v3332, %v3333
        %v3335 = vsel %vm283, %v3299, 0.0
        %v3336 = vadd.f32 %v3334, %v3335
        %v3337 = vsel %vm283, %v3300, 0.0
        %v3338 = vadd.f32 %v3336, %v3337
        %v3339 = vsel %vm283, %v3301, 0.0
        %v3340 = vadd.f32 %v3338, %v3339
        %v3341 = vsel %vm283, %v3302, 0.0
        %v3342 = vadd.f32 %v3340, %v3341
        %v3343 = vsel %vm283, %v3303, 0.0
        %v3344 = vadd.f32 %v3342, %v3343
        %v3345 = vsel %vm283, %v3304, 0.0
        %v3346 = vadd.f32 %v3344, %v3345
        %v3347 = vsel %vm283, %v3305, 0.0
        %v3348 = vadd.f32 %v3346, %v3347
        %v3349 = vsel %vm283, %v3306, 0.0
        %v3350 = vadd.f32 %v3348, %v3349
        %v3351 = vsel %vm283, %v3307, 0.0
        %v3352 = vadd.f32 %v3350, %v3351
        %v3353 = vsel %vm283, %v3308, 0.0
        %v3354 = vadd.f32 %v3352, %v3353
        %v3355 = vsel %vm283, %v3309, 0.0
        %v3356 = vadd.f32 %v3354, %v3355
        %v3357 = vsel %vm283, %v3310, 0.0
        %v3358 = vadd.f32 %v3356, %v3357
        %v3359 = vsel %vm283, %v3311, 0.0
        %v3360 = vadd.f32 %v3358, %v3359
        %v3361 = vsel %vm283, %v3312, 0.0
        %v3362 = vadd.f32 %v3360, %v3361
        %v3363 = vsel %vm283, %v3313, 0.0
        %v3364 = vadd.f32 %v3362, %v3363
        %v3365 = vsel %vm283, %v3314, 0.0
        %v3366 = vadd.f32 %v3364, %v3365
        %v3367 = vsel %vm283, %v3315, 0.0
        %v3368 = vadd.f32 %v3366, %v3367
        %v3369 = vsel %vm283, %v3316, 0.0
        %v3370 = vadd.f32 %v3368, %v3369
        %v3371 = vsel %vm283, %v3317, 0.0
        %v3372 = vadd.f32 %v3370, %v3371
        %v3373 = vsel %vm283, %v3318, 0.0
        %v3374 = vadd.f32 %v3372, %v3373
        %v3375 = vsel %vm283, %v3319, 0.0
        %v3376 = vadd.f32 %v3374, %v3375
        %v3377 = vsel %vm283, %v3320, 0.0
        %v3378 = vadd.f32 %v3376, %v3377
        %v3379 = vsel %vm283, %v3321, 0.0
        %v3380 = vadd.f32 %v3378, %v3379
        %v3381 = vsel %vm283, %v3322, 0.0
        %v3382 = vadd.f32 %v3380, %v3381
        %v3383 = vsel %vm283, %v3323, 0.0
        %v3384 = vadd.f32 %v3382, %v3383
        %v3385 = vsel %vm283, %v3324, 0.0
        %v3386 = vadd.f32 %v3384, %v3385
        %v3387 = vsel %vm283, %v3325, 0.0
        %v3388 = vadd.f32 %v3386, %v3387
        %v3389 = vrot.slane %v3388, 4
        %v3390 = vadd.f32 %v3388, %v3389
        %v3391 = vrot.slane %v3390, 2
        %v3392 = vadd.f32 %v3390, %v3391
        %v3393 = vrot.slane %v3392, 1
        %v3394 = vadd.f32 %v3392, %v3393
        %3395 = vst.msk [vmem:[%s249] sm:$0x1] %vm3292, %v3394
        %p3396 = scmp.lt.s32.totalorder %s20, 1
        %s3397 = scalar_select %p3396, %s20, 1
        %s3398 = smul.addr %s3397, 32
        %s3399 = smul.addr %s3398, 4
        %s3400 = scalar_lea.vmem %s2, %s3399
        %p3401 = scmp.lt.s32.totalorder %s20, 1
        %s3402 = scalar_select %p3401, %s20, 1
        %s3403 = scalar_lea.vmem %s3, %s3402
        %p3404 = scmp.lt.s32.totalorder %s20, 1
        %s3405 = scalar_select %p3404, %s20, 1
        %s3406 = scalar_lea.vmem %s4, %s3405
        // Predicated region
        $region37: #{upsample_forward.3} parent=27 // pred_check
          %p3407 = pneg %p85
        $region38: #{upsample_forward.3} parent=27 // pred_check_branch
          %3409 = sbr.rel (%p3407) target = $region40
        $region39: #{upsample_forward.3} parent=27 // pred_region
          _
        $region40: #{upsample_forward.3} parent=27 // pred_fallthru
          _
        // Predicated region
        $region41: #{upsample_forward.3} parent=27 // pred_check
          %p3410 = pneg %p111
        $region42: #{upsample_forward.3} parent=27 // pred_check_branch
          %3412 = sbr.rel (%p3410) target = $region44
        $region43: #{upsample_forward.3} parent=27 // pred_region
          _
        $region44: #{upsample_forward.3} parent=27 // pred_fallthru
          _
        // Predicated region
        $region45: #{upsample_forward.3} parent=27 // pred_check
          %p3413 = pneg %p137
        $region46: #{upsample_forward.3} parent=27 // pred_check_branch
          %3415 = sbr.rel (%p3413) target = $region48
        $region47: #{upsample_forward.3} parent=27 // pred_region
          _
        $region48: #{upsample_forward.3} parent=27 // pred_fallthru
          _
      $region28: #{upsample_forward.3} parent=5 // pred_fallthru
        _
      %p3416 = scmp.le.s32.totalorder 2, %s15
      // Predicated region
      $region49: #{upsample_forward.3} parent=5 // pred_check
        %p3417 = pneg %p3416
      $region50: #{upsample_forward.3} parent=5 // pred_check_branch
        %3419 = sbr.rel (%p3417) target = $region52
      $region51: #{upsample_forward.3} parent=5 // pred_region
        %s3420 = ssub.s32 %s15, 2
        // Predicated region
        $region53: #{upsample_forward.3} parent=51 // pred_check
          %p3421 = pneg %p91
        $region54: #{upsample_forward.3} parent=51 // pred_check_branch
          %3423 = sbr.rel (%p3421) target = $region56
        $region55: #{upsample_forward.3} parent=51 // pred_region
          %p3424 = scmp.lt.s32.totalorder %s21, 1
          %s3425 = scalar_select %p3424, %s21, 1
          %s3426 = smul.addr %s3425, 32
          %s3427 = smul.addr %s3426, 4
          %s3428 = scalar_lea.vmem %s2, %s3427
        $region56: #{upsample_forward.3} parent=51 // pred_fallthru
          _
        // Predicated region
        $region57: #{upsample_forward.3} parent=51 // pred_check
          %p3429 = pneg %p117
        $region58: #{upsample_forward.3} parent=51 // pred_check_branch
          %3431 = sbr.rel (%p3429) target = $region60
        $region59: #{upsample_forward.3} parent=51 // pred_region
          %p3432 = scmp.lt.s32.totalorder %s21, 1
          %s3433 = scalar_select %p3432, %s21, 1
          %s3434 = scalar_lea.vmem %s3, %s3433
        $region60: #{upsample_forward.3} parent=51 // pred_fallthru
          _
        // Predicated region
        $region61: #{upsample_forward.3} parent=51 // pred_check
          %p3435 = pneg %p143
        $region62: #{upsample_forward.3} parent=51 // pred_check_branch
          %3437 = sbr.rel (%p3435) target = $region64
        $region63: #{upsample_forward.3} parent=51 // pred_region
          %p3438 = scmp.lt.s32.totalorder %s21, 1
          %s3439 = scalar_select %p3438, %s21, 1
          %s3440 = scalar_lea.vmem %s4, %s3439
        $region64: #{upsample_forward.3} parent=51 // pred_fallthru
          _
      $region52: #{upsample_forward.3} parent=5 // pred_fallthru
        _
    $region6: #{upsample_forward.3} parent=1 // loop_footer
      %s19 = sadd.s32 1, %s15
    $region7: #{upsample_forward.3} parent=1 // loop_footer_branch
      %14 = sbr.rel target = $region3
    $region8: #{upsample_forward.3} parent=1 // loop_exit
      _
    %3441 = vsyncpa [#allocation4], 1
    %s3442 = scalar_lea.sflag [#allocation4], 1
    %3443 = vsyncpa %s3442, 1
    %3444 = vsyncpa [#allocation6], 1

// kernel: tile.8
$region0: #{tile.8}
  #allocation0 [shape = 's32[1]{0}', space=sflag, size = 0x4, scoped, tag = 'scoped memory for tile.8']
  %s0 = inlined_call_operand.vmem [shape: f32[8], index: 0, kind: input, shape index: {}]
  %s1 = inlined_call_operand.vmem [shape: f32[32,8], index: 1, kind: output, shape index: {}]
  // Predicated region
  $region2: #{tile.8} parent=0 // pred_check
    _
  $region3: #{tile.8} parent=0 // pred_check_branch
    %3 = sbr.rel (0) target = $region5
  $region4: #{tile.8} parent=0 // pred_region
    _
  $region5: #{tile.8} parent=0 // pred_fallthru
    _
  %v4 = vld [vmem:[%s0] ss:$0 sm:$0xff]
  %5 = vst [vmem:[%s1] sm:$0xff] %v4
  %s6 = scalar_lea.vmem %s1, 8
  %7 = vst [vmem:[%s6] sm:$0xff] %v4
  %s8 = scalar_lea.vmem %s1, 16
  %9 = vst [vmem:[%s8] sm:$0xff] %v4
  %s10 = scalar_lea.vmem %s1, 24
  %11 = vst [vmem:[%s10] sm:$0xff] %v4

// kernel: upsample_forward.4
$region0: #{upsample_forward.4}
  #allocation0 [shape = 'u32[]', space=smem, size = 0x4, offset = 0x4, fixed_abs, tag = 'smem constant byte address 0x4 - core index']
  #allocation1 [shape = 'u32[144,128]{1,0:T(1,128)}', space=vmem, size = 0x12000, scoped, tag = 'internal scratch']
  #allocation2 [shape = 'f32[18,18,32]{2,1,0:T(8,128)}', space=vmem, size = 0x36000, scoped, tag = 'scratch operand']
  %s0 = inlined_call_operand.vmem [shape: bf16[2,16,16,32], index: 0, kind: input, shape index: {}]
  %s1 = inlined_call_operand.vmem [shape: bf16[3,3,32,16], index: 1, kind: input, shape index: {}]
  %s2 = inlined_call_operand.vmem [shape: f32[1,32], index: 2, kind: input, shape index: {}]
  %s3 = inlined_call_operand.vmem [shape: f32[1,32], index: 3, kind: input, shape index: {}]
  %s4 = inlined_call_operand.vmem [shape: bf16[2,16,16,16], index: 4, kind: output, shape index: {0}]
  %s5 = inlined_call_operand.vmem [shape: f32[2,1,16], index: 5, kind: output, shape index: {1}]
  %s6 = inlined_call_operand.vmem [shape: f32[2,1,16], index: 6, kind: output, shape index: {2}]
  %7 = xla_tuple %s4, %s5, %s6
  %s8 = sld [smem:[#allocation0]]
  $region65: #{upsample_forward.4} parent=0
    _
  %s10 = ssub.s32 1, %s8
  %s11 = scalar_select 0, %s10, %s8
  loop: start=0, step=1, limit=4
  $region2: #{upsample_forward.4} parent=0 // loop_pre_header
    _
  $region3: #{upsample_forward.4} parent=0 // loop_header
    %s13 = sphi 0, %s17
    %p14 = scmp.ge.s32.totalorder %s13, 4
    %s23 = sphi 0, %s25
    %s26 = sphi 0, %s23
    %s27 = sphi 0, %s26
    %s43 = sphi 0, %s27
    %s47 = sphi 0, %s47
    %s49 = sphi 0, %s47
    %s50 = sphi 0, %s49
    %s64 = sphi 0, %s50
    %s68 = sphi 0, %s68
    %s70 = sphi 0, %s68
    %s71 = sphi 0, %s70
    %s85 = sphi 0, %s71
    %s89 = sphi 0, %s89
    %s91 = sphi 0, %s89
    %s92 = sphi 0, %s91
    %s106 = sphi 0, %s92
    %s112 = sphi 0, %s114
    %s115 = sphi 0, %s112
    %s116 = sphi 0, %s115
    %s132 = sphi 0, %s116
    %s138 = sphi 0, %s140
    %s141 = sphi 0, %s138
    %s142 = sphi 0, %s141
    %s158 = sphi 0, %s142
    %s164 = sphi 0, %s166
    %s167 = sphi 0, %s164
    %s168 = sphi 0, %s167
    %s184 = sphi 0, %s168
  $region4: #{upsample_forward.4} parent=0 // loop_header_branch
    %16 = sbr.rel (%p14) target = $region8
  $region5: #{upsample_forward.4} parent=0 // loop_body
    %s18 = ssub.s32 %s13, 1
    %s19 = ssub.s32 %s13, 2
    %s20 = sadd.s32 %s13, 1
    %s21 = ssub.s32 %s13, %s20
    %p22 = scmp.eq.s32.totalorder %s21, 0
    %s24 = sadd.s32 %s23, 1
    %s25 = scalar_select %p22, %s23, %s24
    %p28 = pneg %p22
    %p29 = scmp.eq.s32.totalorder %s13, 1
    %p30 = por %p28, %p29
    %p31 = scmp.ne.s32.totalorder %s23, %s26
    %p32 = scmp.eq.s32.totalorder %s13, 0
    %p33 = por %p31, %p32
    %p34 = scmp.ne.s32.totalorder %s23, %s26
    %p35 = scmp.eq.s32.totalorder %s18, 1
    %p36 = por %p34, %p35
    %p37 = scmp.ne.s32.totalorder %s26, %s27
    %p38 = scmp.eq.s32.totalorder %s18, 0
    %p39 = por %p37, %p38
    %p40 = scmp.ne.s32.totalorder %s26, %s27
    %p41 = scmp.eq.s32.totalorder %s19, 1
    %p42 = por %p40, %p41
    %p44 = scmp.ne.s32.totalorder %s27, %s43
    %p45 = scmp.eq.s32.totalorder %s19, 0
    %p46 = por %p44, %p45
    %s48 = sadd.s32 %s47, 1
    %p51 = scmp.eq.s32.totalorder %s13, 1
    %p52 = scmp.ne.s32.totalorder %s47, %s49
    %p53 = scmp.eq.s32.totalorder %s13, 0
    %p54 = por %p52, %p53
    %p55 = scmp.ne.s32.totalorder %s47, %s49
    %p56 = scmp.eq.s32.totalorder %s18, 1
    %p57 = por %p55, %p56
    %p58 = scmp.ne.s32.totalorder %s49, %s50
    %p59 = scmp.eq.s32.totalorder %s18, 0
    %p60 = por %p58, %p59
    %p61 = scmp.ne.s32.totalorder %s49, %s50
    %p62 = scmp.eq.s32.totalorder %s19, 1
    %p63 = por %p61, %p62
    %p65 = scmp.ne.s32.totalorder %s50, %s64
    %p66 = scmp.eq.s32.totalorder %s19, 0
    %p67 = por %p65, %p66
    %s69 = sadd.s32 %s68, 1
    %p72 = scmp.eq.s32.totalorder %s13, 1
    %p73 = scmp.ne.s32.totalorder %s68, %s70
    %p74 = scmp.eq.s32.totalorder %s13, 0
    %p75 = por %p73, %p74
    %p76 = scmp.ne.s32.totalorder %s68, %s70
    %p77 = scmp.eq.s32.totalorder %s18, 1
    %p78 = por %p76, %p77
    %p79 = scmp.ne.s32.totalorder %s70, %s71
    %p80 = scmp.eq.s32.totalorder %s18, 0
    %p81 = por %p79, %p80
    %p82 = scmp.ne.s32.totalorder %s70, %s71
    %p83 = scmp.eq.s32.totalorder %s19, 1
    %p84 = por %p82, %p83
    %p86 = scmp.ne.s32.totalorder %s71, %s85
    %p87 = scmp.eq.s32.totalorder %s19, 0
    %p88 = por %p86, %p87
    %s90 = sadd.s32 %s89, 1
    %p93 = scmp.eq.s32.totalorder %s13, 1
    %p94 = scmp.ne.s32.totalorder %s89, %s91
    %p95 = scmp.eq.s32.totalorder %s13, 0
    %p96 = por %p94, %p95
    %p97 = scmp.ne.s32.totalorder %s89, %s91
    %p98 = scmp.eq.s32.totalorder %s18, 1
    %p99 = por %p97, %p98
    %p100 = scmp.ne.s32.totalorder %s91, %s92
    %p101 = scmp.eq.s32.totalorder %s18, 0
    %p102 = por %p100, %p101
    %p103 = scmp.ne.s32.totalorder %s91, %s92
    %p104 = scmp.eq.s32.totalorder %s19, 1
    %p105 = por %p103, %p104
    %p107 = scmp.ne.s32.totalorder %s92, %s106
    %p108 = scmp.eq.s32.totalorder %s19, 0
    %p109 = por %p107, %p108
    %s110 = ssub.s32 %s13, %s20
    %p111 = scmp.eq.s32.totalorder %s110, 0
    %s113 = sadd.s32 %s112, 1
    %s114 = scalar_select %p111, %s112, %s113
    %p117 = pneg %p111
    %p118 = scmp.eq.s32.totalorder %s13, 1
    %p119 = por %p117, %p118
    %p120 = scmp.ne.s32.totalorder %s112, %s115
    %p121 = scmp.eq.s32.totalorder %s13, 0
    %p122 = por %p120, %p121
    %p123 = scmp.ne.s32.totalorder %s112, %s115
    %p124 = scmp.eq.s32.totalorder %s18, 1
    %p125 = por %p123, %p124
    %p126 = scmp.ne.s32.totalorder %s115, %s116
    %p127 = scmp.eq.s32.totalorder %s18, 0
    %p128 = por %p126, %p127
    %p129 = scmp.ne.s32.totalorder %s115, %s116
    %p130 = scmp.eq.s32.totalorder %s19, 1
    %p131 = por %p129, %p130
    %p133 = scmp.ne.s32.totalorder %s116, %s132
    %p134 = scmp.eq.s32.totalorder %s19, 0
    %p135 = por %p133, %p134
    %s136 = ssub.s32 %s13, %s20
    %p137 = scmp.eq.s32.totalorder %s136, 0
    %s139 = sadd.s32 %s138, 1
    %s140 = scalar_select %p137, %s138, %s139
    %p143 = pneg %p137
    %p144 = scmp.eq.s32.totalorder %s13, 1
    %p145 = por %p143, %p144
    %p146 = scmp.ne.s32.totalorder %s138, %s141
    %p147 = scmp.eq.s32.totalorder %s13, 0
    %p148 = por %p146, %p147
    %p149 = scmp.ne.s32.totalorder %s138, %s141
    %p150 = scmp.eq.s32.totalorder %s18, 1
    %p151 = por %p149, %p150
    %p152 = scmp.ne.s32.totalorder %s141, %s142
    %p153 = scmp.eq.s32.totalorder %s18, 0
    %p154 = por %p152, %p153
    %p155 = scmp.ne.s32.totalorder %s141, %s142
    %p156 = scmp.eq.s32.totalorder %s19, 1
    %p157 = por %p155, %p156
    %p159 = scmp.ne.s32.totalorder %s142, %s158
    %p160 = scmp.eq.s32.totalorder %s19, 0
    %p161 = por %p159, %p160
    %s162 = ssub.s32 %s13, %s20
    %p163 = scmp.eq.s32.totalorder %s162, 0
    %s165 = sadd.s32 %s164, 1
    %s166 = scalar_select %p163, %s164, %s165
    %p169 = pneg %p163
    %p170 = scmp.eq.s32.totalorder %s13, 1
    %p171 = por %p169, %p170
    %p172 = scmp.ne.s32.totalorder %s164, %s167
    %p173 = scmp.eq.s32.totalorder %s13, 0
    %p174 = por %p172, %p173
    %p175 = scmp.ne.s32.totalorder %s164, %s167
    %p176 = scmp.eq.s32.totalorder %s18, 1
    %p177 = por %p175, %p176
    %p178 = scmp.ne.s32.totalorder %s167, %s168
    %p179 = scmp.eq.s32.totalorder %s18, 0
    %p180 = por %p178, %p179
    %p181 = scmp.ne.s32.totalorder %s167, %s168
    %p182 = scmp.eq.s32.totalorder %s19, 1
    %p183 = por %p181, %p182
    %p185 = scmp.ne.s32.totalorder %s168, %s184
    %p186 = scmp.eq.s32.totalorder %s19, 0
    %p187 = por %p185, %p186
    %p188 = scmp.le.s32.totalorder 1, %s13
    %p189 = scmp.lt.s32.totalorder %s13, 3
    %p190 = pnand %p188, %p189
    %p191 = pneg %p190
    // Predicated region
    $region9: #{upsample_forward.4} parent=5 // pred_check
      _
    $region10: #{upsample_forward.4} parent=5 // pred_check_branch
      %193 = sbr.rel (%p190) target = $region12
    $region11: #{upsample_forward.4} parent=5 // pred_region
      %s194 = ssub.s32 %s13, 1
      // Predicated region
      $region13: #{upsample_forward.4} parent=11 // pred_check
        %p195 = pneg %p60
      $region14: #{upsample_forward.4} parent=11 // pred_check_branch
        %197 = sbr.rel (%p195) target = $region16
      $region15: #{upsample_forward.4} parent=11 // pred_region
        _
      $region16: #{upsample_forward.4} parent=11 // pred_fallthru
        _
      // Predicated region
      $region17: #{upsample_forward.4} parent=11 // pred_check
        %p198 = pneg %p81
      $region18: #{upsample_forward.4} parent=11 // pred_check_branch
        %200 = sbr.rel (%p198) target = $region20
      $region19: #{upsample_forward.4} parent=11 // pred_region
        _
      $region20: #{upsample_forward.4} parent=11 // pred_fallthru
        _
      // Predicated region
      $region21: #{upsample_forward.4} parent=11 // pred_check
        %p201 = pneg %p102
      $region22: #{upsample_forward.4} parent=11 // pred_check_branch
        %203 = sbr.rel (%p201) target = $region24
      $region23: #{upsample_forward.4} parent=11 // pred_region
        _
      $region24: #{upsample_forward.4} parent=11 // pred_fallthru
        _
    $region12: #{upsample_forward.4} parent=5 // pred_fallthru
      _
    %p204 = scmp.lt.s32.totalorder %s13, 2
    // Predicated region
    $region25: #{upsample_forward.4} parent=5 // pred_check
      %p205 = pneg %p204
    $region26: #{upsample_forward.4} parent=5 // pred_check_branch
      %207 = sbr.rel (%p205) target = $region28
    $region27: #{upsample_forward.4} parent=5 // pred_region
      // Predicated region
      $region29: #{upsample_forward.4} parent=27 // pred_check
        %p208 = pneg %p33
      $region30: #{upsample_forward.4} parent=27 // pred_check_branch
        %210 = sbr.rel (%p208) target = $region32
      $region31: #{upsample_forward.4} parent=27 // pred_region
        %p211 = scmp.lt.s32.totalorder %s13, 1
        %s212 = scalar_select %p211, %s13, 1
        %s213 = smul.addr %s212, 32
        %s214 = smul.addr %s213, 4
        %s215 = scalar_lea.vmem %s0, %s214
      $region32: #{upsample_forward.4} parent=27 // pred_fallthru
        _
    $region28: #{upsample_forward.4} parent=5 // pred_fallthru
      _
    %p216 = scmp.le.s32.totalorder 1, %s13
    %p217 = scmp.lt.s32.totalorder %s13, 3
    %p218 = pnand %p216, %p217
    %p219 = pneg %p218
    // Predicated region
    $region33: #{upsample_forward.4} parent=5 // pred_check
      _
    $region34: #{upsample_forward.4} parent=5 // pred_check_branch
      %221 = sbr.rel (%p218) target = $region36
    $region35: #{upsample_forward.4} parent=5 // pred_region
      %s222 = ssub.s32 %s13, 1
      %p223 = scmp.lt.s32.totalorder %s18, 1
      %s224 = scalar_select %p223, %s18, 1
      %s225 = smul.addr %s224, 32
      %s226 = smul.addr %s225, 4
      %s227 = scalar_lea.vmem %s0, %s226
      %p228 = pneg %p39
      %p229 = pneg %p36
      %p230 = pneg %p60
      %p231 = pneg %p57
      %p232 = pneg %p81
      %p233 = pneg %p78
      %p234 = pneg %p102
      %p235 = pneg %p99
      %p236 = pneg %p128
      %p237 = pneg %p125
      %p238 = scmp.lt.s32.totalorder %s18, 1
      %s239 = scalar_select %p238, %s18, 1
      %s240 = smul.addr %s239, 32
      %s241 = smul.addr %s240, 4
      %s242 = scalar_lea.vmem %s4, %s241
      %p243 = pneg %p154
      %p244 = pneg %p151
      %p245 = scmp.lt.s32.totalorder %s18, 1
      %s246 = scalar_select %p245, %s18, 1
      %s247 = scalar_lea.vmem %s5, %s246
      %p248 = pneg %p180
      %p249 = pneg %p177
      %p250 = scmp.lt.s32.totalorder %s18, 1
      %s251 = scalar_select %p250, %s18, 1
      %s252 = scalar_lea.vmem %s6, %s251
      %p253 = scmp.lt.s32.totalorder %s18, 1
      %s254 = scalar_select %p253, %s18, 1
      %s255 = smul.addr %s254, 32
      %s256 = smul.addr %s255, 4
      %s257 = scalar_lea.vmem %s0, %s256
      %p258 = scmp.lt.s32.totalorder %s18, 1
      %s259 = scalar_select %p258, %s18, 1
      %s260 = smul.addr %s259, 32
      %s261 = smul.addr %s260, 4
      %s262 = scalar_lea.vmem %s4, %s261
      %p263 = scmp.lt.s32.totalorder %s18, 1
      %s264 = scalar_select %p263, %s18, 1
      %s265 = scalar_lea.vmem %s5, %s264
      %p266 = scmp.lt.s32.totalorder %s18, 1
      %s267 = scalar_select %p266, %s18, 1
      %s268 = scalar_lea.vmem %s6, %s267
      %v270 = vld [vmem:[%s257] sm:$0xf]
      %v271 = vld [vmem:[%s257 + $0x4] sm:$0xf]
      %v272 = vld [vmem:[%s257 + $0x8] sm:$0xf]
      %v273 = vld [vmem:[%s257 + $0xc] sm:$0xf]
      %v274 = vld [vmem:[%s257 + $0x10] sm:$0xf]
      %v275 = vld [vmem:[%s257 + $0x14] sm:$0xf]
      %v276 = vld [vmem:[%s257 + $0x18] sm:$0xf]
      %v277 = vld [vmem:[%s257 + $0x1c] sm:$0xf]
      %v278 = vld [vmem:[%s257 + $0x20] sm:$0xf]
      %v279 = vld [vmem:[%s257 + $0x24] sm:$0xf]
      %v280 = vld [vmem:[%s257 + $0x28] sm:$0xf]
      %v281 = vld [vmem:[%s257 + $0x2c] sm:$0xf]
      %v282 = vld [vmem:[%s257 + $0x30] sm:$0xf]
      %v283 = vld [vmem:[%s257 + $0x34] sm:$0xf]
      %v284 = vld [vmem:[%s257 + $0x38] sm:$0xf]
      %v285 = vld [vmem:[%s257 + $0x3c] sm:$0xf]
      %v286 = vld [vmem:[%s257 + $0x40] sm:$0xf]
      %v287 = vld [vmem:[%s257 + $0x44] sm:$0xf]
      %v288 = vld [vmem:[%s257 + $0x48] sm:$0xf]
      %v289 = vld [vmem:[%s257 + $0x4c] sm:$0xf]
      %v290 = vld [vmem:[%s257 + $0x50] sm:$0xf]
      %v291 = vld [vmem:[%s257 + $0x54] sm:$0xf]
      %v292 = vld [vmem:[%s257 + $0x58] sm:$0xf]
      %v293 = vld [vmem:[%s257 + $0x5c] sm:$0xf]
      %v294 = vld [vmem:[%s257 + $0x60] sm:$0xf]
      %v295 = vld [vmem:[%s257 + $0x64] sm:$0xf]
      %v296 = vld [vmem:[%s257 + $0x68] sm:$0xf]
      %v297 = vld [vmem:[%s257 + $0x6c] sm:$0xf]
      %v298 = vld [vmem:[%s257 + $0x70] sm:$0xf]
      %v299 = vld [vmem:[%s257 + $0x74] sm:$0xf]
      %v300 = vld [vmem:[%s257 + $0x78] sm:$0xf]
      %v301 = vld [vmem:[%s257 + $0x7c] sm:$0xf]
      %v302 = vunpack.c.l.bf16 %v270
      %v303 = vunpack.c.l.bf16 %v271
      %v304 = vunpack.c.l.bf16 %v272
      %v305 = vunpack.c.l.bf16 %v273
      %v306 = vunpack.c.l.bf16 %v274
      %v307 = vunpack.c.l.bf16 %v275
      %v308 = vunpack.c.l.bf16 %v276
      %v309 = vunpack.c.l.bf16 %v277
      %v310 = vunpack.c.l.bf16 %v278
      %v311 = vunpack.c.l.bf16 %v279
      %v312 = vunpack.c.l.bf16 %v280
      %v313 = vunpack.c.l.bf16 %v281
      %v314 = vunpack.c.l.bf16 %v282
      %v315 = vunpack.c.l.bf16 %v283
      %v316 = vunpack.c.l.bf16 %v284
      %v317 = vunpack.c.l.bf16 %v285
      %v318 = vunpack.c.l.bf16 %v286
      %v319 = vunpack.c.l.bf16 %v287
      %v320 = vunpack.c.l.bf16 %v288
      %v321 = vunpack.c.l.bf16 %v289
      %v322 = vunpack.c.l.bf16 %v290
      %v323 = vunpack.c.l.bf16 %v291
      %v324 = vunpack.c.l.bf16 %v292
      %v325 = vunpack.c.l.bf16 %v293
      %v326 = vunpack.c.l.bf16 %v294
      %v327 = vunpack.c.l.bf16 %v295
      %v328 = vunpack.c.l.bf16 %v296
      %v329 = vunpack.c.l.bf16 %v297
      %v330 = vunpack.c.l.bf16 %v298
      %v331 = vunpack.c.l.bf16 %v299
      %v332 = vunpack.c.l.bf16 %v300
      %v333 = vunpack.c.l.bf16 %v301
      %v334 = vld [vmem:[%s2] sm:$0x1]
      %v336 = vlaneseq
      %v337 = vshrl.u32 %v336, 7
      %v338 = vsub.s32 0, %v337
      %v339 = vrot.slane %v334, %v338
      %v341 = vmul.f32 %v302, %v339
      %v342 = vmul.f32 %v303, %v339
      %v343 = vmul.f32 %v304, %v339
      %v344 = vmul.f32 %v305, %v339
      %v345 = vmul.f32 %v306, %v339
      %v346 = vmul.f32 %v307, %v339
      %v347 = vmul.f32 %v308, %v339
      %v348 = vmul.f32 %v309, %v339
      %v349 = vmul.f32 %v310, %v339
      %v350 = vmul.f32 %v311, %v339
      %v351 = vmul.f32 %v312, %v339
      %v352 = vmul.f32 %v313, %v339
      %v353 = vmul.f32 %v314, %v339
      %v354 = vmul.f32 %v315, %v339
      %v355 = vmul.f32 %v316, %v339
      %v356 = vmul.f32 %v317, %v339
      %v357 = vmul.f32 %v318, %v339
      %v358 = vmul.f32 %v319, %v339
      %v359 = vmul.f32 %v320, %v339
      %v360 = vmul.f32 %v321, %v339
      %v361 = vmul.f32 %v322, %v339
      %v362 = vmul.f32 %v323, %v339
      %v363 = vmul.f32 %v324, %v339
      %v364 = vmul.f32 %v325, %v339
      %v365 = vmul.f32 %v326, %v339
      %v366 = vmul.f32 %v327, %v339
      %v367 = vmul.f32 %v328, %v339
      %v368 = vmul.f32 %v329, %v339
      %v369 = vmul.f32 %v330, %v339
      %v370 = vmul.f32 %v331, %v339
      %v371 = vmul.f32 %v332, %v339
      %v372 = vmul.f32 %v333, %v339
      %v373 = vld [vmem:[%s3] sm:$0x1]
      %v375 = vlaneseq
      %v376 = vshrl.u32 %v375, 7
      %v377 = vsub.s32 0, %v376
      %v378 = vrot.slane %v373, %v377
      %v380 = vadd.f32 %v341, %v378
      %v381 = vadd.f32 %v342, %v378
      %v382 = vadd.f32 %v343, %v378
      %v383 = vadd.f32 %v344, %v378
      %v384 = vadd.f32 %v345, %v378
      %v385 = vadd.f32 %v346, %v378
      %v386 = vadd.f32 %v347, %v378
      %v387 = vadd.f32 %v348, %v378
      %v388 = vadd.f32 %v349, %v378
      %v389 = vadd.f32 %v350, %v378
      %v390 = vadd.f32 %v351, %v378
      %v391 = vadd.f32 %v352, %v378
      %v392 = vadd.f32 %v353, %v378
      %v393 = vadd.f32 %v354, %v378
      %v394 = vadd.f32 %v355, %v378
      %v395 = vadd.f32 %v356, %v378
      %v396 = vadd.f32 %v357, %v378
      %v397 = vadd.f32 %v358, %v378
      %v398 = vadd.f32 %v359, %v378
      %v399 = vadd.f32 %v360, %v378
      %v400 = vadd.f32 %v361, %v378
      %v401 = vadd.f32 %v362, %v378
      %v402 = vadd.f32 %v363, %v378
      %v403 = vadd.f32 %v364, %v378
      %v404 = vadd.f32 %v365, %v378
      %v405 = vadd.f32 %v366, %v378
      %v406 = vadd.f32 %v367, %v378
      %v407 = vadd.f32 %v368, %v378
      %v408 = vadd.f32 %v369, %v378
      %v409 = vadd.f32 %v370, %v378
      %v410 = vadd.f32 %v371, %v378
      %v411 = vadd.f32 %v372, %v378
      %vm412 = vcmp.ge.f32.partialorder %v380, 0.0
      %vm413 = vcmp.ge.f32.partialorder %v381, 0.0
      %vm414 = vcmp.ge.f32.partialorder %v382, 0.0
      %vm415 = vcmp.ge.f32.partialorder %v383, 0.0
      %vm416 = vcmp.ge.f32.partialorder %v384, 0.0
      %vm417 = vcmp.ge.f32.partialorder %v385, 0.0
      %vm418 = vcmp.ge.f32.partialorder %v386, 0.0
      %vm419 = vcmp.ge.f32.partialorder %v387, 0.0
      %vm420 = vcmp.ge.f32.partialorder %v388, 0.0
      %vm421 = vcmp.ge.f32.partialorder %v389, 0.0
      %vm422 = vcmp.ge.f32.partialorder %v390, 0.0
      %vm423 = vcmp.ge.f32.partialorder %v391, 0.0
      %vm424 = vcmp.ge.f32.partialorder %v392, 0.0
      %vm425 = vcmp.ge.f32.partialorder %v393, 0.0
      %vm426 = vcmp.ge.f32.partialorder %v394, 0.0
      %vm427 = vcmp.ge.f32.partialorder %v395, 0.0
      %vm428 = vcmp.ge.f32.partialorder %v396, 0.0
      %vm429 = vcmp.ge.f32.partialorder %v397, 0.0
      %vm430 = vcmp.ge.f32.partialorder %v398, 0.0
      %vm431 = vcmp.ge.f32.partialorder %v399, 0.0
      %vm432 = vcmp.ge.f32.partialorder %v400, 0.0
      %vm433 = vcmp.ge.f32.partialorder %v401, 0.0
      %vm434 = vcmp.ge.f32.partialorder %v402, 0.0
      %vm435 = vcmp.ge.f32.partialorder %v403, 0.0
      %vm436 = vcmp.ge.f32.partialorder %v404, 0.0
      %vm437 = vcmp.ge.f32.partialorder %v405, 0.0
      %vm438 = vcmp.ge.f32.partialorder %v406, 0.0
      %vm439 = vcmp.ge.f32.partialorder %v407, 0.0
      %vm440 = vcmp.ge.f32.partialorder %v408, 0.0
      %vm441 = vcmp.ge.f32.partialorder %v409, 0.0
      %vm442 = vcmp.ge.f32.partialorder %v410, 0.0
      %vm443 = vcmp.ge.f32.partialorder %v411, 0.0
      %v444 = vmul.f32 %v380, 0.01
      %v445 = vmul.f32 %v381, 0.01
      %v446 = vmul.f32 %v382, 0.01
      %v447 = vmul.f32 %v383, 0.01
      %v448 = vmul.f32 %v384, 0.01
      %v449 = vmul.f32 %v385, 0.01
      %v450 = vmul.f32 %v386, 0.01
      %v451 = vmul.f32 %v387, 0.01
      %v452 = vmul.f32 %v388, 0.01
      %v453 = vmul.f32 %v389, 0.01
      %v454 = vmul.f32 %v390, 0.01
      %v455 = vmul.f32 %v391, 0.01
      %v456 = vmul.f32 %v392, 0.01
      %v457 = vmul.f32 %v393, 0.01
      %v458 = vmul.f32 %v394, 0.01
      %v459 = vmul.f32 %v395, 0.01
      %v460 = vmul.f32 %v396, 0.01
      %v461 = vmul.f32 %v397, 0.01
      %v462 = vmul.f32 %v398, 0.01
      %v463 = vmul.f32 %v399, 0.01
      %v464 = vmul.f32 %v400, 0.01
      %v465 = vmul.f32 %v401, 0.01
      %v466 = vmul.f32 %v402, 0.01
      %v467 = vmul.f32 %v403, 0.01
      %v468 = vmul.f32 %v404, 0.01
      %v469 = vmul.f32 %v405, 0.01
      %v470 = vmul.f32 %v406, 0.01
      %v471 = vmul.f32 %v407, 0.01
      %v472 = vmul.f32 %v408, 0.01
      %v473 = vmul.f32 %v409, 0.01
      %v474 = vmul.f32 %v410, 0.01
      %v475 = vmul.f32 %v411, 0.01
      %v476 = vsel %vm412, %v380, %v444
      %v477 = vsel %vm413, %v381, %v445
      %v478 = vsel %vm414, %v382, %v446
      %v479 = vsel %vm415, %v383, %v447
      %v480 = vsel %vm416, %v384, %v448
      %v481 = vsel %vm417, %v385, %v449
      %v482 = vsel %vm418, %v386, %v450
      %v483 = vsel %vm419, %v387, %v451
      %v484 = vsel %vm420, %v388, %v452
      %v485 = vsel %vm421, %v389, %v453
      %v486 = vsel %vm422, %v390, %v454
      %v487 = vsel %vm423, %v391, %v455
      %v488 = vsel %vm424, %v392, %v456
      %v489 = vsel %vm425, %v393, %v457
      %v490 = vsel %vm426, %v394, %v458
      %v491 = vsel %vm427, %v395, %v459
      %v492 = vsel %vm428, %v396, %v460
      %v493 = vsel %vm429, %v397, %v461
      %v494 = vsel %vm430, %v398, %v462
      %v495 = vsel %vm431, %v399, %v463
      %v496 = vsel %vm432, %v400, %v464
      %v497 = vsel %vm433, %v401, %v465
      %v498 = vsel %vm434, %v402, %v466
      %v499 = vsel %vm435, %v403, %v467
      %v500 = vsel %vm436, %v404, %v468
      %v501 = vsel %vm437, %v405, %v469
      %v502 = vsel %vm438, %v406, %v470
      %v503 = vsel %vm439, %v407, %v471
      %v504 = vsel %vm440, %v408, %v472
      %v505 = vsel %vm441, %v409, %v473
      %v506 = vsel %vm442, %v410, %v474
      %v507 = vsel %vm443, %v411, %v475
      %vm508 = vcmask 261120
      %509 = vst.msk [vmem:[#allocation2] sm:$0xff] %vm508, 0.0
      %510 = vst.msk [vmem:[#allocation2 + $0x8] sm:$0xff] %vm508, 0.0
      %vm511 = vcmask 254976
      %512 = vst.msk [vmem:[#allocation2 + $0x10] sm:$0x3] %vm511, 0.0
      %513 = vst.msk [vmem:[#allocation2 + $0x18] sm:$0xff] %vm508, 0.0
      %514 = vst.msk [vmem:[#allocation2 + $0x20] sm:$0xff] %vm508, 0.0
      %515 = vst.msk [vmem:[#allocation2 + $0x28] sm:$0x3] %vm511, 0.0
      %516 = vst.msk [vmem:[#allocation2 + $0x30] sm:$0xff] %vm508, 0.0
      %517 = vst.msk [vmem:[#allocation2 + $0x38] sm:$0xff] %vm508, 0.0
      %518 = vst.msk [vmem:[#allocation2 + $0x40] sm:$0x3] %vm511, 0.0
      %519 = vst.msk [vmem:[#allocation2 + $0x48] sm:$0xff] %vm508, 0.0
      %520 = vst.msk [vmem:[#allocation2 + $0x50] sm:$0xff] %vm508, 0.0
      %521 = vst.msk [vmem:[#allocation2 + $0x58] sm:$0x3] %vm511, 0.0
      %522 = vst.msk [vmem:[#allocation2 + $0x60] sm:$0xff] %vm508, 0.0
      %523 = vst.msk [vmem:[#allocation2 + $0x68] sm:$0xff] %vm508, 0.0
      %524 = vst.msk [vmem:[#allocation2 + $0x70] sm:$0x3] %vm511, 0.0
      %525 = vst.msk [vmem:[#allocation2 + $0x78] sm:$0xff] %vm508, 0.0
      %526 = vst.msk [vmem:[#allocation2 + $0x80] sm:$0xff] %vm508, 0.0
      %527 = vst.msk [vmem:[#allocation2 + $0x88] sm:$0x3] %vm511, 0.0
      %528 = vst.msk [vmem:[#allocation2 + $0x90] sm:$0xff] %vm508, 0.0
      %529 = vst.msk [vmem:[#allocation2 + $0x98] sm:$0xff] %vm508, 0.0
      %530 = vst.msk [vmem:[#allocation2 + $0xa0] sm:$0x3] %vm511, 0.0
      %531 = vst.msk [vmem:[#allocation2 + $0xa8] sm:$0xff] %vm508, 0.0
      %532 = vst.msk [vmem:[#allocation2 + $0xb0] sm:$0xff] %vm508, 0.0
      %533 = vst.msk [vmem:[#allocation2 + $0xb8] sm:$0x3] %vm511, 0.0
      %534 = vst.msk [vmem:[#allocation2 + $0xc0] sm:$0xff] %vm508, 0.0
      %535 = vst.msk [vmem:[#allocation2 + $0xc8] sm:$0xff] %vm508, 0.0
      %536 = vst.msk [vmem:[#allocation2 + $0xd0] sm:$0x3] %vm511, 0.0
      %537 = vst.msk [vmem:[#allocation2 + $0xd8] sm:$0xff] %vm508, 0.0
      %538 = vst.msk [vmem:[#allocation2 + $0xe0] sm:$0xff] %vm508, 0.0
      %539 = vst.msk [vmem:[#allocation2 + $0xe8] sm:$0x3] %vm511, 0.0
      %540 = vst.msk [vmem:[#allocation2 + $0xf0] sm:$0xff] %vm508, 0.0
      %541 = vst.msk [vmem:[#allocation2 + $0xf8] sm:$0xff] %vm508, 0.0
      %542 = vst.msk [vmem:[#allocation2 + $0x100] sm:$0x3] %vm511, 0.0
      %543 = vst.msk [vmem:[#allocation2 + $0x108] sm:$0xff] %vm508, 0.0
      %544 = vst.msk [vmem:[#allocation2 + $0x110] sm:$0xff] %vm508, 0.0
      %545 = vst.msk [vmem:[#allocation2 + $0x118] sm:$0x3] %vm511, 0.0
      %546 = vst.msk [vmem:[#allocation2 + $0x120] sm:$0xff] %vm508, 0.0
      %547 = vst.msk [vmem:[#allocation2 + $0x128] sm:$0xff] %vm508, 0.0
      %548 = vst.msk [vmem:[#allocation2 + $0x130] sm:$0x3] %vm511, 0.0
      %549 = vst.msk [vmem:[#allocation2 + $0x138] sm:$0xff] %vm508, 0.0
      %550 = vst.msk [vmem:[#allocation2 + $0x140] sm:$0xff] %vm508, 0.0
      %551 = vst.msk [vmem:[#allocation2 + $0x148] sm:$0x3] %vm511, 0.0
      %552 = vst.msk [vmem:[#allocation2 + $0x150] sm:$0xff] %vm508, 0.0
      %553 = vst.msk [vmem:[#allocation2 + $0x158] sm:$0xff] %vm508, 0.0
      %554 = vst.msk [vmem:[#allocation2 + $0x160] sm:$0x3] %vm511, 0.0
      %555 = vst.msk [vmem:[#allocation2 + $0x168] sm:$0xff] %vm508, 0.0
      %556 = vst.msk [vmem:[#allocation2 + $0x170] sm:$0xff] %vm508, 0.0
      %557 = vst.msk [vmem:[#allocation2 + $0x178] sm:$0x3] %vm511, 0.0
      %558 = vst.msk [vmem:[#allocation2 + $0x180] sm:$0xff] %vm508, 0.0
      %559 = vst.msk [vmem:[#allocation2 + $0x188] sm:$0xff] %vm508, 0.0
      %560 = vst.msk [vmem:[#allocation2 + $0x190] sm:$0x3] %vm511, 0.0
      %561 = vst.msk [vmem:[#allocation2 + $0x198] sm:$0xff] %vm508, 0.0
      %562 = vst.msk [vmem:[#allocation2 + $0x1a0] sm:$0xff] %vm508, 0.0
      %563 = vst.msk [vmem:[#allocation2 + $0x1a8] sm:$0x3] %vm511, 0.0
      %s564 = scalar_lea.vmem [#allocation2], 24
      %565 = vst.msk [vmem:[%s564 + $0x1] sm:$0xff] %vm508, %v476
      %566 = vst.msk [vmem:[%s564 + $0x9] sm:$0xff] %vm508, %v477
      %567 = vst.msk [vmem:[%s564 + $0x19] sm:$0xff] %vm508, %v478
      %568 = vst.msk [vmem:[%s564 + $0x21] sm:$0xff] %vm508, %v479
      %569 = vst.msk [vmem:[%s564 + $0x31] sm:$0xff] %vm508, %v480
      %570 = vst.msk [vmem:[%s564 + $0x39] sm:$0xff] %vm508, %v481
      %571 = vst.msk [vmem:[%s564 + $0x49] sm:$0xff] %vm508, %v482
      %572 = vst.msk [vmem:[%s564 + $0x51] sm:$0xff] %vm508, %v483
      %573 = vst.msk [vmem:[%s564 + $0x61] sm:$0xff] %vm508, %v484
      %574 = vst.msk [vmem:[%s564 + $0x69] sm:$0xff] %vm508, %v485
      %575 = vst.msk [vmem:[%s564 + $0x79] sm:$0xff] %vm508, %v486
      %576 = vst.msk [vmem:[%s564 + $0x81] sm:$0xff] %vm508, %v487
      %577 = vst.msk [vmem:[%s564 + $0x91] sm:$0xff] %vm508, %v488
      %578 = vst.msk [vmem:[%s564 + $0x99] sm:$0xff] %vm508, %v489
      %579 = vst.msk [vmem:[%s564 + $0xa9] sm:$0xff] %vm508, %v490
      %580 = vst.msk [vmem:[%s564 + $0xb1] sm:$0xff] %vm508, %v491
      %581 = vst.msk [vmem:[%s564 + $0xc1] sm:$0xff] %vm508, %v492
      %582 = vst.msk [vmem:[%s564 + $0xc9] sm:$0xff] %vm508, %v493
      %583 = vst.msk [vmem:[%s564 + $0xd9] sm:$0xff] %vm508, %v494
      %584 = vst.msk [vmem:[%s564 + $0xe1] sm:$0xff] %vm508, %v495
      %585 = vst.msk [vmem:[%s564 + $0xf1] sm:$0xff] %vm508, %v496
      %586 = vst.msk [vmem:[%s564 + $0xf9] sm:$0xff] %vm508, %v497
      %587 = vst.msk [vmem:[%s564 + $0x109] sm:$0xff] %vm508, %v498
      %588 = vst.msk [vmem:[%s564 + $0x111] sm:$0xff] %vm508, %v499
      %589 = vst.msk [vmem:[%s564 + $0x121] sm:$0xff] %vm508, %v500
      %590 = vst.msk [vmem:[%s564 + $0x129] sm:$0xff] %vm508, %v501
      %591 = vst.msk [vmem:[%s564 + $0x139] sm:$0xff] %vm508, %v502
      %592 = vst.msk [vmem:[%s564 + $0x141] sm:$0xff] %vm508, %v503
      %593 = vst.msk [vmem:[%s564 + $0x151] sm:$0xff] %vm508, %v504
      %594 = vst.msk [vmem:[%s564 + $0x159] sm:$0xff] %vm508, %v505
      %595 = vst.msk [vmem:[%s564 + $0x169] sm:$0xff] %vm508, %v506
      %596 = vst.msk [vmem:[%s564 + $0x171] sm:$0xff] %vm508, %v507
      %v597 = vld [vmem:[#allocation2] sm:$0xff]
      %v598 = vld [vmem:[#allocation2 + $0x8] sm:$0xff]
      %v599 = vld [vmem:[#allocation2 + $0x18] sm:$0xff]
      %v600 = vld [vmem:[#allocation2 + $0x20] sm:$0xff]
      %v601 = vld [vmem:[#allocation2 + $0x30] sm:$0xff]
      %v602 = vld [vmem:[#allocation2 + $0x38] sm:$0xff]
      %v603 = vld [vmem:[#allocation2 + $0x48] sm:$0xff]
      %v604 = vld [vmem:[#allocation2 + $0x50] sm:$0xff]
      %v605 = vld [vmem:[#allocation2 + $0x60] sm:$0xff]
      %v606 = vld [vmem:[#allocation2 + $0x68] sm:$0xff]
      %v607 = vld [vmem:[#allocation2 + $0x78] sm:$0xff]
      %v608 = vld [vmem:[#allocation2 + $0x80] sm:$0xff]
      %v609 = vld [vmem:[#allocation2 + $0x90] sm:$0xff]
      %v610 = vld [vmem:[#allocation2 + $0x98] sm:$0xff]
      %v611 = vld [vmem:[#allocation2 + $0xa8] sm:$0xff]
      %v612 = vld [vmem:[#allocation2 + $0xb0] sm:$0xff]
      %v613 = vld [vmem:[#allocation2 + $0xc0] sm:$0xff]
      %v614 = vld [vmem:[#allocation2 + $0xc8] sm:$0xff]
      %v615 = vld [vmem:[#allocation2 + $0xd8] sm:$0xff]
      %v616 = vld [vmem:[#allocation2 + $0xe0] sm:$0xff]
      %v617 = vld [vmem:[#allocation2 + $0xf0] sm:$0xff]
      %v618 = vld [vmem:[#allocation2 + $0xf8] sm:$0xff]
      %v619 = vld [vmem:[#allocation2 + $0x108] sm:$0xff]
      %v620 = vld [vmem:[#allocation2 + $0x110] sm:$0xff]
      %v621 = vld [vmem:[#allocation2 + $0x120] sm:$0xff]
      %v622 = vld [vmem:[#allocation2 + $0x128] sm:$0xff]
      %v623 = vld [vmem:[#allocation2 + $0x138] sm:$0xff]
      %v624 = vld [vmem:[#allocation2 + $0x140] sm:$0xff]
      %v625 = vld [vmem:[#allocation2 + $0x150] sm:$0xff]
      %v626 = vld [vmem:[#allocation2 + $0x158] sm:$0xff]
      %v627 = vld [vmem:[#allocation2 + $0x168] sm:$0xff]
      %v628 = vld [vmem:[#allocation2 + $0x170] sm:$0xff]
      %v629 = vpack.c.bf16 %v598, %v597
      %v630 = vpack.c.bf16 %v600, %v599
      %v631 = vpack.c.bf16 %v602, %v601
      %v632 = vpack.c.bf16 %v604, %v603
      %v633 = vpack.c.bf16 %v606, %v605
      %v634 = vpack.c.bf16 %v608, %v607
      %v635 = vpack.c.bf16 %v610, %v609
      %v636 = vpack.c.bf16 %v612, %v611
      %v637 = vpack.c.bf16 %v614, %v613
      %v638 = vpack.c.bf16 %v616, %v615
      %v639 = vpack.c.bf16 %v618, %v617
      %v640 = vpack.c.bf16 %v620, %v619
      %v641 = vpack.c.bf16 %v622, %v621
      %v642 = vpack.c.bf16 %v624, %v623
      %v643 = vpack.c.bf16 %v626, %v625
      %v644 = vpack.c.bf16 %v628, %v627
      %v645 = vld [vmem:[%s1] sm:$0xf]
      %v646 = vld [vmem:[%s1 + $0x4] sm:$0xf]
      %v647 = vld [vmem:[%s1 + $0x8] sm:$0xf]
      %v648 = vld [vmem:[%s1 + $0xc] sm:$0xf]
      %v649 = vld [vmem:[#allocation2 + $0x1] sm:$0xff]
      %v650 = vld [vmem:[#allocation2 + $0x9] sm:$0xff]
      %v651 = vld [vmem:[#allocation2 + $0x19] sm:$0xff]
      %v652 = vld [vmem:[#allocation2 + $0x21] sm:$0xff]
      %v653 = vld [vmem:[#allocation2 + $0x31] sm:$0xff]
      %v654 = vld [vmem:[#allocation2 + $0x39] sm:$0xff]
      %v655 = vld [vmem:[#allocation2 + $0x49] sm:$0xff]
      %v656 = vld [vmem:[#allocation2 + $0x51] sm:$0xff]
      %v657 = vld [vmem:[#allocation2 + $0x61] sm:$0xff]
      %v658 = vld [vmem:[#allocation2 + $0x69] sm:$0xff]
      %v659 = vld [vmem:[#allocation2 + $0x79] sm:$0xff]
      %v660 = vld [vmem:[#allocation2 + $0x81] sm:$0xff]
      %v661 = vld [vmem:[#allocation2 + $0x91] sm:$0xff]
      %v662 = vld [vmem:[#allocation2 + $0x99] sm:$0xff]
      %v663 = vld [vmem:[#allocation2 + $0xa9] sm:$0xff]
      %v664 = vld [vmem:[#allocation2 + $0xb1] sm:$0xff]
      %v665 = vld [vmem:[#allocation2 + $0xc1] sm:$0xff]
      %v666 = vld [vmem:[#allocation2 + $0xc9] sm:$0xff]
      %v667 = vld [vmem:[#allocation2 + $0xd9] sm:$0xff]
      %v668 = vld [vmem:[#allocation2 + $0xe1] sm:$0xff]
      %v669 = vld [vmem:[#allocation2 + $0xf1] sm:$0xff]
      %v670 = vld [vmem:[#allocation2 + $0xf9] sm:$0xff]
      %v671 = vld [vmem:[#allocation2 + $0x109] sm:$0xff]
      %v672 = vld [vmem:[#allocation2 + $0x111] sm:$0xff]
      %v673 = vld [vmem:[#allocation2 + $0x121] sm:$0xff]
      %v674 = vld [vmem:[#allocation2 + $0x129] sm:$0xff]
      %v675 = vld [vmem:[#allocation2 + $0x139] sm:$0xff]
      %v676 = vld [vmem:[#allocation2 + $0x141] sm:$0xff]
      %v677 = vld [vmem:[#allocation2 + $0x151] sm:$0xff]
      %v678 = vld [vmem:[#allocation2 + $0x159] sm:$0xff]
      %v679 = vld [vmem:[#allocation2 + $0x169] sm:$0xff]
      %v680 = vld [vmem:[#allocation2 + $0x171] sm:$0xff]
      %v681 = vpack.c.bf16 %v650, %v649
      %v682 = vpack.c.bf16 %v652, %v651
      %v683 = vpack.c.bf16 %v654, %v653
      %v684 = vpack.c.bf16 %v656, %v655
      %v685 = vpack.c.bf16 %v658, %v657
      %v686 = vpack.c.bf16 %v660, %v659
      %v687 = vpack.c.bf16 %v662, %v661
      %v688 = vpack.c.bf16 %v664, %v663
      %v689 = vpack.c.bf16 %v666, %v665
      %v690 = vpack.c.bf16 %v668, %v667
      %v691 = vpack.c.bf16 %v670, %v669
      %v692 = vpack.c.bf16 %v672, %v671
      %v693 = vpack.c.bf16 %v674, %v673
      %v694 = vpack.c.bf16 %v676, %v675
      %v695 = vpack.c.bf16 %v678, %v677
      %v696 = vpack.c.bf16 %v680, %v679
      %s697 = scalar_lea.vmem %s1, 16
      %v698 = vld [vmem:[%s697] sm:$0xf]
      %v699 = vld [vmem:[%s697 + $0x4] sm:$0xf]
      %v700 = vld [vmem:[%s697 + $0x8] sm:$0xf]
      %v701 = vld [vmem:[%s697 + $0xc] sm:$0xf]
      %v706 = vunpack.c.l.b16 %v698
      %v707 = vunpack.c.l.b16 %v699
      %v708 = vunpack.c.l.b16 %v700
      %v709 = vunpack.c.l.b16 %v701
      %v710 = vpack.c.b16 %v707, %v706
      %v711 = vpack.c.b16 %v709, %v708
      %v715 = vsel %vm508, %v681, 0
      %v718 = vsel %vm508, %v682, 0
      %v721 = vsel %vm508, %v683, 0
      %v724 = vsel %vm508, %v684, 0
      %v727 = vsel %vm508, %v685, 0
      %v730 = vsel %vm508, %v686, 0
      %v733 = vsel %vm508, %v687, 0
      %v736 = vsel %vm508, %v688, 0
      %v739 = vsel %vm508, %v689, 0
      %v742 = vsel %vm508, %v690, 0
      %v745 = vsel %vm508, %v691, 0
      %v748 = vsel %vm508, %v692, 0
      %v751 = vsel %vm508, %v693, 0
      %v754 = vsel %vm508, %v694, 0
      %v757 = vsel %vm508, %v695, 0
      %v760 = vsel %vm508, %v696, 0
      %762 = vmatprep.subr.bf16.mxu0 0
      %763 = vmatpush1.bf16.msra.mxu0 %v710
      %764 = vmatprep.subr.bf16.mxu0 0
      %765 = vmatpush1.bf16.msra.mxu0 %v711
      %766 = vmatprep.subr.bf16.mxu0 0
      %767 = vmatpush1.bf16.msra.mxu0 0
      %768 = vmatprep.subr.bf16.mxu0 0
      %769 = vmatpush1.bf16.msra.mxu0 0
      %770 = vmatprep.subr.bf16.mxu0 0
      %771 = vmatpush1.bf16.msra.mxu0 0
      %772 = vmatprep.subr.bf16.mxu0 0
      %773 = vmatpush1.bf16.msra.mxu0 0
      %774 = vmatprep.subr.bf16.mxu0 0
      %775 = vmatpush1.bf16.msra.mxu0 0
      %776 = vmatprep.subr.bf16.mxu0 0
      %777 = vmatpush1.bf16.msra.mxu0 0
      %778 = vmatprep.subr.bf16.mxu0 0
      %779 = vmatpush1.bf16.msra.mxu0 0
      %780 = vmatprep.subr.bf16.mxu0 0
      %781 = vmatpush1.bf16.msra.mxu0 0
      %782 = vmatprep.subr.bf16.mxu0 0
      %783 = vmatpush1.bf16.msra.mxu0 0
      %784 = vmatprep.subr.bf16.mxu0 0
      %785 = vmatpush1.bf16.msra.mxu0 0
      %786 = vmatprep.subr.bf16.mxu0 0
      %787 = vmatpush1.bf16.msra.mxu0 0
      %788 = vmatprep.subr.bf16.mxu0 0
      %789 = vmatpush1.bf16.msra.mxu0 0
      %790 = vmatprep.subr.bf16.mxu0 0
      %791 = vmatpush1.bf16.msra.mxu0 0
      %792 = vmatprep.subr.bf16.mxu0 0
      %793 = vmatpush1.bf16.msra.mxu0 0
      %794 = vmatprep.mubr.bf16.mxu0 0
      %795 = vmatmul.mubr.bf16.gmra.mrb[0].mxu0 %v715
      %v796 = vpop.f32.mrb[0].mxu0
      %v797 = vadd.f32 0.0, %v796
      %v798 = vpop.f32.mrb[0].mxu0
      %v799 = vpop.f32.mrb[0].mxu0
      %v800 = vadd.f32 0.0, %v799
      %v801 = vpop.f32.mrb[0].mxu0
      %802 = vmatprep.mubr.bf16.mxu0 0
      %803 = vmatmul.mubr.bf16.gmra.mrb[0].mxu0 %v718
      %v804 = vpop.f32.mrb[0].mxu0
      %v805 = vadd.f32 0.0, %v804
      %v806 = vpop.f32.mrb[0].mxu0
      %v807 = vpop.f32.mrb[0].mxu0
      %v808 = vadd.f32 0.0, %v807
      %v809 = vpop.f32.mrb[0].mxu0
      %810 = vmatprep.mubr.bf16.mxu0 0
      %811 = vmatmul.mubr.bf16.gmra.mrb[0].mxu0 %v721
      %v812 = vpop.f32.mrb[0].mxu0
      %v813 = vadd.f32 0.0, %v812
      %v814 = vpop.f32.mrb[0].mxu0
      %v815 = vpop.f32.mrb[0].mxu0
      %v816 = vadd.f32 0.0, %v815
      %v817 = vpop.f32.mrb[0].mxu0
      %818 = vmatprep.mubr.bf16.mxu0 0
      %819 = vmatmul.mubr.bf16.gmra.mrb[0].mxu0 %v724
      %v820 = vpop.f32.mrb[0].mxu0
      %v821 = vadd.f32 0.0, %v820
      %v822 = vpop.f32.mrb[0].mxu0
      %v823 = vpop.f32.mrb[0].mxu0
      %v824 = vadd.f32 0.0, %v823
      %v825 = vpop.f32.mrb[0].mxu0
      %826 = vmatprep.mubr.bf16.mxu0 0
      %827 = vmatmul.mubr.bf16.gmra.mrb[0].mxu0 %v727
      %v828 = vpop.f32.mrb[0].mxu0
      %v829 = vadd.f32 0.0, %v828
      %v830 = vpop.f32.mrb[0].mxu0
      %v831 = vpop.f32.mrb[0].mxu0
      %v832 = vadd.f32 0.0, %v831
      %v833 = vpop.f32.mrb[0].mxu0
      %834 = vmatprep.mubr.bf16.mxu0 0
      %835 = vmatmul.mubr.bf16.gmra.mrb[0].mxu0 %v730
      %v836 = vpop.f32.mrb[0].mxu0
      %v837 = vadd.f32 0.0, %v836
      %v838 = vpop.f32.mrb[0].mxu0
      %v839 = vpop.f32.mrb[0].mxu0
      %v840 = vadd.f32 0.0, %v839
      %v841 = vpop.f32.mrb[0].mxu0
      %842 = vmatprep.mubr.bf16.mxu0 0
      %843 = vmatmul.mubr.bf16.gmra.mrb[0].mxu0 %v733
      %v844 = vpop.f32.mrb[0].mxu0
      %v845 = vadd.f32 0.0, %v844
      %v846 = vpop.f32.mrb[0].mxu0
      %v847 = vpop.f32.mrb[0].mxu0
      %v848 = vadd.f32 0.0, %v847
      %v849 = vpop.f32.mrb[0].mxu0
      %850 = vmatprep.mubr.bf16.mxu0 0
      %851 = vmatmul.mubr.bf16.gmra.mrb[0].mxu0 %v736
      %v852 = vpop.f32.mrb[0].mxu0
      %v853 = vadd.f32 0.0, %v852
      %v854 = vpop.f32.mrb[0].mxu0
      %v855 = vpop.f32.mrb[0].mxu0
      %v856 = vadd.f32 0.0, %v855
      %v857 = vpop.f32.mrb[0].mxu0
      %858 = vmatprep.mubr.bf16.mxu0 0
      %859 = vmatmul.mubr.bf16.gmra.mrb[0].mxu0 %v739
      %v860 = vpop.f32.mrb[0].mxu0
      %v861 = vadd.f32 0.0, %v860
      %v862 = vpop.f32.mrb[0].mxu0
      %v863 = vpop.f32.mrb[0].mxu0
      %v864 = vadd.f32 0.0, %v863
      %v865 = vpop.f32.mrb[0].mxu0
      %866 = vmatprep.mubr.bf16.mxu0 0
      %867 = vmatmul.mubr.bf16.gmra.mrb[0].mxu0 %v742
      %v868 = vpop.f32.mrb[0].mxu0
      %v869 = vadd.f32 0.0, %v868
      %v870 = vpop.f32.mrb[0].mxu0
      %v871 = vpop.f32.mrb[0].mxu0
      %v872 = vadd.f32 0.0, %v871
      %v873 = vpop.f32.mrb[0].mxu0
      %874 = vmatprep.mubr.bf16.mxu0 0
      %875 = vmatmul.mubr.bf16.gmra.mrb[0].mxu0 %v745
      %v876 = vpop.f32.mrb[0].mxu0
      %v877 = vadd.f32 0.0, %v876
      %v878 = vpop.f32.mrb[0].mxu0
      %v879 = vpop.f32.mrb[0].mxu0
      %v880 = vadd.f32 0.0, %v879
      %v881 = vpop.f32.mrb[0].mxu0
      %882 = vmatprep.mubr.bf16.mxu0 0
      %883 = vmatmul.mubr.bf16.gmra.mrb[0].mxu0 %v748
      %v884 = vpop.f32.mrb[0].mxu0
      %v885 = vadd.f32 0.0, %v884
      %v886 = vpop.f32.mrb[0].mxu0
      %v887 = vpop.f32.mrb[0].mxu0
      %v888 = vadd.f32 0.0, %v887
      %v889 = vpop.f32.mrb[0].mxu0
      %890 = vmatprep.mubr.bf16.mxu0 0
      %891 = vmatmul.mubr.bf16.gmra.mrb[0].mxu0 %v751
      %v892 = vpop.f32.mrb[0].mxu0
      %v893 = vadd.f32 0.0, %v892
      %v894 = vpop.f32.mrb[0].mxu0
      %v895 = vpop.f32.mrb[0].mxu0
      %v896 = vadd.f32 0.0, %v895
      %v897 = vpop.f32.mrb[0].mxu0
      %898 = vmatprep.mubr.bf16.mxu0 0
      %899 = vmatmul.mubr.bf16.gmra.mrb[0].mxu0 %v754
      %v900 = vpop.f32.mrb[0].mxu0
      %v901 = vadd.f32 0.0, %v900
      %v902 = vpop.f32.mrb[0].mxu0
      %v903 = vpop.f32.mrb[0].mxu0
      %v904 = vadd.f32 0.0, %v903
      %v905 = vpop.f32.mrb[0].mxu0
      %906 = vmatprep.mubr.bf16.mxu0 0
      %907 = vmatmul.mubr.bf16.gmra.mrb[0].mxu0 %v757
      %v908 = vpop.f32.mrb[0].mxu0
      %v909 = vadd.f32 0.0, %v908
      %v910 = vpop.f32.mrb[0].mxu0
      %v911 = vpop.f32.mrb[0].mxu0
      %v912 = vadd.f32 0.0, %v911
      %v913 = vpop.f32.mrb[0].mxu0
      %914 = vmatprep.mubr.bf16.mxu0 0
      %915 = vmatmul.mubr.bf16.gmra.mrb[0].mxu0 %v760
      %v916 = vpop.f32.mrb[0].mxu0
      %v917 = vadd.f32 0.0, %v916
      %v918 = vpop.f32.mrb[0].mxu0
      %v919 = vpop.f32.mrb[0].mxu0
      %v920 = vadd.f32 0.0, %v919
      %v921 = vpop.f32.mrb[0].mxu0
      %922 = vdwg.mxu0
      %v927 = vunpack.c.l.b16 %v645
      %v928 = vunpack.c.l.b16 %v646
      %v929 = vunpack.c.l.b16 %v647
      %v930 = vunpack.c.l.b16 %v648
      %v931 = vpack.c.b16 %v928, %v927
      %v932 = vpack.c.b16 %v930, %v929
      %v936 = vsel %vm508, %v629, 0
      %v939 = vsel %vm508, %v630, 0
      %v942 = vsel %vm508, %v631, 0
      %v945 = vsel %vm508, %v632, 0
      %v948 = vsel %vm508, %v633, 0
      %v951 = vsel %vm508, %v634, 0
      %v954 = vsel %vm508, %v635, 0
      %v957 = vsel %vm508, %v636, 0
      %v960 = vsel %vm508, %v637, 0
      %v963 = vsel %vm508, %v638, 0
      %v966 = vsel %vm508, %v639, 0
      %v969 = vsel %vm508, %v640, 0
      %v972 = vsel %vm508, %v641, 0
      %v975 = vsel %vm508, %v642, 0
      %v978 = vsel %vm508, %v643, 0
      %v981 = vsel %vm508, %v644, 0
      %983 = vmatprep.subr.bf16.mxu0 0
      %984 = vmatpush1.bf16.msra.mxu0 %v931
      %985 = vmatprep.subr.bf16.mxu0 0
      %986 = vmatpush1.bf16.msra.mxu0 %v932
      %987 = vmatprep.subr.bf16.mxu0 0
      %988 = vmatpush1.bf16.msra.mxu0 0
      %989 = vmatprep.subr.bf16.mxu0 0
      %990 = vmatpush1.bf16.msra.mxu0 0
      %991 = vmatprep.subr.bf16.mxu0 0
      %992 = vmatpush1.bf16.msra.mxu0 0
      %993 = vmatprep.subr.bf16.mxu0 0
      %994 = vmatpush1.bf16.msra.mxu0 0
      %995 = vmatprep.subr.bf16.mxu0 0
      %996 = vmatpush1.bf16.msra.mxu0 0
      %997 = vmatprep.subr.bf16.mxu0 0
      %998 = vmatpush1.bf16.msra.mxu0 0
      %999 = vmatprep.subr.bf16.mxu0 0
      %1000 = vmatpush1.bf16.msra.mxu0 0
      %1001 = vmatprep.subr.bf16.mxu0 0
      %1002 = vmatpush1.bf16.msra.mxu0 0
      %1003 = vmatprep.subr.bf16.mxu0 0
      %1004 = vmatpush1.bf16.msra.mxu0 0
      %1005 = vmatprep.subr.bf16.mxu0 0
      %1006 = vmatpush1.bf16.msra.mxu0 0
      %1007 = vmatprep.subr.bf16.mxu0 0
      %1008 = vmatpush1.bf16.msra.mxu0 0
      %1009 = vmatprep.subr.bf16.mxu0 0
      %1010 = vmatpush1.bf16.msra.mxu0 0
      %1011 = vmatprep.subr.bf16.mxu0 0
      %1012 = vmatpush1.bf16.msra.mxu0 0
      %1013 = vmatprep.subr.bf16.mxu0 0
      %1014 = vmatpush1.bf16.msra.mxu0 0
      %1015 = vmatprep.mubr.bf16.mxu0 0
      %1016 = vmatmul.mubr.bf16.gmra.mrb[0].mxu0 %v936
      %v1017 = vpop.f32.mrb[0].mxu0
      %v1018 = vadd.f32 %v797, %v1017
      %v1019 = vpop.f32.mrb[0].mxu0
      %v1020 = vpop.f32.mrb[0].mxu0
      %v1021 = vadd.f32 %v800, %v1020
      %v1022 = vpop.f32.mrb[0].mxu0
      %1023 = vmatprep.mubr.bf16.mxu0 0
      %1024 = vmatmul.mubr.bf16.gmra.mrb[0].mxu0 %v939
      %v1025 = vpop.f32.mrb[0].mxu0
      %v1026 = vadd.f32 %v805, %v1025
      %v1027 = vpop.f32.mrb[0].mxu0
      %v1028 = vpop.f32.mrb[0].mxu0
      %v1029 = vadd.f32 %v808, %v1028
      %v1030 = vpop.f32.mrb[0].mxu0
      %1031 = vmatprep.mubr.bf16.mxu0 0
      %1032 = vmatmul.mubr.bf16.gmra.mrb[0].mxu0 %v942
      %v1033 = vpop.f32.mrb[0].mxu0
      %v1034 = vadd.f32 %v813, %v1033
      %v1035 = vpop.f32.mrb[0].mxu0
      %v1036 = vpop.f32.mrb[0].mxu0
      %v1037 = vadd.f32 %v816, %v1036
      %v1038 = vpop.f32.mrb[0].mxu0
      %1039 = vmatprep.mubr.bf16.mxu0 0
      %1040 = vmatmul.mubr.bf16.gmra.mrb[0].mxu0 %v945
      %v1041 = vpop.f32.mrb[0].mxu0
      %v1042 = vadd.f32 %v821, %v1041
      %v1043 = vpop.f32.mrb[0].mxu0
      %v1044 = vpop.f32.mrb[0].mxu0
      %v1045 = vadd.f32 %v824, %v1044
      %v1046 = vpop.f32.mrb[0].mxu0
      %1047 = vmatprep.mubr.bf16.mxu0 0
      %1048 = vmatmul.mubr.bf16.gmra.mrb[0].mxu0 %v948
      %v1049 = vpop.f32.mrb[0].mxu0
      %v1050 = vadd.f32 %v829, %v1049
      %v1051 = vpop.f32.mrb[0].mxu0
      %v1052 = vpop.f32.mrb[0].mxu0
      %v1053 = vadd.f32 %v832, %v1052
      %v1054 = vpop.f32.mrb[0].mxu0
      %1055 = vmatprep.mubr.bf16.mxu0 0
      %1056 = vmatmul.mubr.bf16.gmra.mrb[0].mxu0 %v951
      %v1057 = vpop.f32.mrb[0].mxu0
      %v1058 = vadd.f32 %v837, %v1057
      %v1059 = vpop.f32.mrb[0].mxu0
      %v1060 = vpop.f32.mrb[0].mxu0
      %v1061 = vadd.f32 %v840, %v1060
      %v1062 = vpop.f32.mrb[0].mxu0
      %1063 = vmatprep.mubr.bf16.mxu0 0
      %1064 = vmatmul.mubr.bf16.gmra.mrb[0].mxu0 %v954
      %v1065 = vpop.f32.mrb[0].mxu0
      %v1066 = vadd.f32 %v845, %v1065
      %v1067 = vpop.f32.mrb[0].mxu0
      %v1068 = vpop.f32.mrb[0].mxu0
      %v1069 = vadd.f32 %v848, %v1068
      %v1070 = vpop.f32.mrb[0].mxu0
      %1071 = vmatprep.mubr.bf16.mxu0 0
      %1072 = vmatmul.mubr.bf16.gmra.mrb[0].mxu0 %v957
      %v1073 = vpop.f32.mrb[0].mxu0
      %v1074 = vadd.f32 %v853, %v1073
      %v1075 = vpop.f32.mrb[0].mxu0
      %v1076 = vpop.f32.mrb[0].mxu0
      %v1077 = vadd.f32 %v856, %v1076
      %v1078 = vpop.f32.mrb[0].mxu0
      %1079 = vmatprep.mubr.bf16.mxu0 0
      %1080 = vmatmul.mubr.bf16.gmra.mrb[0].mxu0 %v960
      %v1081 = vpop.f32.mrb[0].mxu0
      %v1082 = vadd.f32 %v861, %v1081
      %v1083 = vpop.f32.mrb[0].mxu0
      %v1084 = vpop.f32.mrb[0].mxu0
      %v1085 = vadd.f32 %v864, %v1084
      %v1086 = vpop.f32.mrb[0].mxu0
      %1087 = vmatprep.mubr.bf16.mxu0 0
      %1088 = vmatmul.mubr.bf16.gmra.mrb[0].mxu0 %v963
      %v1089 = vpop.f32.mrb[0].mxu0
      %v1090 = vadd.f32 %v869, %v1089
      %v1091 = vpop.f32.mrb[0].mxu0
      %v1092 = vpop.f32.mrb[0].mxu0
      %v1093 = vadd.f32 %v872, %v1092
      %v1094 = vpop.f32.mrb[0].mxu0
      %1095 = vmatprep.mubr.bf16.mxu0 0
      %1096 = vmatmul.mubr.bf16.gmra.mrb[0].mxu0 %v966
      %v1097 = vpop.f32.mrb[0].mxu0
      %v1098 = vadd.f32 %v877, %v1097
      %v1099 = vpop.f32.mrb[0].mxu0
      %v1100 = vpop.f32.mrb[0].mxu0
      %v1101 = vadd.f32 %v880, %v1100
      %v1102 = vpop.f32.mrb[0].mxu0
      %1103 = vmatprep.mubr.bf16.mxu0 0
      %1104 = vmatmul.mubr.bf16.gmra.mrb[0].mxu0 %v969
      %v1105 = vpop.f32.mrb[0].mxu0
      %v1106 = vadd.f32 %v885, %v1105
      %v1107 = vpop.f32.mrb[0].mxu0
      %v1108 = vpop.f32.mrb[0].mxu0
      %v1109 = vadd.f32 %v888, %v1108
      %v1110 = vpop.f32.mrb[0].mxu0
      %1111 = vmatprep.mubr.bf16.mxu0 0
      %1112 = vmatmul.mubr.bf16.gmra.mrb[0].mxu0 %v972
      %v1113 = vpop.f32.mrb[0].mxu0
      %v1114 = vadd.f32 %v893, %v1113
      %v1115 = vpop.f32.mrb[0].mxu0
      %v1116 = vpop.f32.mrb[0].mxu0
      %v1117 = vadd.f32 %v896, %v1116
      %v1118 = vpop.f32.mrb[0].mxu0
      %1119 = vmatprep.mubr.bf16.mxu0 0
      %1120 = vmatmul.mubr.bf16.gmra.mrb[0].mxu0 %v975
      %v1121 = vpop.f32.mrb[0].mxu0
      %v1122 = vadd.f32 %v901, %v1121
      %v1123 = vpop.f32.mrb[0].mxu0
      %v1124 = vpop.f32.mrb[0].mxu0
      %v1125 = vadd.f32 %v904, %v1124
      %v1126 = vpop.f32.mrb[0].mxu0
      %1127 = vmatprep.mubr.bf16.mxu0 0
      %1128 = vmatmul.mubr.bf16.gmra.mrb[0].mxu0 %v978
      %v1129 = vpop.f32.mrb[0].mxu0
      %v1130 = vadd.f32 %v909, %v1129
      %v1131 = vpop.f32.mrb[0].mxu0
      %v1132 = vpop.f32.mrb[0].mxu0
      %v1133 = vadd.f32 %v912, %v1132
      %v1134 = vpop.f32.mrb[0].mxu0
      %1135 = vmatprep.mubr.bf16.mxu0 0
      %1136 = vmatmul.mubr.bf16.gmra.mrb[0].mxu0 %v981
      %v1137 = vpop.f32.mrb[0].mxu0
      %v1138 = vadd.f32 %v917, %v1137
      %v1139 = vpop.f32.mrb[0].mxu0
      %v1140 = vpop.f32.mrb[0].mxu0
      %v1141 = vadd.f32 %v920, %v1140
      %v1142 = vpop.f32.mrb[0].mxu0
      %1143 = vdwg.mxu0
      %v1144 = vld [vmem:[#allocation2 + $0x2] sm:$0xff]
      %v1145 = vld [vmem:[#allocation2 + $0xa] sm:$0xff]
      %v1146 = vld [vmem:[#allocation2 + $0x1a] sm:$0xff]
      %v1147 = vld [vmem:[#allocation2 + $0x22] sm:$0xff]
      %v1148 = vld [vmem:[#allocation2 + $0x32] sm:$0xff]
      %v1149 = vld [vmem:[#allocation2 + $0x3a] sm:$0xff]
      %v1150 = vld [vmem:[#allocation2 + $0x4a] sm:$0xff]
      %v1151 = vld [vmem:[#allocation2 + $0x52] sm:$0xff]
      %v1152 = vld [vmem:[#allocation2 + $0x62] sm:$0xff]
      %v1153 = vld [vmem:[#allocation2 + $0x6a] sm:$0xff]
      %v1154 = vld [vmem:[#allocation2 + $0x7a] sm:$0xff]
      %v1155 = vld [vmem:[#allocation2 + $0x82] sm:$0xff]
      %v1156 = vld [vmem:[#allocation2 + $0x92] sm:$0xff]
      %v1157 = vld [vmem:[#allocation2 + $0x9a] sm:$0xff]
      %v1158 = vld [vmem:[#allocation2 + $0xaa] sm:$0xff]
      %v1159 = vld [vmem:[#allocation2 + $0xb2] sm:$0xff]
      %v1160 = vld [vmem:[#allocation2 + $0xc2] sm:$0xff]
      %v1161 = vld [vmem:[#allocation2 + $0xca] sm:$0xff]
      %v1162 = vld [vmem:[#allocation2 + $0xda] sm:$0xff]
      %v1163 = vld [vmem:[#allocation2 + $0xe2] sm:$0xff]
      %v1164 = vld [vmem:[#allocation2 + $0xf2] sm:$0xff]
      %v1165 = vld [vmem:[#allocation2 + $0xfa] sm:$0xff]
      %v1166 = vld [vmem:[#allocation2 + $0x10a] sm:$0xff]
      %v1167 = vld [vmem:[#allocation2 + $0x112] sm:$0xff]
      %v1168 = vld [vmem:[#allocation2 + $0x122] sm:$0xff]
      %v1169 = vld [vmem:[#allocation2 + $0x12a] sm:$0xff]
      %v1170 = vld [vmem:[#allocation2 + $0x13a] sm:$0xff]
      %v1171 = vld [vmem:[#allocation2 + $0x142] sm:$0xff]
      %v1172 = vld [vmem:[#allocation2 + $0x152] sm:$0xff]
      %v1173 = vld [vmem:[#allocation2 + $0x15a] sm:$0xff]
      %v1174 = vld [vmem:[#allocation2 + $0x16a] sm:$0xff]
      %v1175 = vld [vmem:[#allocation2 + $0x172] sm:$0xff]
      %v1176 = vpack.c.bf16 %v1145, %v1144
      %v1177 = vpack.c.bf16 %v1147, %v1146
      %v1178 = vpack.c.bf16 %v1149, %v1148
      %v1179 = vpack.c.bf16 %v1151, %v1150
      %v1180 = vpack.c.bf16 %v1153, %v1152
      %v1181 = vpack.c.bf16 %v1155, %v1154
      %v1182 = vpack.c.bf16 %v1157, %v1156
      %v1183 = vpack.c.bf16 %v1159, %v1158
      %v1184 = vpack.c.bf16 %v1161, %v1160
      %v1185 = vpack.c.bf16 %v1163, %v1162
      %v1186 = vpack.c.bf16 %v1165, %v1164
      %v1187 = vpack.c.bf16 %v1167, %v1166
      %v1188 = vpack.c.bf16 %v1169, %v1168
      %v1189 = vpack.c.bf16 %v1171, %v1170
      %v1190 = vpack.c.bf16 %v1173, %v1172
      %v1191 = vpack.c.bf16 %v1175, %v1174
      %s1192 = scalar_lea.vmem %s1, 32
      %v1193 = vld [vmem:[%s1192] sm:$0xf]
      %v1194 = vld [vmem:[%s1192 + $0x4] sm:$0xf]
      %v1195 = vld [vmem:[%s1192 + $0x8] sm:$0xf]
      %v1196 = vld [vmem:[%s1192 + $0xc] sm:$0xf]
      %v1201 = vunpack.c.l.b16 %v1193
      %v1202 = vunpack.c.l.b16 %v1194
      %v1203 = vunpack.c.l.b16 %v1195
      %v1204 = vunpack.c.l.b16 %v1196
      %v1205 = vpack.c.b16 %v1202, %v1201
      %v1206 = vpack.c.b16 %v1204, %v1203
      %v1210 = vsel %vm508, %v1176, 0
      %v1213 = vsel %vm508, %v1177, 0
      %v1216 = vsel %vm508, %v1178, 0
      %v1219 = vsel %vm508, %v1179, 0
      %v1222 = vsel %vm508, %v1180, 0
      %v1225 = vsel %vm508, %v1181, 0
      %v1228 = vsel %vm508, %v1182, 0
      %v1231 = vsel %vm508, %v1183, 0
      %v1234 = vsel %vm508, %v1184, 0
      %v1237 = vsel %vm508, %v1185, 0
      %v1240 = vsel %vm508, %v1186, 0
      %v1243 = vsel %vm508, %v1187, 0
      %v1246 = vsel %vm508, %v1188, 0
      %v1249 = vsel %vm508, %v1189, 0
      %v1252 = vsel %vm508, %v1190, 0
      %v1255 = vsel %vm508, %v1191, 0
      %1257 = vmatprep.subr.bf16.mxu0 0
      %1258 = vmatpush1.bf16.msra.mxu0 %v1205
      %1259 = vmatprep.subr.bf16.mxu0 0
      %1260 = vmatpush1.bf16.msra.mxu0 %v1206
      %1261 = vmatprep.subr.bf16.mxu0 0
      %1262 = vmatpush1.bf16.msra.mxu0 0
      %1263 = vmatprep.subr.bf16.mxu0 0
      %1264 = vmatpush1.bf16.msra.mxu0 0
      %1265 = vmatprep.subr.bf16.mxu0 0
      %1266 = vmatpush1.bf16.msra.mxu0 0
      %1267 = vmatprep.subr.bf16.mxu0 0
      %1268 = vmatpush1.bf16.msra.mxu0 0
      %1269 = vmatprep.subr.bf16.mxu0 0
      %1270 = vmatpush1.bf16.msra.mxu0 0
      %1271 = vmatprep.subr.bf16.mxu0 0
      %1272 = vmatpush1.bf16.msra.mxu0 0
      %1273 = vmatprep.subr.bf16.mxu0 0
      %1274 = vmatpush1.bf16.msra.mxu0 0
      %1275 = vmatprep.subr.bf16.mxu0 0
      %1276 = vmatpush1.bf16.msra.mxu0 0
      %1277 = vmatprep.subr.bf16.mxu0 0
      %1278 = vmatpush1.bf16.msra.mxu0 0
      %1279 = vmatprep.subr.bf16.mxu0 0
      %1280 = vmatpush1.bf16.msra.mxu0 0
      %1281 = vmatprep.subr.bf16.mxu0 0
      %1282 = vmatpush1.bf16.msra.mxu0 0
      %1283 = vmatprep.subr.bf16.mxu0 0
      %1284 = vmatpush1.bf16.msra.mxu0 0
      %1285 = vmatprep.subr.bf16.mxu0 0
      %1286 = vmatpush1.bf16.msra.mxu0 0
      %1287 = vmatprep.subr.bf16.mxu0 0
      %1288 = vmatpush1.bf16.msra.mxu0 0
      %1289 = vmatprep.mubr.bf16.mxu0 0
      %1290 = vmatmul.mubr.bf16.gmra.mrb[0].mxu0 %v1210
      %v1291 = vpop.f32.mrb[0].mxu0
      %v1292 = vadd.f32 0.0, %v1291
      %v1293 = vpop.f32.mrb[0].mxu0
      %v1294 = vpop.f32.mrb[0].mxu0
      %v1295 = vadd.f32 0.0, %v1294
      %v1296 = vpop.f32.mrb[0].mxu0
      %1297 = vmatprep.mubr.bf16.mxu0 0
      %1298 = vmatmul.mubr.bf16.gmra.mrb[0].mxu0 %v1213
      %v1299 = vpop.f32.mrb[0].mxu0
      %v1300 = vadd.f32 0.0, %v1299
      %v1301 = vpop.f32.mrb[0].mxu0
      %v1302 = vpop.f32.mrb[0].mxu0
      %v1303 = vadd.f32 0.0, %v1302
      %v1304 = vpop.f32.mrb[0].mxu0
      %1305 = vmatprep.mubr.bf16.mxu0 0
      %1306 = vmatmul.mubr.bf16.gmra.mrb[0].mxu0 %v1216
      %v1307 = vpop.f32.mrb[0].mxu0
      %v1308 = vadd.f32 0.0, %v1307
      %v1309 = vpop.f32.mrb[0].mxu0
      %v1310 = vpop.f32.mrb[0].mxu0
      %v1311 = vadd.f32 0.0, %v1310
      %v1312 = vpop.f32.mrb[0].mxu0
      %1313 = vmatprep.mubr.bf16.mxu0 0
      %1314 = vmatmul.mubr.bf16.gmra.mrb[0].mxu0 %v1219
      %v1315 = vpop.f32.mrb[0].mxu0
      %v1316 = vadd.f32 0.0, %v1315
      %v1317 = vpop.f32.mrb[0].mxu0
      %v1318 = vpop.f32.mrb[0].mxu0
      %v1319 = vadd.f32 0.0, %v1318
      %v1320 = vpop.f32.mrb[0].mxu0
      %1321 = vmatprep.mubr.bf16.mxu0 0
      %1322 = vmatmul.mubr.bf16.gmra.mrb[0].mxu0 %v1222
      %v1323 = vpop.f32.mrb[0].mxu0
      %v1324 = vadd.f32 0.0, %v1323
      %v1325 = vpop.f32.mrb[0].mxu0
      %v1326 = vpop.f32.mrb[0].mxu0
      %v1327 = vadd.f32 0.0, %v1326
      %v1328 = vpop.f32.mrb[0].mxu0
      %1329 = vmatprep.mubr.bf16.mxu0 0
      %1330 = vmatmul.mubr.bf16.gmra.mrb[0].mxu0 %v1225
      %v1331 = vpop.f32.mrb[0].mxu0
      %v1332 = vadd.f32 0.0, %v1331
      %v1333 = vpop.f32.mrb[0].mxu0
      %v1334 = vpop.f32.mrb[0].mxu0
      %v1335 = vadd.f32 0.0, %v1334
      %v1336 = vpop.f32.mrb[0].mxu0
      %1337 = vmatprep.mubr.bf16.mxu0 0
      %1338 = vmatmul.mubr.bf16.gmra.mrb[0].mxu0 %v1228
      %v1339 = vpop.f32.mrb[0].mxu0
      %v1340 = vadd.f32 0.0, %v1339
      %v1341 = vpop.f32.mrb[0].mxu0
      %v1342 = vpop.f32.mrb[0].mxu0
      %v1343 = vadd.f32 0.0, %v1342
      %v1344 = vpop.f32.mrb[0].mxu0
      %1345 = vmatprep.mubr.bf16.mxu0 0
      %1346 = vmatmul.mubr.bf16.gmra.mrb[0].mxu0 %v1231
      %v1347 = vpop.f32.mrb[0].mxu0
      %v1348 = vadd.f32 0.0, %v1347
      %v1349 = vpop.f32.mrb[0].mxu0
      %v1350 = vpop.f32.mrb[0].mxu0
      %v1351 = vadd.f32 0.0, %v1350
      %v1352 = vpop.f32.mrb[0].mxu0
      %1353 = vmatprep.mubr.bf16.mxu0 0
      %1354 = vmatmul.mubr.bf16.gmra.mrb[0].mxu0 %v1234
      %v1355 = vpop.f32.mrb[0].mxu0
      %v1356 = vadd.f32 0.0, %v1355
      %v1357 = vpop.f32.mrb[0].mxu0
      %v1358 = vpop.f32.mrb[0].mxu0
      %v1359 = vadd.f32 0.0, %v1358
      %v1360 = vpop.f32.mrb[0].mxu0
      %1361 = vmatprep.mubr.bf16.mxu0 0
      %1362 = vmatmul.mubr.bf16.gmra.mrb[0].mxu0 %v1237
      %v1363 = vpop.f32.mrb[0].mxu0
      %v1364 = vadd.f32 0.0, %v1363
      %v1365 = vpop.f32.mrb[0].mxu0
      %v1366 = vpop.f32.mrb[0].mxu0
      %v1367 = vadd.f32 0.0, %v1366
      %v1368 = vpop.f32.mrb[0].mxu0
      %1369 = vmatprep.mubr.bf16.mxu0 0
      %1370 = vmatmul.mubr.bf16.gmra.mrb[0].mxu0 %v1240
      %v1371 = vpop.f32.mrb[0].mxu0
      %v1372 = vadd.f32 0.0, %v1371
      %v1373 = vpop.f32.mrb[0].mxu0
      %v1374 = vpop.f32.mrb[0].mxu0
      %v1375 = vadd.f32 0.0, %v1374
      %v1376 = vpop.f32.mrb[0].mxu0
      %1377 = vmatprep.mubr.bf16.mxu0 0
      %1378 = vmatmul.mubr.bf16.gmra.mrb[0].mxu0 %v1243
      %v1379 = vpop.f32.mrb[0].mxu0
      %v1380 = vadd.f32 0.0, %v1379
      %v1381 = vpop.f32.mrb[0].mxu0
      %v1382 = vpop.f32.mrb[0].mxu0
      %v1383 = vadd.f32 0.0, %v1382
      %v1384 = vpop.f32.mrb[0].mxu0
      %1385 = vmatprep.mubr.bf16.mxu0 0
      %1386 = vmatmul.mubr.bf16.gmra.mrb[0].mxu0 %v1246
      %v1387 = vpop.f32.mrb[0].mxu0
      %v1388 = vadd.f32 0.0, %v1387
      %v1389 = vpop.f32.mrb[0].mxu0
      %v1390 = vpop.f32.mrb[0].mxu0
      %v1391 = vadd.f32 0.0, %v1390
      %v1392 = vpop.f32.mrb[0].mxu0
      %1393 = vmatprep.mubr.bf16.mxu0 0
      %1394 = vmatmul.mubr.bf16.gmra.mrb[0].mxu0 %v1249
      %v1395 = vpop.f32.mrb[0].mxu0
      %v1396 = vadd.f32 0.0, %v1395
      %v1397 = vpop.f32.mrb[0].mxu0
      %v1398 = vpop.f32.mrb[0].mxu0
      %v1399 = vadd.f32 0.0, %v1398
      %v1400 = vpop.f32.mrb[0].mxu0
      %1401 = vmatprep.mubr.bf16.mxu0 0
      %1402 = vmatmul.mubr.bf16.gmra.mrb[0].mxu0 %v1252
      %v1403 = vpop.f32.mrb[0].mxu0
      %v1404 = vadd.f32 0.0, %v1403
      %v1405 = vpop.f32.mrb[0].mxu0
      %v1406 = vpop.f32.mrb[0].mxu0
      %v1407 = vadd.f32 0.0, %v1406
      %v1408 = vpop.f32.mrb[0].mxu0
      %1409 = vmatprep.mubr.bf16.mxu0 0
      %1410 = vmatmul.mubr.bf16.gmra.mrb[0].mxu0 %v1255
      %v1411 = vpop.f32.mrb[0].mxu0
      %v1412 = vadd.f32 0.0, %v1411
      %v1413 = vpop.f32.mrb[0].mxu0
      %v1414 = vpop.f32.mrb[0].mxu0
      %v1415 = vadd.f32 0.0, %v1414
      %v1416 = vpop.f32.mrb[0].mxu0
      %1417 = vdwg.mxu0
      %v1418 = vadd.f32 %v1018, %v1292
      %v1419 = vadd.f32 %v1021, %v1295
      %v1420 = vadd.f32 %v1026, %v1300
      %v1421 = vadd.f32 %v1029, %v1303
      %v1422 = vadd.f32 %v1034, %v1308
      %v1423 = vadd.f32 %v1037, %v1311
      %v1424 = vadd.f32 %v1042, %v1316
      %v1425 = vadd.f32 %v1045, %v1319
      %v1426 = vadd.f32 %v1050, %v1324
      %v1427 = vadd.f32 %v1053, %v1327
      %v1428 = vadd.f32 %v1058, %v1332
      %v1429 = vadd.f32 %v1061, %v1335
      %v1430 = vadd.f32 %v1066, %v1340
      %v1431 = vadd.f32 %v1069, %v1343
      %v1432 = vadd.f32 %v1074, %v1348
      %v1433 = vadd.f32 %v1077, %v1351
      %v1434 = vadd.f32 %v1082, %v1356
      %v1435 = vadd.f32 %v1085, %v1359
      %v1436 = vadd.f32 %v1090, %v1364
      %v1437 = vadd.f32 %v1093, %v1367
      %v1438 = vadd.f32 %v1098, %v1372
      %v1439 = vadd.f32 %v1101, %v1375
      %v1440 = vadd.f32 %v1106, %v1380
      %v1441 = vadd.f32 %v1109, %v1383
      %v1442 = vadd.f32 %v1114, %v1388
      %v1443 = vadd.f32 %v1117, %v1391
      %v1444 = vadd.f32 %v1122, %v1396
      %v1445 = vadd.f32 %v1125, %v1399
      %v1446 = vadd.f32 %v1130, %v1404
      %v1447 = vadd.f32 %v1133, %v1407
      %v1448 = vadd.f32 %v1138, %v1412
      %v1449 = vadd.f32 %v1141, %v1415
      %v1450 = vld [vmem:[%s564] sm:$0xff]
      %v1451 = vld [vmem:[%s564 + $0x8] sm:$0xff]
      %v1452 = vld [vmem:[%s564 + $0x18] sm:$0xff]
      %v1453 = vld [vmem:[%s564 + $0x20] sm:$0xff]
      %v1454 = vld [vmem:[%s564 + $0x30] sm:$0xff]
      %v1455 = vld [vmem:[%s564 + $0x38] sm:$0xff]
      %v1456 = vld [vmem:[%s564 + $0x48] sm:$0xff]
      %v1457 = vld [vmem:[%s564 + $0x50] sm:$0xff]
      %v1458 = vld [vmem:[%s564 + $0x60] sm:$0xff]
      %v1459 = vld [vmem:[%s564 + $0x68] sm:$0xff]
      %v1460 = vld [vmem:[%s564 + $0x78] sm:$0xff]
      %v1461 = vld [vmem:[%s564 + $0x80] sm:$0xff]
      %v1462 = vld [vmem:[%s564 + $0x90] sm:$0xff]
      %v1463 = vld [vmem:[%s564 + $0x98] sm:$0xff]
      %v1464 = vld [vmem:[%s564 + $0xa8] sm:$0xff]
      %v1465 = vld [vmem:[%s564 + $0xb0] sm:$0xff]
      %v1466 = vld [vmem:[%s564 + $0xc0] sm:$0xff]
      %v1467 = vld [vmem:[%s564 + $0xc8] sm:$0xff]
      %v1468 = vld [vmem:[%s564 + $0xd8] sm:$0xff]
      %v1469 = vld [vmem:[%s564 + $0xe0] sm:$0xff]
      %v1470 = vld [vmem:[%s564 + $0xf0] sm:$0xff]
      %v1471 = vld [vmem:[%s564 + $0xf8] sm:$0xff]
      %v1472 = vld [vmem:[%s564 + $0x108] sm:$0xff]
      %v1473 = vld [vmem:[%s564 + $0x110] sm:$0xff]
      %v1474 = vld [vmem:[%s564 + $0x120] sm:$0xff]
      %v1475 = vld [vmem:[%s564 + $0x128] sm:$0xff]
      %v1476 = vld [vmem:[%s564 + $0x138] sm:$0xff]
      %v1477 = vld [vmem:[%s564 + $0x140] sm:$0xff]
      %v1478 = vld [vmem:[%s564 + $0x150] sm:$0xff]
      %v1479 = vld [vmem:[%s564 + $0x158] sm:$0xff]
      %v1480 = vld [vmem:[%s564 + $0x168] sm:$0xff]
      %v1481 = vld [vmem:[%s564 + $0x170] sm:$0xff]
      %v1482 = vpack.c.bf16 %v1451, %v1450
      %v1483 = vpack.c.bf16 %v1453, %v1452
      %v1484 = vpack.c.bf16 %v1455, %v1454
      %v1485 = vpack.c.bf16 %v1457, %v1456
      %v1486 = vpack.c.bf16 %v1459, %v1458
      %v1487 = vpack.c.bf16 %v1461, %v1460
      %v1488 = vpack.c.bf16 %v1463, %v1462
      %v1489 = vpack.c.bf16 %v1465, %v1464
      %v1490 = vpack.c.bf16 %v1467, %v1466
      %v1491 = vpack.c.bf16 %v1469, %v1468
      %v1492 = vpack.c.bf16 %v1471, %v1470
      %v1493 = vpack.c.bf16 %v1473, %v1472
      %v1494 = vpack.c.bf16 %v1475, %v1474
      %v1495 = vpack.c.bf16 %v1477, %v1476
      %v1496 = vpack.c.bf16 %v1479, %v1478
      %v1497 = vpack.c.bf16 %v1481, %v1480
      %s1498 = scalar_lea.vmem %s1, 48
      %v1499 = vld [vmem:[%s1498] sm:$0xf]
      %v1500 = vld [vmem:[%s1498 + $0x4] sm:$0xf]
      %v1501 = vld [vmem:[%s1498 + $0x8] sm:$0xf]
      %v1502 = vld [vmem:[%s1498 + $0xc] sm:$0xf]
      %v1507 = vunpack.c.l.b16 %v1499
      %v1508 = vunpack.c.l.b16 %v1500
      %v1509 = vunpack.c.l.b16 %v1501
      %v1510 = vunpack.c.l.b16 %v1502
      %v1511 = vpack.c.b16 %v1508, %v1507
      %v1512 = vpack.c.b16 %v1510, %v1509
      %v1516 = vsel %vm508, %v1482, 0
      %v1519 = vsel %vm508, %v1483, 0
      %v1522 = vsel %vm508, %v1484, 0
      %v1525 = vsel %vm508, %v1485, 0
      %v1528 = vsel %vm508, %v1486, 0
      %v1531 = vsel %vm508, %v1487, 0
      %v1534 = vsel %vm508, %v1488, 0
      %v1537 = vsel %vm508, %v1489, 0
      %v1540 = vsel %vm508, %v1490, 0
      %v1543 = vsel %vm508, %v1491, 0
      %v1546 = vsel %vm508, %v1492, 0
      %v1549 = vsel %vm508, %v1493, 0
      %v1552 = vsel %vm508, %v1494, 0
      %v1555 = vsel %vm508, %v1495, 0
      %v1558 = vsel %vm508, %v1496, 0
      %v1561 = vsel %vm508, %v1497, 0
      %1563 = vmatprep.subr.bf16.mxu0 0
      %1564 = vmatpush1.bf16.msra.mxu0 %v1511
      %1565 = vmatprep.subr.bf16.mxu0 0
      %1566 = vmatpush1.bf16.msra.mxu0 %v1512
      %1567 = vmatprep.subr.bf16.mxu0 0
      %1568 = vmatpush1.bf16.msra.mxu0 0
      %1569 = vmatprep.subr.bf16.mxu0 0
      %1570 = vmatpush1.bf16.msra.mxu0 0
      %1571 = vmatprep.subr.bf16.mxu0 0
      %1572 = vmatpush1.bf16.msra.mxu0 0
      %1573 = vmatprep.subr.bf16.mxu0 0
      %1574 = vmatpush1.bf16.msra.mxu0 0
      %1575 = vmatprep.subr.bf16.mxu0 0
      %1576 = vmatpush1.bf16.msra.mxu0 0
      %1577 = vmatprep.subr.bf16.mxu0 0
      %1578 = vmatpush1.bf16.msra.mxu0 0
      %1579 = vmatprep.subr.bf16.mxu0 0
      %1580 = vmatpush1.bf16.msra.mxu0 0
      %1581 = vmatprep.subr.bf16.mxu0 0
      %1582 = vmatpush1.bf16.msra.mxu0 0
      %1583 = vmatprep.subr.bf16.mxu0 0
      %1584 = vmatpush1.bf16.msra.mxu0 0
      %1585 = vmatprep.subr.bf16.mxu0 0
      %1586 = vmatpush1.bf16.msra.mxu0 0
      %1587 = vmatprep.subr.bf16.mxu0 0
      %1588 = vmatpush1.bf16.msra.mxu0 0
      %1589 = vmatprep.subr.bf16.mxu0 0
      %1590 = vmatpush1.bf16.msra.mxu0 0
      %1591 = vmatprep.subr.bf16.mxu0 0
      %1592 = vmatpush1.bf16.msra.mxu0 0
      %1593 = vmatprep.subr.bf16.mxu0 0
      %1594 = vmatpush1.bf16.msra.mxu0 0
      %1595 = vmatprep.mubr.bf16.mxu0 0
      %1596 = vmatmul.mubr.bf16.gmra.mrb[0].mxu0 %v1516
      %v1597 = vpop.f32.mrb[0].mxu0
      %v1598 = vadd.f32 0.0, %v1597
      %v1599 = vpop.f32.mrb[0].mxu0
      %v1600 = vpop.f32.mrb[0].mxu0
      %v1601 = vadd.f32 0.0, %v1600
      %v1602 = vpop.f32.mrb[0].mxu0
      %1603 = vmatprep.mubr.bf16.mxu0 0
      %1604 = vmatmul.mubr.bf16.gmra.mrb[0].mxu0 %v1519
      %v1605 = vpop.f32.mrb[0].mxu0
      %v1606 = vadd.f32 0.0, %v1605
      %v1607 = vpop.f32.mrb[0].mxu0
      %v1608 = vpop.f32.mrb[0].mxu0
      %v1609 = vadd.f32 0.0, %v1608
      %v1610 = vpop.f32.mrb[0].mxu0
      %1611 = vmatprep.mubr.bf16.mxu0 0
      %1612 = vmatmul.mubr.bf16.gmra.mrb[0].mxu0 %v1522
      %v1613 = vpop.f32.mrb[0].mxu0
      %v1614 = vadd.f32 0.0, %v1613
      %v1615 = vpop.f32.mrb[0].mxu0
      %v1616 = vpop.f32.mrb[0].mxu0
      %v1617 = vadd.f32 0.0, %v1616
      %v1618 = vpop.f32.mrb[0].mxu0
      %1619 = vmatprep.mubr.bf16.mxu0 0
      %1620 = vmatmul.mubr.bf16.gmra.mrb[0].mxu0 %v1525
      %v1621 = vpop.f32.mrb[0].mxu0
      %v1622 = vadd.f32 0.0, %v1621
      %v1623 = vpop.f32.mrb[0].mxu0
      %v1624 = vpop.f32.mrb[0].mxu0
      %v1625 = vadd.f32 0.0, %v1624
      %v1626 = vpop.f32.mrb[0].mxu0
      %1627 = vmatprep.mubr.bf16.mxu0 0
      %1628 = vmatmul.mubr.bf16.gmra.mrb[0].mxu0 %v1528
      %v1629 = vpop.f32.mrb[0].mxu0
      %v1630 = vadd.f32 0.0, %v1629
      %v1631 = vpop.f32.mrb[0].mxu0
      %v1632 = vpop.f32.mrb[0].mxu0
      %v1633 = vadd.f32 0.0, %v1632
      %v1634 = vpop.f32.mrb[0].mxu0
      %1635 = vmatprep.mubr.bf16.mxu0 0
      %1636 = vmatmul.mubr.bf16.gmra.mrb[0].mxu0 %v1531
      %v1637 = vpop.f32.mrb[0].mxu0
      %v1638 = vadd.f32 0.0, %v1637
      %v1639 = vpop.f32.mrb[0].mxu0
      %v1640 = vpop.f32.mrb[0].mxu0
      %v1641 = vadd.f32 0.0, %v1640
      %v1642 = vpop.f32.mrb[0].mxu0
      %1643 = vmatprep.mubr.bf16.mxu0 0
      %1644 = vmatmul.mubr.bf16.gmra.mrb[0].mxu0 %v1534
      %v1645 = vpop.f32.mrb[0].mxu0
      %v1646 = vadd.f32 0.0, %v1645
      %v1647 = vpop.f32.mrb[0].mxu0
      %v1648 = vpop.f32.mrb[0].mxu0
      %v1649 = vadd.f32 0.0, %v1648
      %v1650 = vpop.f32.mrb[0].mxu0
      %1651 = vmatprep.mubr.bf16.mxu0 0
      %1652 = vmatmul.mubr.bf16.gmra.mrb[0].mxu0 %v1537
      %v1653 = vpop.f32.mrb[0].mxu0
      %v1654 = vadd.f32 0.0, %v1653
      %v1655 = vpop.f32.mrb[0].mxu0
      %v1656 = vpop.f32.mrb[0].mxu0
      %v1657 = vadd.f32 0.0, %v1656
      %v1658 = vpop.f32.mrb[0].mxu0
      %1659 = vmatprep.mubr.bf16.mxu0 0
      %1660 = vmatmul.mubr.bf16.gmra.mrb[0].mxu0 %v1540
      %v1661 = vpop.f32.mrb[0].mxu0
      %v1662 = vadd.f32 0.0, %v1661
      %v1663 = vpop.f32.mrb[0].mxu0
      %v1664 = vpop.f32.mrb[0].mxu0
      %v1665 = vadd.f32 0.0, %v1664
      %v1666 = vpop.f32.mrb[0].mxu0
      %1667 = vmatprep.mubr.bf16.mxu0 0
      %1668 = vmatmul.mubr.bf16.gmra.mrb[0].mxu0 %v1543
      %v1669 = vpop.f32.mrb[0].mxu0
      %v1670 = vadd.f32 0.0, %v1669
      %v1671 = vpop.f32.mrb[0].mxu0
      %v1672 = vpop.f32.mrb[0].mxu0
      %v1673 = vadd.f32 0.0, %v1672
      %v1674 = vpop.f32.mrb[0].mxu0
      %1675 = vmatprep.mubr.bf16.mxu0 0
      %1676 = vmatmul.mubr.bf16.gmra.mrb[0].mxu0 %v1546
      %v1677 = vpop.f32.mrb[0].mxu0
      %v1678 = vadd.f32 0.0, %v1677
      %v1679 = vpop.f32.mrb[0].mxu0
      %v1680 = vpop.f32.mrb[0].mxu0
      %v1681 = vadd.f32 0.0, %v1680
      %v1682 = vpop.f32.mrb[0].mxu0
      %1683 = vmatprep.mubr.bf16.mxu0 0
      %1684 = vmatmul.mubr.bf16.gmra.mrb[0].mxu0 %v1549
      %v1685 = vpop.f32.mrb[0].mxu0
      %v1686 = vadd.f32 0.0, %v1685
      %v1687 = vpop.f32.mrb[0].mxu0
      %v1688 = vpop.f32.mrb[0].mxu0
      %v1689 = vadd.f32 0.0, %v1688
      %v1690 = vpop.f32.mrb[0].mxu0
      %1691 = vmatprep.mubr.bf16.mxu0 0
      %1692 = vmatmul.mubr.bf16.gmra.mrb[0].mxu0 %v1552
      %v1693 = vpop.f32.mrb[0].mxu0
      %v1694 = vadd.f32 0.0, %v1693
      %v1695 = vpop.f32.mrb[0].mxu0
      %v1696 = vpop.f32.mrb[0].mxu0
      %v1697 = vadd.f32 0.0, %v1696
      %v1698 = vpop.f32.mrb[0].mxu0
      %1699 = vmatprep.mubr.bf16.mxu0 0
      %1700 = vmatmul.mubr.bf16.gmra.mrb[0].mxu0 %v1555
      %v1701 = vpop.f32.mrb[0].mxu0
      %v1702 = vadd.f32 0.0, %v1701
      %v1703 = vpop.f32.mrb[0].mxu0
      %v1704 = vpop.f32.mrb[0].mxu0
      %v1705 = vadd.f32 0.0, %v1704
      %v1706 = vpop.f32.mrb[0].mxu0
      %1707 = vmatprep.mubr.bf16.mxu0 0
      %1708 = vmatmul.mubr.bf16.gmra.mrb[0].mxu0 %v1558
      %v1709 = vpop.f32.mrb[0].mxu0
      %v1710 = vadd.f32 0.0, %v1709
      %v1711 = vpop.f32.mrb[0].mxu0
      %v1712 = vpop.f32.mrb[0].mxu0
      %v1713 = vadd.f32 0.0, %v1712
      %v1714 = vpop.f32.mrb[0].mxu0
      %1715 = vmatprep.mubr.bf16.mxu0 0
      %1716 = vmatmul.mubr.bf16.gmra.mrb[0].mxu0 %v1561
      %v1717 = vpop.f32.mrb[0].mxu0
      %v1718 = vadd.f32 0.0, %v1717
      %v1719 = vpop.f32.mrb[0].mxu0
      %v1720 = vpop.f32.mrb[0].mxu0
      %v1721 = vadd.f32 0.0, %v1720
      %v1722 = vpop.f32.mrb[0].mxu0
      %1723 = vdwg.mxu0
      %v1724 = vadd.f32 %v1418, %v1598
      %v1725 = vadd.f32 %v1419, %v1601
      %v1726 = vadd.f32 %v1420, %v1606
      %v1727 = vadd.f32 %v1421, %v1609
      %v1728 = vadd.f32 %v1422, %v1614
      %v1729 = vadd.f32 %v1423, %v1617
      %v1730 = vadd.f32 %v1424, %v1622
      %v1731 = vadd.f32 %v1425, %v1625
      %v1732 = vadd.f32 %v1426, %v1630
      %v1733 = vadd.f32 %v1427, %v1633
      %v1734 = vadd.f32 %v1428, %v1638
      %v1735 = vadd.f32 %v1429, %v1641
      %v1736 = vadd.f32 %v1430, %v1646
      %v1737 = vadd.f32 %v1431, %v1649
      %v1738 = vadd.f32 %v1432, %v1654
      %v1739 = vadd.f32 %v1433, %v1657
      %v1740 = vadd.f32 %v1434, %v1662
      %v1741 = vadd.f32 %v1435, %v1665
      %v1742 = vadd.f32 %v1436, %v1670
      %v1743 = vadd.f32 %v1437, %v1673
      %v1744 = vadd.f32 %v1438, %v1678
      %v1745 = vadd.f32 %v1439, %v1681
      %v1746 = vadd.f32 %v1440, %v1686
      %v1747 = vadd.f32 %v1441, %v1689
      %v1748 = vadd.f32 %v1442, %v1694
      %v1749 = vadd.f32 %v1443, %v1697
      %v1750 = vadd.f32 %v1444, %v1702
      %v1751 = vadd.f32 %v1445, %v1705
      %v1752 = vadd.f32 %v1446, %v1710
      %v1753 = vadd.f32 %v1447, %v1713
      %v1754 = vadd.f32 %v1448, %v1718
      %v1755 = vadd.f32 %v1449, %v1721
      %v1756 = vld [vmem:[%s564 + $0x1] sm:$0xff]
      %v1757 = vld [vmem:[%s564 + $0x9] sm:$0xff]
      %v1758 = vld [vmem:[%s564 + $0x19] sm:$0xff]
      %v1759 = vld [vmem:[%s564 + $0x21] sm:$0xff]
      %v1760 = vld [vmem:[%s564 + $0x31] sm:$0xff]
      %v1761 = vld [vmem:[%s564 + $0x39] sm:$0xff]
      %v1762 = vld [vmem:[%s564 + $0x49] sm:$0xff]
      %v1763 = vld [vmem:[%s564 + $0x51] sm:$0xff]
      %v1764 = vld [vmem:[%s564 + $0x61] sm:$0xff]
      %v1765 = vld [vmem:[%s564 + $0x69] sm:$0xff]
      %v1766 = vld [vmem:[%s564 + $0x79] sm:$0xff]
      %v1767 = vld [vmem:[%s564 + $0x81] sm:$0xff]
      %v1768 = vld [vmem:[%s564 + $0x91] sm:$0xff]
      %v1769 = vld [vmem:[%s564 + $0x99] sm:$0xff]
      %v1770 = vld [vmem:[%s564 + $0xa9] sm:$0xff]
      %v1771 = vld [vmem:[%s564 + $0xb1] sm:$0xff]
      %v1772 = vld [vmem:[%s564 + $0xc1] sm:$0xff]
      %v1773 = vld [vmem:[%s564 + $0xc9] sm:$0xff]
      %v1774 = vld [vmem:[%s564 + $0xd9] sm:$0xff]
      %v1775 = vld [vmem:[%s564 + $0xe1] sm:$0xff]
      %v1776 = vld [vmem:[%s564 + $0xf1] sm:$0xff]
      %v1777 = vld [vmem:[%s564 + $0xf9] sm:$0xff]
      %v1778 = vld [vmem:[%s564 + $0x109] sm:$0xff]
      %v1779 = vld [vmem:[%s564 + $0x111] sm:$0xff]
      %v1780 = vld [vmem:[%s564 + $0x121] sm:$0xff]
      %v1781 = vld [vmem:[%s564 + $0x129] sm:$0xff]
      %v1782 = vld [vmem:[%s564 + $0x139] sm:$0xff]
      %v1783 = vld [vmem:[%s564 + $0x141] sm:$0xff]
      %v1784 = vld [vmem:[%s564 + $0x151] sm:$0xff]
      %v1785 = vld [vmem:[%s564 + $0x159] sm:$0xff]
      %v1786 = vld [vmem:[%s564 + $0x169] sm:$0xff]
      %v1787 = vld [vmem:[%s564 + $0x171] sm:$0xff]
      %v1788 = vpack.c.bf16 %v1757, %v1756
      %v1789 = vpack.c.bf16 %v1759, %v1758
      %v1790 = vpack.c.bf16 %v1761, %v1760
      %v1791 = vpack.c.bf16 %v1763, %v1762
      %v1792 = vpack.c.bf16 %v1765, %v1764
      %v1793 = vpack.c.bf16 %v1767, %v1766
      %v1794 = vpack.c.bf16 %v1769, %v1768
      %v1795 = vpack.c.bf16 %v1771, %v1770
      %v1796 = vpack.c.bf16 %v1773, %v1772
      %v1797 = vpack.c.bf16 %v1775, %v1774
      %v1798 = vpack.c.bf16 %v1777, %v1776
      %v1799 = vpack.c.bf16 %v1779, %v1778
      %v1800 = vpack.c.bf16 %v1781, %v1780
      %v1801 = vpack.c.bf16 %v1783, %v1782
      %v1802 = vpack.c.bf16 %v1785, %v1784
      %v1803 = vpack.c.bf16 %v1787, %v1786
      %s1804 = scalar_lea.vmem %s1, 64
      %v1805 = vld [vmem:[%s1804] sm:$0xf]
      %v1806 = vld [vmem:[%s1804 + $0x4] sm:$0xf]
      %v1807 = vld [vmem:[%s1804 + $0x8] sm:$0xf]
      %v1808 = vld [vmem:[%s1804 + $0xc] sm:$0xf]
      %v1813 = vunpack.c.l.b16 %v1805
      %v1814 = vunpack.c.l.b16 %v1806
      %v1815 = vunpack.c.l.b16 %v1807
      %v1816 = vunpack.c.l.b16 %v1808
      %v1817 = vpack.c.b16 %v1814, %v1813
      %v1818 = vpack.c.b16 %v1816, %v1815
      %v1822 = vsel %vm508, %v1788, 0
      %v1825 = vsel %vm508, %v1789, 0
      %v1828 = vsel %vm508, %v1790, 0
      %v1831 = vsel %vm508, %v1791, 0
      %v1834 = vsel %vm508, %v1792, 0
      %v1837 = vsel %vm508, %v1793, 0
      %v1840 = vsel %vm508, %v1794, 0
      %v1843 = vsel %vm508, %v1795, 0
      %v1846 = vsel %vm508, %v1796, 0
      %v1849 = vsel %vm508, %v1797, 0
      %v1852 = vsel %vm508, %v1798, 0
      %v1855 = vsel %vm508, %v1799, 0
      %v1858 = vsel %vm508, %v1800, 0
      %v1861 = vsel %vm508, %v1801, 0
      %v1864 = vsel %vm508, %v1802, 0
      %v1867 = vsel %vm508, %v1803, 0
      %1869 = vmatprep.subr.bf16.mxu0 0
      %1870 = vmatpush1.bf16.msra.mxu0 %v1817
      %1871 = vmatprep.subr.bf16.mxu0 0
      %1872 = vmatpush1.bf16.msra.mxu0 %v1818
      %1873 = vmatprep.subr.bf16.mxu0 0
      %1874 = vmatpush1.bf16.msra.mxu0 0
      %1875 = vmatprep.subr.bf16.mxu0 0
      %1876 = vmatpush1.bf16.msra.mxu0 0
      %1877 = vmatprep.subr.bf16.mxu0 0
      %1878 = vmatpush1.bf16.msra.mxu0 0
      %1879 = vmatprep.subr.bf16.mxu0 0
      %1880 = vmatpush1.bf16.msra.mxu0 0
      %1881 = vmatprep.subr.bf16.mxu0 0
      %1882 = vmatpush1.bf16.msra.mxu0 0
      %1883 = vmatprep.subr.bf16.mxu0 0
      %1884 = vmatpush1.bf16.msra.mxu0 0
      %1885 = vmatprep.subr.bf16.mxu0 0
      %1886 = vmatpush1.bf16.msra.mxu0 0
      %1887 = vmatprep.subr.bf16.mxu0 0
      %1888 = vmatpush1.bf16.msra.mxu0 0
      %1889 = vmatprep.subr.bf16.mxu0 0
      %1890 = vmatpush1.bf16.msra.mxu0 0
      %1891 = vmatprep.subr.bf16.mxu0 0
      %1892 = vmatpush1.bf16.msra.mxu0 0
      %1893 = vmatprep.subr.bf16.mxu0 0
      %1894 = vmatpush1.bf16.msra.mxu0 0
      %1895 = vmatprep.subr.bf16.mxu0 0
      %1896 = vmatpush1.bf16.msra.mxu0 0
      %1897 = vmatprep.subr.bf16.mxu0 0
      %1898 = vmatpush1.bf16.msra.mxu0 0
      %1899 = vmatprep.subr.bf16.mxu0 0
      %1900 = vmatpush1.bf16.msra.mxu0 0
      %1901 = vmatprep.mubr.bf16.mxu0 0
      %1902 = vmatmul.mubr.bf16.gmra.mrb[0].mxu0 %v1822
      %v1903 = vpop.f32.mrb[0].mxu0
      %v1904 = vadd.f32 0.0, %v1903
      %v1905 = vpop.f32.mrb[0].mxu0
      %v1906 = vpop.f32.mrb[0].mxu0
      %v1907 = vadd.f32 0.0, %v1906
      %v1908 = vpop.f32.mrb[0].mxu0
      %1909 = vmatprep.mubr.bf16.mxu0 0
      %1910 = vmatmul.mubr.bf16.gmra.mrb[0].mxu0 %v1825
      %v1911 = vpop.f32.mrb[0].mxu0
      %v1912 = vadd.f32 0.0, %v1911
      %v1913 = vpop.f32.mrb[0].mxu0
      %v1914 = vpop.f32.mrb[0].mxu0
      %v1915 = vadd.f32 0.0, %v1914
      %v1916 = vpop.f32.mrb[0].mxu0
      %1917 = vmatprep.mubr.bf16.mxu0 0
      %1918 = vmatmul.mubr.bf16.gmra.mrb[0].mxu0 %v1828
      %v1919 = vpop.f32.mrb[0].mxu0
      %v1920 = vadd.f32 0.0, %v1919
      %v1921 = vpop.f32.mrb[0].mxu0
      %v1922 = vpop.f32.mrb[0].mxu0
      %v1923 = vadd.f32 0.0, %v1922
      %v1924 = vpop.f32.mrb[0].mxu0
      %1925 = vmatprep.mubr.bf16.mxu0 0
      %1926 = vmatmul.mubr.bf16.gmra.mrb[0].mxu0 %v1831
      %v1927 = vpop.f32.mrb[0].mxu0
      %v1928 = vadd.f32 0.0, %v1927
      %v1929 = vpop.f32.mrb[0].mxu0
      %v1930 = vpop.f32.mrb[0].mxu0
      %v1931 = vadd.f32 0.0, %v1930
      %v1932 = vpop.f32.mrb[0].mxu0
      %1933 = vmatprep.mubr.bf16.mxu0 0
      %1934 = vmatmul.mubr.bf16.gmra.mrb[0].mxu0 %v1834
      %v1935 = vpop.f32.mrb[0].mxu0
      %v1936 = vadd.f32 0.0, %v1935
      %v1937 = vpop.f32.mrb[0].mxu0
      %v1938 = vpop.f32.mrb[0].mxu0
      %v1939 = vadd.f32 0.0, %v1938
      %v1940 = vpop.f32.mrb[0].mxu0
      %1941 = vmatprep.mubr.bf16.mxu0 0
      %1942 = vmatmul.mubr.bf16.gmra.mrb[0].mxu0 %v1837
      %v1943 = vpop.f32.mrb[0].mxu0
      %v1944 = vadd.f32 0.0, %v1943
      %v1945 = vpop.f32.mrb[0].mxu0
      %v1946 = vpop.f32.mrb[0].mxu0
      %v1947 = vadd.f32 0.0, %v1946
      %v1948 = vpop.f32.mrb[0].mxu0
      %1949 = vmatprep.mubr.bf16.mxu0 0
      %1950 = vmatmul.mubr.bf16.gmra.mrb[0].mxu0 %v1840
      %v1951 = vpop.f32.mrb[0].mxu0
      %v1952 = vadd.f32 0.0, %v1951
      %v1953 = vpop.f32.mrb[0].mxu0
      %v1954 = vpop.f32.mrb[0].mxu0
      %v1955 = vadd.f32 0.0, %v1954
      %v1956 = vpop.f32.mrb[0].mxu0
      %1957 = vmatprep.mubr.bf16.mxu0 0
      %1958 = vmatmul.mubr.bf16.gmra.mrb[0].mxu0 %v1843
      %v1959 = vpop.f32.mrb[0].mxu0
      %v1960 = vadd.f32 0.0, %v1959
      %v1961 = vpop.f32.mrb[0].mxu0
      %v1962 = vpop.f32.mrb[0].mxu0
      %v1963 = vadd.f32 0.0, %v1962
      %v1964 = vpop.f32.mrb[0].mxu0
      %1965 = vmatprep.mubr.bf16.mxu0 0
      %1966 = vmatmul.mubr.bf16.gmra.mrb[0].mxu0 %v1846
      %v1967 = vpop.f32.mrb[0].mxu0
      %v1968 = vadd.f32 0.0, %v1967
      %v1969 = vpop.f32.mrb[0].mxu0
      %v1970 = vpop.f32.mrb[0].mxu0
      %v1971 = vadd.f32 0.0, %v1970
      %v1972 = vpop.f32.mrb[0].mxu0
      %1973 = vmatprep.mubr.bf16.mxu0 0
      %1974 = vmatmul.mubr.bf16.gmra.mrb[0].mxu0 %v1849
      %v1975 = vpop.f32.mrb[0].mxu0
      %v1976 = vadd.f32 0.0, %v1975
      %v1977 = vpop.f32.mrb[0].mxu0
      %v1978 = vpop.f32.mrb[0].mxu0
      %v1979 = vadd.f32 0.0, %v1978
      %v1980 = vpop.f32.mrb[0].mxu0
      %1981 = vmatprep.mubr.bf16.mxu0 0
      %1982 = vmatmul.mubr.bf16.gmra.mrb[0].mxu0 %v1852
      %v1983 = vpop.f32.mrb[0].mxu0
      %v1984 = vadd.f32 0.0, %v1983
      %v1985 = vpop.f32.mrb[0].mxu0
      %v1986 = vpop.f32.mrb[0].mxu0
      %v1987 = vadd.f32 0.0, %v1986
      %v1988 = vpop.f32.mrb[0].mxu0
      %1989 = vmatprep.mubr.bf16.mxu0 0
      %1990 = vmatmul.mubr.bf16.gmra.mrb[0].mxu0 %v1855
      %v1991 = vpop.f32.mrb[0].mxu0
      %v1992 = vadd.f32 0.0, %v1991
      %v1993 = vpop.f32.mrb[0].mxu0
      %v1994 = vpop.f32.mrb[0].mxu0
      %v1995 = vadd.f32 0.0, %v1994
      %v1996 = vpop.f32.mrb[0].mxu0
      %1997 = vmatprep.mubr.bf16.mxu0 0
      %1998 = vmatmul.mubr.bf16.gmra.mrb[0].mxu0 %v1858
      %v1999 = vpop.f32.mrb[0].mxu0
      %v2000 = vadd.f32 0.0, %v1999
      %v2001 = vpop.f32.mrb[0].mxu0
      %v2002 = vpop.f32.mrb[0].mxu0
      %v2003 = vadd.f32 0.0, %v2002
      %v2004 = vpop.f32.mrb[0].mxu0
      %2005 = vmatprep.mubr.bf16.mxu0 0
      %2006 = vmatmul.mubr.bf16.gmra.mrb[0].mxu0 %v1861
      %v2007 = vpop.f32.mrb[0].mxu0
      %v2008 = vadd.f32 0.0, %v2007
      %v2009 = vpop.f32.mrb[0].mxu0
      %v2010 = vpop.f32.mrb[0].mxu0
      %v2011 = vadd.f32 0.0, %v2010
      %v2012 = vpop.f32.mrb[0].mxu0
      %2013 = vmatprep.mubr.bf16.mxu0 0
      %2014 = vmatmul.mubr.bf16.gmra.mrb[0].mxu0 %v1864
      %v2015 = vpop.f32.mrb[0].mxu0
      %v2016 = vadd.f32 0.0, %v2015
      %v2017 = vpop.f32.mrb[0].mxu0
      %v2018 = vpop.f32.mrb[0].mxu0
      %v2019 = vadd.f32 0.0, %v2018
      %v2020 = vpop.f32.mrb[0].mxu0
      %2021 = vmatprep.mubr.bf16.mxu0 0
      %2022 = vmatmul.mubr.bf16.gmra.mrb[0].mxu0 %v1867
      %v2023 = vpop.f32.mrb[0].mxu0
      %v2024 = vadd.f32 0.0, %v2023
      %v2025 = vpop.f32.mrb[0].mxu0
      %v2026 = vpop.f32.mrb[0].mxu0
      %v2027 = vadd.f32 0.0, %v2026
      %v2028 = vpop.f32.mrb[0].mxu0
      %2029 = vdwg.mxu0
      %v2030 = vadd.f32 %v1724, %v1904
      %v2031 = vadd.f32 %v1725, %v1907
      %v2032 = vadd.f32 %v1726, %v1912
      %v2033 = vadd.f32 %v1727, %v1915
      %v2034 = vadd.f32 %v1728, %v1920
      %v2035 = vadd.f32 %v1729, %v1923
      %v2036 = vadd.f32 %v1730, %v1928
      %v2037 = vadd.f32 %v1731, %v1931
      %v2038 = vadd.f32 %v1732, %v1936
      %v2039 = vadd.f32 %v1733, %v1939
      %v2040 = vadd.f32 %v1734, %v1944
      %v2041 = vadd.f32 %v1735, %v1947
      %v2042 = vadd.f32 %v1736, %v1952
      %v2043 = vadd.f32 %v1737, %v1955
      %v2044 = vadd.f32 %v1738, %v1960
      %v2045 = vadd.f32 %v1739, %v1963
      %v2046 = vadd.f32 %v1740, %v1968
      %v2047 = vadd.f32 %v1741, %v1971
      %v2048 = vadd.f32 %v1742, %v1976
      %v2049 = vadd.f32 %v1743, %v1979
      %v2050 = vadd.f32 %v1744, %v1984
      %v2051 = vadd.f32 %v1745, %v1987
      %v2052 = vadd.f32 %v1746, %v1992
      %v2053 = vadd.f32 %v1747, %v1995
      %v2054 = vadd.f32 %v1748, %v2000
      %v2055 = vadd.f32 %v1749, %v2003
      %v2056 = vadd.f32 %v1750, %v2008
      %v2057 = vadd.f32 %v1751, %v2011
      %v2058 = vadd.f32 %v1752, %v2016
      %v2059 = vadd.f32 %v1753, %v2019
      %v2060 = vadd.f32 %v1754, %v2024
      %v2061 = vadd.f32 %v1755, %v2027
      %v2062 = vld [vmem:[%s564 + $0x2] sm:$0xff]
      %v2063 = vld [vmem:[%s564 + $0xa] sm:$0xff]
      %v2064 = vld [vmem:[%s564 + $0x1a] sm:$0xff]
      %v2065 = vld [vmem:[%s564 + $0x22] sm:$0xff]
      %v2066 = vld [vmem:[%s564 + $0x32] sm:$0xff]
      %v2067 = vld [vmem:[%s564 + $0x3a] sm:$0xff]
      %v2068 = vld [vmem:[%s564 + $0x4a] sm:$0xff]
      %v2069 = vld [vmem:[%s564 + $0x52] sm:$0xff]
      %v2070 = vld [vmem:[%s564 + $0x62] sm:$0xff]
      %v2071 = vld [vmem:[%s564 + $0x6a] sm:$0xff]
      %v2072 = vld [vmem:[%s564 + $0x7a] sm:$0xff]
      %v2073 = vld [vmem:[%s564 + $0x82] sm:$0xff]
      %v2074 = vld [vmem:[%s564 + $0x92] sm:$0xff]
      %v2075 = vld [vmem:[%s564 + $0x9a] sm:$0xff]
      %v2076 = vld [vmem:[%s564 + $0xaa] sm:$0xff]
      %v2077 = vld [vmem:[%s564 + $0xb2] sm:$0xff]
      %v2078 = vld [vmem:[%s564 + $0xc2] sm:$0xff]
      %v2079 = vld [vmem:[%s564 + $0xca] sm:$0xff]
      %v2080 = vld [vmem:[%s564 + $0xda] sm:$0xff]
      %v2081 = vld [vmem:[%s564 + $0xe2] sm:$0xff]
      %v2082 = vld [vmem:[%s564 + $0xf2] sm:$0xff]
      %v2083 = vld [vmem:[%s564 + $0xfa] sm:$0xff]
      %v2084 = vld [vmem:[%s564 + $0x10a] sm:$0xff]
      %v2085 = vld [vmem:[%s564 + $0x112] sm:$0xff]
      %v2086 = vld [vmem:[%s564 + $0x122] sm:$0xff]
      %v2087 = vld [vmem:[%s564 + $0x12a] sm:$0xff]
      %v2088 = vld [vmem:[%s564 + $0x13a] sm:$0xff]
      %v2089 = vld [vmem:[%s564 + $0x142] sm:$0xff]
      %v2090 = vld [vmem:[%s564 + $0x152] sm:$0xff]
      %v2091 = vld [vmem:[%s564 + $0x15a] sm:$0xff]
      %v2092 = vld [vmem:[%s564 + $0x16a] sm:$0xff]
      %v2093 = vld [vmem:[%s564 + $0x172] sm:$0xff]
      %v2094 = vpack.c.bf16 %v2063, %v2062
      %v2095 = vpack.c.bf16 %v2065, %v2064
      %v2096 = vpack.c.bf16 %v2067, %v2066
      %v2097 = vpack.c.bf16 %v2069, %v2068
      %v2098 = vpack.c.bf16 %v2071, %v2070
      %v2099 = vpack.c.bf16 %v2073, %v2072
      %v2100 = vpack.c.bf16 %v2075, %v2074
      %v2101 = vpack.c.bf16 %v2077, %v2076
      %v2102 = vpack.c.bf16 %v2079, %v2078
      %v2103 = vpack.c.bf16 %v2081, %v2080
      %v2104 = vpack.c.bf16 %v2083, %v2082
      %v2105 = vpack.c.bf16 %v2085, %v2084
      %v2106 = vpack.c.bf16 %v2087, %v2086
      %v2107 = vpack.c.bf16 %v2089, %v2088
      %v2108 = vpack.c.bf16 %v2091, %v2090
      %v2109 = vpack.c.bf16 %v2093, %v2092
      %s2110 = scalar_lea.vmem %s1, 80
      %v2111 = vld [vmem:[%s2110] sm:$0xf]
      %v2112 = vld [vmem:[%s2110 + $0x4] sm:$0xf]
      %v2113 = vld [vmem:[%s2110 + $0x8] sm:$0xf]
      %v2114 = vld [vmem:[%s2110 + $0xc] sm:$0xf]
      %v2119 = vunpack.c.l.b16 %v2111
      %v2120 = vunpack.c.l.b16 %v2112
      %v2121 = vunpack.c.l.b16 %v2113
      %v2122 = vunpack.c.l.b16 %v2114
      %v2123 = vpack.c.b16 %v2120, %v2119
      %v2124 = vpack.c.b16 %v2122, %v2121
      %v2128 = vsel %vm508, %v2094, 0
      %v2131 = vsel %vm508, %v2095, 0
      %v2134 = vsel %vm508, %v2096, 0
      %v2137 = vsel %vm508, %v2097, 0
      %v2140 = vsel %vm508, %v2098, 0
      %v2143 = vsel %vm508, %v2099, 0
      %v2146 = vsel %vm508, %v2100, 0
      %v2149 = vsel %vm508, %v2101, 0
      %v2152 = vsel %vm508, %v2102, 0
      %v2155 = vsel %vm508, %v2103, 0
      %v2158 = vsel %vm508, %v2104, 0
      %v2161 = vsel %vm508, %v2105, 0
      %v2164 = vsel %vm508, %v2106, 0
      %v2167 = vsel %vm508, %v2107, 0
      %v2170 = vsel %vm508, %v2108, 0
      %v2173 = vsel %vm508, %v2109, 0
      %2175 = vmatprep.subr.bf16.mxu0 0
      %2176 = vmatpush1.bf16.msra.mxu0 %v2123
      %2177 = vmatprep.subr.bf16.mxu0 0
      %2178 = vmatpush1.bf16.msra.mxu0 %v2124
      %2179 = vmatprep.subr.bf16.mxu0 0
      %2180 = vmatpush1.bf16.msra.mxu0 0
      %2181 = vmatprep.subr.bf16.mxu0 0
      %2182 = vmatpush1.bf16.msra.mxu0 0
      %2183 = vmatprep.subr.bf16.mxu0 0
      %2184 = vmatpush1.bf16.msra.mxu0 0
      %2185 = vmatprep.subr.bf16.mxu0 0
      %2186 = vmatpush1.bf16.msra.mxu0 0
      %2187 = vmatprep.subr.bf16.mxu0 0
      %2188 = vmatpush1.bf16.msra.mxu0 0
      %2189 = vmatprep.subr.bf16.mxu0 0
      %2190 = vmatpush1.bf16.msra.mxu0 0
      %2191 = vmatprep.subr.bf16.mxu0 0
      %2192 = vmatpush1.bf16.msra.mxu0 0
      %2193 = vmatprep.subr.bf16.mxu0 0
      %2194 = vmatpush1.bf16.msra.mxu0 0
      %2195 = vmatprep.subr.bf16.mxu0 0
      %2196 = vmatpush1.bf16.msra.mxu0 0
      %2197 = vmatprep.subr.bf16.mxu0 0
      %2198 = vmatpush1.bf16.msra.mxu0 0
      %2199 = vmatprep.subr.bf16.mxu0 0
      %2200 = vmatpush1.bf16.msra.mxu0 0
      %2201 = vmatprep.subr.bf16.mxu0 0
      %2202 = vmatpush1.bf16.msra.mxu0 0
      %2203 = vmatprep.subr.bf16.mxu0 0
      %2204 = vmatpush1.bf16.msra.mxu0 0
      %2205 = vmatprep.subr.bf16.mxu0 0
      %2206 = vmatpush1.bf16.msra.mxu0 0
      %2207 = vmatprep.mubr.bf16.mxu0 0
      %2208 = vmatmul.mubr.bf16.gmra.mrb[0].mxu0 %v2128
      %v2209 = vpop.f32.mrb[0].mxu0
      %v2210 = vadd.f32 0.0, %v2209
      %v2211 = vpop.f32.mrb[0].mxu0
      %v2212 = vpop.f32.mrb[0].mxu0
      %v2213 = vadd.f32 0.0, %v2212
      %v2214 = vpop.f32.mrb[0].mxu0
      %2215 = vmatprep.mubr.bf16.mxu0 0
      %2216 = vmatmul.mubr.bf16.gmra.mrb[0].mxu0 %v2131
      %v2217 = vpop.f32.mrb[0].mxu0
      %v2218 = vadd.f32 0.0, %v2217
      %v2219 = vpop.f32.mrb[0].mxu0
      %v2220 = vpop.f32.mrb[0].mxu0
      %v2221 = vadd.f32 0.0, %v2220
      %v2222 = vpop.f32.mrb[0].mxu0
      %2223 = vmatprep.mubr.bf16.mxu0 0
      %2224 = vmatmul.mubr.bf16.gmra.mrb[0].mxu0 %v2134
      %v2225 = vpop.f32.mrb[0].mxu0
      %v2226 = vadd.f32 0.0, %v2225
      %v2227 = vpop.f32.mrb[0].mxu0
      %v2228 = vpop.f32.mrb[0].mxu0
      %v2229 = vadd.f32 0.0, %v2228
      %v2230 = vpop.f32.mrb[0].mxu0
      %2231 = vmatprep.mubr.bf16.mxu0 0
      %2232 = vmatmul.mubr.bf16.gmra.mrb[0].mxu0 %v2137
      %v2233 = vpop.f32.mrb[0].mxu0
      %v2234 = vadd.f32 0.0, %v2233
      %v2235 = vpop.f32.mrb[0].mxu0
      %v2236 = vpop.f32.mrb[0].mxu0
      %v2237 = vadd.f32 0.0, %v2236
      %v2238 = vpop.f32.mrb[0].mxu0
      %2239 = vmatprep.mubr.bf16.mxu0 0
      %2240 = vmatmul.mubr.bf16.gmra.mrb[0].mxu0 %v2140
      %v2241 = vpop.f32.mrb[0].mxu0
      %v2242 = vadd.f32 0.0, %v2241
      %v2243 = vpop.f32.mrb[0].mxu0
      %v2244 = vpop.f32.mrb[0].mxu0
      %v2245 = vadd.f32 0.0, %v2244
      %v2246 = vpop.f32.mrb[0].mxu0
      %2247 = vmatprep.mubr.bf16.mxu0 0
      %2248 = vmatmul.mubr.bf16.gmra.mrb[0].mxu0 %v2143
      %v2249 = vpop.f32.mrb[0].mxu0
      %v2250 = vadd.f32 0.0, %v2249
      %v2251 = vpop.f32.mrb[0].mxu0
      %v2252 = vpop.f32.mrb[0].mxu0
      %v2253 = vadd.f32 0.0, %v2252
      %v2254 = vpop.f32.mrb[0].mxu0
      %2255 = vmatprep.mubr.bf16.mxu0 0
      %2256 = vmatmul.mubr.bf16.gmra.mrb[0].mxu0 %v2146
      %v2257 = vpop.f32.mrb[0].mxu0
      %v2258 = vadd.f32 0.0, %v2257
      %v2259 = vpop.f32.mrb[0].mxu0
      %v2260 = vpop.f32.mrb[0].mxu0
      %v2261 = vadd.f32 0.0, %v2260
      %v2262 = vpop.f32.mrb[0].mxu0
      %2263 = vmatprep.mubr.bf16.mxu0 0
      %2264 = vmatmul.mubr.bf16.gmra.mrb[0].mxu0 %v2149
      %v2265 = vpop.f32.mrb[0].mxu0
      %v2266 = vadd.f32 0.0, %v2265
      %v2267 = vpop.f32.mrb[0].mxu0
      %v2268 = vpop.f32.mrb[0].mxu0
      %v2269 = vadd.f32 0.0, %v2268
      %v2270 = vpop.f32.mrb[0].mxu0
      %2271 = vmatprep.mubr.bf16.mxu0 0
      %2272 = vmatmul.mubr.bf16.gmra.mrb[0].mxu0 %v2152
      %v2273 = vpop.f32.mrb[0].mxu0
      %v2274 = vadd.f32 0.0, %v2273
      %v2275 = vpop.f32.mrb[0].mxu0
      %v2276 = vpop.f32.mrb[0].mxu0
      %v2277 = vadd.f32 0.0, %v2276
      %v2278 = vpop.f32.mrb[0].mxu0
      %2279 = vmatprep.mubr.bf16.mxu0 0
      %2280 = vmatmul.mubr.bf16.gmra.mrb[0].mxu0 %v2155
      %v2281 = vpop.f32.mrb[0].mxu0
      %v2282 = vadd.f32 0.0, %v2281
      %v2283 = vpop.f32.mrb[0].mxu0
      %v2284 = vpop.f32.mrb[0].mxu0
      %v2285 = vadd.f32 0.0, %v2284
      %v2286 = vpop.f32.mrb[0].mxu0
      %2287 = vmatprep.mubr.bf16.mxu0 0
      %2288 = vmatmul.mubr.bf16.gmra.mrb[0].mxu0 %v2158
      %v2289 = vpop.f32.mrb[0].mxu0
      %v2290 = vadd.f32 0.0, %v2289
      %v2291 = vpop.f32.mrb[0].mxu0
      %v2292 = vpop.f32.mrb[0].mxu0
      %v2293 = vadd.f32 0.0, %v2292
      %v2294 = vpop.f32.mrb[0].mxu0
      %2295 = vmatprep.mubr.bf16.mxu0 0
      %2296 = vmatmul.mubr.bf16.gmra.mrb[0].mxu0 %v2161
      %v2297 = vpop.f32.mrb[0].mxu0
      %v2298 = vadd.f32 0.0, %v2297
      %v2299 = vpop.f32.mrb[0].mxu0
      %v2300 = vpop.f32.mrb[0].mxu0
      %v2301 = vadd.f32 0.0, %v2300
      %v2302 = vpop.f32.mrb[0].mxu0
      %2303 = vmatprep.mubr.bf16.mxu0 0
      %2304 = vmatmul.mubr.bf16.gmra.mrb[0].mxu0 %v2164
      %v2305 = vpop.f32.mrb[0].mxu0
      %v2306 = vadd.f32 0.0, %v2305
      %v2307 = vpop.f32.mrb[0].mxu0
      %v2308 = vpop.f32.mrb[0].mxu0
      %v2309 = vadd.f32 0.0, %v2308
      %v2310 = vpop.f32.mrb[0].mxu0
      %2311 = vmatprep.mubr.bf16.mxu0 0
      %2312 = vmatmul.mubr.bf16.gmra.mrb[0].mxu0 %v2167
      %v2313 = vpop.f32.mrb[0].mxu0
      %v2314 = vadd.f32 0.0, %v2313
      %v2315 = vpop.f32.mrb[0].mxu0
      %v2316 = vpop.f32.mrb[0].mxu0
      %v2317 = vadd.f32 0.0, %v2316
      %v2318 = vpop.f32.mrb[0].mxu0
      %2319 = vmatprep.mubr.bf16.mxu0 0
      %2320 = vmatmul.mubr.bf16.gmra.mrb[0].mxu0 %v2170
      %v2321 = vpop.f32.mrb[0].mxu0
      %v2322 = vadd.f32 0.0, %v2321
      %v2323 = vpop.f32.mrb[0].mxu0
      %v2324 = vpop.f32.mrb[0].mxu0
      %v2325 = vadd.f32 0.0, %v2324
      %v2326 = vpop.f32.mrb[0].mxu0
      %2327 = vmatprep.mubr.bf16.mxu0 0
      %2328 = vmatmul.mubr.bf16.gmra.mrb[0].mxu0 %v2173
      %v2329 = vpop.f32.mrb[0].mxu0
      %v2330 = vadd.f32 0.0, %v2329
      %v2331 = vpop.f32.mrb[0].mxu0
      %v2332 = vpop.f32.mrb[0].mxu0
      %v2333 = vadd.f32 0.0, %v2332
      %v2334 = vpop.f32.mrb[0].mxu0
      %2335 = vdwg.mxu0
      %v2336 = vadd.f32 %v2030, %v2210
      %v2337 = vadd.f32 %v2031, %v2213
      %v2338 = vadd.f32 %v2032, %v2218
      %v2339 = vadd.f32 %v2033, %v2221
      %v2340 = vadd.f32 %v2034, %v2226
      %v2341 = vadd.f32 %v2035, %v2229
      %v2342 = vadd.f32 %v2036, %v2234
      %v2343 = vadd.f32 %v2037, %v2237
      %v2344 = vadd.f32 %v2038, %v2242
      %v2345 = vadd.f32 %v2039, %v2245
      %v2346 = vadd.f32 %v2040, %v2250
      %v2347 = vadd.f32 %v2041, %v2253
      %v2348 = vadd.f32 %v2042, %v2258
      %v2349 = vadd.f32 %v2043, %v2261
      %v2350 = vadd.f32 %v2044, %v2266
      %v2351 = vadd.f32 %v2045, %v2269
      %v2352 = vadd.f32 %v2046, %v2274
      %v2353 = vadd.f32 %v2047, %v2277
      %v2354 = vadd.f32 %v2048, %v2282
      %v2355 = vadd.f32 %v2049, %v2285
      %v2356 = vadd.f32 %v2050, %v2290
      %v2357 = vadd.f32 %v2051, %v2293
      %v2358 = vadd.f32 %v2052, %v2298
      %v2359 = vadd.f32 %v2053, %v2301
      %v2360 = vadd.f32 %v2054, %v2306
      %v2361 = vadd.f32 %v2055, %v2309
      %v2362 = vadd.f32 %v2056, %v2314
      %v2363 = vadd.f32 %v2057, %v2317
      %v2364 = vadd.f32 %v2058, %v2322
      %v2365 = vadd.f32 %v2059, %v2325
      %v2366 = vadd.f32 %v2060, %v2330
      %v2367 = vadd.f32 %v2061, %v2333
      %s2368 = scalar_lea.vmem [#allocation2], 48
      %v2369 = vld [vmem:[%s2368] sm:$0xff]
      %v2370 = vld [vmem:[%s2368 + $0x8] sm:$0xff]
      %v2371 = vld [vmem:[%s2368 + $0x18] sm:$0xff]
      %v2372 = vld [vmem:[%s2368 + $0x20] sm:$0xff]
      %v2373 = vld [vmem:[%s2368 + $0x30] sm:$0xff]
      %v2374 = vld [vmem:[%s2368 + $0x38] sm:$0xff]
      %v2375 = vld [vmem:[%s2368 + $0x48] sm:$0xff]
      %v2376 = vld [vmem:[%s2368 + $0x50] sm:$0xff]
      %v2377 = vld [vmem:[%s2368 + $0x60] sm:$0xff]
      %v2378 = vld [vmem:[%s2368 + $0x68] sm:$0xff]
      %v2379 = vld [vmem:[%s2368 + $0x78] sm:$0xff]
      %v2380 = vld [vmem:[%s2368 + $0x80] sm:$0xff]
      %v2381 = vld [vmem:[%s2368 + $0x90] sm:$0xff]
      %v2382 = vld [vmem:[%s2368 + $0x98] sm:$0xff]
      %v2383 = vld [vmem:[%s2368 + $0xa8] sm:$0xff]
      %v2384 = vld [vmem:[%s2368 + $0xb0] sm:$0xff]
      %v2385 = vld [vmem:[%s2368 + $0xc0] sm:$0xff]
      %v2386 = vld [vmem:[%s2368 + $0xc8] sm:$0xff]
      %v2387 = vld [vmem:[%s2368 + $0xd8] sm:$0xff]
      %v2388 = vld [vmem:[%s2368 + $0xe0] sm:$0xff]
      %v2389 = vld [vmem:[%s2368 + $0xf0] sm:$0xff]
      %v2390 = vld [vmem:[%s2368 + $0xf8] sm:$0xff]
      %v2391 = vld [vmem:[%s2368 + $0x108] sm:$0xff]
      %v2392 = vld [vmem:[%s2368 + $0x110] sm:$0xff]
      %v2393 = vld [vmem:[%s2368 + $0x120] sm:$0xff]
      %v2394 = vld [vmem:[%s2368 + $0x128] sm:$0xff]
      %v2395 = vld [vmem:[%s2368 + $0x138] sm:$0xff]
      %v2396 = vld [vmem:[%s2368 + $0x140] sm:$0xff]
      %v2397 = vld [vmem:[%s2368 + $0x150] sm:$0xff]
      %v2398 = vld [vmem:[%s2368 + $0x158] sm:$0xff]
      %v2399 = vld [vmem:[%s2368 + $0x168] sm:$0xff]
      %v2400 = vld [vmem:[%s2368 + $0x170] sm:$0xff]
      %v2401 = vpack.c.bf16 %v2370, %v2369
      %v2402 = vpack.c.bf16 %v2372, %v2371
      %v2403 = vpack.c.bf16 %v2374, %v2373
      %v2404 = vpack.c.bf16 %v2376, %v2375
      %v2405 = vpack.c.bf16 %v2378, %v2377
      %v2406 = vpack.c.bf16 %v2380, %v2379
      %v2407 = vpack.c.bf16 %v2382, %v2381
      %v2408 = vpack.c.bf16 %v2384, %v2383
      %v2409 = vpack.c.bf16 %v2386, %v2385
      %v2410 = vpack.c.bf16 %v2388, %v2387
      %v2411 = vpack.c.bf16 %v2390, %v2389
      %v2412 = vpack.c.bf16 %v2392, %v2391
      %v2413 = vpack.c.bf16 %v2394, %v2393
      %v2414 = vpack.c.bf16 %v2396, %v2395
      %v2415 = vpack.c.bf16 %v2398, %v2397
      %v2416 = vpack.c.bf16 %v2400, %v2399
      %s2417 = scalar_lea.vmem %s1, 96
      %v2418 = vld [vmem:[%s2417] sm:$0xf]
      %v2419 = vld [vmem:[%s2417 + $0x4] sm:$0xf]
      %v2420 = vld [vmem:[%s2417 + $0x8] sm:$0xf]
      %v2421 = vld [vmem:[%s2417 + $0xc] sm:$0xf]
      %v2426 = vunpack.c.l.b16 %v2418
      %v2427 = vunpack.c.l.b16 %v2419
      %v2428 = vunpack.c.l.b16 %v2420
      %v2429 = vunpack.c.l.b16 %v2421
      %v2430 = vpack.c.b16 %v2427, %v2426
      %v2431 = vpack.c.b16 %v2429, %v2428
      %v2435 = vsel %vm508, %v2401, 0
      %v2438 = vsel %vm508, %v2402, 0
      %v2441 = vsel %vm508, %v2403, 0
      %v2444 = vsel %vm508, %v2404, 0
      %v2447 = vsel %vm508, %v2405, 0
      %v2450 = vsel %vm508, %v2406, 0
      %v2453 = vsel %vm508, %v2407, 0
      %v2456 = vsel %vm508, %v2408, 0
      %v2459 = vsel %vm508, %v2409, 0
      %v2462 = vsel %vm508, %v2410, 0
      %v2465 = vsel %vm508, %v2411, 0
      %v2468 = vsel %vm508, %v2412, 0
      %v2471 = vsel %vm508, %v2413, 0
      %v2474 = vsel %vm508, %v2414, 0
      %v2477 = vsel %vm508, %v2415, 0
      %v2480 = vsel %vm508, %v2416, 0
      %2482 = vmatprep.subr.bf16.mxu0 0
      %2483 = vmatpush1.bf16.msra.mxu0 %v2430
      %2484 = vmatprep.subr.bf16.mxu0 0
      %2485 = vmatpush1.bf16.msra.mxu0 %v2431
      %2486 = vmatprep.subr.bf16.mxu0 0
      %2487 = vmatpush1.bf16.msra.mxu0 0
      %2488 = vmatprep.subr.bf16.mxu0 0
      %2489 = vmatpush1.bf16.msra.mxu0 0
      %2490 = vmatprep.subr.bf16.mxu0 0
      %2491 = vmatpush1.bf16.msra.mxu0 0
      %2492 = vmatprep.subr.bf16.mxu0 0
      %2493 = vmatpush1.bf16.msra.mxu0 0
      %2494 = vmatprep.subr.bf16.mxu0 0
      %2495 = vmatpush1.bf16.msra.mxu0 0
      %2496 = vmatprep.subr.bf16.mxu0 0
      %2497 = vmatpush1.bf16.msra.mxu0 0
      %2498 = vmatprep.subr.bf16.mxu0 0
      %2499 = vmatpush1.bf16.msra.mxu0 0
      %2500 = vmatprep.subr.bf16.mxu0 0
      %2501 = vmatpush1.bf16.msra.mxu0 0
      %2502 = vmatprep.subr.bf16.mxu0 0
      %2503 = vmatpush1.bf16.msra.mxu0 0
      %2504 = vmatprep.subr.bf16.mxu0 0
      %2505 = vmatpush1.bf16.msra.mxu0 0
      %2506 = vmatprep.subr.bf16.mxu0 0
      %2507 = vmatpush1.bf16.msra.mxu0 0
      %2508 = vmatprep.subr.bf16.mxu0 0
      %2509 = vmatpush1.bf16.msra.mxu0 0
      %2510 = vmatprep.subr.bf16.mxu0 0
      %2511 = vmatpush1.bf16.msra.mxu0 0
      %2512 = vmatprep.subr.bf16.mxu0 0
      %2513 = vmatpush1.bf16.msra.mxu0 0
      %2514 = vmatprep.mubr.bf16.mxu0 0
      %2515 = vmatmul.mubr.bf16.gmra.mrb[0].mxu0 %v2435
      %v2516 = vpop.f32.mrb[0].mxu0
      %v2517 = vadd.f32 0.0, %v2516
      %v2518 = vpop.f32.mrb[0].mxu0
      %v2519 = vpop.f32.mrb[0].mxu0
      %v2520 = vadd.f32 0.0, %v2519
      %v2521 = vpop.f32.mrb[0].mxu0
      %2522 = vmatprep.mubr.bf16.mxu0 0
      %2523 = vmatmul.mubr.bf16.gmra.mrb[0].mxu0 %v2438
      %v2524 = vpop.f32.mrb[0].mxu0
      %v2525 = vadd.f32 0.0, %v2524
      %v2526 = vpop.f32.mrb[0].mxu0
      %v2527 = vpop.f32.mrb[0].mxu0
      %v2528 = vadd.f32 0.0, %v2527
      %v2529 = vpop.f32.mrb[0].mxu0
      %2530 = vmatprep.mubr.bf16.mxu0 0
      %2531 = vmatmul.mubr.bf16.gmra.mrb[0].mxu0 %v2441
      %v2532 = vpop.f32.mrb[0].mxu0
      %v2533 = vadd.f32 0.0, %v2532
      %v2534 = vpop.f32.mrb[0].mxu0
      %v2535 = vpop.f32.mrb[0].mxu0
      %v2536 = vadd.f32 0.0, %v2535
      %v2537 = vpop.f32.mrb[0].mxu0
      %2538 = vmatprep.mubr.bf16.mxu0 0
      %2539 = vmatmul.mubr.bf16.gmra.mrb[0].mxu0 %v2444
      %v2540 = vpop.f32.mrb[0].mxu0
      %v2541 = vadd.f32 0.0, %v2540
      %v2542 = vpop.f32.mrb[0].mxu0
      %v2543 = vpop.f32.mrb[0].mxu0
      %v2544 = vadd.f32 0.0, %v2543
      %v2545 = vpop.f32.mrb[0].mxu0
      %2546 = vmatprep.mubr.bf16.mxu0 0
      %2547 = vmatmul.mubr.bf16.gmra.mrb[0].mxu0 %v2447
      %v2548 = vpop.f32.mrb[0].mxu0
      %v2549 = vadd.f32 0.0, %v2548
      %v2550 = vpop.f32.mrb[0].mxu0
      %v2551 = vpop.f32.mrb[0].mxu0
      %v2552 = vadd.f32 0.0, %v2551
      %v2553 = vpop.f32.mrb[0].mxu0
      %2554 = vmatprep.mubr.bf16.mxu0 0
      %2555 = vmatmul.mubr.bf16.gmra.mrb[0].mxu0 %v2450
      %v2556 = vpop.f32.mrb[0].mxu0
      %v2557 = vadd.f32 0.0, %v2556
      %v2558 = vpop.f32.mrb[0].mxu0
      %v2559 = vpop.f32.mrb[0].mxu0
      %v2560 = vadd.f32 0.0, %v2559
      %v2561 = vpop.f32.mrb[0].mxu0
      %2562 = vmatprep.mubr.bf16.mxu0 0
      %2563 = vmatmul.mubr.bf16.gmra.mrb[0].mxu0 %v2453
      %v2564 = vpop.f32.mrb[0].mxu0
      %v2565 = vadd.f32 0.0, %v2564
      %v2566 = vpop.f32.mrb[0].mxu0
      %v2567 = vpop.f32.mrb[0].mxu0
      %v2568 = vadd.f32 0.0, %v2567
      %v2569 = vpop.f32.mrb[0].mxu0
      %2570 = vmatprep.mubr.bf16.mxu0 0
      %2571 = vmatmul.mubr.bf16.gmra.mrb[0].mxu0 %v2456
      %v2572 = vpop.f32.mrb[0].mxu0
      %v2573 = vadd.f32 0.0, %v2572
      %v2574 = vpop.f32.mrb[0].mxu0
      %v2575 = vpop.f32.mrb[0].mxu0
      %v2576 = vadd.f32 0.0, %v2575
      %v2577 = vpop.f32.mrb[0].mxu0
      %2578 = vmatprep.mubr.bf16.mxu0 0
      %2579 = vmatmul.mubr.bf16.gmra.mrb[0].mxu0 %v2459
      %v2580 = vpop.f32.mrb[0].mxu0
      %v2581 = vadd.f32 0.0, %v2580
      %v2582 = vpop.f32.mrb[0].mxu0
      %v2583 = vpop.f32.mrb[0].mxu0
      %v2584 = vadd.f32 0.0, %v2583
      %v2585 = vpop.f32.mrb[0].mxu0
      %2586 = vmatprep.mubr.bf16.mxu0 0
      %2587 = vmatmul.mubr.bf16.gmra.mrb[0].mxu0 %v2462
      %v2588 = vpop.f32.mrb[0].mxu0
      %v2589 = vadd.f32 0.0, %v2588
      %v2590 = vpop.f32.mrb[0].mxu0
      %v2591 = vpop.f32.mrb[0].mxu0
      %v2592 = vadd.f32 0.0, %v2591
      %v2593 = vpop.f32.mrb[0].mxu0
      %2594 = vmatprep.mubr.bf16.mxu0 0
      %2595 = vmatmul.mubr.bf16.gmra.mrb[0].mxu0 %v2465
      %v2596 = vpop.f32.mrb[0].mxu0
      %v2597 = vadd.f32 0.0, %v2596
      %v2598 = vpop.f32.mrb[0].mxu0
      %v2599 = vpop.f32.mrb[0].mxu0
      %v2600 = vadd.f32 0.0, %v2599
      %v2601 = vpop.f32.mrb[0].mxu0
      %2602 = vmatprep.mubr.bf16.mxu0 0
      %2603 = vmatmul.mubr.bf16.gmra.mrb[0].mxu0 %v2468
      %v2604 = vpop.f32.mrb[0].mxu0
      %v2605 = vadd.f32 0.0, %v2604
      %v2606 = vpop.f32.mrb[0].mxu0
      %v2607 = vpop.f32.mrb[0].mxu0
      %v2608 = vadd.f32 0.0, %v2607
      %v2609 = vpop.f32.mrb[0].mxu0
      %2610 = vmatprep.mubr.bf16.mxu0 0
      %2611 = vmatmul.mubr.bf16.gmra.mrb[0].mxu0 %v2471
      %v2612 = vpop.f32.mrb[0].mxu0
      %v2613 = vadd.f32 0.0, %v2612
      %v2614 = vpop.f32.mrb[0].mxu0
      %v2615 = vpop.f32.mrb[0].mxu0
      %v2616 = vadd.f32 0.0, %v2615
      %v2617 = vpop.f32.mrb[0].mxu0
      %2618 = vmatprep.mubr.bf16.mxu0 0
      %2619 = vmatmul.mubr.bf16.gmra.mrb[0].mxu0 %v2474
      %v2620 = vpop.f32.mrb[0].mxu0
      %v2621 = vadd.f32 0.0, %v2620
      %v2622 = vpop.f32.mrb[0].mxu0
      %v2623 = vpop.f32.mrb[0].mxu0
      %v2624 = vadd.f32 0.0, %v2623
      %v2625 = vpop.f32.mrb[0].mxu0
      %2626 = vmatprep.mubr.bf16.mxu0 0
      %2627 = vmatmul.mubr.bf16.gmra.mrb[0].mxu0 %v2477
      %v2628 = vpop.f32.mrb[0].mxu0
      %v2629 = vadd.f32 0.0, %v2628
      %v2630 = vpop.f32.mrb[0].mxu0
      %v2631 = vpop.f32.mrb[0].mxu0
      %v2632 = vadd.f32 0.0, %v2631
      %v2633 = vpop.f32.mrb[0].mxu0
      %2634 = vmatprep.mubr.bf16.mxu0 0
      %2635 = vmatmul.mubr.bf16.gmra.mrb[0].mxu0 %v2480
      %v2636 = vpop.f32.mrb[0].mxu0
      %v2637 = vadd.f32 0.0, %v2636
      %v2638 = vpop.f32.mrb[0].mxu0
      %v2639 = vpop.f32.mrb[0].mxu0
      %v2640 = vadd.f32 0.0, %v2639
      %v2641 = vpop.f32.mrb[0].mxu0
      %2642 = vdwg.mxu0
      %v2643 = vadd.f32 %v2336, %v2517
      %v2644 = vadd.f32 %v2337, %v2520
      %v2645 = vadd.f32 %v2338, %v2525
      %v2646 = vadd.f32 %v2339, %v2528
      %v2647 = vadd.f32 %v2340, %v2533
      %v2648 = vadd.f32 %v2341, %v2536
      %v2649 = vadd.f32 %v2342, %v2541
      %v2650 = vadd.f32 %v2343, %v2544
      %v2651 = vadd.f32 %v2344, %v2549
      %v2652 = vadd.f32 %v2345, %v2552
      %v2653 = vadd.f32 %v2346, %v2557
      %v2654 = vadd.f32 %v2347, %v2560
      %v2655 = vadd.f32 %v2348, %v2565
      %v2656 = vadd.f32 %v2349, %v2568
      %v2657 = vadd.f32 %v2350, %v2573
      %v2658 = vadd.f32 %v2351, %v2576
      %v2659 = vadd.f32 %v2352, %v2581
      %v2660 = vadd.f32 %v2353, %v2584
      %v2661 = vadd.f32 %v2354, %v2589
      %v2662 = vadd.f32 %v2355, %v2592
      %v2663 = vadd.f32 %v2356, %v2597
      %v2664 = vadd.f32 %v2357, %v2600
      %v2665 = vadd.f32 %v2358, %v2605
      %v2666 = vadd.f32 %v2359, %v2608
      %v2667 = vadd.f32 %v2360, %v2613
      %v2668 = vadd.f32 %v2361, %v2616
      %v2669 = vadd.f32 %v2362, %v2621
      %v2670 = vadd.f32 %v2363, %v2624
      %v2671 = vadd.f32 %v2364, %v2629
      %v2672 = vadd.f32 %v2365, %v2632
      %v2673 = vadd.f32 %v2366, %v2637
      %v2674 = vadd.f32 %v2367, %v2640
      %v2675 = vld [vmem:[%s2368 + $0x1] sm:$0xff]
      %v2676 = vld [vmem:[%s2368 + $0x9] sm:$0xff]
      %v2677 = vld [vmem:[%s2368 + $0x19] sm:$0xff]
      %v2678 = vld [vmem:[%s2368 + $0x21] sm:$0xff]
      %v2679 = vld [vmem:[%s2368 + $0x31] sm:$0xff]
      %v2680 = vld [vmem:[%s2368 + $0x39] sm:$0xff]
      %v2681 = vld [vmem:[%s2368 + $0x49] sm:$0xff]
      %v2682 = vld [vmem:[%s2368 + $0x51] sm:$0xff]
      %v2683 = vld [vmem:[%s2368 + $0x61] sm:$0xff]
      %v2684 = vld [vmem:[%s2368 + $0x69] sm:$0xff]
      %v2685 = vld [vmem:[%s2368 + $0x79] sm:$0xff]
      %v2686 = vld [vmem:[%s2368 + $0x81] sm:$0xff]
      %v2687 = vld [vmem:[%s2368 + $0x91] sm:$0xff]
      %v2688 = vld [vmem:[%s2368 + $0x99] sm:$0xff]
      %v2689 = vld [vmem:[%s2368 + $0xa9] sm:$0xff]
      %v2690 = vld [vmem:[%s2368 + $0xb1] sm:$0xff]
      %v2691 = vld [vmem:[%s2368 + $0xc1] sm:$0xff]
      %v2692 = vld [vmem:[%s2368 + $0xc9] sm:$0xff]
      %v2693 = vld [vmem:[%s2368 + $0xd9] sm:$0xff]
      %v2694 = vld [vmem:[%s2368 + $0xe1] sm:$0xff]
      %v2695 = vld [vmem:[%s2368 + $0xf1] sm:$0xff]
      %v2696 = vld [vmem:[%s2368 + $0xf9] sm:$0xff]
      %v2697 = vld [vmem:[%s2368 + $0x109] sm:$0xff]
      %v2698 = vld [vmem:[%s2368 + $0x111] sm:$0xff]
      %v2699 = vld [vmem:[%s2368 + $0x121] sm:$0xff]
      %v2700 = vld [vmem:[%s2368 + $0x129] sm:$0xff]
      %v2701 = vld [vmem:[%s2368 + $0x139] sm:$0xff]
      %v2702 = vld [vmem:[%s2368 + $0x141] sm:$0xff]
      %v2703 = vld [vmem:[%s2368 + $0x151] sm:$0xff]
      %v2704 = vld [vmem:[%s2368 + $0x159] sm:$0xff]
      %v2705 = vld [vmem:[%s2368 + $0x169] sm:$0xff]
      %v2706 = vld [vmem:[%s2368 + $0x171] sm:$0xff]
      %v2707 = vpack.c.bf16 %v2676, %v2675
      %v2708 = vpack.c.bf16 %v2678, %v2677
      %v2709 = vpack.c.bf16 %v2680, %v2679
      %v2710 = vpack.c.bf16 %v2682, %v2681
      %v2711 = vpack.c.bf16 %v2684, %v2683
      %v2712 = vpack.c.bf16 %v2686, %v2685
      %v2713 = vpack.c.bf16 %v2688, %v2687
      %v2714 = vpack.c.bf16 %v2690, %v2689
      %v2715 = vpack.c.bf16 %v2692, %v2691
      %v2716 = vpack.c.bf16 %v2694, %v2693
      %v2717 = vpack.c.bf16 %v2696, %v2695
      %v2718 = vpack.c.bf16 %v2698, %v2697
      %v2719 = vpack.c.bf16 %v2700, %v2699
      %v2720 = vpack.c.bf16 %v2702, %v2701
      %v2721 = vpack.c.bf16 %v2704, %v2703
      %v2722 = vpack.c.bf16 %v2706, %v2705
      %s2723 = scalar_lea.vmem %s1, 112
      %v2724 = vld [vmem:[%s2723] sm:$0xf]
      %v2725 = vld [vmem:[%s2723 + $0x4] sm:$0xf]
      %v2726 = vld [vmem:[%s2723 + $0x8] sm:$0xf]
      %v2727 = vld [vmem:[%s2723 + $0xc] sm:$0xf]
      %v2732 = vunpack.c.l.b16 %v2724
      %v2733 = vunpack.c.l.b16 %v2725
      %v2734 = vunpack.c.l.b16 %v2726
      %v2735 = vunpack.c.l.b16 %v2727
      %v2736 = vpack.c.b16 %v2733, %v2732
      %v2737 = vpack.c.b16 %v2735, %v2734
      %v2741 = vsel %vm508, %v2707, 0
      %v2744 = vsel %vm508, %v2708, 0
      %v2747 = vsel %vm508, %v2709, 0
      %v2750 = vsel %vm508, %v2710, 0
      %v2753 = vsel %vm508, %v2711, 0
      %v2756 = vsel %vm508, %v2712, 0
      %v2759 = vsel %vm508, %v2713, 0
      %v2762 = vsel %vm508, %v2714, 0
      %v2765 = vsel %vm508, %v2715, 0
      %v2768 = vsel %vm508, %v2716, 0
      %v2771 = vsel %vm508, %v2717, 0
      %v2774 = vsel %vm508, %v2718, 0
      %v2777 = vsel %vm508, %v2719, 0
      %v2780 = vsel %vm508, %v2720, 0
      %v2783 = vsel %vm508, %v2721, 0
      %v2786 = vsel %vm508, %v2722, 0
      %2788 = vmatprep.subr.bf16.mxu0 0
      %2789 = vmatpush1.bf16.msra.mxu0 %v2736
      %2790 = vmatprep.subr.bf16.mxu0 0
      %2791 = vmatpush1.bf16.msra.mxu0 %v2737
      %2792 = vmatprep.subr.bf16.mxu0 0
      %2793 = vmatpush1.bf16.msra.mxu0 0
      %2794 = vmatprep.subr.bf16.mxu0 0
      %2795 = vmatpush1.bf16.msra.mxu0 0
      %2796 = vmatprep.subr.bf16.mxu0 0
      %2797 = vmatpush1.bf16.msra.mxu0 0
      %2798 = vmatprep.subr.bf16.mxu0 0
      %2799 = vmatpush1.bf16.msra.mxu0 0
      %2800 = vmatprep.subr.bf16.mxu0 0
      %2801 = vmatpush1.bf16.msra.mxu0 0
      %2802 = vmatprep.subr.bf16.mxu0 0
      %2803 = vmatpush1.bf16.msra.mxu0 0
      %2804 = vmatprep.subr.bf16.mxu0 0
      %2805 = vmatpush1.bf16.msra.mxu0 0
      %2806 = vmatprep.subr.bf16.mxu0 0
      %2807 = vmatpush1.bf16.msra.mxu0 0
      %2808 = vmatprep.subr.bf16.mxu0 0
      %2809 = vmatpush1.bf16.msra.mxu0 0
      %2810 = vmatprep.subr.bf16.mxu0 0
      %2811 = vmatpush1.bf16.msra.mxu0 0
      %2812 = vmatprep.subr.bf16.mxu0 0
      %2813 = vmatpush1.bf16.msra.mxu0 0
      %2814 = vmatprep.subr.bf16.mxu0 0
      %2815 = vmatpush1.bf16.msra.mxu0 0
      %2816 = vmatprep.subr.bf16.mxu0 0
      %2817 = vmatpush1.bf16.msra.mxu0 0
      %2818 = vmatprep.subr.bf16.mxu0 0
      %2819 = vmatpush1.bf16.msra.mxu0 0
      %2820 = vmatprep.mubr.bf16.mxu0 0
      %2821 = vmatmul.mubr.bf16.gmra.mrb[0].mxu0 %v2741
      %v2822 = vpop.f32.mrb[0].mxu0
      %v2823 = vadd.f32 0.0, %v2822
      %v2824 = vpop.f32.mrb[0].mxu0
      %v2825 = vpop.f32.mrb[0].mxu0
      %v2826 = vadd.f32 0.0, %v2825
      %v2827 = vpop.f32.mrb[0].mxu0
      %2828 = vmatprep.mubr.bf16.mxu0 0
      %2829 = vmatmul.mubr.bf16.gmra.mrb[0].mxu0 %v2744
      %v2830 = vpop.f32.mrb[0].mxu0
      %v2831 = vadd.f32 0.0, %v2830
      %v2832 = vpop.f32.mrb[0].mxu0
      %v2833 = vpop.f32.mrb[0].mxu0
      %v2834 = vadd.f32 0.0, %v2833
      %v2835 = vpop.f32.mrb[0].mxu0
      %2836 = vmatprep.mubr.bf16.mxu0 0
      %2837 = vmatmul.mubr.bf16.gmra.mrb[0].mxu0 %v2747
      %v2838 = vpop.f32.mrb[0].mxu0
      %v2839 = vadd.f32 0.0, %v2838
      %v2840 = vpop.f32.mrb[0].mxu0
      %v2841 = vpop.f32.mrb[0].mxu0
      %v2842 = vadd.f32 0.0, %v2841
      %v2843 = vpop.f32.mrb[0].mxu0
      %2844 = vmatprep.mubr.bf16.mxu0 0
      %2845 = vmatmul.mubr.bf16.gmra.mrb[0].mxu0 %v2750
      %v2846 = vpop.f32.mrb[0].mxu0
      %v2847 = vadd.f32 0.0, %v2846
      %v2848 = vpop.f32.mrb[0].mxu0
      %v2849 = vpop.f32.mrb[0].mxu0
      %v2850 = vadd.f32 0.0, %v2849
      %v2851 = vpop.f32.mrb[0].mxu0
      %2852 = vmatprep.mubr.bf16.mxu0 0
      %2853 = vmatmul.mubr.bf16.gmra.mrb[0].mxu0 %v2753
      %v2854 = vpop.f32.mrb[0].mxu0
      %v2855 = vadd.f32 0.0, %v2854
      %v2856 = vpop.f32.mrb[0].mxu0
      %v2857 = vpop.f32.mrb[0].mxu0
      %v2858 = vadd.f32 0.0, %v2857
      %v2859 = vpop.f32.mrb[0].mxu0
      %2860 = vmatprep.mubr.bf16.mxu0 0
      %2861 = vmatmul.mubr.bf16.gmra.mrb[0].mxu0 %v2756
      %v2862 = vpop.f32.mrb[0].mxu0
      %v2863 = vadd.f32 0.0, %v2862
      %v2864 = vpop.f32.mrb[0].mxu0
      %v2865 = vpop.f32.mrb[0].mxu0
      %v2866 = vadd.f32 0.0, %v2865
      %v2867 = vpop.f32.mrb[0].mxu0
      %2868 = vmatprep.mubr.bf16.mxu0 0
      %2869 = vmatmul.mubr.bf16.gmra.mrb[0].mxu0 %v2759
      %v2870 = vpop.f32.mrb[0].mxu0
      %v2871 = vadd.f32 0.0, %v2870
      %v2872 = vpop.f32.mrb[0].mxu0
      %v2873 = vpop.f32.mrb[0].mxu0
      %v2874 = vadd.f32 0.0, %v2873
      %v2875 = vpop.f32.mrb[0].mxu0
      %2876 = vmatprep.mubr.bf16.mxu0 0
      %2877 = vmatmul.mubr.bf16.gmra.mrb[0].mxu0 %v2762
      %v2878 = vpop.f32.mrb[0].mxu0
      %v2879 = vadd.f32 0.0, %v2878
      %v2880 = vpop.f32.mrb[0].mxu0
      %v2881 = vpop.f32.mrb[0].mxu0
      %v2882 = vadd.f32 0.0, %v2881
      %v2883 = vpop.f32.mrb[0].mxu0
      %2884 = vmatprep.mubr.bf16.mxu0 0
      %2885 = vmatmul.mubr.bf16.gmra.mrb[0].mxu0 %v2765
      %v2886 = vpop.f32.mrb[0].mxu0
      %v2887 = vadd.f32 0.0, %v2886
      %v2888 = vpop.f32.mrb[0].mxu0
      %v2889 = vpop.f32.mrb[0].mxu0
      %v2890 = vadd.f32 0.0, %v2889
      %v2891 = vpop.f32.mrb[0].mxu0
      %2892 = vmatprep.mubr.bf16.mxu0 0
      %2893 = vmatmul.mubr.bf16.gmra.mrb[0].mxu0 %v2768
      %v2894 = vpop.f32.mrb[0].mxu0
      %v2895 = vadd.f32 0.0, %v2894
      %v2896 = vpop.f32.mrb[0].mxu0
      %v2897 = vpop.f32.mrb[0].mxu0
      %v2898 = vadd.f32 0.0, %v2897
      %v2899 = vpop.f32.mrb[0].mxu0
      %2900 = vmatprep.mubr.bf16.mxu0 0
      %2901 = vmatmul.mubr.bf16.gmra.mrb[0].mxu0 %v2771
      %v2902 = vpop.f32.mrb[0].mxu0
      %v2903 = vadd.f32 0.0, %v2902
      %v2904 = vpop.f32.mrb[0].mxu0
      %v2905 = vpop.f32.mrb[0].mxu0
      %v2906 = vadd.f32 0.0, %v2905
      %v2907 = vpop.f32.mrb[0].mxu0
      %2908 = vmatprep.mubr.bf16.mxu0 0
      %2909 = vmatmul.mubr.bf16.gmra.mrb[0].mxu0 %v2774
      %v2910 = vpop.f32.mrb[0].mxu0
      %v2911 = vadd.f32 0.0, %v2910
      %v2912 = vpop.f32.mrb[0].mxu0
      %v2913 = vpop.f32.mrb[0].mxu0
      %v2914 = vadd.f32 0.0, %v2913
      %v2915 = vpop.f32.mrb[0].mxu0
      %2916 = vmatprep.mubr.bf16.mxu0 0
      %2917 = vmatmul.mubr.bf16.gmra.mrb[0].mxu0 %v2777
      %v2918 = vpop.f32.mrb[0].mxu0
      %v2919 = vadd.f32 0.0, %v2918
      %v2920 = vpop.f32.mrb[0].mxu0
      %v2921 = vpop.f32.mrb[0].mxu0
      %v2922 = vadd.f32 0.0, %v2921
      %v2923 = vpop.f32.mrb[0].mxu0
      %2924 = vmatprep.mubr.bf16.mxu0 0
      %2925 = vmatmul.mubr.bf16.gmra.mrb[0].mxu0 %v2780
      %v2926 = vpop.f32.mrb[0].mxu0
      %v2927 = vadd.f32 0.0, %v2926
      %v2928 = vpop.f32.mrb[0].mxu0
      %v2929 = vpop.f32.mrb[0].mxu0
      %v2930 = vadd.f32 0.0, %v2929
      %v2931 = vpop.f32.mrb[0].mxu0
      %2932 = vmatprep.mubr.bf16.mxu0 0
      %2933 = vmatmul.mubr.bf16.gmra.mrb[0].mxu0 %v2783
      %v2934 = vpop.f32.mrb[0].mxu0
      %v2935 = vadd.f32 0.0, %v2934
      %v2936 = vpop.f32.mrb[0].mxu0
      %v2937 = vpop.f32.mrb[0].mxu0
      %v2938 = vadd.f32 0.0, %v2937
      %v2939 = vpop.f32.mrb[0].mxu0
      %2940 = vmatprep.mubr.bf16.mxu0 0
      %2941 = vmatmul.mubr.bf16.gmra.mrb[0].mxu0 %v2786
      %v2942 = vpop.f32.mrb[0].mxu0
      %v2943 = vadd.f32 0.0, %v2942
      %v2944 = vpop.f32.mrb[0].mxu0
      %v2945 = vpop.f32.mrb[0].mxu0
      %v2946 = vadd.f32 0.0, %v2945
      %v2947 = vpop.f32.mrb[0].mxu0
      %2948 = vdwg.mxu0
      %v2949 = vadd.f32 %v2643, %v2823
      %v2950 = vadd.f32 %v2644, %v2826
      %v2951 = vadd.f32 %v2645, %v2831
      %v2952 = vadd.f32 %v2646, %v2834
      %v2953 = vadd.f32 %v2647, %v2839
      %v2954 = vadd.f32 %v2648, %v2842
      %v2955 = vadd.f32 %v2649, %v2847
      %v2956 = vadd.f32 %v2650, %v2850
      %v2957 = vadd.f32 %v2651, %v2855
      %v2958 = vadd.f32 %v2652, %v2858
      %v2959 = vadd.f32 %v2653, %v2863
      %v2960 = vadd.f32 %v2654, %v2866
      %v2961 = vadd.f32 %v2655, %v2871
      %v2962 = vadd.f32 %v2656, %v2874
      %v2963 = vadd.f32 %v2657, %v2879
      %v2964 = vadd.f32 %v2658, %v2882
      %v2965 = vadd.f32 %v2659, %v2887
      %v2966 = vadd.f32 %v2660, %v2890
      %v2967 = vadd.f32 %v2661, %v2895
      %v2968 = vadd.f32 %v2662, %v2898
      %v2969 = vadd.f32 %v2663, %v2903
      %v2970 = vadd.f32 %v2664, %v2906
      %v2971 = vadd.f32 %v2665, %v2911
      %v2972 = vadd.f32 %v2666, %v2914
      %v2973 = vadd.f32 %v2667, %v2919
      %v2974 = vadd.f32 %v2668, %v2922
      %v2975 = vadd.f32 %v2669, %v2927
      %v2976 = vadd.f32 %v2670, %v2930
      %v2977 = vadd.f32 %v2671, %v2935
      %v2978 = vadd.f32 %v2672, %v2938
      %v2979 = vadd.f32 %v2673, %v2943
      %v2980 = vadd.f32 %v2674, %v2946
      %v2981 = vld [vmem:[%s2368 + $0x2] sm:$0xff]
      %v2982 = vld [vmem:[%s2368 + $0xa] sm:$0xff]
      %v2983 = vld [vmem:[%s2368 + $0x1a] sm:$0xff]
      %v2984 = vld [vmem:[%s2368 + $0x22] sm:$0xff]
      %v2985 = vld [vmem:[%s2368 + $0x32] sm:$0xff]
      %v2986 = vld [vmem:[%s2368 + $0x3a] sm:$0xff]
      %v2987 = vld [vmem:[%s2368 + $0x4a] sm:$0xff]
      %v2988 = vld [vmem:[%s2368 + $0x52] sm:$0xff]
      %v2989 = vld [vmem:[%s2368 + $0x62] sm:$0xff]
      %v2990 = vld [vmem:[%s2368 + $0x6a] sm:$0xff]
      %v2991 = vld [vmem:[%s2368 + $0x7a] sm:$0xff]
      %v2992 = vld [vmem:[%s2368 + $0x82] sm:$0xff]
      %v2993 = vld [vmem:[%s2368 + $0x92] sm:$0xff]
      %v2994 = vld [vmem:[%s2368 + $0x9a] sm:$0xff]
      %v2995 = vld [vmem:[%s2368 + $0xaa] sm:$0xff]
      %v2996 = vld [vmem:[%s2368 + $0xb2] sm:$0xff]
      %v2997 = vld [vmem:[%s2368 + $0xc2] sm:$0xff]
      %v2998 = vld [vmem:[%s2368 + $0xca] sm:$0xff]
      %v2999 = vld [vmem:[%s2368 + $0xda] sm:$0xff]
      %v3000 = vld [vmem:[%s2368 + $0xe2] sm:$0xff]
      %v3001 = vld [vmem:[%s2368 + $0xf2] sm:$0xff]
      %v3002 = vld [vmem:[%s2368 + $0xfa] sm:$0xff]
      %v3003 = vld [vmem:[%s2368 + $0x10a] sm:$0xff]
      %v3004 = vld [vmem:[%s2368 + $0x112] sm:$0xff]
      %v3005 = vld [vmem:[%s2368 + $0x122] sm:$0xff]
      %v3006 = vld [vmem:[%s2368 + $0x12a] sm:$0xff]
      %v3007 = vld [vmem:[%s2368 + $0x13a] sm:$0xff]
      %v3008 = vld [vmem:[%s2368 + $0x142] sm:$0xff]
      %v3009 = vld [vmem:[%s2368 + $0x152] sm:$0xff]
      %v3010 = vld [vmem:[%s2368 + $0x15a] sm:$0xff]
      %v3011 = vld [vmem:[%s2368 + $0x16a] sm:$0xff]
      %v3012 = vld [vmem:[%s2368 + $0x172] sm:$0xff]
      %v3013 = vpack.c.bf16 %v2982, %v2981
      %v3014 = vpack.c.bf16 %v2984, %v2983
      %v3015 = vpack.c.bf16 %v2986, %v2985
      %v3016 = vpack.c.bf16 %v2988, %v2987
      %v3017 = vpack.c.bf16 %v2990, %v2989
      %v3018 = vpack.c.bf16 %v2992, %v2991
      %v3019 = vpack.c.bf16 %v2994, %v2993
      %v3020 = vpack.c.bf16 %v2996, %v2995
      %v3021 = vpack.c.bf16 %v2998, %v2997
      %v3022 = vpack.c.bf16 %v3000, %v2999
      %v3023 = vpack.c.bf16 %v3002, %v3001
      %v3024 = vpack.c.bf16 %v3004, %v3003
      %v3025 = vpack.c.bf16 %v3006, %v3005
      %v3026 = vpack.c.bf16 %v3008, %v3007
      %v3027 = vpack.c.bf16 %v3010, %v3009
      %v3028 = vpack.c.bf16 %v3012, %v3011
      %s3029 = scalar_lea.vmem %s1, 128
      %v3030 = vld [vmem:[%s3029] sm:$0xf]
      %v3031 = vld [vmem:[%s3029 + $0x4] sm:$0xf]
      %v3032 = vld [vmem:[%s3029 + $0x8] sm:$0xf]
      %v3033 = vld [vmem:[%s3029 + $0xc] sm:$0xf]
      %v3038 = vunpack.c.l.b16 %v3030
      %v3039 = vunpack.c.l.b16 %v3031
      %v3040 = vunpack.c.l.b16 %v3032
      %v3041 = vunpack.c.l.b16 %v3033
      %v3042 = vpack.c.b16 %v3039, %v3038
      %v3043 = vpack.c.b16 %v3041, %v3040
      %v3047 = vsel %vm508, %v3013, 0
      %v3050 = vsel %vm508, %v3014, 0
      %v3053 = vsel %vm508, %v3015, 0
      %v3056 = vsel %vm508, %v3016, 0
      %v3059 = vsel %vm508, %v3017, 0
      %v3062 = vsel %vm508, %v3018, 0
      %v3065 = vsel %vm508, %v3019, 0
      %v3068 = vsel %vm508, %v3020, 0
      %v3071 = vsel %vm508, %v3021, 0
      %v3074 = vsel %vm508, %v3022, 0
      %v3077 = vsel %vm508, %v3023, 0
      %v3080 = vsel %vm508, %v3024, 0
      %v3083 = vsel %vm508, %v3025, 0
      %v3086 = vsel %vm508, %v3026, 0
      %v3089 = vsel %vm508, %v3027, 0
      %v3092 = vsel %vm508, %v3028, 0
      %3094 = vmatprep.subr.bf16.mxu0 0
      %3095 = vmatpush1.bf16.msra.mxu0 %v3042
      %3096 = vmatprep.subr.bf16.mxu0 0
      %3097 = vmatpush1.bf16.msra.mxu0 %v3043
      %3098 = vmatprep.subr.bf16.mxu0 0
      %3099 = vmatpush1.bf16.msra.mxu0 0
      %3100 = vmatprep.subr.bf16.mxu0 0
      %3101 = vmatpush1.bf16.msra.mxu0 0
      %3102 = vmatprep.subr.bf16.mxu0 0
      %3103 = vmatpush1.bf16.msra.mxu0 0
      %3104 = vmatprep.subr.bf16.mxu0 0
      %3105 = vmatpush1.bf16.msra.mxu0 0
      %3106 = vmatprep.subr.bf16.mxu0 0
      %3107 = vmatpush1.bf16.msra.mxu0 0
      %3108 = vmatprep.subr.bf16.mxu0 0
      %3109 = vmatpush1.bf16.msra.mxu0 0
      %3110 = vmatprep.subr.bf16.mxu0 0
      %3111 = vmatpush1.bf16.msra.mxu0 0
      %3112 = vmatprep.subr.bf16.mxu0 0
      %3113 = vmatpush1.bf16.msra.mxu0 0
      %3114 = vmatprep.subr.bf16.mxu0 0
      %3115 = vmatpush1.bf16.msra.mxu0 0
      %3116 = vmatprep.subr.bf16.mxu0 0
      %3117 = vmatpush1.bf16.msra.mxu0 0
      %3118 = vmatprep.subr.bf16.mxu0 0
      %3119 = vmatpush1.bf16.msra.mxu0 0
      %3120 = vmatprep.subr.bf16.mxu0 0
      %3121 = vmatpush1.bf16.msra.mxu0 0
      %3122 = vmatprep.subr.bf16.mxu0 0
      %3123 = vmatpush1.bf16.msra.mxu0 0
      %3124 = vmatprep.subr.bf16.mxu0 0
      %3125 = vmatpush1.bf16.msra.mxu0 0
      %3126 = vmatprep.mubr.bf16.mxu0 0
      %3127 = vmatmul.mubr.bf16.gmra.mrb[0].mxu0 %v3047
      %v3128 = vpop.f32.mrb[0].mxu0
      %v3129 = vadd.f32 0.0, %v3128
      %v3130 = vpop.f32.mrb[0].mxu0
      %v3131 = vpop.f32.mrb[0].mxu0
      %v3132 = vadd.f32 0.0, %v3131
      %v3133 = vpop.f32.mrb[0].mxu0
      %3134 = vmatprep.mubr.bf16.mxu0 0
      %3135 = vmatmul.mubr.bf16.gmra.mrb[0].mxu0 %v3050
      %v3136 = vpop.f32.mrb[0].mxu0
      %v3137 = vadd.f32 0.0, %v3136
      %v3138 = vpop.f32.mrb[0].mxu0
      %v3139 = vpop.f32.mrb[0].mxu0
      %v3140 = vadd.f32 0.0, %v3139
      %v3141 = vpop.f32.mrb[0].mxu0
      %3142 = vmatprep.mubr.bf16.mxu0 0
      %3143 = vmatmul.mubr.bf16.gmra.mrb[0].mxu0 %v3053
      %v3144 = vpop.f32.mrb[0].mxu0
      %v3145 = vadd.f32 0.0, %v3144
      %v3146 = vpop.f32.mrb[0].mxu0
      %v3147 = vpop.f32.mrb[0].mxu0
      %v3148 = vadd.f32 0.0, %v3147
      %v3149 = vpop.f32.mrb[0].mxu0
      %3150 = vmatprep.mubr.bf16.mxu0 0
      %3151 = vmatmul.mubr.bf16.gmra.mrb[0].mxu0 %v3056
      %v3152 = vpop.f32.mrb[0].mxu0
      %v3153 = vadd.f32 0.0, %v3152
      %v3154 = vpop.f32.mrb[0].mxu0
      %v3155 = vpop.f32.mrb[0].mxu0
      %v3156 = vadd.f32 0.0, %v3155
      %v3157 = vpop.f32.mrb[0].mxu0
      %3158 = vmatprep.mubr.bf16.mxu0 0
      %3159 = vmatmul.mubr.bf16.gmra.mrb[0].mxu0 %v3059
      %v3160 = vpop.f32.mrb[0].mxu0
      %v3161 = vadd.f32 0.0, %v3160
      %v3162 = vpop.f32.mrb[0].mxu0
      %v3163 = vpop.f32.mrb[0].mxu0
      %v3164 = vadd.f32 0.0, %v3163
      %v3165 = vpop.f32.mrb[0].mxu0
      %3166 = vmatprep.mubr.bf16.mxu0 0
      %3167 = vmatmul.mubr.bf16.gmra.mrb[0].mxu0 %v3062
      %v3168 = vpop.f32.mrb[0].mxu0
      %v3169 = vadd.f32 0.0, %v3168
      %v3170 = vpop.f32.mrb[0].mxu0
      %v3171 = vpop.f32.mrb[0].mxu0
      %v3172 = vadd.f32 0.0, %v3171
      %v3173 = vpop.f32.mrb[0].mxu0
      %3174 = vmatprep.mubr.bf16.mxu0 0
      %3175 = vmatmul.mubr.bf16.gmra.mrb[0].mxu0 %v3065
      %v3176 = vpop.f32.mrb[0].mxu0
      %v3177 = vadd.f32 0.0, %v3176
      %v3178 = vpop.f32.mrb[0].mxu0
      %v3179 = vpop.f32.mrb[0].mxu0
      %v3180 = vadd.f32 0.0, %v3179
      %v3181 = vpop.f32.mrb[0].mxu0
      %3182 = vmatprep.mubr.bf16.mxu0 0
      %3183 = vmatmul.mubr.bf16.gmra.mrb[0].mxu0 %v3068
      %v3184 = vpop.f32.mrb[0].mxu0
      %v3185 = vadd.f32 0.0, %v3184
      %v3186 = vpop.f32.mrb[0].mxu0
      %v3187 = vpop.f32.mrb[0].mxu0
      %v3188 = vadd.f32 0.0, %v3187
      %v3189 = vpop.f32.mrb[0].mxu0
      %3190 = vmatprep.mubr.bf16.mxu0 0
      %3191 = vmatmul.mubr.bf16.gmra.mrb[0].mxu0 %v3071
      %v3192 = vpop.f32.mrb[0].mxu0
      %v3193 = vadd.f32 0.0, %v3192
      %v3194 = vpop.f32.mrb[0].mxu0
      %v3195 = vpop.f32.mrb[0].mxu0
      %v3196 = vadd.f32 0.0, %v3195
      %v3197 = vpop.f32.mrb[0].mxu0
      %3198 = vmatprep.mubr.bf16.mxu0 0
      %3199 = vmatmul.mubr.bf16.gmra.mrb[0].mxu0 %v3074
      %v3200 = vpop.f32.mrb[0].mxu0
      %v3201 = vadd.f32 0.0, %v3200
      %v3202 = vpop.f32.mrb[0].mxu0
      %v3203 = vpop.f32.mrb[0].mxu0
      %v3204 = vadd.f32 0.0, %v3203
      %v3205 = vpop.f32.mrb[0].mxu0
      %3206 = vmatprep.mubr.bf16.mxu0 0
      %3207 = vmatmul.mubr.bf16.gmra.mrb[0].mxu0 %v3077
      %v3208 = vpop.f32.mrb[0].mxu0
      %v3209 = vadd.f32 0.0, %v3208
      %v3210 = vpop.f32.mrb[0].mxu0
      %v3211 = vpop.f32.mrb[0].mxu0
      %v3212 = vadd.f32 0.0, %v3211
      %v3213 = vpop.f32.mrb[0].mxu0
      %3214 = vmatprep.mubr.bf16.mxu0 0
      %3215 = vmatmul.mubr.bf16.gmra.mrb[0].mxu0 %v3080
      %v3216 = vpop.f32.mrb[0].mxu0
      %v3217 = vadd.f32 0.0, %v3216
      %v3218 = vpop.f32.mrb[0].mxu0
      %v3219 = vpop.f32.mrb[0].mxu0
      %v3220 = vadd.f32 0.0, %v3219
      %v3221 = vpop.f32.mrb[0].mxu0
      %3222 = vmatprep.mubr.bf16.mxu0 0
      %3223 = vmatmul.mubr.bf16.gmra.mrb[0].mxu0 %v3083
      %v3224 = vpop.f32.mrb[0].mxu0
      %v3225 = vadd.f32 0.0, %v3224
      %v3226 = vpop.f32.mrb[0].mxu0
      %v3227 = vpop.f32.mrb[0].mxu0
      %v3228 = vadd.f32 0.0, %v3227
      %v3229 = vpop.f32.mrb[0].mxu0
      %3230 = vmatprep.mubr.bf16.mxu0 0
      %3231 = vmatmul.mubr.bf16.gmra.mrb[0].mxu0 %v3086
      %v3232 = vpop.f32.mrb[0].mxu0
      %v3233 = vadd.f32 0.0, %v3232
      %v3234 = vpop.f32.mrb[0].mxu0
      %v3235 = vpop.f32.mrb[0].mxu0
      %v3236 = vadd.f32 0.0, %v3235
      %v3237 = vpop.f32.mrb[0].mxu0
      %3238 = vmatprep.mubr.bf16.mxu0 0
      %3239 = vmatmul.mubr.bf16.gmra.mrb[0].mxu0 %v3089
      %v3240 = vpop.f32.mrb[0].mxu0
      %v3241 = vadd.f32 0.0, %v3240
      %v3242 = vpop.f32.mrb[0].mxu0
      %v3243 = vpop.f32.mrb[0].mxu0
      %v3244 = vadd.f32 0.0, %v3243
      %v3245 = vpop.f32.mrb[0].mxu0
      %3246 = vmatprep.mubr.bf16.mxu0 0
      %3247 = vmatmul.mubr.bf16.gmra.mrb[0].mxu0 %v3092
      %v3248 = vpop.f32.mrb[0].mxu0
      %v3249 = vadd.f32 0.0, %v3248
      %v3250 = vpop.f32.mrb[0].mxu0
      %v3251 = vpop.f32.mrb[0].mxu0
      %v3252 = vadd.f32 0.0, %v3251
      %v3253 = vpop.f32.mrb[0].mxu0
      %3254 = vdwg.mxu0
      %v3255 = vadd.f32 %v2949, %v3129
      %v3256 = vadd.f32 %v2950, %v3132
      %v3257 = vadd.f32 %v2951, %v3137
      %v3258 = vadd.f32 %v2952, %v3140
      %v3259 = vadd.f32 %v2953, %v3145
      %v3260 = vadd.f32 %v2954, %v3148
      %v3261 = vadd.f32 %v2955, %v3153
      %v3262 = vadd.f32 %v2956, %v3156
      %v3263 = vadd.f32 %v2957, %v3161
      %v3264 = vadd.f32 %v2958, %v3164
      %v3265 = vadd.f32 %v2959, %v3169
      %v3266 = vadd.f32 %v2960, %v3172
      %v3267 = vadd.f32 %v2961, %v3177
      %v3268 = vadd.f32 %v2962, %v3180
      %v3269 = vadd.f32 %v2963, %v3185
      %v3270 = vadd.f32 %v2964, %v3188
      %v3271 = vadd.f32 %v2965, %v3193
      %v3272 = vadd.f32 %v2966, %v3196
      %v3273 = vadd.f32 %v2967, %v3201
      %v3274 = vadd.f32 %v2968, %v3204
      %v3275 = vadd.f32 %v2969, %v3209
      %v3276 = vadd.f32 %v2970, %v3212
      %v3277 = vadd.f32 %v2971, %v3217
      %v3278 = vadd.f32 %v2972, %v3220
      %v3279 = vadd.f32 %v2973, %v3225
      %v3280 = vadd.f32 %v2974, %v3228
      %v3281 = vadd.f32 %v2975, %v3233
      %v3282 = vadd.f32 %v2976, %v3236
      %v3283 = vadd.f32 %v2977, %v3241
      %v3284 = vadd.f32 %v2978, %v3244
      %v3285 = vadd.f32 %v2979, %v3249
      %v3286 = vadd.f32 %v2980, %v3252
      %v3287 = vpack.c.bf16 %v3256, %v3255
      %v3288 = vpack.c.bf16 %v3258, %v3257
      %v3289 = vpack.c.bf16 %v3260, %v3259
      %v3290 = vpack.c.bf16 %v3262, %v3261
      %v3291 = vpack.c.bf16 %v3264, %v3263
      %v3292 = vpack.c.bf16 %v3266, %v3265
      %v3293 = vpack.c.bf16 %v3268, %v3267
      %v3294 = vpack.c.bf16 %v3270, %v3269
      %v3295 = vpack.c.bf16 %v3272, %v3271
      %v3296 = vpack.c.bf16 %v3274, %v3273
      %v3297 = vpack.c.bf16 %v3276, %v3275
      %v3298 = vpack.c.bf16 %v3278, %v3277
      %v3299 = vpack.c.bf16 %v3280, %v3279
      %v3300 = vpack.c.bf16 %v3282, %v3281
      %v3301 = vpack.c.bf16 %v3284, %v3283
      %v3302 = vpack.c.bf16 %v3286, %v3285
      %v3319 = vunpack.c.l.b16 %v3287
      %v3320 = vunpack.c.h.b16 %v3287
      %v3321 = vunpack.c.l.b16 %v3288
      %v3322 = vunpack.c.h.b16 %v3288
      %v3323 = vunpack.c.l.b16 %v3289
      %v3324 = vunpack.c.h.b16 %v3289
      %v3325 = vunpack.c.l.b16 %v3290
      %v3326 = vunpack.c.h.b16 %v3290
      %v3327 = vunpack.c.l.b16 %v3291
      %v3328 = vunpack.c.h.b16 %v3291
      %v3329 = vunpack.c.l.b16 %v3292
      %v3330 = vunpack.c.h.b16 %v3292
      %v3331 = vunpack.c.l.b16 %v3293
      %v3332 = vunpack.c.h.b16 %v3293
      %v3333 = vunpack.c.l.b16 %v3294
      %v3334 = vunpack.c.h.b16 %v3294
      %v3335 = vunpack.c.l.b16 %v3295
      %v3336 = vunpack.c.h.b16 %v3295
      %v3337 = vunpack.c.l.b16 %v3296
      %v3338 = vunpack.c.h.b16 %v3296
      %v3339 = vunpack.c.l.b16 %v3297
      %v3340 = vunpack.c.h.b16 %v3297
      %v3341 = vunpack.c.l.b16 %v3298
      %v3342 = vunpack.c.h.b16 %v3298
      %v3343 = vunpack.c.l.b16 %v3299
      %v3344 = vunpack.c.h.b16 %v3299
      %v3345 = vunpack.c.l.b16 %v3300
      %v3346 = vunpack.c.h.b16 %v3300
      %v3347 = vunpack.c.l.b16 %v3301
      %v3348 = vunpack.c.h.b16 %v3301
      %v3349 = vunpack.c.l.b16 %v3302
      %v3350 = vunpack.c.h.b16 %v3302
      %v3351 = vpack.c.b16 %v3319, %v3319
      %v3352 = vpack.c.b16 %v3320, %v3320
      %v3353 = vpack.c.b16 %v3321, %v3321
      %v3354 = vpack.c.b16 %v3322, %v3322
      %v3355 = vpack.c.b16 %v3323, %v3323
      %v3356 = vpack.c.b16 %v3324, %v3324
      %v3357 = vpack.c.b16 %v3325, %v3325
      %v3358 = vpack.c.b16 %v3326, %v3326
      %v3359 = vpack.c.b16 %v3327, %v3327
      %v3360 = vpack.c.b16 %v3328, %v3328
      %v3361 = vpack.c.b16 %v3329, %v3329
      %v3362 = vpack.c.b16 %v3330, %v3330
      %v3363 = vpack.c.b16 %v3331, %v3331
      %v3364 = vpack.c.b16 %v3332, %v3332
      %v3365 = vpack.c.b16 %v3333, %v3333
      %v3366 = vpack.c.b16 %v3334, %v3334
      %v3367 = vpack.c.b16 %v3335, %v3335
      %v3368 = vpack.c.b16 %v3336, %v3336
      %v3369 = vpack.c.b16 %v3337, %v3337
      %v3370 = vpack.c.b16 %v3338, %v3338
      %v3371 = vpack.c.b16 %v3339, %v3339
      %v3372 = vpack.c.b16 %v3340, %v3340
      %v3373 = vpack.c.b16 %v3341, %v3341
      %v3374 = vpack.c.b16 %v3342, %v3342
      %v3375 = vpack.c.b16 %v3343, %v3343
      %v3376 = vpack.c.b16 %v3344, %v3344
      %v3377 = vpack.c.b16 %v3345, %v3345
      %v3378 = vpack.c.b16 %v3346, %v3346
      %v3379 = vpack.c.b16 %v3347, %v3347
      %v3380 = vpack.c.b16 %v3348, %v3348
      %v3381 = vpack.c.b16 %v3349, %v3349
      %v3382 = vpack.c.b16 %v3350, %v3350
      %vm3415 = vcmask 125952
      %3416 = vst.msk [vmem:[%s262] sm:$0xf] %vm3415, %v3351
      %3417 = vst.msk [vmem:[%s262 + $0x4] sm:$0xf] %vm3415, %v3352
      %3418 = vst.msk [vmem:[%s262 + $0x8] sm:$0xf] %vm3415, %v3353
      %3419 = vst.msk [vmem:[%s262 + $0xc] sm:$0xf] %vm3415, %v3354
      %3420 = vst.msk [vmem:[%s262 + $0x10] sm:$0xf] %vm3415, %v3355
      %3421 = vst.msk [vmem:[%s262 + $0x14] sm:$0xf] %vm3415, %v3356
      %3422 = vst.msk [vmem:[%s262 + $0x18] sm:$0xf] %vm3415, %v3357
      %3423 = vst.msk [vmem:[%s262 + $0x1c] sm:$0xf] %vm3415, %v3358
      %3424 = vst.msk [vmem:[%s262 + $0x20] sm:$0xf] %vm3415, %v3359
      %3425 = vst.msk [vmem:[%s262 + $0x24] sm:$0xf] %vm3415, %v3360
      %3426 = vst.msk [vmem:[%s262 + $0x28] sm:$0xf] %vm3415, %v3361
      %3427 = vst.msk [vmem:[%s262 + $0x2c] sm:$0xf] %vm3415, %v3362
      %3428 = vst.msk [vmem:[%s262 + $0x30] sm:$0xf] %vm3415, %v3363
      %3429 = vst.msk [vmem:[%s262 + $0x34] sm:$0xf] %vm3415, %v3364
      %3430 = vst.msk [vmem:[%s262 + $0x38] sm:$0xf] %vm3415, %v3365
      %3431 = vst.msk [vmem:[%s262 + $0x3c] sm:$0xf] %vm3415, %v3366
      %3432 = vst.msk [vmem:[%s262 + $0x40] sm:$0xf] %vm3415, %v3367
      %3433 = vst.msk [vmem:[%s262 + $0x44] sm:$0xf] %vm3415, %v3368
      %3434 = vst.msk [vmem:[%s262 + $0x48] sm:$0xf] %vm3415, %v3369
      %3435 = vst.msk [vmem:[%s262 + $0x4c] sm:$0xf] %vm3415, %v3370
      %3436 = vst.msk [vmem:[%s262 + $0x50] sm:$0xf] %vm3415, %v3371
      %3437 = vst.msk [vmem:[%s262 + $0x54] sm:$0xf] %vm3415, %v3372
      %3438 = vst.msk [vmem:[%s262 + $0x58] sm:$0xf] %vm3415, %v3373
      %3439 = vst.msk [vmem:[%s262 + $0x5c] sm:$0xf] %vm3415, %v3374
      %3440 = vst.msk [vmem:[%s262 + $0x60] sm:$0xf] %vm3415, %v3375
      %3441 = vst.msk [vmem:[%s262 + $0x64] sm:$0xf] %vm3415, %v3376
      %3442 = vst.msk [vmem:[%s262 + $0x68] sm:$0xf] %vm3415, %v3377
      %3443 = vst.msk [vmem:[%s262 + $0x6c] sm:$0xf] %vm3415, %v3378
      %3444 = vst.msk [vmem:[%s262 + $0x70] sm:$0xf] %vm3415, %v3379
      %3445 = vst.msk [vmem:[%s262 + $0x74] sm:$0xf] %vm3415, %v3380
      %3446 = vst.msk [vmem:[%s262 + $0x78] sm:$0xf] %vm3415, %v3381
      %3447 = vst.msk [vmem:[%s262 + $0x7c] sm:$0xf] %vm3415, %v3382
      %vm3448 = vcmask 130048
      %v3449 = vsel %vm3448, %v3255, 0.0
      %v3450 = vsel %vm3448, %v3256, 0.0
      %v3451 = vadd.f32 %v3449, %v3450
      %v3452 = vsel %vm3448, %v3257, 0.0
      %v3453 = vadd.f32 %v3451, %v3452
      %v3454 = vsel %vm3448, %v3258, 0.0
      %v3455 = vadd.f32 %v3453, %v3454
      %v3456 = vsel %vm3448, %v3259, 0.0
      %v3457 = vadd.f32 %v3455, %v3456
      %v3458 = vsel %vm3448, %v3260, 0.0
      %v3459 = vadd.f32 %v3457, %v3458
      %v3460 = vsel %vm3448, %v3261, 0.0
      %v3461 = vadd.f32 %v3459, %v3460
      %v3462 = vsel %vm3448, %v3262, 0.0
      %v3463 = vadd.f32 %v3461, %v3462
      %v3464 = vsel %vm3448, %v3263, 0.0
      %v3465 = vadd.f32 %v3463, %v3464
      %v3466 = vsel %vm3448, %v3264, 0.0
      %v3467 = vadd.f32 %v3465, %v3466
      %v3468 = vsel %vm3448, %v3265, 0.0
      %v3469 = vadd.f32 %v3467, %v3468
      %v3470 = vsel %vm3448, %v3266, 0.0
      %v3471 = vadd.f32 %v3469, %v3470
      %v3472 = vsel %vm3448, %v3267, 0.0
      %v3473 = vadd.f32 %v3471, %v3472
      %v3474 = vsel %vm3448, %v3268, 0.0
      %v3475 = vadd.f32 %v3473, %v3474
      %v3476 = vsel %vm3448, %v3269, 0.0
      %v3477 = vadd.f32 %v3475, %v3476
      %v3478 = vsel %vm3448, %v3270, 0.0
      %v3479 = vadd.f32 %v3477, %v3478
      %v3480 = vsel %vm3448, %v3271, 0.0
      %v3481 = vadd.f32 %v3479, %v3480
      %v3482 = vsel %vm3448, %v3272, 0.0
      %v3483 = vadd.f32 %v3481, %v3482
      %v3484 = vsel %vm3448, %v3273, 0.0
      %v3485 = vadd.f32 %v3483, %v3484
      %v3486 = vsel %vm3448, %v3274, 0.0
      %v3487 = vadd.f32 %v3485, %v3486
      %v3488 = vsel %vm3448, %v3275, 0.0
      %v3489 = vadd.f32 %v3487, %v3488
      %v3490 = vsel %vm3448, %v3276, 0.0
      %v3491 = vadd.f32 %v3489, %v3490
      %v3492 = vsel %vm3448, %v3277, 0.0
      %v3493 = vadd.f32 %v3491, %v3492
      %v3494 = vsel %vm3448, %v3278, 0.0
      %v3495 = vadd.f32 %v3493, %v3494
      %v3496 = vsel %vm3448, %v3279, 0.0
      %v3497 = vadd.f32 %v3495, %v3496
      %v3498 = vsel %vm3448, %v3280, 0.0
      %v3499 = vadd.f32 %v3497, %v3498
      %v3500 = vsel %vm3448, %v3281, 0.0
      %v3501 = vadd.f32 %v3499, %v3500
      %v3502 = vsel %vm3448, %v3282, 0.0
      %v3503 = vadd.f32 %v3501, %v3502
      %v3504 = vsel %vm3448, %v3283, 0.0
      %v3505 = vadd.f32 %v3503, %v3504
      %v3506 = vsel %vm3448, %v3284, 0.0
      %v3507 = vadd.f32 %v3505, %v3506
      %v3508 = vsel %vm3448, %v3285, 0.0
      %v3509 = vadd.f32 %v3507, %v3508
      %v3510 = vsel %vm3448, %v3286, 0.0
      %v3511 = vadd.f32 %v3509, %v3510
      %v3512 = vrot.slane %v3511, 4
      %v3513 = vadd.f32 %v3511, %v3512
      %v3514 = vrot.slane %v3513, 2
      %v3515 = vadd.f32 %v3513, %v3514
      %v3516 = vrot.slane %v3515, 1
      %v3517 = vadd.f32 %v3515, %v3516
      %vm3518 = vcmask 122880
      %3519 = vst.msk [vmem:[%s265] sm:$0x1] %vm3518, %v3517
      %v3520 = vmul.f32 %v3255, %v3255
      %v3521 = vmul.f32 %v3256, %v3256
      %v3522 = vmul.f32 %v3257, %v3257
      %v3523 = vmul.f32 %v3258, %v3258
      %v3524 = vmul.f32 %v3259, %v3259
      %v3525 = vmul.f32 %v3260, %v3260
      %v3526 = vmul.f32 %v3261, %v3261
      %v3527 = vmul.f32 %v3262, %v3262
      %v3528 = vmul.f32 %v3263, %v3263
      %v3529 = vmul.f32 %v3264, %v3264
      %v3530 = vmul.f32 %v3265, %v3265
      %v3531 = vmul.f32 %v3266, %v3266
      %v3532 = vmul.f32 %v3267, %v3267
      %v3533 = vmul.f32 %v3268, %v3268
      %v3534 = vmul.f32 %v3269, %v3269
      %v3535 = vmul.f32 %v3270, %v3270
      %v3536 = vmul.f32 %v3271, %v3271
      %v3537 = vmul.f32 %v3272, %v3272
      %v3538 = vmul.f32 %v3273, %v3273
      %v3539 = vmul.f32 %v3274, %v3274
      %v3540 = vmul.f32 %v3275, %v3275
      %v3541 = vmul.f32 %v3276, %v3276
      %v3542 = vmul.f32 %v3277, %v3277
      %v3543 = vmul.f32 %v3278, %v3278
      %v3544 = vmul.f32 %v3279, %v3279
      %v3545 = vmul.f32 %v3280, %v3280
      %v3546 = vmul.f32 %v3281, %v3281
      %v3547 = vmul.f32 %v3282, %v3282
      %v3548 = vmul.f32 %v3283, %v3283
      %v3549 = vmul.f32 %v3284, %v3284
      %v3550 = vmul.f32 %v3285, %v3285
      %v3551 = vmul.f32 %v3286, %v3286
      %v3552 = vsel %vm3448, %v3520, 0.0
      %v3553 = vsel %vm3448, %v3521, 0.0
      %v3554 = vadd.f32 %v3552, %v3553
      %v3555 = vsel %vm3448, %v3522, 0.0
      %v3556 = vadd.f32 %v3554, %v3555
      %v3557 = vsel %vm3448, %v3523, 0.0
      %v3558 = vadd.f32 %v3556, %v3557
      %v3559 = vsel %vm3448, %v3524, 0.0
      %v3560 = vadd.f32 %v3558, %v3559
      %v3561 = vsel %vm3448, %v3525, 0.0
      %v3562 = vadd.f32 %v3560, %v3561
      %v3563 = vsel %vm3448, %v3526, 0.0
      %v3564 = vadd.f32 %v3562, %v3563
      %v3565 = vsel %vm3448, %v3527, 0.0
      %v3566 = vadd.f32 %v3564, %v3565
      %v3567 = vsel %vm3448, %v3528, 0.0
      %v3568 = vadd.f32 %v3566, %v3567
      %v3569 = vsel %vm3448, %v3529, 0.0
      %v3570 = vadd.f32 %v3568, %v3569
      %v3571 = vsel %vm3448, %v3530, 0.0
      %v3572 = vadd.f32 %v3570, %v3571
      %v3573 = vsel %vm3448, %v3531, 0.0
      %v3574 = vadd.f32 %v3572, %v3573
      %v3575 = vsel %vm3448, %v3532, 0.0
      %v3576 = vadd.f32 %v3574, %v3575
      %v3577 = vsel %vm3448, %v3533, 0.0
      %v3578 = vadd.f32 %v3576, %v3577
      %v3579 = vsel %vm3448, %v3534, 0.0
      %v3580 = vadd.f32 %v3578, %v3579
      %v3581 = vsel %vm3448, %v3535, 0.0
      %v3582 = vadd.f32 %v3580, %v3581
      %v3583 = vsel %vm3448, %v3536, 0.0
      %v3584 = vadd.f32 %v3582, %v3583
      %v3585 = vsel %vm3448, %v3537, 0.0
      %v3586 = vadd.f32 %v3584, %v3585
      %v3587 = vsel %vm3448, %v3538, 0.0
      %v3588 = vadd.f32 %v3586, %v3587
      %v3589 = vsel %vm3448, %v3539, 0.0
      %v3590 = vadd.f32 %v3588, %v3589
      %v3591 = vsel %vm3448, %v3540, 0.0
      %v3592 = vadd.f32 %v3590, %v3591
      %v3593 = vsel %vm3448, %v3541, 0.0
      %v3594 = vadd.f32 %v3592, %v3593
      %v3595 = vsel %vm3448, %v3542, 0.0
      %v3596 = vadd.f32 %v3594, %v3595
      %v3597 = vsel %vm3448, %v3543, 0.0
      %v3598 = vadd.f32 %v3596, %v3597
      %v3599 = vsel %vm3448, %v3544, 0.0
      %v3600 = vadd.f32 %v3598, %v3599
      %v3601 = vsel %vm3448, %v3545, 0.0
      %v3602 = vadd.f32 %v3600, %v3601
      %v3603 = vsel %vm3448, %v3546, 0.0
      %v3604 = vadd.f32 %v3602, %v3603
      %v3605 = vsel %vm3448, %v3547, 0.0
      %v3606 = vadd.f32 %v3604, %v3605
      %v3607 = vsel %vm3448, %v3548, 0.0
      %v3608 = vadd.f32 %v3606, %v3607
      %v3609 = vsel %vm3448, %v3549, 0.0
      %v3610 = vadd.f32 %v3608, %v3609
      %v3611 = vsel %vm3448, %v3550, 0.0
      %v3612 = vadd.f32 %v3610, %v3611
      %v3613 = vsel %vm3448, %v3551, 0.0
      %v3614 = vadd.f32 %v3612, %v3613
      %v3615 = vrot.slane %v3614, 4
      %v3616 = vadd.f32 %v3614, %v3615
      %v3617 = vrot.slane %v3616, 2
      %v3618 = vadd.f32 %v3616, %v3617
      %v3619 = vrot.slane %v3618, 1
      %v3620 = vadd.f32 %v3618, %v3619
      %3621 = vst.msk [vmem:[%s268] sm:$0x1] %vm3518, %v3620
      %p3622 = scmp.lt.s32.totalorder %s18, 1
      %s3623 = scalar_select %p3622, %s18, 1
      %s3624 = smul.addr %s3623, 32
      %s3625 = smul.addr %s3624, 4
      %s3626 = scalar_lea.vmem %s4, %s3625
      %p3627 = scmp.lt.s32.totalorder %s18, 1
      %s3628 = scalar_select %p3627, %s18, 1
      %s3629 = scalar_lea.vmem %s5, %s3628
      %p3630 = scmp.lt.s32.totalorder %s18, 1
      %s3631 = scalar_select %p3630, %s18, 1
      %s3632 = scalar_lea.vmem %s6, %s3631
      // Predicated region
      $region37: #{upsample_forward.4} parent=35 // pred_check
        %p3633 = pneg %p125
      $region38: #{upsample_forward.4} parent=35 // pred_check_branch
        %3635 = sbr.rel (%p3633) target = $region40
      $region39: #{upsample_forward.4} parent=35 // pred_region
        _
      $region40: #{upsample_forward.4} parent=35 // pred_fallthru
        _
      // Predicated region
      $region41: #{upsample_forward.4} parent=35 // pred_check
        %p3636 = pneg %p151
      $region42: #{upsample_forward.4} parent=35 // pred_check_branch
        %3638 = sbr.rel (%p3636) target = $region44
      $region43: #{upsample_forward.4} parent=35 // pred_region
        _
      $region44: #{upsample_forward.4} parent=35 // pred_fallthru
        _
      // Predicated region
      $region45: #{upsample_forward.4} parent=35 // pred_check
        %p3639 = pneg %p177
      $region46: #{upsample_forward.4} parent=35 // pred_check_branch
        %3641 = sbr.rel (%p3639) target = $region48
      $region47: #{upsample_forward.4} parent=35 // pred_region
        _
      $region48: #{upsample_forward.4} parent=35 // pred_fallthru
        _
    $region36: #{upsample_forward.4} parent=5 // pred_fallthru
      _
    %p3642 = scmp.le.s32.totalorder 2, %s13
    // Predicated region
    $region49: #{upsample_forward.4} parent=5 // pred_check
      %p3643 = pneg %p3642
    $region50: #{upsample_forward.4} parent=5 // pred_check_branch
      %3645 = sbr.rel (%p3643) target = $region52
    $region51: #{upsample_forward.4} parent=5 // pred_region
      %s3646 = ssub.s32 %s13, 2
      // Predicated region
      $region53: #{upsample_forward.4} parent=51 // pred_check
        %p3647 = pneg %p131
      $region54: #{upsample_forward.4} parent=51 // pred_check_branch
        %3649 = sbr.rel (%p3647) target = $region56
      $region55: #{upsample_forward.4} parent=51 // pred_region
        %p3650 = scmp.lt.s32.totalorder %s19, 1
        %s3651 = scalar_select %p3650, %s19, 1
        %s3652 = smul.addr %s3651, 32
        %s3653 = smul.addr %s3652, 4
        %s3654 = scalar_lea.vmem %s4, %s3653
      $region56: #{upsample_forward.4} parent=51 // pred_fallthru
        _
      // Predicated region
      $region57: #{upsample_forward.4} parent=51 // pred_check
        %p3655 = pneg %p157
      $region58: #{upsample_forward.4} parent=51 // pred_check_branch
        %3657 = sbr.rel (%p3655) target = $region60
      $region59: #{upsample_forward.4} parent=51 // pred_region
        %p3658 = scmp.lt.s32.totalorder %s19, 1
        %s3659 = scalar_select %p3658, %s19, 1
        %s3660 = scalar_lea.vmem %s5, %s3659
      $region60: #{upsample_forward.4} parent=51 // pred_fallthru
        _
      // Predicated region
      $region61: #{upsample_forward.4} parent=51 // pred_check
        %p3661 = pneg %p183
      $region62: #{upsample_forward.4} parent=51 // pred_check_branch
        %3663 = sbr.rel (%p3661) target = $region64
      $region63: #{upsample_forward.4} parent=51 // pred_region
        %p3664 = scmp.lt.s32.totalorder %s19, 1
        %s3665 = scalar_select %p3664, %s19, 1
        %s3666 = scalar_lea.vmem %s6, %s3665
      $region64: #{upsample_forward.4} parent=51 // pred_fallthru
        _
    $region52: #{upsample_forward.4} parent=5 // pred_fallthru
      _
  $region6: #{upsample_forward.4} parent=0 // loop_footer
    %s17 = sadd.s32 1, %s13
  $region7: #{upsample_forward.4} parent=0 // loop_footer_branch
    %12 = sbr.rel target = $region3
  $region8: #{upsample_forward.4} parent=0 // loop_exit
    _

// kernel: tile.9
$region0: #{tile.9}
  %s0 = inlined_call_operand.vmem [shape: f32[32,8], index: 0, kind: input, shape index: {}]
  %s1 = inlined_call_operand.vmem [shape: f32[1,256], index: 1, kind: output, shape index: {}]
  $region1: #{tile.9} parent=0
    #allocation0 [shape = 'u8[8192]{0}', space=vmem, size = 0x2000, scoped, tag = 'scoped mem for output reshape']
    %s2 = smov 3
    %v3 = vld [vmem:[%s0] ss:$16 sm:%s2]
    %vm4 = vcmask 64512
    %5 = vst.msk [vmem:[#allocation0] ss:$8 sm:$0x3] %vm4, %v3
    %s6 = scalar_lea.vmem %s0, 15
    %s7 = smov 3
    %v8 = vld [vmem:[%s6] ss:$16 sm:%s7]
    %9 = vrot.lane.b32.xlu0 %v8, 120
    %v10 = vpop.permute.xlu0 %9
    %vm11 = vcmask 1048512
    %12 = vst.msk [vmem:[#allocation0] ss:$8 sm:$0x3] %vm11, %v10
    %s13 = scalar_lea.vmem %s0, 14
    %s14 = smov 3
    %v15 = vld [vmem:[%s13] ss:$16 sm:%s14]
    %16 = vrot.lane.b32.xlu0 %v15, 112
    %v17 = vpop.permute.xlu0 %16
    %vm18 = vcmask 982912
    %19 = vst.msk [vmem:[#allocation0] ss:$8 sm:$0x3] %vm18, %v17
    %s20 = scalar_lea.vmem %s0, 13
    %s21 = smov 3
    %v22 = vld [vmem:[%s20] ss:$16 sm:%s21]
    %23 = vrot.lane.b32.xlu0 %v22, 104
    %v24 = vpop.permute.xlu0 %23
    %vm25 = vcmask 917312
    %26 = vst.msk [vmem:[#allocation0] ss:$8 sm:$0x3] %vm25, %v24
    %s27 = scalar_lea.vmem %s0, 12
    %s28 = smov 3
    %v29 = vld [vmem:[%s27] ss:$16 sm:%s28]
    %30 = vrot.lane.b32.xlu0 %v29, 96
    %v31 = vpop.permute.xlu0 %30
    %vm32 = vcmask 851712
    %33 = vst.msk [vmem:[#allocation0] ss:$8 sm:$0x3] %vm32, %v31
    %s34 = scalar_lea.vmem %s0, 11
    %s35 = smov 3
    %v36 = vld [vmem:[%s34] ss:$16 sm:%s35]
    %37 = vrot.lane.b32.xlu0 %v36, 88
    %v38 = vpop.permute.xlu0 %37
    %vm39 = vcmask 786112
    %40 = vst.msk [vmem:[#allocation0] ss:$8 sm:$0x3] %vm39, %v38
    %s41 = scalar_lea.vmem %s0, 10
    %s42 = smov 3
    %v43 = vld [vmem:[%s41] ss:$16 sm:%s42]
    %44 = vrot.lane.b32.xlu0 %v43, 80
    %v45 = vpop.permute.xlu0 %44
    %vm46 = vcmask 720512
    %47 = vst.msk [vmem:[#allocation0] ss:$8 sm:$0x3] %vm46, %v45
    %s48 = scalar_lea.vmem %s0, 9
    %s49 = smov 3
    %v50 = vld [vmem:[%s48] ss:$16 sm:%s49]
    %51 = vrot.lane.b32.xlu0 %v50, 72
    %v52 = vpop.permute.xlu0 %51
    %vm53 = vcmask 654912
    %54 = vst.msk [vmem:[#allocation0] ss:$8 sm:$0x3] %vm53, %v52
    %s55 = scalar_lea.vmem %s0, 8
    %s56 = smov 3
    %v57 = vld [vmem:[%s55] ss:$16 sm:%s56]
    %58 = vrot.lane.b32.xlu0 %v57, 64
    %v59 = vpop.permute.xlu0 %58
    %vm60 = vcmask 589312
    %61 = vst.msk [vmem:[#allocation0] ss:$8 sm:$0x3] %vm60, %v59
    %s62 = scalar_lea.vmem %s0, 7
    %s63 = smov 3
    %v64 = vld [vmem:[%s62] ss:$16 sm:%s63]
    %65 = vrot.lane.b32.xlu0 %v64, 56
    %v66 = vpop.permute.xlu0 %65
    %vm67 = vcmask 523712
    %68 = vst.msk [vmem:[#allocation0] ss:$8 sm:$0x3] %vm67, %v66
    %s69 = scalar_lea.vmem %s0, 6
    %s70 = smov 3
    %v71 = vld [vmem:[%s69] ss:$16 sm:%s70]
    %72 = vrot.lane.b32.xlu0 %v71, 48
    %v73 = vpop.permute.xlu0 %72
    %vm74 = vcmask 458112
    %75 = vst.msk [vmem:[#allocation0] ss:$8 sm:$0x3] %vm74, %v73
    %s76 = scalar_lea.vmem %s0, 5
    %s77 = smov 3
    %v78 = vld [vmem:[%s76] ss:$16 sm:%s77]
    %79 = vrot.lane.b32.xlu0 %v78, 40
    %v80 = vpop.permute.xlu0 %79
    %vm81 = vcmask 392512
    %82 = vst.msk [vmem:[#allocation0] ss:$8 sm:$0x3] %vm81, %v80
    %s83 = scalar_lea.vmem %s0, 4
    %s84 = smov 3
    %v85 = vld [vmem:[%s83] ss:$16 sm:%s84]
    %86 = vrot.lane.b32.xlu0 %v85, 32
    %v87 = vpop.permute.xlu0 %86
    %vm88 = vcmask 326912
    %89 = vst.msk [vmem:[#allocation0] ss:$8 sm:$0x3] %vm88, %v87
    %s90 = scalar_lea.vmem %s0, 3
    %s91 = smov 3
    %v92 = vld [vmem:[%s90] ss:$16 sm:%s91]
    %93 = vrot.lane.b32.xlu0 %v92, 24
    %v94 = vpop.permute.xlu0 %93
    %vm95 = vcmask 261312
    %96 = vst.msk [vmem:[#allocation0] ss:$8 sm:$0x3] %vm95, %v94
    %s97 = scalar_lea.vmem %s0, 2
    %s98 = smov 3
    %v99 = vld [vmem:[%s97] ss:$16 sm:%s98]
    %100 = vrot.lane.b32.xlu0 %v99, 16
    %v101 = vpop.permute.xlu0 %100
    %vm102 = vcmask 195712
    %103 = vst.msk [vmem:[#allocation0] ss:$8 sm:$0x3] %vm102, %v101
    %s104 = scalar_lea.vmem %s0, 1
    %s105 = smov 3
    %v106 = vld [vmem:[%s104] ss:$16 sm:%s105]
    %107 = vrot.lane.b32.xlu0 %v106, 8
    %v108 = vpop.permute.xlu0 %107
    %vm109 = vcmask 130112
    %110 = vst.msk [vmem:[#allocation0] ss:$8 sm:$0x3] %vm109, %v108
    %s112 = sshllo.u32 0, 1
    %v114 = vld [vmem:[#allocation0] sm:%s112]
    %s115 = sshllo.u32 0, 1
    %116 = vst [vmem:[%s1] sm:%s115] %v114
    %s117 = scalar_lea.vmem [#allocation0], 8
    %v118 = vld [vmem:[%s117] sm:%s112]
    %s119 = sshllo.u32 0, 1
    %s120 = scalar_lea.vmem %s1, 1
    %121 = vst [vmem:[%s120] sm:%s119] %v118

// kernel: upsample_forward.5
$region0: #{upsample_forward.5}
  #allocation0 [shape = 'u32[]', space=smem, size = 0x4, offset = 0x4, fixed_abs, tag = 'smem constant byte address 0x4 - core index']
  #allocation1 [shape = 'u32[144,128]{1,0:T(1,128)}', space=vmem, size = 0x12000, scoped, tag = 'internal scratch']
  %s0 = inlined_call_operand.vmem [shape: bf16[2,16,256], index: 0, kind: input, shape index: {}]
  %s1 = inlined_call_operand.vmem [shape: f32[256,256], index: 1, kind: input, shape index: {}]
  %s2 = inlined_call_operand.vmem [shape: f32[32,16], index: 2, kind: input, shape index: {}]
  %s3 = inlined_call_operand.vmem [shape: f32[1,256], index: 3, kind: input, shape index: {}]
  %s4 = inlined_call_operand.vmem [shape: f32[2,32,256], index: 4, kind: output, shape index: {}]
  %s5 = sld [smem:[#allocation0]]
  $region49: #{upsample_forward.5} parent=0
    _
  %s7 = ssub.s32 1, %s5
  %s8 = scalar_select 0, %s7, %s5
  loop: start=0, step=1, limit=4
  $region2: #{upsample_forward.5} parent=0 // loop_pre_header
    _
  $region3: #{upsample_forward.5} parent=0 // loop_header
    %s10 = sphi 0, %s14
    %p11 = scmp.ge.s32.totalorder %s10, 4
    %s20 = sphi 0, %s22
    %s23 = sphi 0, %s20
    %s24 = sphi 0, %s23
    %s40 = sphi 0, %s24
    %s44 = sphi 0, %s44
    %s46 = sphi 0, %s44
    %s47 = sphi 0, %s46
    %s61 = sphi 0, %s47
    %s65 = sphi 0, %s65
    %s67 = sphi 0, %s65
    %s68 = sphi 0, %s67
    %s82 = sphi 0, %s68
    %s86 = sphi 0, %s86
    %s88 = sphi 0, %s86
    %s89 = sphi 0, %s88
    %s103 = sphi 0, %s89
    %s109 = sphi 0, %s111
    %s112 = sphi 0, %s109
    %s113 = sphi 0, %s112
    %s129 = sphi 0, %s113
  $region4: #{upsample_forward.5} parent=0 // loop_header_branch
    %13 = sbr.rel (%p11) target = $region8
  $region5: #{upsample_forward.5} parent=0 // loop_body
    %s15 = ssub.s32 %s10, 1
    %s16 = ssub.s32 %s10, 2
    %s17 = sadd.s32 %s10, 1
    %s18 = ssub.s32 %s10, %s17
    %p19 = scmp.eq.s32.totalorder %s18, 0
    %s21 = sadd.s32 %s20, 1
    %s22 = scalar_select %p19, %s20, %s21
    %p25 = pneg %p19
    %p26 = scmp.eq.s32.totalorder %s10, 1
    %p27 = por %p25, %p26
    %p28 = scmp.ne.s32.totalorder %s20, %s23
    %p29 = scmp.eq.s32.totalorder %s10, 0
    %p30 = por %p28, %p29
    %p31 = scmp.ne.s32.totalorder %s20, %s23
    %p32 = scmp.eq.s32.totalorder %s15, 1
    %p33 = por %p31, %p32
    %p34 = scmp.ne.s32.totalorder %s23, %s24
    %p35 = scmp.eq.s32.totalorder %s15, 0
    %p36 = por %p34, %p35
    %p37 = scmp.ne.s32.totalorder %s23, %s24
    %p38 = scmp.eq.s32.totalorder %s16, 1
    %p39 = por %p37, %p38
    %p41 = scmp.ne.s32.totalorder %s24, %s40
    %p42 = scmp.eq.s32.totalorder %s16, 0
    %p43 = por %p41, %p42
    %s45 = sadd.s32 %s44, 1
    %p48 = scmp.eq.s32.totalorder %s10, 1
    %p49 = scmp.ne.s32.totalorder %s44, %s46
    %p50 = scmp.eq.s32.totalorder %s10, 0
    %p51 = por %p49, %p50
    %p52 = scmp.ne.s32.totalorder %s44, %s46
    %p53 = scmp.eq.s32.totalorder %s15, 1
    %p54 = por %p52, %p53
    %p55 = scmp.ne.s32.totalorder %s46, %s47
    %p56 = scmp.eq.s32.totalorder %s15, 0
    %p57 = por %p55, %p56
    %p58 = scmp.ne.s32.totalorder %s46, %s47
    %p59 = scmp.eq.s32.totalorder %s16, 1
    %p60 = por %p58, %p59
    %p62 = scmp.ne.s32.totalorder %s47, %s61
    %p63 = scmp.eq.s32.totalorder %s16, 0
    %p64 = por %p62, %p63
    %s66 = sadd.s32 %s65, 1
    %p69 = scmp.eq.s32.totalorder %s10, 1
    %p70 = scmp.ne.s32.totalorder %s65, %s67
    %p71 = scmp.eq.s32.totalorder %s10, 0
    %p72 = por %p70, %p71
    %p73 = scmp.ne.s32.totalorder %s65, %s67
    %p74 = scmp.eq.s32.totalorder %s15, 1
    %p75 = por %p73, %p74
    %p76 = scmp.ne.s32.totalorder %s67, %s68
    %p77 = scmp.eq.s32.totalorder %s15, 0
    %p78 = por %p76, %p77
    %p79 = scmp.ne.s32.totalorder %s67, %s68
    %p80 = scmp.eq.s32.totalorder %s16, 1
    %p81 = por %p79, %p80
    %p83 = scmp.ne.s32.totalorder %s68, %s82
    %p84 = scmp.eq.s32.totalorder %s16, 0
    %p85 = por %p83, %p84
    %s87 = sadd.s32 %s86, 1
    %p90 = scmp.eq.s32.totalorder %s10, 1
    %p91 = scmp.ne.s32.totalorder %s86, %s88
    %p92 = scmp.eq.s32.totalorder %s10, 0
    %p93 = por %p91, %p92
    %p94 = scmp.ne.s32.totalorder %s86, %s88
    %p95 = scmp.eq.s32.totalorder %s15, 1
    %p96 = por %p94, %p95
    %p97 = scmp.ne.s32.totalorder %s88, %s89
    %p98 = scmp.eq.s32.totalorder %s15, 0
    %p99 = por %p97, %p98
    %p100 = scmp.ne.s32.totalorder %s88, %s89
    %p101 = scmp.eq.s32.totalorder %s16, 1
    %p102 = por %p100, %p101
    %p104 = scmp.ne.s32.totalorder %s89, %s103
    %p105 = scmp.eq.s32.totalorder %s16, 0
    %p106 = por %p104, %p105
    %s107 = ssub.s32 %s10, %s17
    %p108 = scmp.eq.s32.totalorder %s107, 0
    %s110 = sadd.s32 %s109, 1
    %s111 = scalar_select %p108, %s109, %s110
    %p114 = pneg %p108
    %p115 = scmp.eq.s32.totalorder %s10, 1
    %p116 = por %p114, %p115
    %p117 = scmp.ne.s32.totalorder %s109, %s112
    %p118 = scmp.eq.s32.totalorder %s10, 0
    %p119 = por %p117, %p118
    %p120 = scmp.ne.s32.totalorder %s109, %s112
    %p121 = scmp.eq.s32.totalorder %s15, 1
    %p122 = por %p120, %p121
    %p123 = scmp.ne.s32.totalorder %s112, %s113
    %p124 = scmp.eq.s32.totalorder %s15, 0
    %p125 = por %p123, %p124
    %p126 = scmp.ne.s32.totalorder %s112, %s113
    %p127 = scmp.eq.s32.totalorder %s16, 1
    %p128 = por %p126, %p127
    %p130 = scmp.ne.s32.totalorder %s113, %s129
    %p131 = scmp.eq.s32.totalorder %s16, 0
    %p132 = por %p130, %p131
    %p133 = scmp.le.s32.totalorder 1, %s10
    %p134 = scmp.lt.s32.totalorder %s10, 3
    %p135 = pnand %p133, %p134
    %p136 = pneg %p135
    // Predicated region
    $region9: #{upsample_forward.5} parent=5 // pred_check
      _
    $region10: #{upsample_forward.5} parent=5 // pred_check_branch
      %138 = sbr.rel (%p135) target = $region12
    $region11: #{upsample_forward.5} parent=5 // pred_region
      %s139 = ssub.s32 %s10, 1
      // Predicated region
      $region13: #{upsample_forward.5} parent=11 // pred_check
        %p140 = pneg %p57
      $region14: #{upsample_forward.5} parent=11 // pred_check_branch
        %142 = sbr.rel (%p140) target = $region16
      $region15: #{upsample_forward.5} parent=11 // pred_region
        _
      $region16: #{upsample_forward.5} parent=11 // pred_fallthru
        _
      // Predicated region
      $region17: #{upsample_forward.5} parent=11 // pred_check
        %p143 = pneg %p78
      $region18: #{upsample_forward.5} parent=11 // pred_check_branch
        %145 = sbr.rel (%p143) target = $region20
      $region19: #{upsample_forward.5} parent=11 // pred_region
        _
      $region20: #{upsample_forward.5} parent=11 // pred_fallthru
        _
      // Predicated region
      $region21: #{upsample_forward.5} parent=11 // pred_check
        %p146 = pneg %p99
      $region22: #{upsample_forward.5} parent=11 // pred_check_branch
        %148 = sbr.rel (%p146) target = $region24
      $region23: #{upsample_forward.5} parent=11 // pred_region
        _
      $region24: #{upsample_forward.5} parent=11 // pred_fallthru
        _
    $region12: #{upsample_forward.5} parent=5 // pred_fallthru
      _
    %p149 = scmp.lt.s32.totalorder %s10, 2
    // Predicated region
    $region25: #{upsample_forward.5} parent=5 // pred_check
      %p150 = pneg %p149
    $region26: #{upsample_forward.5} parent=5 // pred_check_branch
      %152 = sbr.rel (%p150) target = $region28
    $region27: #{upsample_forward.5} parent=5 // pred_region
      // Predicated region
      $region29: #{upsample_forward.5} parent=27 // pred_check
        %p153 = pneg %p30
      $region30: #{upsample_forward.5} parent=27 // pred_check_branch
        %155 = sbr.rel (%p153) target = $region32
      $region31: #{upsample_forward.5} parent=27 // pred_region
        %p156 = scmp.lt.s32.totalorder %s10, 1
        %s157 = scalar_select %p156, %s10, 1
        %s158 = smul.addr %s157, 4
        %s159 = smul.addr %s158, 4
        %s160 = scalar_lea.vmem %s0, %s159
      $region32: #{upsample_forward.5} parent=27 // pred_fallthru
        _
    $region28: #{upsample_forward.5} parent=5 // pred_fallthru
      _
    %p161 = scmp.le.s32.totalorder 1, %s10
    %p162 = scmp.lt.s32.totalorder %s10, 3
    %p163 = pnand %p161, %p162
    %p164 = pneg %p163
    // Predicated region
    $region33: #{upsample_forward.5} parent=5 // pred_check
      _
    $region34: #{upsample_forward.5} parent=5 // pred_check_branch
      %166 = sbr.rel (%p163) target = $region36
    $region35: #{upsample_forward.5} parent=5 // pred_region
      %s167 = ssub.s32 %s10, 1
      %p168 = scmp.lt.s32.totalorder %s15, 1
      %s169 = scalar_select %p168, %s15, 1
      %s170 = smul.addr %s169, 4
      %s171 = smul.addr %s170, 4
      %s172 = scalar_lea.vmem %s0, %s171
      %p173 = pneg %p36
      %p174 = pneg %p33
      %p175 = pneg %p57
      %p176 = pneg %p54
      %p177 = pneg %p78
      %p178 = pneg %p75
      %p179 = pneg %p99
      %p180 = pneg %p96
      %p181 = pneg %p125
      %p182 = pneg %p122
      %p183 = scmp.lt.s32.totalorder %s15, 1
      %s184 = scalar_select %p183, %s15, 1
      %s185 = smul.addr %s184, 8
      %s186 = smul.addr %s185, 8
      %s187 = scalar_lea.vmem %s4, %s186
      %p188 = scmp.lt.s32.totalorder %s15, 1
      %s189 = scalar_select %p188, %s15, 1
      %s190 = smul.addr %s189, 4
      %s191 = smul.addr %s190, 4
      %s192 = scalar_lea.vmem %s0, %s191
      %p193 = scmp.lt.s32.totalorder %s15, 1
      %s194 = scalar_select %p193, %s15, 1
      %s195 = smul.addr %s194, 8
      %s196 = smul.addr %s195, 8
      %s197 = scalar_lea.vmem %s4, %s196
      %v198 = vld [vmem:[%s192] sm:$0xff]
      %v199 = vld [vmem:[%s192 + $0x8] sm:$0xff]
      %v200 = vunpack.c.l.bf16 %v198
      %v201 = vunpack.c.h.bf16 %v198
      %v202 = vunpack.c.l.bf16 %v199
      %v203 = vunpack.c.h.bf16 %v199
      %v204 = vld [vmem:[%s1] sm:$0xff]
      %v205 = vld [vmem:[%s1 + $0x8] sm:$0xff]
      %v206 = vld [vmem:[%s1 + $0x10] sm:$0xff]
      %v207 = vld [vmem:[%s1 + $0x18] sm:$0xff]
      %v208 = vld [vmem:[%s1 + $0x20] sm:$0xff]
      %v209 = vld [vmem:[%s1 + $0x28] sm:$0xff]
      %v210 = vld [vmem:[%s1 + $0x30] sm:$0xff]
      %v211 = vld [vmem:[%s1 + $0x38] sm:$0xff]
      %v212 = vld [vmem:[%s1 + $0x40] sm:$0xff]
      %v213 = vld [vmem:[%s1 + $0x48] sm:$0xff]
      %v214 = vld [vmem:[%s1 + $0x50] sm:$0xff]
      %v215 = vld [vmem:[%s1 + $0x58] sm:$0xff]
      %v216 = vld [vmem:[%s1 + $0x60] sm:$0xff]
      %v217 = vld [vmem:[%s1 + $0x68] sm:$0xff]
      %v218 = vld [vmem:[%s1 + $0x70] sm:$0xff]
      %v219 = vld [vmem:[%s1 + $0x78] sm:$0xff]
      %v220 = vld [vmem:[%s1 + $0x80] sm:$0xff]
      %v221 = vld [vmem:[%s1 + $0x88] sm:$0xff]
      %v222 = vld [vmem:[%s1 + $0x90] sm:$0xff]
      %v223 = vld [vmem:[%s1 + $0x98] sm:$0xff]
      %v224 = vld [vmem:[%s1 + $0xa0] sm:$0xff]
      %v225 = vld [vmem:[%s1 + $0xa8] sm:$0xff]
      %v226 = vld [vmem:[%s1 + $0xb0] sm:$0xff]
      %v227 = vld [vmem:[%s1 + $0xb8] sm:$0xff]
      %v228 = vld [vmem:[%s1 + $0xc0] sm:$0xff]
      %v229 = vld [vmem:[%s1 + $0xc8] sm:$0xff]
      %v230 = vld [vmem:[%s1 + $0xd0] sm:$0xff]
      %v231 = vld [vmem:[%s1 + $0xd8] sm:$0xff]
      %v232 = vld [vmem:[%s1 + $0xe0] sm:$0xff]
      %v233 = vld [vmem:[%s1 + $0xe8] sm:$0xff]
      %v234 = vld [vmem:[%s1 + $0xf0] sm:$0xff]
      %v235 = vld [vmem:[%s1 + $0xf8] sm:$0xff]
      %v236 = vld [vmem:[%s1 + $0x100] sm:$0xff]
      %v237 = vld [vmem:[%s1 + $0x108] sm:$0xff]
      %v238 = vld [vmem:[%s1 + $0x110] sm:$0xff]
      %v239 = vld [vmem:[%s1 + $0x118] sm:$0xff]
      %v240 = vld [vmem:[%s1 + $0x120] sm:$0xff]
      %v241 = vld [vmem:[%s1 + $0x128] sm:$0xff]
      %v242 = vld [vmem:[%s1 + $0x130] sm:$0xff]
      %v243 = vld [vmem:[%s1 + $0x138] sm:$0xff]
      %v244 = vld [vmem:[%s1 + $0x140] sm:$0xff]
      %v245 = vld [vmem:[%s1 + $0x148] sm:$0xff]
      %v246 = vld [vmem:[%s1 + $0x150] sm:$0xff]
      %v247 = vld [vmem:[%s1 + $0x158] sm:$0xff]
      %v248 = vld [vmem:[%s1 + $0x160] sm:$0xff]
      %v249 = vld [vmem:[%s1 + $0x168] sm:$0xff]
      %v250 = vld [vmem:[%s1 + $0x170] sm:$0xff]
      %v251 = vld [vmem:[%s1 + $0x178] sm:$0xff]
      %v252 = vld [vmem:[%s1 + $0x180] sm:$0xff]
      %v253 = vld [vmem:[%s1 + $0x188] sm:$0xff]
      %v254 = vld [vmem:[%s1 + $0x190] sm:$0xff]
      %v255 = vld [vmem:[%s1 + $0x198] sm:$0xff]
      %v256 = vld [vmem:[%s1 + $0x1a0] sm:$0xff]
      %v257 = vld [vmem:[%s1 + $0x1a8] sm:$0xff]
      %v258 = vld [vmem:[%s1 + $0x1b0] sm:$0xff]
      %v259 = vld [vmem:[%s1 + $0x1b8] sm:$0xff]
      %v260 = vld [vmem:[%s1 + $0x1c0] sm:$0xff]
      %v261 = vld [vmem:[%s1 + $0x1c8] sm:$0xff]
      %v262 = vld [vmem:[%s1 + $0x1d0] sm:$0xff]
      %v263 = vld [vmem:[%s1 + $0x1d8] sm:$0xff]
      %v264 = vld [vmem:[%s1 + $0x1e0] sm:$0xff]
      %v265 = vld [vmem:[%s1 + $0x1e8] sm:$0xff]
      %v266 = vld [vmem:[%s1 + $0x1f0] sm:$0xff]
      %v267 = vld [vmem:[%s1 + $0x1f8] sm:$0xff]
      %268 = vmatprep.subr.mxu0 %v205
      %269 = vmatpush1.msra.mxu0 %v204
      %270 = vmatprep.subr.mxu0 %v207
      %271 = vmatpush1.msra.mxu0 %v206
      %272 = vmatprep.subr.mxu0 %v209
      %273 = vmatpush1.msra.mxu0 %v208
      %274 = vmatprep.subr.mxu0 %v211
      %275 = vmatpush1.msra.mxu0 %v210
      %276 = vmatprep.subr.mxu0 %v213
      %277 = vmatpush1.msra.mxu0 %v212
      %278 = vmatprep.subr.mxu0 %v215
      %279 = vmatpush1.msra.mxu0 %v214
      %280 = vmatprep.subr.mxu0 %v217
      %281 = vmatpush1.msra.mxu0 %v216
      %282 = vmatprep.subr.mxu0 %v219
      %283 = vmatpush1.msra.mxu0 %v218
      %284 = vmatprep.subr.mxu0 %v221
      %285 = vmatpush1.msra.mxu0 %v220
      %286 = vmatprep.subr.mxu0 %v223
      %287 = vmatpush1.msra.mxu0 %v222
      %288 = vmatprep.subr.mxu0 %v225
      %289 = vmatpush1.msra.mxu0 %v224
      %290 = vmatprep.subr.mxu0 %v227
      %291 = vmatpush1.msra.mxu0 %v226
      %292 = vmatprep.subr.mxu0 %v229
      %293 = vmatpush1.msra.mxu0 %v228
      %294 = vmatprep.subr.mxu0 %v231
      %295 = vmatpush1.msra.mxu0 %v230
      %296 = vmatprep.subr.mxu0 %v233
      %297 = vmatpush1.msra.mxu0 %v232
      %298 = vmatprep.subr.mxu0 %v235
      %299 = vmatpush1.msra.mxu0 %v234
      %300 = vmatprep.subr.mxu0 %v237
      %301 = vmatpush1.msra.mxu0 %v236
      %302 = vmatprep.subr.mxu0 %v239
      %303 = vmatpush1.msra.mxu0 %v238
      %304 = vmatprep.subr.mxu0 %v241
      %305 = vmatpush1.msra.mxu0 %v240
      %306 = vmatprep.subr.mxu0 %v243
      %307 = vmatpush1.msra.mxu0 %v242
      %308 = vmatprep.subr.mxu0 %v245
      %309 = vmatpush1.msra.mxu0 %v244
      %310 = vmatprep.subr.mxu0 %v247
      %311 = vmatpush1.msra.mxu0 %v246
      %312 = vmatprep.subr.mxu0 %v249
      %313 = vmatpush1.msra.mxu0 %v248
      %314 = vmatprep.subr.mxu0 %v251
      %315 = vmatpush1.msra.mxu0 %v250
      %316 = vmatprep.subr.mxu0 %v253
      %317 = vmatpush1.msra.mxu0 %v252
      %318 = vmatprep.subr.mxu0 %v255
      %319 = vmatpush1.msra.mxu0 %v254
      %320 = vmatprep.subr.mxu0 %v257
      %321 = vmatpush1.msra.mxu0 %v256
      %322 = vmatprep.subr.mxu0 %v259
      %323 = vmatpush1.msra.mxu0 %v258
      %324 = vmatprep.subr.mxu0 %v261
      %325 = vmatpush1.msra.mxu0 %v260
      %326 = vmatprep.subr.mxu0 %v263
      %327 = vmatpush1.msra.mxu0 %v262
      %328 = vmatprep.subr.mxu0 %v265
      %329 = vmatpush1.msra.mxu0 %v264
      %330 = vmatprep.subr.mxu0 %v267
      %331 = vmatpush1.msra.mxu0 %v266
      %332 = vmatprep.mubr.f32.mxu0 %v201
      %333 = vmatmul.mubr.f32.gmra.mrb[0].mxu0 %v200
      %v334 = vpop.f32.mrb[0].mxu0
      %v335 = vadd.f32 0.0, %v334
      %v336 = vpop.f32.mrb[0].mxu0
      %v337 = vadd.f32 0.0, %v336
      %338 = vmatprep.mubr.f32.mxu0 %v203
      %339 = vmatmul.mubr.f32.gmra.mrb[0].mxu0 %v202
      %v340 = vpop.f32.mrb[0].mxu0
      %v341 = vadd.f32 0.0, %v340
      %v342 = vpop.f32.mrb[0].mxu0
      %v343 = vadd.f32 0.0, %v342
      %344 = vdwg.mxu0
      %v345 = vld [vmem:[%s2] sm:$0xff]
      %v346 = vld [vmem:[%s2 + $0x8] sm:$0xff]
      %v347 = vld [vmem:[%s2 + $0x10] sm:$0xff]
      %v348 = vld [vmem:[%s2 + $0x18] sm:$0xff]
      %v349 = vld [vmem:[%s3] sm:$0x3]
      %v351 = vlaneseq
      %v352 = vshrl.u32 %v351, 7
      %v353 = vsub.s32 0, %v352
      %v354 = vrot.slane %v349, %v353
      %v355 = vlaneseq
      %v356 = vshrl.u32 %v355, 7
      %v357 = vsub.s32 1, %v356
      %v358 = vrot.slane %v349, %v357
      %vm361 = vcmask 130048
      %v363 = vsel %vm361, %v345, 0
      %v366 = vsel %vm361, %v346, 0
      %v369 = vsel %vm361, %v347, 0
      %v372 = vsel %vm361, %v348, 0
      %374 = vmatprep.subr.mxu0 %v337
      %375 = vmatpush1.msra.mxu0 %v335
      %376 = vmatprep.subr.mxu0 %v343
      %377 = vmatpush1.msra.mxu0 %v341
      %378 = vmatprep.subr.mxu0 0.0
      %379 = vmatpush1.msra.mxu0 0.0
      %380 = vmatprep.subr.mxu0 0.0
      %381 = vmatpush1.msra.mxu0 0.0
      %382 = vmatprep.subr.mxu0 0.0
      %383 = vmatpush1.msra.mxu0 0.0
      %384 = vmatprep.subr.mxu0 0.0
      %385 = vmatpush1.msra.mxu0 0.0
      %386 = vmatprep.subr.mxu0 0.0
      %387 = vmatpush1.msra.mxu0 0.0
      %388 = vmatprep.subr.mxu0 0.0
      %389 = vmatpush1.msra.mxu0 0.0
      %390 = vmatprep.subr.mxu0 0.0
      %391 = vmatpush1.msra.mxu0 0.0
      %392 = vmatprep.subr.mxu0 0.0
      %393 = vmatpush1.msra.mxu0 0.0
      %394 = vmatprep.subr.mxu0 0.0
      %395 = vmatpush1.msra.mxu0 0.0
      %396 = vmatprep.subr.mxu0 0.0
      %397 = vmatpush1.msra.mxu0 0.0
      %398 = vmatprep.subr.mxu0 0.0
      %399 = vmatpush1.msra.mxu0 0.0
      %400 = vmatprep.subr.mxu0 0.0
      %401 = vmatpush1.msra.mxu0 0.0
      %402 = vmatprep.subr.mxu0 0.0
      %403 = vmatpush1.msra.mxu0 0.0
      %404 = vmatprep.subr.mxu0 0.0
      %405 = vmatpush1.msra.mxu0 0.0
      %406 = vmatprep.subr.mxu0 0.0
      %407 = vmatpush1.msra.mxu0 0.0
      %408 = vmatprep.subr.mxu0 0.0
      %409 = vmatpush1.msra.mxu0 0.0
      %410 = vmatprep.subr.mxu0 0.0
      %411 = vmatpush1.msra.mxu0 0.0
      %412 = vmatprep.subr.mxu0 0.0
      %413 = vmatpush1.msra.mxu0 0.0
      %414 = vmatprep.subr.mxu0 0.0
      %415 = vmatpush1.msra.mxu0 0.0
      %416 = vmatprep.subr.mxu0 0.0
      %417 = vmatpush1.msra.mxu0 0.0
      %418 = vmatprep.subr.mxu0 0.0
      %419 = vmatpush1.msra.mxu0 0.0
      %420 = vmatprep.subr.mxu0 0.0
      %421 = vmatpush1.msra.mxu0 0.0
      %422 = vmatprep.subr.mxu0 0.0
      %423 = vmatpush1.msra.mxu0 0.0
      %424 = vmatprep.subr.mxu0 0.0
      %425 = vmatpush1.msra.mxu0 0.0
      %426 = vmatprep.subr.mxu0 0.0
      %427 = vmatpush1.msra.mxu0 0.0
      %428 = vmatprep.subr.mxu0 0.0
      %429 = vmatpush1.msra.mxu0 0.0
      %430 = vmatprep.subr.mxu0 0.0
      %431 = vmatpush1.msra.mxu0 0.0
      %432 = vmatprep.subr.mxu0 0.0
      %433 = vmatpush1.msra.mxu0 0.0
      %434 = vmatprep.subr.mxu0 0.0
      %435 = vmatpush1.msra.mxu0 0.0
      %436 = vmatprep.subr.mxu0 0.0
      %437 = vmatpush1.msra.mxu0 0.0
      %438 = vmatprep.mubr.f32.mxu0 0.0
      %439 = vmatmul.mubr.f32.gmra.mrb[0].mxu0 %v363
      %v440 = vpop.f32.mrb[0].mxu0
      %v441 = vadd.f32 %v354, %v440
      %v442 = vpop.f32.mrb[0].mxu0
      %v443 = vadd.f32 %v358, %v442
      %444 = vmatprep.mubr.f32.mxu0 0.0
      %445 = vmatmul.mubr.f32.gmra.mrb[0].mxu0 %v366
      %v446 = vpop.f32.mrb[0].mxu0
      %v447 = vadd.f32 %v354, %v446
      %v448 = vpop.f32.mrb[0].mxu0
      %v449 = vadd.f32 %v358, %v448
      %450 = vmatprep.mubr.f32.mxu0 0.0
      %451 = vmatmul.mubr.f32.gmra.mrb[0].mxu0 %v369
      %v452 = vpop.f32.mrb[0].mxu0
      %v453 = vadd.f32 %v354, %v452
      %v454 = vpop.f32.mrb[0].mxu0
      %v455 = vadd.f32 %v358, %v454
      %456 = vmatprep.mubr.f32.mxu0 0.0
      %457 = vmatmul.mubr.f32.gmra.mrb[0].mxu0 %v372
      %v458 = vpop.f32.mrb[0].mxu0
      %v459 = vadd.f32 %v354, %v458
      %v460 = vpop.f32.mrb[0].mxu0
      %v461 = vadd.f32 %v358, %v460
      %462 = vdwg.mxu0
      %463 = vst [vmem:[%s197] sm:$0xff] %v441
      %464 = vst [vmem:[%s197 + $0x8] sm:$0xff] %v443
      %465 = vst [vmem:[%s197 + $0x10] sm:$0xff] %v447
      %466 = vst [vmem:[%s197 + $0x18] sm:$0xff] %v449
      %467 = vst [vmem:[%s197 + $0x20] sm:$0xff] %v453
      %468 = vst [vmem:[%s197 + $0x28] sm:$0xff] %v455
      %469 = vst [vmem:[%s197 + $0x30] sm:$0xff] %v459
      %470 = vst [vmem:[%s197 + $0x38] sm:$0xff] %v461
      %p471 = scmp.lt.s32.totalorder %s15, 1
      %s472 = scalar_select %p471, %s15, 1
      %s473 = smul.addr %s472, 8
      %s474 = smul.addr %s473, 8
      %s475 = scalar_lea.vmem %s4, %s474
      // Predicated region
      $region37: #{upsample_forward.5} parent=35 // pred_check
        %p476 = pneg %p122
      $region38: #{upsample_forward.5} parent=35 // pred_check_branch
        %478 = sbr.rel (%p476) target = $region40
      $region39: #{upsample_forward.5} parent=35 // pred_region
        _
      $region40: #{upsample_forward.5} parent=35 // pred_fallthru
        _
    $region36: #{upsample_forward.5} parent=5 // pred_fallthru
      _
    %p479 = scmp.le.s32.totalorder 2, %s10
    // Predicated region
    $region41: #{upsample_forward.5} parent=5 // pred_check
      %p480 = pneg %p479
    $region42: #{upsample_forward.5} parent=5 // pred_check_branch
      %482 = sbr.rel (%p480) target = $region44
    $region43: #{upsample_forward.5} parent=5 // pred_region
      %s483 = ssub.s32 %s10, 2
      // Predicated region
      $region45: #{upsample_forward.5} parent=43 // pred_check
        %p484 = pneg %p128
      $region46: #{upsample_forward.5} parent=43 // pred_check_branch
        %486 = sbr.rel (%p484) target = $region48
      $region47: #{upsample_forward.5} parent=43 // pred_region
        %p487 = scmp.lt.s32.totalorder %s16, 1
        %s488 = scalar_select %p487, %s16, 1
        %s489 = smul.addr %s488, 8
        %s490 = smul.addr %s489, 8
        %s491 = scalar_lea.vmem %s4, %s490
      $region48: #{upsample_forward.5} parent=43 // pred_fallthru
        _
    $region44: #{upsample_forward.5} parent=5 // pred_fallthru
      _
  $region6: #{upsample_forward.5} parent=0 // loop_footer
    %s14 = sadd.s32 1, %s10
  $region7: #{upsample_forward.5} parent=0 // loop_footer_branch
    %9 = sbr.rel target = $region3
  $region8: #{upsample_forward.5} parent=0 // loop_exit
    _

</llo_original>
